<compile_context>
chip_gen: v7x
topology: tpu7x:2x2x1
jax: 0.10.0
libtpu: 0.0.40
codegen_flags: <defaults>
</compile_context>

<pallas_src>
import jax
import jax.numpy as jnp
from jax.experimental import pallas as pl
from jax.experimental.pallas import tpu as pltpu

BN_EPS = 1e-5
LANE = 128
MAX_TM = 2048
VMEM_LIMIT = 32 * 1024 * 1024   # safe on v5e/v6e (128 MiB) and v7x (64 MiB)


def _round_up(x, m):
    return (x + m - 1) // m * m


def _grid_and_tile(m):
    """Pick (tm, grid_m, m_pad): grid >= 2 when M allows (v7x megacore),
    tiles capped at MAX_TM so big-M layers still pipeline."""
    m8 = _round_up(m, 8)
    if m8 < 16:
        return m8, 1, m8
    grid = max(2, -(-m8 // MAX_TM))
    tm = _round_up(-(-m8 // grid), 8)
    grid = -(-m8 // tm)
    return tm, grid, tm * grid


def _compiler_params():
    return pltpu.CompilerParams(dimension_semantics=("parallel",),
                                vmem_limit_bytes=VMEM_LIMIT)


# ----------------------------- Pallas kernels ------------------------------

def _conv_stats_kernel(a_ref, b_ref, o_ref, st_ref):
    """Conv matmul (bf16 x bf16 -> f32 acc) with fused per-tile BN stats.

    Writes the activation tile back as bf16; stats (sum / sum-of-squares per
    column) are taken from the f32 accumulator.  Only stats rows 0 and 1 are
    written (rows 2-7 of the 8-row block are never read downstream)."""
    acc = jnp.dot(a_ref[...], b_ref[...], preferred_element_type=jnp.float32)
    o_ref[...] = acc.astype(o_ref.dtype)
    st_ref[0:1, :] = jnp.sum(acc, axis=0, keepdims=True)
    st_ref[1:2, :] = jnp.sum(acc * acc, axis=0, keepdims=True)


def _affine_relu_kernel(x_ref, scale_ref, shift_ref, o_ref):
    """Folded BatchNorm (per-column affine) + ReLU; bf16 in, bf16 out."""
    y = x_ref[...].astype(jnp.float32) * scale_ref[...] + shift_ref[...]
    o_ref[...] = jnp.maximum(y, 0.0).astype(o_ref.dtype)


def _conv_bias_tanh_kernel(a_ref, b_ref, bias_ref, o_ref):
    """Final conv matmul with fused bias + Tanh epilogue; bf16 output."""
    acc = jnp.dot(a_ref[...], b_ref[...], preferred_element_type=jnp.float32)
    o_ref[...] = jnp.tanh(acc + bias_ref[...]).astype(o_ref.dtype)


# ----------------------------- plain-JAX glue -------------------------------

def _im2col_3x3(x_nhwc, cin_pad):
    """3x3 patches of the (pad=1) input -> (N*H*W, 9*cin_pad) bf16."""
    n, h, w, c = x_nhwc.shape
    xp = jnp.pad(x_nhwc, ((0, 0), (1, 1), (1, 1), (0, cin_pad - c)))
    cols = [xp[:, a:a + h, b:b + w, :] for a in range(3) for b in range(3)]
    patches = jnp.stack(cols, axis=3)               # (N, H, W, 9, cin_pad)
    return patches.reshape(n * h * w, 9 * cin_pad)


def _phase_packed_weight(w_ct, cin_pad, p_cols):
    """PyTorch ConvTranspose weight (Cin, Cout, 4, 4), stride 2, pad 1 ->
    phase-packed matrix (9*cin_pad, p_cols) so one matmul over 3x3 patches
    produces all 4 sub-pixel phases (columns = phase*Cout + co)."""
    cin, cout = w_ct.shape[0], w_ct.shape[1]
    b = jnp.zeros((9, cin_pad, 4, cout), jnp.float32)
    for r in range(2):
        for s in range(2):
            ph = r * 2 + s
            for dh in range(2):
                for dw in range(2):
                    pos = (r + dh) * 3 + (s + dw)
                    kh = 3 - r - 2 * dh
                    kw = 3 - s - 2 * dw
                    b = b.at[pos, :cin, ph, :].set(w_ct[:, :, kh, kw])
    b = b.reshape(9 * cin_pad, 4 * cout)
    b = jnp.pad(b, ((0, 0), (0, p_cols - 4 * cout)))
    return b.astype(jnp.bfloat16)


def _bn_scale_shift(col_sum, col_sumsq, rep, cout, count, gamma, beta, p):
    """Reduce per-column stats (columns = rep copies x Cout) to per-channel
    BN scale/shift, broadcast back to column layout (1, p) f32."""
    s = col_sum[:rep * cout].reshape(rep, cout).sum(axis=0)
    q = col_sumsq[:rep * cout].reshape(rep, cout).sum(axis=0)
    mean = s / count
    var = jnp.maximum(q / count - mean * mean, 0.0)   # biased, train-mode BN
    scale = gamma / jnp.sqrt(var + BN_EPS)
    shift = beta - mean * scale
    scale_c = jnp.pad(jnp.tile(scale, rep), (0, p - rep * cout))
    shift_c = jnp.pad(jnp.tile(shift, rep), (0, p - rep * cout))
    return (scale_c.reshape(1, p).astype(jnp.float32),
            shift_c.reshape(1, p).astype(jnp.float32))


# --------------------------- pallas_call wrappers ----------------------------

def _matmul_stats(a, b_mat, m):
    """bf16 matmul with fused BN stats.  Returns (raw bf16, col_sum, col_sq,
    tm, grid_m, m_pad)."""
    k = a.shape[1]
    p = b_mat.shape[1]
    tm, grid_m, m_pad = _grid_and_tile(m)
    if m_pad != a.shape[0]:
        a = jnp.pad(a, ((0, m_pad - a.shape[0]), (0, 0)))

    raw, stats = pl.pallas_call(
        _conv_stats_kernel,
        out_shape=(jax.ShapeDtypeStruct((m_pad, p), jnp.bfloat16),
                   jax.ShapeDtypeStruct((grid_m * 8, p), jnp.float32)),
        grid_spec=pltpu.PrefetchScalarGridSpec(
            num_scalar_prefetch=0,
            grid=(grid_m,),
            in_specs=[pl.BlockSpec((tm, k), lambda i: (i, 0)),
                      pl.BlockSpec((k, p), lambda i: (0, 0))],
            out_specs=[pl.BlockSpec((tm, p), lambda i: (i, 0)),
                       pl.BlockSpec((8, p), lambda i: (i, 0))]),
        compiler_params=_compiler_params(),
    )(a, b_mat)

    st = stats.reshape(grid_m, 8, p)
    return raw, st[:, 0, :].sum(axis=0), st[:, 1, :].sum(axis=0), tm, grid_m, m_pad


def _affine_relu(raw, scale_c, shift_c, tm, grid_m, m_pad):
    p = raw.shape[1]
    return pl.pallas_call(
        _affine_relu_kernel,
        out_shape=jax.ShapeDtypeStruct((m_pad, p), jnp.bfloat16),
        grid_spec=pltpu.PrefetchScalarGridSpec(
            num_scalar_prefetch=0,
            grid=(grid_m,),
            in_specs=[pl.BlockSpec((tm, p), lambda i: (i, 0)),
                      pl.BlockSpec((1, p), lambda i: (0, 0)),
                      pl.BlockSpec((1, p), lambda i: (0, 0))],
            out_specs=pl.BlockSpec((tm, p), lambda i: (i, 0))),
        compiler_params=_compiler_params(),
    )(raw, scale_c, shift_c)


# ----------------------------- layer wrappers -------------------------------

def _layer1_bn_relu(z_nchw, w_ct, gamma, beta):
    """ConvT(k=4, s=1, p=0) on a 1x1 input == plain matmul with the 4x4
    spatial positions folded into the lane dim, + BN + ReLU."""
    n, cin = z_nchw.shape[0], z_nchw.shape[1]
    cout, kh, kw = w_ct.shape[1], w_ct.shape[2], w_ct.shape[3]
    cin_p = _round_up(cin, 8)
    cols = kh * kw * cout
    p = _round_up(cols, LANE)

    a = z_nchw.reshape(n, cin).astype(jnp.bfloat16)
    a = jnp.pad(a, ((0, 0), (0, cin_p - cin)))
    b = jnp.transpose(w_ct, (0, 2, 3, 1)).reshape(cin, cols)
    b = jnp.pad(b, ((0, cin_p - cin), (0, p - cols))).astype(jnp.bfloat16)

    raw, cs, cq, tm, gm, m_pad = _matmul_stats(a, b, n)
    scale_c, shift_c = _bn_scale_shift(cs, cq, kh * kw, cout, n * kh * kw,
                                       gamma, beta, p)
    y = _affine_relu(raw, scale_c, shift_c, tm, gm, m_pad)
    return y[:n, :cols].reshape(n, kh, kw, cout)          # NHWC bf16


def _convT_s2_bn_relu(x_nhwc, w_ct, gamma, beta):
    """ConvT(k=4, s=2, p=1) via sub-pixel (4-phase) decomposition + BN + ReLU."""
    n, h, w, cin = x_nhwc.shape
    cout = w_ct.shape[1]
    cin_p = _round_up(cin, 8)
    cols = 4 * cout
    p = _round_up(cols, LANE)

    a = _im2col_3x3(x_nhwc, cin_p)                    # (n*h*w, 9*cin_p) bf16
    b = _phase_packed_weight(w_ct, cin_p, p)
    m = n * h * w

    raw, cs, cq, tm, gm, m_pad = _matmul_stats(a, b, m)
    scale_c, shift_c = _bn_scale_shift(cs, cq, 4, cout, m * 4, gamma, beta, p)
    y = _affine_relu(raw, scale_c, shift_c, tm, gm, m_pad)

    y = y[:m, :cols].reshape(n, h, w, 2, 2, cout)     # (n, i, j, r, s, c)
    y = jnp.transpose(y, (0, 1, 3, 2, 4, 5)).reshape(n, 2 * h, 2 * w, cout)
    return y


def _convT_s2_bias_tanh(x_nhwc, w_ct, bias):
    """Final ConvT(k=4, s=2, p=1) with fused bias + Tanh, bf16 output."""
    n, h, w, cin = x_nhwc.shape
    cout = w_ct.shape[1]
    cin_p = _round_up(cin, 8)
    cols = 4 * cout
    p = _round_up(cols, LANE)

    a = _im2col_3x3(x_nhwc, cin_p)
    b = _phase_packed_weight(w_ct, cin_p, p)
    m = n * h * w
    k = a.shape[1]
    tm, gm, m_pad = _grid_and_tile(m)
    if m_pad != m:
        a = jnp.pad(a, ((0, m_pad - m), (0, 0)))
    bias_c = jnp.pad(jnp.tile(bias.astype(jnp.float32), 4),
                     (0, p - cols)).reshape(1, p)

    y = pl.pallas_call(
        _conv_bias_tanh_kernel,
        out_shape=jax.ShapeDtypeStruct((m_pad, p), jnp.bfloat16),
        grid_spec=pltpu.PrefetchScalarGridSpec(
            num_scalar_prefetch=0,
            grid=(gm,),
            in_specs=[pl.BlockSpec((tm, k), lambda i: (i, 0)),
                      pl.BlockSpec((k, p), lambda i: (0, 0)),
                      pl.BlockSpec((1, p), lambda i: (0, 0))],
            out_specs=pl.BlockSpec((tm, p), lambda i: (i, 0))),
        compiler_params=_compiler_params(),
    )(a, b, bias_c)

    y = y[:m, :cols].reshape(n, h, w, 2, 2, cout)
    y = jnp.transpose(y, (0, 1, 3, 2, 4, 5)).reshape(n, 2 * h, 2 * w, cout)
    return y


# ------------------------------ Generator ----------------------------------

def generator_forward(z_nchw, p):
    x = _layer1_bn_relu(z_nchw, p["w1"], p["g1"], p["b1"])   # -> 4x4,   fg*16
    x = _convT_s2_bn_relu(x, p["w2"], p["g2"], p["b2"])      # -> 8x8,   fg*8
    x = _convT_s2_bn_relu(x, p["w3"], p["g3"], p["b3"])      # -> 16x16, fg*4
    x = _convT_s2_bn_relu(x, p["w4"], p["g4"], p["b4"])      # -> 32x32, fg*2
    x = _convT_s2_bias_tanh(x, p["w5"], p["bias5"])          # -> 64x64, C_img
    return jnp.transpose(x, (0, 3, 1, 2)).astype(jnp.float32)  # NHWC -> NCHW


def init_params(key, channels_noise, channels_img, features_g):
    fg = features_g
    ks = jax.random.split(key, 14)

    def ct_w(k, cin, cout):   # PyTorch ConvTranspose2d weight: (Cin, Cout, KH, KW)
        return 0.02 * jax.random.normal(k, (cin, cout, 4, 4), jnp.float32)

    return {
        "w1": ct_w(ks[0], channels_noise, fg * 16),
        "g1": 1.0 + 0.1 * jax.random.normal(ks[1], (fg * 16,), jnp.float32),
        "b1": 0.1 * jax.random.normal(ks[2], (fg * 16,), jnp.float32),
        "w2": ct_w(ks[3], fg * 16, fg * 8),
        "g2": 1.0 + 0.1 * jax.random.normal(ks[4], (fg * 8,), jnp.float32),
        "b2": 0.1 * jax.random.normal(ks[5], (fg * 8,), jnp.float32),
        "w3": ct_w(ks[6], fg * 8, fg * 4),
        "g3": 1.0 + 0.1 * jax.random.normal(ks[7], (fg * 4,), jnp.float32),
        "b3": 0.1 * jax.random.normal(ks[8], (fg * 4,), jnp.float32),
        "w4": ct_w(ks[9], fg * 4, fg * 2),
        "g4": 1.0 + 0.1 * jax.random.normal(ks[10], (fg * 2,), jnp.float32),
        "b4": 0.1 * jax.random.normal(ks[11], (fg * 2,), jnp.float32),
        "w5": ct_w(ks[12], fg * 2, channels_img),
        "bias5": 0.01 * jax.random.normal(ks[13], (channels_img,), jnp.float32),
    }


# ----------------------------- pure-JAX reference ----------------------------

def ref_forward(z, p):
    def convT(x, w_ct, stride, pad, b=None):
        k = w_ct.shape[2]
        w = jnp.transpose(w_ct[:, :, ::-1, ::-1], (1, 0, 2, 3))  # (Cout,Cin,KH,KW)
        y = jax.lax.conv_general_dilated(
            x, w, window_strides=(1, 1),
            padding=[(k - 1 - pad, k - 1 - pad)] * 2,
            lhs_dilation=(stride, stride),
            dimension_numbers=("NCHW", "OIHW", "NCHW"))
        if b is not None:
            y = y + b[None, :, None, None]
        return y

    def bn_relu(v, g, b):
        mean = v.mean(axis=(0, 2, 3), keepdims=True)
        var = v.var(axis=(0, 2, 3), keepdims=True)
        vhat = (v - mean) / jnp.sqrt(var + BN_EPS)
        return jnp.maximum(vhat * g[None, :, None, None]
                           + b[None, :, None, None], 0.0)

    y = bn_relu(convT(z, p["w1"], 1, 0), p["g1"], p["b1"])
    y = bn_relu(convT(y, p["w2"], 2, 1), p["g2"], p["b2"])
    y = bn_relu(convT(y, p["w3"], 2, 1), p["g3"], p["b3"])
    y = bn_relu(convT(y, p["w4"], 2, 1), p["g4"], p["b4"])
    return jnp.tanh(convT(y, p["w5"], 2, 1, p["bias5"]))


if __name__ == "__main__":
    key = jax.random.PRNGKey(0)
    k_z, k_p = jax.random.split(key)

    channels_noise, channels_img, features_g = 16, 3, 8
    batch = 2
    z = jax.random.normal(k_z, (batch, channels_noise, 1, 1), jnp.float32)
    params = init_params(k_p, channels_noise, channels_img, features_g)

    fwd = jax.jit(generator_forward)
    out = jax.block_until_ready(fwd(z, params))
    assert out.shape == (batch, channels_img, 64, 64), out.shape

    ref = jax.block_until_ready(ref_forward(z, params))
    max_err = float(jnp.max(jnp.abs(out - ref)))
    assert max_err < 5e-2, f"mismatch vs reference: {max_err}"

    print("KERNEL_OK")
</pallas_src>

<mosaic_0001>
module attributes {stable_mosaic.version = 11 : i64} {
  func.func @_conv_stats_kernel(%arg0: i32, %arg1: memref<8x16xbf16, #tpu.memory_space<vmem>>, %arg2: memref<16x2048xbf16, #tpu.memory_space<vmem>>, %arg3: memref<8x2048xbf16, #tpu.memory_space<vmem>>, %arg4: memref<8x2048xf32, #tpu.memory_space<vmem>>) attributes {dimension_semantics = [#tpu.dimension_semantics<parallel>], iteration_bounds = array<i64: 1>, scalar_prefetch = 0 : i64, scratch_operands = 0 : i64, tpu.core_type = #tpu.core_type<tc>, window_params = [{transform_indices = @transform_0, window_bounds = array<i64: 8, 16>}, {pipeline_mode = #tpu.pipeline_mode<synchronous>, transform_indices = @transform_1, window_bounds = array<i64: 16, 2048>}, {transform_indices = @transform_2, window_bounds = array<i64: 8, 2048>}, {transform_indices = @transform_3, window_bounds = array<i64: 8, 2048>}]} {
    %c0 = arith.constant 0 : index
    %c0_0 = arith.constant 0 : index
    %0 = vector.load %arg1[%c0, %c0_0] : memref<8x16xbf16, #tpu.memory_space<vmem>>, vector<8x16xbf16>
    %c0_1 = arith.constant 0 : index
    %c0_2 = arith.constant 0 : index
    %1 = vector.load %arg2[%c0_1, %c0_2] : memref<16x2048xbf16, #tpu.memory_space<vmem>>, vector<16x2048xbf16>
    %cst = arith.constant dense<0.000000e+00> : vector<8x2048xf32>
    %2 = tpu.matmul %0, %1, %cst {dimension_numbers = #tpu.dot_dimension_numbers<[1], [0], [0], [1], [0, 0, 1, 1], [], []>} : vector<8x16xbf16>, vector<16x2048xbf16>, vector<8x2048xf32> -> vector<8x2048xf32>
    %3 = arith.truncf %2 : vector<8x2048xf32> to vector<8x2048xbf16>
    %c0_3 = arith.constant 0 : index
    %c0_4 = arith.constant 0 : index
    %4 = vector.load %arg3[%c0_3, %c0_4] : memref<8x2048xbf16, #tpu.memory_space<vmem>>, vector<8x2048xbf16>
    tpu.vector_store %arg3[%c0_3, %c0_4], %3 {strides = array<i32>} : memref<8x2048xbf16, #tpu.memory_space<vmem>>, vector<8x2048xbf16>,
    %cst_5 = arith.constant dense<0.000000e+00> : vector<2048xf32>
    %5 = vector.multi_reduction <add>, %2, %cst_5 [0] : vector<8x2048xf32> to vector<2048xf32>
    %6 = vector.shape_cast %5 : vector<2048xf32> to vector<1x2048xf32>
    %c0_6 = arith.constant 0 : index
    %c0_7 = arith.constant 0 : index
    %7 = vector.load %arg4[%c0_6, %c0_7] : memref<8x2048xf32, #tpu.memory_space<vmem>>, vector<1x2048xf32>
    tpu.vector_store %arg4[%c0_6, %c0_7], %6 {strides = array<i32>} : memref<8x2048xf32, #tpu.memory_space<vmem>>, vector<1x2048xf32>,
    %8 = arith.mulf %2, %2 : vector<8x2048xf32>
    %cst_8 = arith.constant dense<0.000000e+00> : vector<2048xf32>
    %9 = vector.multi_reduction <add>, %8, %cst_8 [0] : vector<8x2048xf32> to vector<2048xf32>
    %10 = vector.shape_cast %9 : vector<2048xf32> to vector<1x2048xf32>
    %c1 = arith.constant 1 : index
    %c0_9 = arith.constant 0 : index
    %11 = vector.load %arg4[%c1, %c0_9] : memref<8x2048xf32, #tpu.memory_space<vmem>>, vector<1x2048xf32>
    tpu.vector_store %arg4[%c1, %c0_9], %10 {strides = array<i32>} : memref<8x2048xf32, #tpu.memory_space<vmem>>, vector<1x2048xf32>,
    return
  }
  func.func @transform_0(%arg0: i32) -> (i32, i32) {
    %c0_i32 = arith.constant 0 : i32
    %c0_i32_0 = arith.constant 0 : i32
    return %arg0, %c0_i32 : i32, i32
  }
  func.func @transform_1(%arg0: i32) -> (i32, i32) {
    %c0_i32 = arith.constant 0 : i32
    %c0_i32_0 = arith.constant 0 : i32
    %c0_i32_1 = arith.constant 0 : i32
    return %c0_i32, %c0_i32_0 : i32, i32
  }
  func.func @transform_2(%arg0: i32) -> (i32, i32) {
    %c0_i32 = arith.constant 0 : i32
    %c0_i32_0 = arith.constant 0 : i32
    return %arg0, %c0_i32 : i32, i32
  }
  func.func @transform_3(%arg0: i32) -> (i32, i32) {
    %c0_i32 = arith.constant 0 : i32
    %c0_i32_0 = arith.constant 0 : i32
    return %arg0, %c0_i32 : i32, i32
  }
}

module attributes {stable_mosaic.version = 11 : i64} {
  func.func @_affine_relu_kernel(%arg0: i32, %arg1: memref<8x2048xbf16, #tpu.memory_space<vmem>>, %arg2: memref<1x2048xf32, #tpu.memory_space<vmem>>, %arg3: memref<1x2048xf32, #tpu.memory_space<vmem>>, %arg4: memref<8x2048xbf16, #tpu.memory_space<vmem>>) attributes {dimension_semantics = [#tpu.dimension_semantics<parallel>], iteration_bounds = array<i64: 1>, scalar_prefetch = 0 : i64, scratch_operands = 0 : i64, tpu.core_type = #tpu.core_type<tc>, window_params = [{transform_indices = @transform_0, window_bounds = array<i64: 8, 2048>}, {pipeline_mode = #tpu.pipeline_mode<synchronous>, transform_indices = @transform_1, window_bounds = array<i64: 1, 2048>}, {pipeline_mode = #tpu.pipeline_mode<synchronous>, transform_indices = @transform_2, window_bounds = array<i64: 1, 2048>}, {transform_indices = @transform_3, window_bounds = array<i64: 8, 2048>}]} {
    %c0 = arith.constant 0 : index
    %c0_0 = arith.constant 0 : index
    %0 = vector.load %arg1[%c0, %c0_0] : memref<8x2048xbf16, #tpu.memory_space<vmem>>, vector<8x2048xbf16>
    %1 = arith.extf %0 : vector<8x2048xbf16> to vector<8x2048xf32>
    %c0_1 = arith.constant 0 : index
    %c0_2 = arith.constant 0 : index
    %2 = vector.load %arg2[%c0_1, %c0_2] : memref<1x2048xf32, #tpu.memory_space<vmem>>, vector<1x2048xf32>
    %3 = vector.broadcast %2 : vector<1x2048xf32> to vector<8x2048xf32>
    %4 = arith.mulf %1, %3 : vector<8x2048xf32>
    %c0_3 = arith.constant 0 : index
    %c0_4 = arith.constant 0 : index
    %5 = vector.load %arg3[%c0_3, %c0_4] : memref<1x2048xf32, #tpu.memory_space<vmem>>, vector<1x2048xf32>
    %6 = vector.broadcast %5 : vector<1x2048xf32> to vector<8x2048xf32>
    %7 = arith.addf %4, %6 : vector<8x2048xf32>
    %cst = arith.constant 0.000000e+00 : f32
    %8 = vector.broadcast %cst : f32 to vector<8x2048xf32>
    %9 = arith.maximumf %7, %8 : vector<8x2048xf32>
    %10 = arith.truncf %9 : vector<8x2048xf32> to vector<8x2048xbf16>
    %c0_5 = arith.constant 0 : index
    %c0_6 = arith.constant 0 : index
    %11 = vector.load %arg4[%c0_5, %c0_6] : memref<8x2048xbf16, #tpu.memory_space<vmem>>, vector<8x2048xbf16>
    tpu.vector_store %arg4[%c0_5, %c0_6], %10 {strides = array<i32>} : memref<8x2048xbf16, #tpu.memory_space<vmem>>, vector<8x2048xbf16>,
    return
  }
  func.func @transform_0(%arg0: i32) -> (i32, i32) {
    %c0_i32 = arith.constant 0 : i32
    %c0_i32_0 = arith.constant 0 : i32
    return %arg0, %c0_i32 : i32, i32
  }
  func.func @transform_1(%arg0: i32) -> (i32, i32) {
    %c0_i32 = arith.constant 0 : i32
    %c0_i32_0 = arith.constant 0 : i32
    %c0_i32_1 = arith.constant 0 : i32
    return %c0_i32, %c0_i32_0 : i32, i32
  }
  func.func @transform_2(%arg0: i32) -> (i32, i32) {
    %c0_i32 = arith.constant 0 : i32
    %c0_i32_0 = arith.constant 0 : i32
    %c0_i32_1 = arith.constant 0 : i32
    return %c0_i32, %c0_i32_0 : i32, i32
  }
  func.func @transform_3(%arg0: i32) -> (i32, i32) {
    %c0_i32 = arith.constant 0 : i32
    %c0_i32_0 = arith.constant 0 : i32
    return %arg0, %c0_i32 : i32, i32
  }
}

module attributes {stable_mosaic.version = 11 : i64} {
  func.func @_conv_stats_kernel(%arg0: i32, %arg1: memref<16x1152xbf16, #tpu.memory_space<vmem>>, %arg2: memref<1152x256xbf16, #tpu.memory_space<vmem>>, %arg3: memref<16x256xbf16, #tpu.memory_space<vmem>>, %arg4: memref<8x256xf32, #tpu.memory_space<vmem>>) attributes {dimension_semantics = [#tpu.dimension_semantics<parallel>], iteration_bounds = array<i64: 2>, scalar_prefetch = 0 : i64, scratch_operands = 0 : i64, tpu.core_type = #tpu.core_type<tc>, window_params = [{transform_indices = @transform_0, window_bounds = array<i64: 16, 1152>}, {pipeline_mode = #tpu.pipeline_mode<synchronous>, transform_indices = @transform_1, window_bounds = array<i64: 1152, 256>}, {transform_indices = @transform_2, window_bounds = array<i64: 16, 256>}, {transform_indices = @transform_3, window_bounds = array<i64: 8, 256>}]} {
    %c0 = arith.constant 0 : index
    %c0_0 = arith.constant 0 : index
    %0 = vector.load %arg1[%c0, %c0_0] : memref<16x1152xbf16, #tpu.memory_space<vmem>>, vector<16x1152xbf16>
    %c0_1 = arith.constant 0 : index
    %c0_2 = arith.constant 0 : index
    %1 = vector.load %arg2[%c0_1, %c0_2] : memref<1152x256xbf16, #tpu.memory_space<vmem>>, vector<1152x256xbf16>
    %cst = arith.constant dense<0.000000e+00> : vector<16x256xf32>
    %2 = tpu.matmul %0, %1, %cst {dimension_numbers = #tpu.dot_dimension_numbers<[1], [0], [0], [1], [0, 0, 1, 1], [], []>} : vector<16x1152xbf16>, vector<1152x256xbf16>, vector<16x256xf32> -> vector<16x256xf32>
    %3 = arith.truncf %2 : vector<16x256xf32> to vector<16x256xbf16>
    %c0_3 = arith.constant 0 : index
    %c0_4 = arith.constant 0 : index
    %4 = vector.load %arg3[%c0_3, %c0_4] : memref<16x256xbf16, #tpu.memory_space<vmem>>, vector<16x256xbf16>
    tpu.vector_store %arg3[%c0_3, %c0_4], %3 {strides = array<i32>} : memref<16x256xbf16, #tpu.memory_space<vmem>>, vector<16x256xbf16>,
    %cst_5 = arith.constant dense<0.000000e+00> : vector<256xf32>
    %5 = vector.multi_reduction <add>, %2, %cst_5 [0] : vector<16x256xf32> to vector<256xf32>
    %6 = vector.shape_cast %5 : vector<256xf32> to vector<1x256xf32>
    %c0_6 = arith.constant 0 : index
    %c0_7 = arith.constant 0 : index
    %7 = vector.load %arg4[%c0_6, %c0_7] : memref<8x256xf32, #tpu.memory_space<vmem>>, vector<1x256xf32>
    tpu.vector_store %arg4[%c0_6, %c0_7], %6 {strides = array<i32>} : memref<8x256xf32, #tpu.memory_space<vmem>>, vector<1x256xf32>,
    %8 = arith.mulf %2, %2 : vector<16x256xf32>
    %cst_8 = arith.constant dense<0.000000e+00> : vector<256xf32>
    %9 = vector.multi_reduction <add>, %8, %cst_8 [0] : vector<16x256xf32> to vector<256xf32>
    %10 = vector.shape_cast %9 : vector<256xf32> to vector<1x256xf32>
    %c1 = arith.constant 1 : index
    %c0_9 = arith.constant 0 : index
    %11 = vector.load %arg4[%c1, %c0_9] : memref<8x256xf32, #tpu.memory_space<vmem>>, vector<1x256xf32>
    tpu.vector_store %arg4[%c1, %c0_9], %10 {strides = array<i32>} : memref<8x256xf32, #tpu.memory_space<vmem>>, vector<1x256xf32>,
    return
  }
  func.func @transform_0(%arg0: i32) -> (i32, i32) {
    %c0_i32 = arith.constant 0 : i32
    %c0_i32_0 = arith.constant 0 : i32
    return %arg0, %c0_i32 : i32, i32
  }
  func.func @transform_1(%arg0: i32) -> (i32, i32) {
    %c0_i32 = arith.constant 0 : i32
    %c0_i32_0 = arith.constant 0 : i32
    %c0_i32_1 = arith.constant 0 : i32
    return %c0_i32, %c0_i32_0 : i32, i32
  }
  func.func @transform_2(%arg0: i32) -> (i32, i32) {
    %c0_i32 = arith.constant 0 : i32
    %c0_i32_0 = arith.constant 0 : i32
    return %arg0, %c0_i32 : i32, i32
  }
  func.func @transform_3(%arg0: i32) -> (i32, i32) {
    %c0_i32 = arith.constant 0 : i32
    %c0_i32_0 = arith.constant 0 : i32
    return %arg0, %c0_i32 : i32, i32
  }
}

module attributes {stable_mosaic.version = 11 : i64} {
  func.func @_affine_relu_kernel(%arg0: i32, %arg1: memref<16x256xbf16, #tpu.memory_space<vmem>>, %arg2: memref<1x256xf32, #tpu.memory_space<vmem>>, %arg3: memref<1x256xf32, #tpu.memory_space<vmem>>, %arg4: memref<16x256xbf16, #tpu.memory_space<vmem>>) attributes {dimension_semantics = [#tpu.dimension_semantics<parallel>], iteration_bounds = array<i64: 2>, scalar_prefetch = 0 : i64, scratch_operands = 0 : i64, tpu.core_type = #tpu.core_type<tc>, window_params = [{transform_indices = @transform_0, window_bounds = array<i64: 16, 256>}, {pipeline_mode = #tpu.pipeline_mode<synchronous>, transform_indices = @transform_1, window_bounds = array<i64: 1, 256>}, {pipeline_mode = #tpu.pipeline_mode<synchronous>, transform_indices = @transform_2, window_bounds = array<i64: 1, 256>}, {transform_indices = @transform_3, window_bounds = array<i64: 16, 256>}]} {
    %c0 = arith.constant 0 : index
    %c0_0 = arith.constant 0 : index
    %0 = vector.load %arg1[%c0, %c0_0] : memref<16x256xbf16, #tpu.memory_space<vmem>>, vector<16x256xbf16>
    %1 = arith.extf %0 : vector<16x256xbf16> to vector<16x256xf32>
    %c0_1 = arith.constant 0 : index
    %c0_2 = arith.constant 0 : index
    %2 = vector.load %arg2[%c0_1, %c0_2] : memref<1x256xf32, #tpu.memory_space<vmem>>, vector<1x256xf32>
    %3 = vector.broadcast %2 : vector<1x256xf32> to vector<16x256xf32>
    %4 = arith.mulf %1, %3 : vector<16x256xf32>
    %c0_3 = arith.constant 0 : index
    %c0_4 = arith.constant 0 : index
    %5 = vector.load %arg3[%c0_3, %c0_4] : memref<1x256xf32, #tpu.memory_space<vmem>>, vector<1x256xf32>
    %6 = vector.broadcast %5 : vector<1x256xf32> to vector<16x256xf32>
    %7 = arith.addf %4, %6 : vector<16x256xf32>
    %cst = arith.constant 0.000000e+00 : f32
    %8 = vector.broadcast %cst : f32 to vector<16x256xf32>
    %9 = arith.maximumf %7, %8 : vector<16x256xf32>
    %10 = arith.truncf %9 : vector<16x256xf32> to vector<16x256xbf16>
    %c0_5 = arith.constant 0 : index
    %c0_6 = arith.constant 0 : index
    %11 = vector.load %arg4[%c0_5, %c0_6] : memref<16x256xbf16, #tpu.memory_space<vmem>>, vector<16x256xbf16>
    tpu.vector_store %arg4[%c0_5, %c0_6], %10 {strides = array<i32>} : memref<16x256xbf16, #tpu.memory_space<vmem>>, vector<16x256xbf16>,
    return
  }
  func.func @transform_0(%arg0: i32) -> (i32, i32) {
    %c0_i32 = arith.constant 0 : i32
    %c0_i32_0 = arith.constant 0 : i32
    return %arg0, %c0_i32 : i32, i32
  }
  func.func @transform_1(%arg0: i32) -> (i32, i32) {
    %c0_i32 = arith.constant 0 : i32
    %c0_i32_0 = arith.constant 0 : i32
    %c0_i32_1 = arith.constant 0 : i32
    return %c0_i32, %c0_i32_0 : i32, i32
  }
  func.func @transform_2(%arg0: i32) -> (i32, i32) {
    %c0_i32 = arith.constant 0 : i32
    %c0_i32_0 = arith.constant 0 : i32
    %c0_i32_1 = arith.constant 0 : i32
    return %c0_i32, %c0_i32_0 : i32, i32
  }
  func.func @transform_3(%arg0: i32) -> (i32, i32) {
    %c0_i32 = arith.constant 0 : i32
    %c0_i32_0 = arith.constant 0 : i32
    return %arg0, %c0_i32 : i32, i32
  }
}

module attributes {stable_mosaic.version = 11 : i64} {
  func.func @_conv_stats_kernel(%arg0: i32, %arg1: memref<64x576xbf16, #tpu.memory_space<vmem>>, %arg2: memref<576x128xbf16, #tpu.memory_space<vmem>>, %arg3: memref<64x128xbf16, #tpu.memory_space<vmem>>, %arg4: memref<8x128xf32, #tpu.memory_space<vmem>>) attributes {dimension_semantics = [#tpu.dimension_semantics<parallel>], iteration_bounds = array<i64: 2>, scalar_prefetch = 0 : i64, scratch_operands = 0 : i64, tpu.core_type = #tpu.core_type<tc>, window_params = [{transform_indices = @transform_0, window_bounds = array<i64: 64, 576>}, {pipeline_mode = #tpu.pipeline_mode<synchronous>, transform_indices = @transform_1, window_bounds = array<i64: 576, 128>}, {transform_indices = @transform_2, window_bounds = array<i64: 64, 128>}, {transform_indices = @transform_3, window_bounds = array<i64: 8, 128>}]} {
    %c0 = arith.constant 0 : index
    %c0_0 = arith.constant 0 : index
    %0 = vector.load %arg1[%c0, %c0_0] : memref<64x576xbf16, #tpu.memory_space<vmem>>, vector<64x576xbf16>
    %c0_1 = arith.constant 0 : index
    %c0_2 = arith.constant 0 : index
    %1 = vector.load %arg2[%c0_1, %c0_2] : memref<576x128xbf16, #tpu.memory_space<vmem>>, vector<576x128xbf16>
    %cst = arith.constant dense<0.000000e+00> : vector<64x128xf32>
    %2 = tpu.matmul %0, %1, %cst {dimension_numbers = #tpu.dot_dimension_numbers<[1], [0], [0], [1], [0, 0, 1, 1], [], []>} : vector<64x576xbf16>, vector<576x128xbf16>, vector<64x128xf32> -> vector<64x128xf32>
    %3 = arith.truncf %2 : vector<64x128xf32> to vector<64x128xbf16>
    %c0_3 = arith.constant 0 : index
    %c0_4 = arith.constant 0 : index
    %4 = vector.load %arg3[%c0_3, %c0_4] : memref<64x128xbf16, #tpu.memory_space<vmem>>, vector<64x128xbf16>
    tpu.vector_store %arg3[%c0_3, %c0_4], %3 {strides = array<i32>} : memref<64x128xbf16, #tpu.memory_space<vmem>>, vector<64x128xbf16>,
    %cst_5 = arith.constant dense<0.000000e+00> : vector<128xf32>
    %5 = vector.multi_reduction <add>, %2, %cst_5 [0] : vector<64x128xf32> to vector<128xf32>
    %6 = vector.shape_cast %5 : vector<128xf32> to vector<1x128xf32>
    %c0_6 = arith.constant 0 : index
    %c0_7 = arith.constant 0 : index
    %7 = vector.load %arg4[%c0_6, %c0_7] : memref<8x128xf32, #tpu.memory_space<vmem>>, vector<1x128xf32>
    tpu.vector_store %arg4[%c0_6, %c0_7], %6 {strides = array<i32>} : memref<8x128xf32, #tpu.memory_space<vmem>>, vector<1x128xf32>,
    %8 = arith.mulf %2, %2 : vector<64x128xf32>
    %cst_8 = arith.constant dense<0.000000e+00> : vector<128xf32>
    %9 = vector.multi_reduction <add>, %8, %cst_8 [0] : vector<64x128xf32> to vector<128xf32>
    %10 = vector.shape_cast %9 : vector<128xf32> to vector<1x128xf32>
    %c1 = arith.constant 1 : index
    %c0_9 = arith.constant 0 : index
    %11 = vector.load %arg4[%c1, %c0_9] : memref<8x128xf32, #tpu.memory_space<vmem>>, vector<1x128xf32>
    tpu.vector_store %arg4[%c1, %c0_9], %10 {strides = array<i32>} : memref<8x128xf32, #tpu.memory_space<vmem>>, vector<1x128xf32>,
    return
  }
  func.func @transform_0(%arg0: i32) -> (i32, i32) {
    %c0_i32 = arith.constant 0 : i32
    %c0_i32_0 = arith.constant 0 : i32
    return %arg0, %c0_i32 : i32, i32
  }
  func.func @transform_1(%arg0: i32) -> (i32, i32) {
    %c0_i32 = arith.constant 0 : i32
    %c0_i32_0 = arith.constant 0 : i32
    %c0_i32_1 = arith.constant 0 : i32
    return %c0_i32, %c0_i32_0 : i32, i32
  }
  func.func @transform_2(%arg0: i32) -> (i32, i32) {
    %c0_i32 = arith.constant 0 : i32
    %c0_i32_0 = arith.constant 0 : i32
    return %arg0, %c0_i32 : i32, i32
  }
  func.func @transform_3(%arg0: i32) -> (i32, i32) {
    %c0_i32 = arith.constant 0 : i32
    %c0_i32_0 = arith.constant 0 : i32
    return %arg0, %c0_i32 : i32, i32
  }
}

module attributes {stable_mosaic.version = 11 : i64} {
  func.func @_affine_relu_kernel(%arg0: i32, %arg1: memref<64x128xbf16, #tpu.memory_space<vmem>>, %arg2: memref<1x128xf32, #tpu.memory_space<vmem>>, %arg3: memref<1x128xf32, #tpu.memory_space<vmem>>, %arg4: memref<64x128xbf16, #tpu.memory_space<vmem>>) attributes {dimension_semantics = [#tpu.dimension_semantics<parallel>], iteration_bounds = array<i64: 2>, scalar_prefetch = 0 : i64, scratch_operands = 0 : i64, tpu.core_type = #tpu.core_type<tc>, window_params = [{transform_indices = @transform_0, window_bounds = array<i64: 64, 128>}, {pipeline_mode = #tpu.pipeline_mode<synchronous>, transform_indices = @transform_1, window_bounds = array<i64: 1, 128>}, {pipeline_mode = #tpu.pipeline_mode<synchronous>, transform_indices = @transform_2, window_bounds = array<i64: 1, 128>}, {transform_indices = @transform_3, window_bounds = array<i64: 64, 128>}]} {
    %c0 = arith.constant 0 : index
    %c0_0 = arith.constant 0 : index
    %0 = vector.load %arg1[%c0, %c0_0] : memref<64x128xbf16, #tpu.memory_space<vmem>>, vector<64x128xbf16>
    %1 = arith.extf %0 : vector<64x128xbf16> to vector<64x128xf32>
    %c0_1 = arith.constant 0 : index
    %c0_2 = arith.constant 0 : index
    %2 = vector.load %arg2[%c0_1, %c0_2] : memref<1x128xf32, #tpu.memory_space<vmem>>, vector<1x128xf32>
    %3 = vector.broadcast %2 : vector<1x128xf32> to vector<64x128xf32>
    %4 = arith.mulf %1, %3 : vector<64x128xf32>
    %c0_3 = arith.constant 0 : index
    %c0_4 = arith.constant 0 : index
    %5 = vector.load %arg3[%c0_3, %c0_4] : memref<1x128xf32, #tpu.memory_space<vmem>>, vector<1x128xf32>
    %6 = vector.broadcast %5 : vector<1x128xf32> to vector<64x128xf32>
    %7 = arith.addf %4, %6 : vector<64x128xf32>
    %cst = arith.constant 0.000000e+00 : f32
    %8 = vector.broadcast %cst : f32 to vector<64x128xf32>
    %9 = arith.maximumf %7, %8 : vector<64x128xf32>
    %10 = arith.truncf %9 : vector<64x128xf32> to vector<64x128xbf16>
    %c0_5 = arith.constant 0 : index
    %c0_6 = arith.constant 0 : index
    %11 = vector.load %arg4[%c0_5, %c0_6] : memref<64x128xbf16, #tpu.memory_space<vmem>>, vector<64x128xbf16>
    tpu.vector_store %arg4[%c0_5, %c0_6], %10 {strides = array<i32>} : memref<64x128xbf16, #tpu.memory_space<vmem>>, vector<64x128xbf16>,
    return
  }
  func.func @transform_0(%arg0: i32) -> (i32, i32) {
    %c0_i32 = arith.constant 0 : i32
    %c0_i32_0 = arith.constant 0 : i32
    return %arg0, %c0_i32 : i32, i32
  }
  func.func @transform_1(%arg0: i32) -> (i32, i32) {
    %c0_i32 = arith.constant 0 : i32
    %c0_i32_0 = arith.constant 0 : i32
    %c0_i32_1 = arith.constant 0 : i32
    return %c0_i32, %c0_i32_0 : i32, i32
  }
  func.func @transform_2(%arg0: i32) -> (i32, i32) {
    %c0_i32 = arith.constant 0 : i32
    %c0_i32_0 = arith.constant 0 : i32
    %c0_i32_1 = arith.constant 0 : i32
    return %c0_i32, %c0_i32_0 : i32, i32
  }
  func.func @transform_3(%arg0: i32) -> (i32, i32) {
    %c0_i32 = arith.constant 0 : i32
    %c0_i32_0 = arith.constant 0 : i32
    return %arg0, %c0_i32 : i32, i32
  }
}

module attributes {stable_mosaic.version = 11 : i64} {
  func.func @_conv_stats_kernel(%arg0: i32, %arg1: memref<256x288xbf16, #tpu.memory_space<vmem>>, %arg2: memref<288x128xbf16, #tpu.memory_space<vmem>>, %arg3: memref<256x128xbf16, #tpu.memory_space<vmem>>, %arg4: memref<8x128xf32, #tpu.memory_space<vmem>>) attributes {dimension_semantics = [#tpu.dimension_semantics<parallel>], iteration_bounds = array<i64: 2>, scalar_prefetch = 0 : i64, scratch_operands = 0 : i64, tpu.core_type = #tpu.core_type<tc>, window_params = [{transform_indices = @transform_0, window_bounds = array<i64: 256, 288>}, {pipeline_mode = #tpu.pipeline_mode<synchronous>, transform_indices = @transform_1, window_bounds = array<i64: 288, 128>}, {transform_indices = @transform_2, window_bounds = array<i64: 256, 128>}, {transform_indices = @transform_3, window_bounds = array<i64: 8, 128>}]} {
    %c0 = arith.constant 0 : index
    %c0_0 = arith.constant 0 : index
    %0 = vector.load %arg1[%c0, %c0_0] : memref<256x288xbf16, #tpu.memory_space<vmem>>, vector<256x288xbf16>
    %c0_1 = arith.constant 0 : index
    %c0_2 = arith.constant 0 : index
    %1 = vector.load %arg2[%c0_1, %c0_2] : memref<288x128xbf16, #tpu.memory_space<vmem>>, vector<288x128xbf16>
    %cst = arith.constant dense<0.000000e+00> : vector<256x128xf32>
    %2 = tpu.matmul %0, %1, %cst {dimension_numbers = #tpu.dot_dimension_numbers<[1], [0], [0], [1], [0, 0, 1, 1], [], []>} : vector<256x288xbf16>, vector<288x128xbf16>, vector<256x128xf32> -> vector<256x128xf32>
    %3 = arith.truncf %2 : vector<256x128xf32> to vector<256x128xbf16>
    %c0_3 = arith.constant 0 : index
    %c0_4 = arith.constant 0 : index
    %4 = vector.load %arg3[%c0_3, %c0_4] : memref<256x128xbf16, #tpu.memory_space<vmem>>, vector<256x128xbf16>
    tpu.vector_store %arg3[%c0_3, %c0_4], %3 {strides = array<i32>} : memref<256x128xbf16, #tpu.memory_space<vmem>>, vector<256x128xbf16>,
    %cst_5 = arith.constant dense<0.000000e+00> : vector<128xf32>
    %5 = vector.multi_reduction <add>, %2, %cst_5 [0] : vector<256x128xf32> to vector<128xf32>
    %6 = vector.shape_cast %5 : vector<128xf32> to vector<1x128xf32>
    %c0_6 = arith.constant 0 : index
    %c0_7 = arith.constant 0 : index
    %7 = vector.load %arg4[%c0_6, %c0_7] : memref<8x128xf32, #tpu.memory_space<vmem>>, vector<1x128xf32>
    tpu.vector_store %arg4[%c0_6, %c0_7], %6 {strides = array<i32>} : memref<8x128xf32, #tpu.memory_space<vmem>>, vector<1x128xf32>,
    %8 = arith.mulf %2, %2 : vector<256x128xf32>
    %cst_8 = arith.constant dense<0.000000e+00> : vector<128xf32>
    %9 = vector.multi_reduction <add>, %8, %cst_8 [0] : vector<256x128xf32> to vector<128xf32>
    %10 = vector.shape_cast %9 : vector<128xf32> to vector<1x128xf32>
    %c1 = arith.constant 1 : index
    %c0_9 = arith.constant 0 : index
    %11 = vector.load %arg4[%c1, %c0_9] : memref<8x128xf32, #tpu.memory_space<vmem>>, vector<1x128xf32>
    tpu.vector_store %arg4[%c1, %c0_9], %10 {strides = array<i32>} : memref<8x128xf32, #tpu.memory_space<vmem>>, vector<1x128xf32>,
    return
  }
  func.func @transform_0(%arg0: i32) -> (i32, i32) {
    %c0_i32 = arith.constant 0 : i32
    %c0_i32_0 = arith.constant 0 : i32
    return %arg0, %c0_i32 : i32, i32
  }
  func.func @transform_1(%arg0: i32) -> (i32, i32) {
    %c0_i32 = arith.constant 0 : i32
    %c0_i32_0 = arith.constant 0 : i32
    %c0_i32_1 = arith.constant 0 : i32
    return %c0_i32, %c0_i32_0 : i32, i32
  }
  func.func @transform_2(%arg0: i32) -> (i32, i32) {
    %c0_i32 = arith.constant 0 : i32
    %c0_i32_0 = arith.constant 0 : i32
    return %arg0, %c0_i32 : i32, i32
  }
  func.func @transform_3(%arg0: i32) -> (i32, i32) {
    %c0_i32 = arith.constant 0 : i32
    %c0_i32_0 = arith.constant 0 : i32
    return %arg0, %c0_i32 : i32, i32
  }
}

module attributes {stable_mosaic.version = 11 : i64} {
  func.func @_affine_relu_kernel(%arg0: i32, %arg1: memref<256x128xbf16, #tpu.memory_space<vmem>>, %arg2: memref<1x128xf32, #tpu.memory_space<vmem>>, %arg3: memref<1x128xf32, #tpu.memory_space<vmem>>, %arg4: memref<256x128xbf16, #tpu.memory_space<vmem>>) attributes {dimension_semantics = [#tpu.dimension_semantics<parallel>], iteration_bounds = array<i64: 2>, scalar_prefetch = 0 : i64, scratch_operands = 0 : i64, tpu.core_type = #tpu.core_type<tc>, window_params = [{transform_indices = @transform_0, window_bounds = array<i64: 256, 128>}, {pipeline_mode = #tpu.pipeline_mode<synchronous>, transform_indices = @transform_1, window_bounds = array<i64: 1, 128>}, {pipeline_mode = #tpu.pipeline_mode<synchronous>, transform_indices = @transform_2, window_bounds = array<i64: 1, 128>}, {transform_indices = @transform_3, window_bounds = array<i64: 256, 128>}]} {
    %c0 = arith.constant 0 : index
    %c0_0 = arith.constant 0 : index
    %0 = vector.load %arg1[%c0, %c0_0] : memref<256x128xbf16, #tpu.memory_space<vmem>>, vector<256x128xbf16>
    %1 = arith.extf %0 : vector<256x128xbf16> to vector<256x128xf32>
    %c0_1 = arith.constant 0 : index
    %c0_2 = arith.constant 0 : index
    %2 = vector.load %arg2[%c0_1, %c0_2] : memref<1x128xf32, #tpu.memory_space<vmem>>, vector<1x128xf32>
    %3 = vector.broadcast %2 : vector<1x128xf32> to vector<256x128xf32>
    %4 = arith.mulf %1, %3 : vector<256x128xf32>
    %c0_3 = arith.constant 0 : index
    %c0_4 = arith.constant 0 : index
    %5 = vector.load %arg3[%c0_3, %c0_4] : memref<1x128xf32, #tpu.memory_space<vmem>>, vector<1x128xf32>
    %6 = vector.broadcast %5 : vector<1x128xf32> to vector<256x128xf32>
    %7 = arith.addf %4, %6 : vector<256x128xf32>
    %cst = arith.constant 0.000000e+00 : f32
    %8 = vector.broadcast %cst : f32 to vector<256x128xf32>
    %9 = arith.maximumf %7, %8 : vector<256x128xf32>
    %10 = arith.truncf %9 : vector<256x128xf32> to vector<256x128xbf16>
    %c0_5 = arith.constant 0 : index
    %c0_6 = arith.constant 0 : index
    %11 = vector.load %arg4[%c0_5, %c0_6] : memref<256x128xbf16, #tpu.memory_space<vmem>>, vector<256x128xbf16>
    tpu.vector_store %arg4[%c0_5, %c0_6], %10 {strides = array<i32>} : memref<256x128xbf16, #tpu.memory_space<vmem>>, vector<256x128xbf16>,
    return
  }
  func.func @transform_0(%arg0: i32) -> (i32, i32) {
    %c0_i32 = arith.constant 0 : i32
    %c0_i32_0 = arith.constant 0 : i32
    return %arg0, %c0_i32 : i32, i32
  }
  func.func @transform_1(%arg0: i32) -> (i32, i32) {
    %c0_i32 = arith.constant 0 : i32
    %c0_i32_0 = arith.constant 0 : i32
    %c0_i32_1 = arith.constant 0 : i32
    return %c0_i32, %c0_i32_0 : i32, i32
  }
  func.func @transform_2(%arg0: i32) -> (i32, i32) {
    %c0_i32 = arith.constant 0 : i32
    %c0_i32_0 = arith.constant 0 : i32
    %c0_i32_1 = arith.constant 0 : i32
    return %c0_i32, %c0_i32_0 : i32, i32
  }
  func.func @transform_3(%arg0: i32) -> (i32, i32) {
    %c0_i32 = arith.constant 0 : i32
    %c0_i32_0 = arith.constant 0 : i32
    return %arg0, %c0_i32 : i32, i32
  }
}

module attributes {stable_mosaic.version = 11 : i64} {
  func.func @_conv_bias_tanh_kernel(%arg0: i32, %arg1: memref<1024x144xbf16, #tpu.memory_space<vmem>>, %arg2: memref<144x128xbf16, #tpu.memory_space<vmem>>, %arg3: memref<1x128xf32, #tpu.memory_space<vmem>>, %arg4: memref<1024x128xbf16, #tpu.memory_space<vmem>>) attributes {dimension_semantics = [#tpu.dimension_semantics<parallel>], iteration_bounds = array<i64: 2>, scalar_prefetch = 0 : i64, scratch_operands = 0 : i64, tpu.core_type = #tpu.core_type<tc>, window_params = [{transform_indices = @transform_0, window_bounds = array<i64: 1024, 144>}, {pipeline_mode = #tpu.pipeline_mode<synchronous>, transform_indices = @transform_1, window_bounds = array<i64: 144, 128>}, {pipeline_mode = #tpu.pipeline_mode<synchronous>, transform_indices = @transform_2, window_bounds = array<i64: 1, 128>}, {transform_indices = @transform_3, window_bounds = array<i64: 1024, 128>}]} {
    %c0 = arith.constant 0 : index
    %c0_0 = arith.constant 0 : index
    %0 = vector.load %arg1[%c0, %c0_0] : memref<1024x144xbf16, #tpu.memory_space<vmem>>, vector<1024x144xbf16>
    %c0_1 = arith.constant 0 : index
    %c0_2 = arith.constant 0 : index
    %1 = vector.load %arg2[%c0_1, %c0_2] : memref<144x128xbf16, #tpu.memory_space<vmem>>, vector<144x128xbf16>
    %cst = arith.constant dense<0.000000e+00> : vector<1024x128xf32>
    %2 = tpu.matmul %0, %1, %cst {dimension_numbers = #tpu.dot_dimension_numbers<[1], [0], [0], [1], [0, 0, 1, 1], [], []>} : vector<1024x144xbf16>, vector<144x128xbf16>, vector<1024x128xf32> -> vector<1024x128xf32>
    %c0_3 = arith.constant 0 : index
    %c0_4 = arith.constant 0 : index
    %3 = vector.load %arg3[%c0_3, %c0_4] : memref<1x128xf32, #tpu.memory_space<vmem>>, vector<1x128xf32>
    %4 = vector.broadcast %3 : vector<1x128xf32> to vector<1024x128xf32>
    %5 = arith.addf %2, %4 : vector<1024x128xf32>
    %6 = math.tanh %5 : vector<1024x128xf32>
    %7 = arith.truncf %6 : vector<1024x128xf32> to vector<1024x128xbf16>
    %c0_5 = arith.constant 0 : index
    %c0_6 = arith.constant 0 : index
    %8 = vector.load %arg4[%c0_5, %c0_6] : memref<1024x128xbf16, #tpu.memory_space<vmem>>, vector<1024x128xbf16>
    tpu.vector_store %arg4[%c0_5, %c0_6], %7 {strides = array<i32>} : memref<1024x128xbf16, #tpu.memory_space<vmem>>, vector<1024x128xbf16>,
    return
  }
  func.func @transform_0(%arg0: i32) -> (i32, i32) {
    %c0_i32 = arith.constant 0 : i32
    %c0_i32_0 = arith.constant 0 : i32
    return %arg0, %c0_i32 : i32, i32
  }
  func.func @transform_1(%arg0: i32) -> (i32, i32) {
    %c0_i32 = arith.constant 0 : i32
    %c0_i32_0 = arith.constant 0 : i32
    %c0_i32_1 = arith.constant 0 : i32
    return %c0_i32, %c0_i32_0 : i32, i32
  }
  func.func @transform_2(%arg0: i32) -> (i32, i32) {
    %c0_i32 = arith.constant 0 : i32
    %c0_i32_0 = arith.constant 0 : i32
    %c0_i32_1 = arith.constant 0 : i32
    return %c0_i32, %c0_i32_0 : i32, i32
  }
  func.func @transform_3(%arg0: i32) -> (i32, i32) {
    %c0_i32 = arith.constant 0 : i32
    %c0_i32_0 = arith.constant 0 : i32
    return %arg0, %c0_i32 : i32, i32
  }
}

</mosaic_0001>

<llo_original>
// kernel: generator_forward.9
$region0: #{generator_forward.9}
  #allocation0 [shape = 'u32[]', space=smem, size = 0x4, offset = 0x4, fixed_abs, tag = 'smem constant byte address 0x4 - core index']
  #allocation1 [shape = 'u32[144,128]{1,0:T(1,128)}', space=vmem, size = 0x12000, scoped, tag = 'internal scratch']
  %s0 = inlined_call_operand.vmem [shape: bf16[8,16], index: 0, kind: input, shape index: {}]
  %s1 = inlined_call_operand.vmem [shape: bf16[16,2048], index: 1, kind: input, shape index: {}]
  %s2 = inlined_call_operand.vmem [shape: bf16[8,2048], index: 2, kind: output, shape index: {0}]
  %s3 = inlined_call_operand.vmem [shape: f32[8,2048], index: 3, kind: output, shape index: {1}]
  %4 = xla_tuple %s2, %s3
  %s5 = sld [smem:[#allocation0]]
  $region26: #{generator_forward.9} parent=0
    _
  %s7 = ssub.s32 1, %s5
  %s8 = scalar_select 0, %s7, %s5
  // Predicated region
  $region2: #{generator_forward.9} parent=0 // pred_check
    _
  $region3: #{generator_forward.9} parent=0 // pred_check_branch
    %10 = sbr.rel (0) target = $region5
  $region4: #{generator_forward.9} parent=0 // pred_region
    _
  $region5: #{generator_forward.9} parent=0 // pred_fallthru
    _
  // Predicated region
  $region6: #{generator_forward.9} parent=0 // pred_check
    _
  $region7: #{generator_forward.9} parent=0 // pred_check_branch
    %12 = sbr.rel (0) target = $region9
  $region8: #{generator_forward.9} parent=0 // pred_region
    _
  $region9: #{generator_forward.9} parent=0 // pred_fallthru
    _
  %v14 = vld [vmem:[%s0] sm:$0xf]
  %v15 = vld [vmem:[%s1] sm:$0xff]
  %v16 = vld [vmem:[%s1 + $0x8] sm:$0xff]
  %v17 = vld [vmem:[%s1 + $0x10] sm:$0xff]
  %v18 = vld [vmem:[%s1 + $0x18] sm:$0xff]
  %v19 = vld [vmem:[%s1 + $0x20] sm:$0xff]
  %v20 = vld [vmem:[%s1 + $0x28] sm:$0xff]
  %v21 = vld [vmem:[%s1 + $0x30] sm:$0xff]
  %v22 = vld [vmem:[%s1 + $0x38] sm:$0xff]
  %v23 = vld [vmem:[%s1 + $0x40] sm:$0xff]
  %v24 = vld [vmem:[%s1 + $0x48] sm:$0xff]
  %v25 = vld [vmem:[%s1 + $0x50] sm:$0xff]
  %v26 = vld [vmem:[%s1 + $0x58] sm:$0xff]
  %v27 = vld [vmem:[%s1 + $0x60] sm:$0xff]
  %v28 = vld [vmem:[%s1 + $0x68] sm:$0xff]
  %v29 = vld [vmem:[%s1 + $0x70] sm:$0xff]
  %v30 = vld [vmem:[%s1 + $0x78] sm:$0xff]
  %v47 = vunpack.c.l.b16 %v15
  %v48 = vunpack.c.h.b16 %v15
  %v49 = vunpack.c.l.b16 %v16
  %v50 = vunpack.c.h.b16 %v16
  %v51 = vunpack.c.l.b16 %v17
  %v52 = vunpack.c.h.b16 %v17
  %v53 = vunpack.c.l.b16 %v18
  %v54 = vunpack.c.h.b16 %v18
  %v55 = vunpack.c.l.b16 %v19
  %v56 = vunpack.c.h.b16 %v19
  %v57 = vunpack.c.l.b16 %v20
  %v58 = vunpack.c.h.b16 %v20
  %v59 = vunpack.c.l.b16 %v21
  %v60 = vunpack.c.h.b16 %v21
  %v61 = vunpack.c.l.b16 %v22
  %v62 = vunpack.c.h.b16 %v22
  %v63 = vunpack.c.l.b16 %v23
  %v64 = vunpack.c.h.b16 %v23
  %v65 = vunpack.c.l.b16 %v24
  %v66 = vunpack.c.h.b16 %v24
  %v67 = vunpack.c.l.b16 %v25
  %v68 = vunpack.c.h.b16 %v25
  %v69 = vunpack.c.l.b16 %v26
  %v70 = vunpack.c.h.b16 %v26
  %v71 = vunpack.c.l.b16 %v27
  %v72 = vunpack.c.h.b16 %v27
  %v73 = vunpack.c.l.b16 %v28
  %v74 = vunpack.c.h.b16 %v28
  %v75 = vunpack.c.l.b16 %v29
  %v76 = vunpack.c.h.b16 %v29
  %v77 = vunpack.c.l.b16 %v30
  %v78 = vunpack.c.h.b16 %v30
  %v79 = vpack.c.b16 %v63, %v47
  %v80 = vpack.c.b16 %v64, %v48
  %v81 = vpack.c.b16 %v65, %v49
  %v82 = vpack.c.b16 %v66, %v50
  %v83 = vpack.c.b16 %v67, %v51
  %v84 = vpack.c.b16 %v68, %v52
  %v85 = vpack.c.b16 %v69, %v53
  %v86 = vpack.c.b16 %v70, %v54
  %v87 = vpack.c.b16 %v71, %v55
  %v88 = vpack.c.b16 %v72, %v56
  %v89 = vpack.c.b16 %v73, %v57
  %v90 = vpack.c.b16 %v74, %v58
  %v91 = vpack.c.b16 %v75, %v59
  %v92 = vpack.c.b16 %v76, %v60
  %v93 = vpack.c.b16 %v77, %v61
  %v94 = vpack.c.b16 %v78, %v62
  %vm111 = vcmask 130048
  %v113 = vsel %vm111, %v14, 0
  %115 = vmatprep.subr.bf16.mxu0 %v80
  %116 = vmatpush1.bf16.msra.mxu0 %v79
  %117 = vmatprep.subr.bf16.mxu0 0
  %118 = vmatpush1.bf16.msra.mxu0 0
  %119 = vmatprep.subr.bf16.mxu0 0
  %120 = vmatpush1.bf16.msra.mxu0 0
  %121 = vmatprep.subr.bf16.mxu0 0
  %122 = vmatpush1.bf16.msra.mxu0 0
  %123 = vmatprep.subr.bf16.mxu0 0
  %124 = vmatpush1.bf16.msra.mxu0 0
  %125 = vmatprep.subr.bf16.mxu0 0
  %126 = vmatpush1.bf16.msra.mxu0 0
  %127 = vmatprep.subr.bf16.mxu0 0
  %128 = vmatpush1.bf16.msra.mxu0 0
  %129 = vmatprep.subr.bf16.mxu0 0
  %130 = vmatpush1.bf16.msra.mxu0 0
  %131 = vmatprep.subr.bf16.mxu0 0
  %132 = vmatpush1.bf16.msra.mxu0 0
  %133 = vmatprep.subr.bf16.mxu0 0
  %134 = vmatpush1.bf16.msra.mxu0 0
  %135 = vmatprep.subr.bf16.mxu0 0
  %136 = vmatpush1.bf16.msra.mxu0 0
  %137 = vmatprep.subr.bf16.mxu0 0
  %138 = vmatpush1.bf16.msra.mxu0 0
  %139 = vmatprep.subr.bf16.mxu0 0
  %140 = vmatpush1.bf16.msra.mxu0 0
  %141 = vmatprep.subr.bf16.mxu0 0
  %142 = vmatpush1.bf16.msra.mxu0 0
  %143 = vmatprep.subr.bf16.mxu0 0
  %144 = vmatpush1.bf16.msra.mxu0 0
  %145 = vmatprep.subr.bf16.mxu0 0
  %146 = vmatpush1.bf16.msra.mxu0 0
  %147 = vmatprep.mubr.bf16.mxu0 0
  %148 = vmatmul.mubr.bf16.gmra.mrb[0].mxu0 %v113
  %v149 = vpop.f32.mrb[0].mxu0
  %v150 = vadd.f32 0.0, %v149
  %v151 = vpop.f32.mrb[0].mxu0
  %v152 = vadd.f32 0.0, %v151
  %v153 = vpop.f32.mrb[0].mxu0
  %v154 = vpop.f32.mrb[0].mxu0
  %155 = vdwg.mxu0
  %156 = vmatprep.subr.bf16.mxu0 %v82
  %157 = vmatpush1.bf16.msra.mxu0 %v81
  %158 = vmatprep.subr.bf16.mxu0 0
  %159 = vmatpush1.bf16.msra.mxu0 0
  %160 = vmatprep.subr.bf16.mxu0 0
  %161 = vmatpush1.bf16.msra.mxu0 0
  %162 = vmatprep.subr.bf16.mxu0 0
  %163 = vmatpush1.bf16.msra.mxu0 0
  %164 = vmatprep.subr.bf16.mxu0 0
  %165 = vmatpush1.bf16.msra.mxu0 0
  %166 = vmatprep.subr.bf16.mxu0 0
  %167 = vmatpush1.bf16.msra.mxu0 0
  %168 = vmatprep.subr.bf16.mxu0 0
  %169 = vmatpush1.bf16.msra.mxu0 0
  %170 = vmatprep.subr.bf16.mxu0 0
  %171 = vmatpush1.bf16.msra.mxu0 0
  %172 = vmatprep.subr.bf16.mxu0 0
  %173 = vmatpush1.bf16.msra.mxu0 0
  %174 = vmatprep.subr.bf16.mxu0 0
  %175 = vmatpush1.bf16.msra.mxu0 0
  %176 = vmatprep.subr.bf16.mxu0 0
  %177 = vmatpush1.bf16.msra.mxu0 0
  %178 = vmatprep.subr.bf16.mxu0 0
  %179 = vmatpush1.bf16.msra.mxu0 0
  %180 = vmatprep.subr.bf16.mxu0 0
  %181 = vmatpush1.bf16.msra.mxu0 0
  %182 = vmatprep.subr.bf16.mxu0 0
  %183 = vmatpush1.bf16.msra.mxu0 0
  %184 = vmatprep.subr.bf16.mxu0 0
  %185 = vmatpush1.bf16.msra.mxu0 0
  %186 = vmatprep.subr.bf16.mxu0 0
  %187 = vmatpush1.bf16.msra.mxu0 0
  %188 = vmatprep.mubr.bf16.mxu0 0
  %189 = vmatmul.mubr.bf16.gmra.mrb[0].mxu0 %v113
  %v190 = vpop.f32.mrb[0].mxu0
  %v191 = vadd.f32 0.0, %v190
  %v192 = vpop.f32.mrb[0].mxu0
  %v193 = vadd.f32 0.0, %v192
  %v194 = vpop.f32.mrb[0].mxu0
  %v195 = vpop.f32.mrb[0].mxu0
  %196 = vdwg.mxu0
  %197 = vmatprep.subr.bf16.mxu0 %v84
  %198 = vmatpush1.bf16.msra.mxu0 %v83
  %199 = vmatprep.subr.bf16.mxu0 0
  %200 = vmatpush1.bf16.msra.mxu0 0
  %201 = vmatprep.subr.bf16.mxu0 0
  %202 = vmatpush1.bf16.msra.mxu0 0
  %203 = vmatprep.subr.bf16.mxu0 0
  %204 = vmatpush1.bf16.msra.mxu0 0
  %205 = vmatprep.subr.bf16.mxu0 0
  %206 = vmatpush1.bf16.msra.mxu0 0
  %207 = vmatprep.subr.bf16.mxu0 0
  %208 = vmatpush1.bf16.msra.mxu0 0
  %209 = vmatprep.subr.bf16.mxu0 0
  %210 = vmatpush1.bf16.msra.mxu0 0
  %211 = vmatprep.subr.bf16.mxu0 0
  %212 = vmatpush1.bf16.msra.mxu0 0
  %213 = vmatprep.subr.bf16.mxu0 0
  %214 = vmatpush1.bf16.msra.mxu0 0
  %215 = vmatprep.subr.bf16.mxu0 0
  %216 = vmatpush1.bf16.msra.mxu0 0
  %217 = vmatprep.subr.bf16.mxu0 0
  %218 = vmatpush1.bf16.msra.mxu0 0
  %219 = vmatprep.subr.bf16.mxu0 0
  %220 = vmatpush1.bf16.msra.mxu0 0
  %221 = vmatprep.subr.bf16.mxu0 0
  %222 = vmatpush1.bf16.msra.mxu0 0
  %223 = vmatprep.subr.bf16.mxu0 0
  %224 = vmatpush1.bf16.msra.mxu0 0
  %225 = vmatprep.subr.bf16.mxu0 0
  %226 = vmatpush1.bf16.msra.mxu0 0
  %227 = vmatprep.subr.bf16.mxu0 0
  %228 = vmatpush1.bf16.msra.mxu0 0
  %229 = vmatprep.mubr.bf16.mxu0 0
  %230 = vmatmul.mubr.bf16.gmra.mrb[0].mxu0 %v113
  %v231 = vpop.f32.mrb[0].mxu0
  %v232 = vadd.f32 0.0, %v231
  %v233 = vpop.f32.mrb[0].mxu0
  %v234 = vadd.f32 0.0, %v233
  %v235 = vpop.f32.mrb[0].mxu0
  %v236 = vpop.f32.mrb[0].mxu0
  %237 = vdwg.mxu0
  %238 = vmatprep.subr.bf16.mxu0 %v86
  %239 = vmatpush1.bf16.msra.mxu0 %v85
  %240 = vmatprep.subr.bf16.mxu0 0
  %241 = vmatpush1.bf16.msra.mxu0 0
  %242 = vmatprep.subr.bf16.mxu0 0
  %243 = vmatpush1.bf16.msra.mxu0 0
  %244 = vmatprep.subr.bf16.mxu0 0
  %245 = vmatpush1.bf16.msra.mxu0 0
  %246 = vmatprep.subr.bf16.mxu0 0
  %247 = vmatpush1.bf16.msra.mxu0 0
  %248 = vmatprep.subr.bf16.mxu0 0
  %249 = vmatpush1.bf16.msra.mxu0 0
  %250 = vmatprep.subr.bf16.mxu0 0
  %251 = vmatpush1.bf16.msra.mxu0 0
  %252 = vmatprep.subr.bf16.mxu0 0
  %253 = vmatpush1.bf16.msra.mxu0 0
  %254 = vmatprep.subr.bf16.mxu0 0
  %255 = vmatpush1.bf16.msra.mxu0 0
  %256 = vmatprep.subr.bf16.mxu0 0
  %257 = vmatpush1.bf16.msra.mxu0 0
  %258 = vmatprep.subr.bf16.mxu0 0
  %259 = vmatpush1.bf16.msra.mxu0 0
  %260 = vmatprep.subr.bf16.mxu0 0
  %261 = vmatpush1.bf16.msra.mxu0 0
  %262 = vmatprep.subr.bf16.mxu0 0
  %263 = vmatpush1.bf16.msra.mxu0 0
  %264 = vmatprep.subr.bf16.mxu0 0
  %265 = vmatpush1.bf16.msra.mxu0 0
  %266 = vmatprep.subr.bf16.mxu0 0
  %267 = vmatpush1.bf16.msra.mxu0 0
  %268 = vmatprep.subr.bf16.mxu0 0
  %269 = vmatpush1.bf16.msra.mxu0 0
  %270 = vmatprep.mubr.bf16.mxu0 0
  %271 = vmatmul.mubr.bf16.gmra.mrb[0].mxu0 %v113
  %v272 = vpop.f32.mrb[0].mxu0
  %v273 = vadd.f32 0.0, %v272
  %v274 = vpop.f32.mrb[0].mxu0
  %v275 = vadd.f32 0.0, %v274
  %v276 = vpop.f32.mrb[0].mxu0
  %v277 = vpop.f32.mrb[0].mxu0
  %278 = vdwg.mxu0
  %279 = vmatprep.subr.bf16.mxu0 %v88
  %280 = vmatpush1.bf16.msra.mxu0 %v87
  %281 = vmatprep.subr.bf16.mxu0 0
  %282 = vmatpush1.bf16.msra.mxu0 0
  %283 = vmatprep.subr.bf16.mxu0 0
  %284 = vmatpush1.bf16.msra.mxu0 0
  %285 = vmatprep.subr.bf16.mxu0 0
  %286 = vmatpush1.bf16.msra.mxu0 0
  %287 = vmatprep.subr.bf16.mxu0 0
  %288 = vmatpush1.bf16.msra.mxu0 0
  %289 = vmatprep.subr.bf16.mxu0 0
  %290 = vmatpush1.bf16.msra.mxu0 0
  %291 = vmatprep.subr.bf16.mxu0 0
  %292 = vmatpush1.bf16.msra.mxu0 0
  %293 = vmatprep.subr.bf16.mxu0 0
  %294 = vmatpush1.bf16.msra.mxu0 0
  %295 = vmatprep.subr.bf16.mxu0 0
  %296 = vmatpush1.bf16.msra.mxu0 0
  %297 = vmatprep.subr.bf16.mxu0 0
  %298 = vmatpush1.bf16.msra.mxu0 0
  %299 = vmatprep.subr.bf16.mxu0 0
  %300 = vmatpush1.bf16.msra.mxu0 0
  %301 = vmatprep.subr.bf16.mxu0 0
  %302 = vmatpush1.bf16.msra.mxu0 0
  %303 = vmatprep.subr.bf16.mxu0 0
  %304 = vmatpush1.bf16.msra.mxu0 0
  %305 = vmatprep.subr.bf16.mxu0 0
  %306 = vmatpush1.bf16.msra.mxu0 0
  %307 = vmatprep.subr.bf16.mxu0 0
  %308 = vmatpush1.bf16.msra.mxu0 0
  %309 = vmatprep.subr.bf16.mxu0 0
  %310 = vmatpush1.bf16.msra.mxu0 0
  %311 = vmatprep.mubr.bf16.mxu0 0
  %312 = vmatmul.mubr.bf16.gmra.mrb[0].mxu0 %v113
  %v313 = vpop.f32.mrb[0].mxu0
  %v314 = vadd.f32 0.0, %v313
  %v315 = vpop.f32.mrb[0].mxu0
  %v316 = vadd.f32 0.0, %v315
  %v317 = vpop.f32.mrb[0].mxu0
  %v318 = vpop.f32.mrb[0].mxu0
  %319 = vdwg.mxu0
  %320 = vmatprep.subr.bf16.mxu0 %v90
  %321 = vmatpush1.bf16.msra.mxu0 %v89
  %322 = vmatprep.subr.bf16.mxu0 0
  %323 = vmatpush1.bf16.msra.mxu0 0
  %324 = vmatprep.subr.bf16.mxu0 0
  %325 = vmatpush1.bf16.msra.mxu0 0
  %326 = vmatprep.subr.bf16.mxu0 0
  %327 = vmatpush1.bf16.msra.mxu0 0
  %328 = vmatprep.subr.bf16.mxu0 0
  %329 = vmatpush1.bf16.msra.mxu0 0
  %330 = vmatprep.subr.bf16.mxu0 0
  %331 = vmatpush1.bf16.msra.mxu0 0
  %332 = vmatprep.subr.bf16.mxu0 0
  %333 = vmatpush1.bf16.msra.mxu0 0
  %334 = vmatprep.subr.bf16.mxu0 0
  %335 = vmatpush1.bf16.msra.mxu0 0
  %336 = vmatprep.subr.bf16.mxu0 0
  %337 = vmatpush1.bf16.msra.mxu0 0
  %338 = vmatprep.subr.bf16.mxu0 0
  %339 = vmatpush1.bf16.msra.mxu0 0
  %340 = vmatprep.subr.bf16.mxu0 0
  %341 = vmatpush1.bf16.msra.mxu0 0
  %342 = vmatprep.subr.bf16.mxu0 0
  %343 = vmatpush1.bf16.msra.mxu0 0
  %344 = vmatprep.subr.bf16.mxu0 0
  %345 = vmatpush1.bf16.msra.mxu0 0
  %346 = vmatprep.subr.bf16.mxu0 0
  %347 = vmatpush1.bf16.msra.mxu0 0
  %348 = vmatprep.subr.bf16.mxu0 0
  %349 = vmatpush1.bf16.msra.mxu0 0
  %350 = vmatprep.subr.bf16.mxu0 0
  %351 = vmatpush1.bf16.msra.mxu0 0
  %352 = vmatprep.mubr.bf16.mxu0 0
  %353 = vmatmul.mubr.bf16.gmra.mrb[0].mxu0 %v113
  %v354 = vpop.f32.mrb[0].mxu0
  %v355 = vadd.f32 0.0, %v354
  %v356 = vpop.f32.mrb[0].mxu0
  %v357 = vadd.f32 0.0, %v356
  %v358 = vpop.f32.mrb[0].mxu0
  %v359 = vpop.f32.mrb[0].mxu0
  %360 = vdwg.mxu0
  %361 = vmatprep.subr.bf16.mxu0 %v92
  %362 = vmatpush1.bf16.msra.mxu0 %v91
  %363 = vmatprep.subr.bf16.mxu0 0
  %364 = vmatpush1.bf16.msra.mxu0 0
  %365 = vmatprep.subr.bf16.mxu0 0
  %366 = vmatpush1.bf16.msra.mxu0 0
  %367 = vmatprep.subr.bf16.mxu0 0
  %368 = vmatpush1.bf16.msra.mxu0 0
  %369 = vmatprep.subr.bf16.mxu0 0
  %370 = vmatpush1.bf16.msra.mxu0 0
  %371 = vmatprep.subr.bf16.mxu0 0
  %372 = vmatpush1.bf16.msra.mxu0 0
  %373 = vmatprep.subr.bf16.mxu0 0
  %374 = vmatpush1.bf16.msra.mxu0 0
  %375 = vmatprep.subr.bf16.mxu0 0
  %376 = vmatpush1.bf16.msra.mxu0 0
  %377 = vmatprep.subr.bf16.mxu0 0
  %378 = vmatpush1.bf16.msra.mxu0 0
  %379 = vmatprep.subr.bf16.mxu0 0
  %380 = vmatpush1.bf16.msra.mxu0 0
  %381 = vmatprep.subr.bf16.mxu0 0
  %382 = vmatpush1.bf16.msra.mxu0 0
  %383 = vmatprep.subr.bf16.mxu0 0
  %384 = vmatpush1.bf16.msra.mxu0 0
  %385 = vmatprep.subr.bf16.mxu0 0
  %386 = vmatpush1.bf16.msra.mxu0 0
  %387 = vmatprep.subr.bf16.mxu0 0
  %388 = vmatpush1.bf16.msra.mxu0 0
  %389 = vmatprep.subr.bf16.mxu0 0
  %390 = vmatpush1.bf16.msra.mxu0 0
  %391 = vmatprep.subr.bf16.mxu0 0
  %392 = vmatpush1.bf16.msra.mxu0 0
  %393 = vmatprep.mubr.bf16.mxu0 0
  %394 = vmatmul.mubr.bf16.gmra.mrb[0].mxu0 %v113
  %v395 = vpop.f32.mrb[0].mxu0
  %v396 = vadd.f32 0.0, %v395
  %v397 = vpop.f32.mrb[0].mxu0
  %v398 = vadd.f32 0.0, %v397
  %v399 = vpop.f32.mrb[0].mxu0
  %v400 = vpop.f32.mrb[0].mxu0
  %401 = vdwg.mxu0
  %402 = vmatprep.subr.bf16.mxu0 %v94
  %403 = vmatpush1.bf16.msra.mxu0 %v93
  %404 = vmatprep.subr.bf16.mxu0 0
  %405 = vmatpush1.bf16.msra.mxu0 0
  %406 = vmatprep.subr.bf16.mxu0 0
  %407 = vmatpush1.bf16.msra.mxu0 0
  %408 = vmatprep.subr.bf16.mxu0 0
  %409 = vmatpush1.bf16.msra.mxu0 0
  %410 = vmatprep.subr.bf16.mxu0 0
  %411 = vmatpush1.bf16.msra.mxu0 0
  %412 = vmatprep.subr.bf16.mxu0 0
  %413 = vmatpush1.bf16.msra.mxu0 0
  %414 = vmatprep.subr.bf16.mxu0 0
  %415 = vmatpush1.bf16.msra.mxu0 0
  %416 = vmatprep.subr.bf16.mxu0 0
  %417 = vmatpush1.bf16.msra.mxu0 0
  %418 = vmatprep.subr.bf16.mxu0 0
  %419 = vmatpush1.bf16.msra.mxu0 0
  %420 = vmatprep.subr.bf16.mxu0 0
  %421 = vmatpush1.bf16.msra.mxu0 0
  %422 = vmatprep.subr.bf16.mxu0 0
  %423 = vmatpush1.bf16.msra.mxu0 0
  %424 = vmatprep.subr.bf16.mxu0 0
  %425 = vmatpush1.bf16.msra.mxu0 0
  %426 = vmatprep.subr.bf16.mxu0 0
  %427 = vmatpush1.bf16.msra.mxu0 0
  %428 = vmatprep.subr.bf16.mxu0 0
  %429 = vmatpush1.bf16.msra.mxu0 0
  %430 = vmatprep.subr.bf16.mxu0 0
  %431 = vmatpush1.bf16.msra.mxu0 0
  %432 = vmatprep.subr.bf16.mxu0 0
  %433 = vmatpush1.bf16.msra.mxu0 0
  %434 = vmatprep.mubr.bf16.mxu0 0
  %435 = vmatmul.mubr.bf16.gmra.mrb[0].mxu0 %v113
  %v436 = vpop.f32.mrb[0].mxu0
  %v437 = vadd.f32 0.0, %v436
  %v438 = vpop.f32.mrb[0].mxu0
  %v439 = vadd.f32 0.0, %v438
  %v440 = vpop.f32.mrb[0].mxu0
  %v441 = vpop.f32.mrb[0].mxu0
  %442 = vdwg.mxu0
  %v443 = vpack.c.bf16 %v150, %v150
  %v444 = vpack.c.bf16 %v152, %v152
  %v445 = vpack.c.bf16 %v191, %v191
  %v446 = vpack.c.bf16 %v193, %v193
  %v447 = vpack.c.bf16 %v232, %v232
  %v448 = vpack.c.bf16 %v234, %v234
  %v449 = vpack.c.bf16 %v273, %v273
  %v450 = vpack.c.bf16 %v275, %v275
  %v451 = vpack.c.bf16 %v314, %v314
  %v452 = vpack.c.bf16 %v316, %v316
  %v453 = vpack.c.bf16 %v355, %v355
  %v454 = vpack.c.bf16 %v357, %v357
  %v455 = vpack.c.bf16 %v396, %v396
  %v456 = vpack.c.bf16 %v398, %v398
  %v457 = vpack.c.bf16 %v437, %v437
  %v458 = vpack.c.bf16 %v439, %v439
  %v475 = vunpack.c.l.b16 %v443
  %v476 = vunpack.c.l.b16 %v444
  %v477 = vunpack.c.l.b16 %v445
  %v478 = vunpack.c.l.b16 %v446
  %v479 = vunpack.c.l.b16 %v447
  %v480 = vunpack.c.l.b16 %v448
  %v481 = vunpack.c.l.b16 %v449
  %v482 = vunpack.c.l.b16 %v450
  %v483 = vunpack.c.l.b16 %v451
  %v484 = vunpack.c.l.b16 %v452
  %v485 = vunpack.c.l.b16 %v453
  %v486 = vunpack.c.l.b16 %v454
  %v487 = vunpack.c.l.b16 %v455
  %v488 = vunpack.c.l.b16 %v456
  %v489 = vunpack.c.l.b16 %v457
  %v490 = vunpack.c.l.b16 %v458
  %v491 = vpack.c.b16 %v476, %v475
  %v492 = vpack.c.b16 %v478, %v477
  %v493 = vpack.c.b16 %v480, %v479
  %v494 = vpack.c.b16 %v482, %v481
  %v495 = vpack.c.b16 %v484, %v483
  %v496 = vpack.c.b16 %v486, %v485
  %v497 = vpack.c.b16 %v488, %v487
  %v498 = vpack.c.b16 %v490, %v489
  %507 = vst [vmem:[%s2] sm:$0xff] %v491
  %508 = vst [vmem:[%s2 + $0x8] sm:$0xff] %v492
  %509 = vst [vmem:[%s2 + $0x10] sm:$0xff] %v493
  %510 = vst [vmem:[%s2 + $0x18] sm:$0xff] %v494
  %511 = vst [vmem:[%s2 + $0x20] sm:$0xff] %v495
  %512 = vst [vmem:[%s2 + $0x28] sm:$0xff] %v496
  %513 = vst [vmem:[%s2 + $0x30] sm:$0xff] %v497
  %514 = vst [vmem:[%s2 + $0x38] sm:$0xff] %v498
  %v515 = vrot.slane %v150, 4
  %v516 = vadd.f32 %v150, %v515
  %v517 = vrot.slane %v516, 2
  %v518 = vadd.f32 %v516, %v517
  %v519 = vrot.slane %v518, 1
  %v520 = vadd.f32 %v518, %v519
  %v521 = vrot.slane %v152, 4
  %v522 = vadd.f32 %v152, %v521
  %v523 = vrot.slane %v522, 2
  %v524 = vadd.f32 %v522, %v523
  %v525 = vrot.slane %v524, 1
  %v526 = vadd.f32 %v524, %v525
  %v527 = vrot.slane %v191, 4
  %v528 = vadd.f32 %v191, %v527
  %v529 = vrot.slane %v528, 2
  %v530 = vadd.f32 %v528, %v529
  %v531 = vrot.slane %v530, 1
  %v532 = vadd.f32 %v530, %v531
  %v533 = vrot.slane %v193, 4
  %v534 = vadd.f32 %v193, %v533
  %v535 = vrot.slane %v534, 2
  %v536 = vadd.f32 %v534, %v535
  %v537 = vrot.slane %v536, 1
  %v538 = vadd.f32 %v536, %v537
  %v539 = vrot.slane %v232, 4
  %v540 = vadd.f32 %v232, %v539
  %v541 = vrot.slane %v540, 2
  %v542 = vadd.f32 %v540, %v541
  %v543 = vrot.slane %v542, 1
  %v544 = vadd.f32 %v542, %v543
  %v545 = vrot.slane %v234, 4
  %v546 = vadd.f32 %v234, %v545
  %v547 = vrot.slane %v546, 2
  %v548 = vadd.f32 %v546, %v547
  %v549 = vrot.slane %v548, 1
  %v550 = vadd.f32 %v548, %v549
  %v551 = vrot.slane %v273, 4
  %v552 = vadd.f32 %v273, %v551
  %v553 = vrot.slane %v552, 2
  %v554 = vadd.f32 %v552, %v553
  %v555 = vrot.slane %v554, 1
  %v556 = vadd.f32 %v554, %v555
  %v557 = vrot.slane %v275, 4
  %v558 = vadd.f32 %v275, %v557
  %v559 = vrot.slane %v558, 2
  %v560 = vadd.f32 %v558, %v559
  %v561 = vrot.slane %v560, 1
  %v562 = vadd.f32 %v560, %v561
  %v563 = vrot.slane %v314, 4
  %v564 = vadd.f32 %v314, %v563
  %v565 = vrot.slane %v564, 2
  %v566 = vadd.f32 %v564, %v565
  %v567 = vrot.slane %v566, 1
  %v568 = vadd.f32 %v566, %v567
  %v569 = vrot.slane %v316, 4
  %v570 = vadd.f32 %v316, %v569
  %v571 = vrot.slane %v570, 2
  %v572 = vadd.f32 %v570, %v571
  %v573 = vrot.slane %v572, 1
  %v574 = vadd.f32 %v572, %v573
  %v575 = vrot.slane %v355, 4
  %v576 = vadd.f32 %v355, %v575
  %v577 = vrot.slane %v576, 2
  %v578 = vadd.f32 %v576, %v577
  %v579 = vrot.slane %v578, 1
  %v580 = vadd.f32 %v578, %v579
  %v581 = vrot.slane %v357, 4
  %v582 = vadd.f32 %v357, %v581
  %v583 = vrot.slane %v582, 2
  %v584 = vadd.f32 %v582, %v583
  %v585 = vrot.slane %v584, 1
  %v586 = vadd.f32 %v584, %v585
  %v587 = vrot.slane %v396, 4
  %v588 = vadd.f32 %v396, %v587
  %v589 = vrot.slane %v588, 2
  %v590 = vadd.f32 %v588, %v589
  %v591 = vrot.slane %v590, 1
  %v592 = vadd.f32 %v590, %v591
  %v593 = vrot.slane %v398, 4
  %v594 = vadd.f32 %v398, %v593
  %v595 = vrot.slane %v594, 2
  %v596 = vadd.f32 %v594, %v595
  %v597 = vrot.slane %v596, 1
  %v598 = vadd.f32 %v596, %v597
  %v599 = vrot.slane %v437, 4
  %v600 = vadd.f32 %v437, %v599
  %v601 = vrot.slane %v600, 2
  %v602 = vadd.f32 %v600, %v601
  %v603 = vrot.slane %v602, 1
  %v604 = vadd.f32 %v602, %v603
  %v605 = vrot.slane %v439, 4
  %v606 = vadd.f32 %v439, %v605
  %v607 = vrot.slane %v606, 2
  %v608 = vadd.f32 %v606, %v607
  %v609 = vrot.slane %v608, 1
  %v610 = vadd.f32 %v608, %v609
  %v627 = vcombine.low %v520, %v526
  %v628 = vcombine.low %v532, %v538
  %v629 = vcombine.low %v544, %v550
  %v630 = vcombine.low %v556, %v562
  %v632 = vunpack.c.l.s4 1966171168
  %v633 = vunpack.c.0.s8 %v632
  %v634 = vlaneseq
  %v635 = vshrl.u32 %v634, 7
  %v636 = vsub.s32 %v633, %v635
  %v637 = vrot.slane %v627, %v636
  %v639 = vunpack.c.l.s4 1966171168
  %v640 = vunpack.c.0.s8 %v639
  %v641 = vlaneseq
  %v642 = vshrl.u32 %v641, 7
  %v643 = vsub.s32 %v640, %v642
  %v644 = vrot.slane %v628, %v643
  %v646 = vunpack.c.l.s4 1966171168
  %v647 = vunpack.c.0.s8 %v646
  %v648 = vlaneseq
  %v649 = vshrl.u32 %v648, 7
  %v650 = vsub.s32 %v647, %v649
  %v651 = vrot.slane %v629, %v650
  %v653 = vunpack.c.l.s4 1966171168
  %v654 = vunpack.c.0.s8 %v653
  %v655 = vlaneseq
  %v656 = vshrl.u32 %v655, 7
  %v657 = vsub.s32 %v654, %v656
  %v658 = vrot.slane %v630, %v657
  %v659 = vcombine.low %v637, %v644
  %v660 = vcombine.low %v651, %v658
  %v662 = vunpack.c.l.s4 1966171168
  %v663 = vunpack.c.0.s8 %v662
  %v664 = vlaneseq
  %v665 = vshrl.u32 %v664, 7
  %v666 = vsub.s32 %v663, %v665
  %v667 = vrot.slane %v659, %v666
  %v669 = vunpack.c.l.s4 1966171168
  %v670 = vunpack.c.0.s8 %v669
  %v671 = vlaneseq
  %v672 = vshrl.u32 %v671, 7
  %v673 = vsub.s32 %v670, %v672
  %v674 = vrot.slane %v660, %v673
  %v675 = vcombine.low %v667, %v674
  %v676 = vcombine.low %v568, %v574
  %v677 = vcombine.low %v580, %v586
  %v678 = vcombine.low %v592, %v598
  %v679 = vcombine.low %v604, %v610
  %v681 = vunpack.c.l.s4 1966171168
  %v682 = vunpack.c.0.s8 %v681
  %v683 = vlaneseq
  %v684 = vshrl.u32 %v683, 7
  %v685 = vsub.s32 %v682, %v684
  %v686 = vrot.slane %v676, %v685
  %v688 = vunpack.c.l.s4 1966171168
  %v689 = vunpack.c.0.s8 %v688
  %v690 = vlaneseq
  %v691 = vshrl.u32 %v690, 7
  %v692 = vsub.s32 %v689, %v691
  %v693 = vrot.slane %v677, %v692
  %v695 = vunpack.c.l.s4 1966171168
  %v696 = vunpack.c.0.s8 %v695
  %v697 = vlaneseq
  %v698 = vshrl.u32 %v697, 7
  %v699 = vsub.s32 %v696, %v698
  %v700 = vrot.slane %v678, %v699
  %v702 = vunpack.c.l.s4 1966171168
  %v703 = vunpack.c.0.s8 %v702
  %v704 = vlaneseq
  %v705 = vshrl.u32 %v704, 7
  %v706 = vsub.s32 %v703, %v705
  %v707 = vrot.slane %v679, %v706
  %v708 = vcombine.low %v686, %v693
  %v709 = vcombine.low %v700, %v707
  %v711 = vunpack.c.l.s4 1966171168
  %v712 = vunpack.c.0.s8 %v711
  %v713 = vlaneseq
  %v714 = vshrl.u32 %v713, 7
  %v715 = vsub.s32 %v712, %v714
  %v716 = vrot.slane %v708, %v715
  %v718 = vunpack.c.l.s4 1966171168
  %v719 = vunpack.c.0.s8 %v718
  %v720 = vlaneseq
  %v721 = vshrl.u32 %v720, 7
  %v722 = vsub.s32 %v719, %v721
  %v723 = vrot.slane %v709, %v722
  %v724 = vcombine.low %v716, %v723
  %727 = vst [vmem:[%s3] ss:$8 sm:$0xf] %v675
  %728 = vst [vmem:[%s3] ss:$8 sm:$0xf0] %v675
  %s729 = scalar_lea.vmem %s3, 64
  %730 = vst [vmem:[%s729] ss:$8 sm:$0xf] %v724
  %731 = vst [vmem:[%s729] ss:$8 sm:$0xf0] %v724
  %v732 = vmul.f32 %v150, %v150
  %v733 = vmul.f32 %v152, %v152
  %v734 = vmul.f32 %v191, %v191
  %v735 = vmul.f32 %v193, %v193
  %v736 = vmul.f32 %v232, %v232
  %v737 = vmul.f32 %v234, %v234
  %v738 = vmul.f32 %v273, %v273
  %v739 = vmul.f32 %v275, %v275
  %v740 = vmul.f32 %v314, %v314
  %v741 = vmul.f32 %v316, %v316
  %v742 = vmul.f32 %v355, %v355
  %v743 = vmul.f32 %v357, %v357
  %v744 = vmul.f32 %v396, %v396
  %v745 = vmul.f32 %v398, %v398
  %v746 = vmul.f32 %v437, %v437
  %v747 = vmul.f32 %v439, %v439
  %v748 = vrot.slane %v732, 4
  %v749 = vadd.f32 %v732, %v748
  %v750 = vrot.slane %v749, 2
  %v751 = vadd.f32 %v749, %v750
  %v752 = vrot.slane %v751, 1
  %v753 = vadd.f32 %v751, %v752
  %v754 = vrot.slane %v733, 4
  %v755 = vadd.f32 %v733, %v754
  %v756 = vrot.slane %v755, 2
  %v757 = vadd.f32 %v755, %v756
  %v758 = vrot.slane %v757, 1
  %v759 = vadd.f32 %v757, %v758
  %v760 = vrot.slane %v734, 4
  %v761 = vadd.f32 %v734, %v760
  %v762 = vrot.slane %v761, 2
  %v763 = vadd.f32 %v761, %v762
  %v764 = vrot.slane %v763, 1
  %v765 = vadd.f32 %v763, %v764
  %v766 = vrot.slane %v735, 4
  %v767 = vadd.f32 %v735, %v766
  %v768 = vrot.slane %v767, 2
  %v769 = vadd.f32 %v767, %v768
  %v770 = vrot.slane %v769, 1
  %v771 = vadd.f32 %v769, %v770
  %v772 = vrot.slane %v736, 4
  %v773 = vadd.f32 %v736, %v772
  %v774 = vrot.slane %v773, 2
  %v775 = vadd.f32 %v773, %v774
  %v776 = vrot.slane %v775, 1
  %v777 = vadd.f32 %v775, %v776
  %v778 = vrot.slane %v737, 4
  %v779 = vadd.f32 %v737, %v778
  %v780 = vrot.slane %v779, 2
  %v781 = vadd.f32 %v779, %v780
  %v782 = vrot.slane %v781, 1
  %v783 = vadd.f32 %v781, %v782
  %v784 = vrot.slane %v738, 4
  %v785 = vadd.f32 %v738, %v784
  %v786 = vrot.slane %v785, 2
  %v787 = vadd.f32 %v785, %v786
  %v788 = vrot.slane %v787, 1
  %v789 = vadd.f32 %v787, %v788
  %v790 = vrot.slane %v739, 4
  %v791 = vadd.f32 %v739, %v790
  %v792 = vrot.slane %v791, 2
  %v793 = vadd.f32 %v791, %v792
  %v794 = vrot.slane %v793, 1
  %v795 = vadd.f32 %v793, %v794
  %v796 = vrot.slane %v740, 4
  %v797 = vadd.f32 %v740, %v796
  %v798 = vrot.slane %v797, 2
  %v799 = vadd.f32 %v797, %v798
  %v800 = vrot.slane %v799, 1
  %v801 = vadd.f32 %v799, %v800
  %v802 = vrot.slane %v741, 4
  %v803 = vadd.f32 %v741, %v802
  %v804 = vrot.slane %v803, 2
  %v805 = vadd.f32 %v803, %v804
  %v806 = vrot.slane %v805, 1
  %v807 = vadd.f32 %v805, %v806
  %v808 = vrot.slane %v742, 4
  %v809 = vadd.f32 %v742, %v808
  %v810 = vrot.slane %v809, 2
  %v811 = vadd.f32 %v809, %v810
  %v812 = vrot.slane %v811, 1
  %v813 = vadd.f32 %v811, %v812
  %v814 = vrot.slane %v743, 4
  %v815 = vadd.f32 %v743, %v814
  %v816 = vrot.slane %v815, 2
  %v817 = vadd.f32 %v815, %v816
  %v818 = vrot.slane %v817, 1
  %v819 = vadd.f32 %v817, %v818
  %v820 = vrot.slane %v744, 4
  %v821 = vadd.f32 %v744, %v820
  %v822 = vrot.slane %v821, 2
  %v823 = vadd.f32 %v821, %v822
  %v824 = vrot.slane %v823, 1
  %v825 = vadd.f32 %v823, %v824
  %v826 = vrot.slane %v745, 4
  %v827 = vadd.f32 %v745, %v826
  %v828 = vrot.slane %v827, 2
  %v829 = vadd.f32 %v827, %v828
  %v830 = vrot.slane %v829, 1
  %v831 = vadd.f32 %v829, %v830
  %v832 = vrot.slane %v746, 4
  %v833 = vadd.f32 %v746, %v832
  %v834 = vrot.slane %v833, 2
  %v835 = vadd.f32 %v833, %v834
  %v836 = vrot.slane %v835, 1
  %v837 = vadd.f32 %v835, %v836
  %v838 = vrot.slane %v747, 4
  %v839 = vadd.f32 %v747, %v838
  %v840 = vrot.slane %v839, 2
  %v841 = vadd.f32 %v839, %v840
  %v842 = vrot.slane %v841, 1
  %v843 = vadd.f32 %v841, %v842
  %v860 = vcombine.low %v753, %v759
  %v861 = vcombine.low %v765, %v771
  %v862 = vcombine.low %v777, %v783
  %v863 = vcombine.low %v789, %v795
  %v865 = vunpack.c.l.s4 1966171168
  %v866 = vunpack.c.0.s8 %v865
  %v867 = vlaneseq
  %v868 = vshrl.u32 %v867, 7
  %v869 = vsub.s32 %v866, %v868
  %v870 = vrot.slane %v860, %v869
  %v872 = vunpack.c.l.s4 1966171168
  %v873 = vunpack.c.0.s8 %v872
  %v874 = vlaneseq
  %v875 = vshrl.u32 %v874, 7
  %v876 = vsub.s32 %v873, %v875
  %v877 = vrot.slane %v861, %v876
  %v879 = vunpack.c.l.s4 1966171168
  %v880 = vunpack.c.0.s8 %v879
  %v881 = vlaneseq
  %v882 = vshrl.u32 %v881, 7
  %v883 = vsub.s32 %v880, %v882
  %v884 = vrot.slane %v862, %v883
  %v886 = vunpack.c.l.s4 1966171168
  %v887 = vunpack.c.0.s8 %v886
  %v888 = vlaneseq
  %v889 = vshrl.u32 %v888, 7
  %v890 = vsub.s32 %v887, %v889
  %v891 = vrot.slane %v863, %v890
  %v892 = vcombine.low %v870, %v877
  %v893 = vcombine.low %v884, %v891
  %v895 = vunpack.c.l.s4 1966171168
  %v896 = vunpack.c.0.s8 %v895
  %v897 = vlaneseq
  %v898 = vshrl.u32 %v897, 7
  %v899 = vsub.s32 %v896, %v898
  %v900 = vrot.slane %v892, %v899
  %v902 = vunpack.c.l.s4 1966171168
  %v903 = vunpack.c.0.s8 %v902
  %v904 = vlaneseq
  %v905 = vshrl.u32 %v904, 7
  %v906 = vsub.s32 %v903, %v905
  %v907 = vrot.slane %v893, %v906
  %v908 = vcombine.low %v900, %v907
  %v909 = vcombine.low %v801, %v807
  %v910 = vcombine.low %v813, %v819
  %v911 = vcombine.low %v825, %v831
  %v912 = vcombine.low %v837, %v843
  %v914 = vunpack.c.l.s4 1966171168
  %v915 = vunpack.c.0.s8 %v914
  %v916 = vlaneseq
  %v917 = vshrl.u32 %v916, 7
  %v918 = vsub.s32 %v915, %v917
  %v919 = vrot.slane %v909, %v918
  %v921 = vunpack.c.l.s4 1966171168
  %v922 = vunpack.c.0.s8 %v921
  %v923 = vlaneseq
  %v924 = vshrl.u32 %v923, 7
  %v925 = vsub.s32 %v922, %v924
  %v926 = vrot.slane %v910, %v925
  %v928 = vunpack.c.l.s4 1966171168
  %v929 = vunpack.c.0.s8 %v928
  %v930 = vlaneseq
  %v931 = vshrl.u32 %v930, 7
  %v932 = vsub.s32 %v929, %v931
  %v933 = vrot.slane %v911, %v932
  %v935 = vunpack.c.l.s4 1966171168
  %v936 = vunpack.c.0.s8 %v935
  %v937 = vlaneseq
  %v938 = vshrl.u32 %v937, 7
  %v939 = vsub.s32 %v936, %v938
  %v940 = vrot.slane %v912, %v939
  %v941 = vcombine.low %v919, %v926
  %v942 = vcombine.low %v933, %v940
  %v944 = vunpack.c.l.s4 1966171168
  %v945 = vunpack.c.0.s8 %v944
  %v946 = vlaneseq
  %v947 = vshrl.u32 %v946, 7
  %v948 = vsub.s32 %v945, %v947
  %v949 = vrot.slane %v941, %v948
  %v951 = vunpack.c.l.s4 1966171168
  %v952 = vunpack.c.0.s8 %v951
  %v953 = vlaneseq
  %v954 = vshrl.u32 %v953, 7
  %v955 = vsub.s32 %v952, %v954
  %v956 = vrot.slane %v942, %v955
  %v957 = vcombine.low %v949, %v956
  %s960 = scalar_lea.vmem %s3, 1
  %961 = vst [vmem:[%s960] ss:$8 sm:$0xf] %v908
  %962 = vst [vmem:[%s960] ss:$8 sm:$0xf0] %v908
  %s963 = scalar_lea.vmem %s3, 65
  %964 = vst [vmem:[%s963] ss:$8 sm:$0xf] %v957
  %965 = vst [vmem:[%s963] ss:$8 sm:$0xf0] %v957
  // Predicated region
  $region10: #{generator_forward.9} parent=0 // pred_check
    _
  $region11: #{generator_forward.9} parent=0 // pred_check_branch
    %967 = sbr.rel (0) target = $region13
  $region12: #{generator_forward.9} parent=0 // pred_region
    _
  $region13: #{generator_forward.9} parent=0 // pred_fallthru
    _
  // Predicated region
  $region14: #{generator_forward.9} parent=0 // pred_check
    _
  $region15: #{generator_forward.9} parent=0 // pred_check_branch
    %969 = sbr.rel (0) target = $region17
  $region16: #{generator_forward.9} parent=0 // pred_region
    _
  $region17: #{generator_forward.9} parent=0 // pred_fallthru
    _
  // Predicated region
  $region18: #{generator_forward.9} parent=0 // pred_check
    _
  $region19: #{generator_forward.9} parent=0 // pred_check_branch
    %971 = sbr.rel (0) target = $region21
  $region20: #{generator_forward.9} parent=0 // pred_region
    _
  $region21: #{generator_forward.9} parent=0 // pred_fallthru
    _
  // Predicated region
  $region22: #{generator_forward.9} parent=0 // pred_check
    _
  $region23: #{generator_forward.9} parent=0 // pred_check_branch
    %973 = sbr.rel (0) target = $region25
  $region24: #{generator_forward.9} parent=0 // pred_region
    _
  $region25: #{generator_forward.9} parent=0 // pred_fallthru
    _

// kernel: tile.48
$region0: #{tile.48}
  #allocation0 [shape = 's32[1]{0}', space=sflag, size = 0x4, scoped, tag = 'scoped memory for tile.48']
  %s0 = inlined_call_operand.vmem [shape: f32[128], index: 0, kind: input, shape index: {}]
  %s1 = inlined_call_operand.vmem [shape: f32[16,128], index: 1, kind: output, shape index: {}]
  // Predicated region
  $region2: #{tile.48} parent=0 // pred_check
    _
  $region3: #{tile.48} parent=0 // pred_check_branch
    %3 = sbr.rel (0) target = $region5
  $region4: #{tile.48} parent=0 // pred_region
    _
  $region5: #{tile.48} parent=0 // pred_fallthru
    _
  %v4 = vld [vmem:[%s0] ss:$0 sm:$0xff]
  %5 = vst [vmem:[%s1] sm:$0xff] %v4
  %s6 = scalar_lea.vmem %s1, 8
  %7 = vst [vmem:[%s6] sm:$0xff] %v4

// kernel: generator_forward.10
$region0: #{generator_forward.10}
  #allocation0 [shape = 'u32[]', space=smem, size = 0x4, offset = 0x4, fixed_abs, tag = 'smem constant byte address 0x4 - core index']
  #allocation1 [shape = 'u32[144,128]{1,0:T(1,128)}', space=vmem, size = 0x12000, scoped, tag = 'internal scratch']
  %s0 = inlined_call_operand.vmem [shape: bf16[8,2048], index: 0, kind: input, shape index: {}]
  %s1 = inlined_call_operand.vmem [shape: f32[1,2048], index: 1, kind: input, shape index: {}]
  %s2 = inlined_call_operand.vmem [shape: f32[1,2048], index: 2, kind: input, shape index: {}]
  %s3 = inlined_call_operand.vmem [shape: bf16[8,2048], index: 3, kind: output, shape index: {}]
  %s4 = sld [smem:[#allocation0]]
  $region22: #{generator_forward.10} parent=0
    _
  %s6 = ssub.s32 1, %s4
  %s7 = scalar_select 0, %s6, %s4
  // Predicated region
  $region2: #{generator_forward.10} parent=0 // pred_check
    _
  $region3: #{generator_forward.10} parent=0 // pred_check_branch
    %9 = sbr.rel (0) target = $region5
  $region4: #{generator_forward.10} parent=0 // pred_region
    _
  $region5: #{generator_forward.10} parent=0 // pred_fallthru
    _
  // Predicated region
  $region6: #{generator_forward.10} parent=0 // pred_check
    _
  $region7: #{generator_forward.10} parent=0 // pred_check_branch
    %11 = sbr.rel (0) target = $region9
  $region8: #{generator_forward.10} parent=0 // pred_region
    _
  $region9: #{generator_forward.10} parent=0 // pred_fallthru
    _
  // Predicated region
  $region10: #{generator_forward.10} parent=0 // pred_check
    _
  $region11: #{generator_forward.10} parent=0 // pred_check_branch
    %13 = sbr.rel (0) target = $region13
  $region12: #{generator_forward.10} parent=0 // pred_region
    _
  $region13: #{generator_forward.10} parent=0 // pred_fallthru
    _
  %v14 = vld [vmem:[%s0] sm:$0xff]
  %v15 = vld [vmem:[%s0 + $0x8] sm:$0xff]
  %v16 = vld [vmem:[%s0 + $0x10] sm:$0xff]
  %v17 = vld [vmem:[%s0 + $0x18] sm:$0xff]
  %v18 = vld [vmem:[%s0 + $0x20] sm:$0xff]
  %v19 = vld [vmem:[%s0 + $0x28] sm:$0xff]
  %v20 = vld [vmem:[%s0 + $0x30] sm:$0xff]
  %v21 = vld [vmem:[%s0 + $0x38] sm:$0xff]
  %v22 = vunpack.c.l.bf16 %v14
  %v23 = vunpack.c.h.bf16 %v14
  %v24 = vunpack.c.l.bf16 %v15
  %v25 = vunpack.c.h.bf16 %v15
  %v26 = vunpack.c.l.bf16 %v16
  %v27 = vunpack.c.h.bf16 %v16
  %v28 = vunpack.c.l.bf16 %v17
  %v29 = vunpack.c.h.bf16 %v17
  %v30 = vunpack.c.l.bf16 %v18
  %v31 = vunpack.c.h.bf16 %v18
  %v32 = vunpack.c.l.bf16 %v19
  %v33 = vunpack.c.h.bf16 %v19
  %v34 = vunpack.c.l.bf16 %v20
  %v35 = vunpack.c.h.bf16 %v20
  %v36 = vunpack.c.l.bf16 %v21
  %v37 = vunpack.c.h.bf16 %v21
  %v38 = vld [vmem:[%s1] sm:$0xff]
  %v39 = vld [vmem:[%s1 + $0x8] sm:$0xff]
  %v42 = vlaneseq
  %v43 = vshrl.u32 %v42, 7
  %v44 = vsub.s32 0, %v43
  %v45 = vrot.slane %v38, %v44
  %v46 = vlaneseq
  %v47 = vshrl.u32 %v46, 7
  %v48 = vsub.s32 1, %v47
  %v49 = vrot.slane %v38, %v48
  %v50 = vlaneseq
  %v51 = vshrl.u32 %v50, 7
  %v52 = vsub.s32 2, %v51
  %v53 = vrot.slane %v38, %v52
  %v54 = vlaneseq
  %v55 = vshrl.u32 %v54, 7
  %v56 = vsub.s32 3, %v55
  %v57 = vrot.slane %v38, %v56
  %v58 = vlaneseq
  %v59 = vshrl.u32 %v58, 7
  %v60 = vsub.s32 4, %v59
  %v61 = vrot.slane %v38, %v60
  %v62 = vlaneseq
  %v63 = vshrl.u32 %v62, 7
  %v64 = vsub.s32 5, %v63
  %v65 = vrot.slane %v38, %v64
  %v66 = vlaneseq
  %v67 = vshrl.u32 %v66, 7
  %v68 = vsub.s32 6, %v67
  %v69 = vrot.slane %v38, %v68
  %v70 = vlaneseq
  %v71 = vshrl.u32 %v70, 7
  %v72 = vsub.s32 7, %v71
  %v73 = vrot.slane %v38, %v72
  %v74 = vlaneseq
  %v75 = vshrl.u32 %v74, 7
  %v76 = vsub.s32 0, %v75
  %v77 = vrot.slane %v39, %v76
  %v78 = vlaneseq
  %v79 = vshrl.u32 %v78, 7
  %v80 = vsub.s32 1, %v79
  %v81 = vrot.slane %v39, %v80
  %v82 = vlaneseq
  %v83 = vshrl.u32 %v82, 7
  %v84 = vsub.s32 2, %v83
  %v85 = vrot.slane %v39, %v84
  %v86 = vlaneseq
  %v87 = vshrl.u32 %v86, 7
  %v88 = vsub.s32 3, %v87
  %v89 = vrot.slane %v39, %v88
  %v90 = vlaneseq
  %v91 = vshrl.u32 %v90, 7
  %v92 = vsub.s32 4, %v91
  %v93 = vrot.slane %v39, %v92
  %v94 = vlaneseq
  %v95 = vshrl.u32 %v94, 7
  %v96 = vsub.s32 5, %v95
  %v97 = vrot.slane %v39, %v96
  %v98 = vlaneseq
  %v99 = vshrl.u32 %v98, 7
  %v100 = vsub.s32 6, %v99
  %v101 = vrot.slane %v39, %v100
  %v102 = vlaneseq
  %v103 = vshrl.u32 %v102, 7
  %v104 = vsub.s32 7, %v103
  %v105 = vrot.slane %v39, %v104
  %v122 = vmul.f32 %v22, %v45
  %v123 = vmul.f32 %v23, %v49
  %v124 = vmul.f32 %v24, %v53
  %v125 = vmul.f32 %v25, %v57
  %v126 = vmul.f32 %v26, %v61
  %v127 = vmul.f32 %v27, %v65
  %v128 = vmul.f32 %v28, %v69
  %v129 = vmul.f32 %v29, %v73
  %v130 = vmul.f32 %v30, %v77
  %v131 = vmul.f32 %v31, %v81
  %v132 = vmul.f32 %v32, %v85
  %v133 = vmul.f32 %v33, %v89
  %v134 = vmul.f32 %v34, %v93
  %v135 = vmul.f32 %v35, %v97
  %v136 = vmul.f32 %v36, %v101
  %v137 = vmul.f32 %v37, %v105
  %v138 = vld [vmem:[%s2] sm:$0xff]
  %v139 = vld [vmem:[%s2 + $0x8] sm:$0xff]
  %v142 = vlaneseq
  %v143 = vshrl.u32 %v142, 7
  %v144 = vsub.s32 0, %v143
  %v145 = vrot.slane %v138, %v144
  %v146 = vlaneseq
  %v147 = vshrl.u32 %v146, 7
  %v148 = vsub.s32 1, %v147
  %v149 = vrot.slane %v138, %v148
  %v150 = vlaneseq
  %v151 = vshrl.u32 %v150, 7
  %v152 = vsub.s32 2, %v151
  %v153 = vrot.slane %v138, %v152
  %v154 = vlaneseq
  %v155 = vshrl.u32 %v154, 7
  %v156 = vsub.s32 3, %v155
  %v157 = vrot.slane %v138, %v156
  %v158 = vlaneseq
  %v159 = vshrl.u32 %v158, 7
  %v160 = vsub.s32 4, %v159
  %v161 = vrot.slane %v138, %v160
  %v162 = vlaneseq
  %v163 = vshrl.u32 %v162, 7
  %v164 = vsub.s32 5, %v163
  %v165 = vrot.slane %v138, %v164
  %v166 = vlaneseq
  %v167 = vshrl.u32 %v166, 7
  %v168 = vsub.s32 6, %v167
  %v169 = vrot.slane %v138, %v168
  %v170 = vlaneseq
  %v171 = vshrl.u32 %v170, 7
  %v172 = vsub.s32 7, %v171
  %v173 = vrot.slane %v138, %v172
  %v174 = vlaneseq
  %v175 = vshrl.u32 %v174, 7
  %v176 = vsub.s32 0, %v175
  %v177 = vrot.slane %v139, %v176
  %v178 = vlaneseq
  %v179 = vshrl.u32 %v178, 7
  %v180 = vsub.s32 1, %v179
  %v181 = vrot.slane %v139, %v180
  %v182 = vlaneseq
  %v183 = vshrl.u32 %v182, 7
  %v184 = vsub.s32 2, %v183
  %v185 = vrot.slane %v139, %v184
  %v186 = vlaneseq
  %v187 = vshrl.u32 %v186, 7
  %v188 = vsub.s32 3, %v187
  %v189 = vrot.slane %v139, %v188
  %v190 = vlaneseq
  %v191 = vshrl.u32 %v190, 7
  %v192 = vsub.s32 4, %v191
  %v193 = vrot.slane %v139, %v192
  %v194 = vlaneseq
  %v195 = vshrl.u32 %v194, 7
  %v196 = vsub.s32 5, %v195
  %v197 = vrot.slane %v139, %v196
  %v198 = vlaneseq
  %v199 = vshrl.u32 %v198, 7
  %v200 = vsub.s32 6, %v199
  %v201 = vrot.slane %v139, %v200
  %v202 = vlaneseq
  %v203 = vshrl.u32 %v202, 7
  %v204 = vsub.s32 7, %v203
  %v205 = vrot.slane %v139, %v204
  %v222 = vadd.f32 %v122, %v145
  %v223 = vadd.f32 %v123, %v149
  %v224 = vadd.f32 %v124, %v153
  %v225 = vadd.f32 %v125, %v157
  %v226 = vadd.f32 %v126, %v161
  %v227 = vadd.f32 %v127, %v165
  %v228 = vadd.f32 %v128, %v169
  %v229 = vadd.f32 %v129, %v173
  %v230 = vadd.f32 %v130, %v177
  %v231 = vadd.f32 %v131, %v181
  %v232 = vadd.f32 %v132, %v185
  %v233 = vadd.f32 %v133, %v189
  %v234 = vadd.f32 %v134, %v193
  %v235 = vadd.f32 %v135, %v197
  %v236 = vadd.f32 %v136, %v201
  %v237 = vadd.f32 %v137, %v205
  %v238 = vmax.f32 %v222, 0.0
  %v239 = vmax.f32 %v223, 0.0
  %v240 = vmax.f32 %v224, 0.0
  %v241 = vmax.f32 %v225, 0.0
  %v242 = vmax.f32 %v226, 0.0
  %v243 = vmax.f32 %v227, 0.0
  %v244 = vmax.f32 %v228, 0.0
  %v245 = vmax.f32 %v229, 0.0
  %v246 = vmax.f32 %v230, 0.0
  %v247 = vmax.f32 %v231, 0.0
  %v248 = vmax.f32 %v232, 0.0
  %v249 = vmax.f32 %v233, 0.0
  %v250 = vmax.f32 %v234, 0.0
  %v251 = vmax.f32 %v235, 0.0
  %v252 = vmax.f32 %v236, 0.0
  %v253 = vmax.f32 %v237, 0.0
  %v254 = vpack.c.bf16 %v238, %v238
  %v255 = vpack.c.bf16 %v239, %v239
  %v256 = vpack.c.bf16 %v240, %v240
  %v257 = vpack.c.bf16 %v241, %v241
  %v258 = vpack.c.bf16 %v242, %v242
  %v259 = vpack.c.bf16 %v243, %v243
  %v260 = vpack.c.bf16 %v244, %v244
  %v261 = vpack.c.bf16 %v245, %v245
  %v262 = vpack.c.bf16 %v246, %v246
  %v263 = vpack.c.bf16 %v247, %v247
  %v264 = vpack.c.bf16 %v248, %v248
  %v265 = vpack.c.bf16 %v249, %v249
  %v266 = vpack.c.bf16 %v250, %v250
  %v267 = vpack.c.bf16 %v251, %v251
  %v268 = vpack.c.bf16 %v252, %v252
  %v269 = vpack.c.bf16 %v253, %v253
  %v286 = vunpack.c.l.b16 %v254
  %v287 = vunpack.c.l.b16 %v255
  %v288 = vunpack.c.l.b16 %v256
  %v289 = vunpack.c.l.b16 %v257
  %v290 = vunpack.c.l.b16 %v258
  %v291 = vunpack.c.l.b16 %v259
  %v292 = vunpack.c.l.b16 %v260
  %v293 = vunpack.c.l.b16 %v261
  %v294 = vunpack.c.l.b16 %v262
  %v295 = vunpack.c.l.b16 %v263
  %v296 = vunpack.c.l.b16 %v264
  %v297 = vunpack.c.l.b16 %v265
  %v298 = vunpack.c.l.b16 %v266
  %v299 = vunpack.c.l.b16 %v267
  %v300 = vunpack.c.l.b16 %v268
  %v301 = vunpack.c.l.b16 %v269
  %v302 = vpack.c.b16 %v287, %v286
  %v303 = vpack.c.b16 %v289, %v288
  %v304 = vpack.c.b16 %v291, %v290
  %v305 = vpack.c.b16 %v293, %v292
  %v306 = vpack.c.b16 %v295, %v294
  %v307 = vpack.c.b16 %v297, %v296
  %v308 = vpack.c.b16 %v299, %v298
  %v309 = vpack.c.b16 %v301, %v300
  %318 = vst [vmem:[%s3] sm:$0xff] %v302
  %319 = vst [vmem:[%s3 + $0x8] sm:$0xff] %v303
  %320 = vst [vmem:[%s3 + $0x10] sm:$0xff] %v304
  %321 = vst [vmem:[%s3 + $0x18] sm:$0xff] %v305
  %322 = vst [vmem:[%s3 + $0x20] sm:$0xff] %v306
  %323 = vst [vmem:[%s3 + $0x28] sm:$0xff] %v307
  %324 = vst [vmem:[%s3 + $0x30] sm:$0xff] %v308
  %325 = vst [vmem:[%s3 + $0x38] sm:$0xff] %v309
  // Predicated region
  $region14: #{generator_forward.10} parent=0 // pred_check
    _
  $region15: #{generator_forward.10} parent=0 // pred_check_branch
    %327 = sbr.rel (0) target = $region17
  $region16: #{generator_forward.10} parent=0 // pred_region
    _
  $region17: #{generator_forward.10} parent=0 // pred_fallthru
    _
  // Predicated region
  $region18: #{generator_forward.10} parent=0 // pred_check
    _
  $region19: #{generator_forward.10} parent=0 // pred_check_branch
    %329 = sbr.rel (0) target = $region21
  $region20: #{generator_forward.10} parent=0 // pred_region
    _
  $region21: #{generator_forward.10} parent=0 // pred_fallthru
    _

// kernel: tile.58
$region0: #{tile.58}
  #allocation0 [shape = 's32[1]{0}', space=sflag, size = 0x4, scoped, tag = 'scoped memory for tile.58']
  %s0 = inlined_call_operand.vmem [shape: f32[64], index: 0, kind: input, shape index: {}]
  %s1 = inlined_call_operand.vmem [shape: f32[4,64], index: 1, kind: output, shape index: {}]
  // Predicated region
  $region2: #{tile.58} parent=0 // pred_check
    _
  $region3: #{tile.58} parent=0 // pred_check_branch
    %3 = sbr.rel (0) target = $region5
  $region4: #{tile.58} parent=0 // pred_region
    _
  $region5: #{tile.58} parent=0 // pred_fallthru
    _
  %v4 = vld [vmem:[%s0] ss:$0 sm:$0xff]
  %5 = vst [vmem:[%s1] sm:$0xf] %v4

// kernel: generator_forward.12
$region0: #{generator_forward.12}
  #allocation0 [shape = 'u32[]', space=smem, size = 0x4, offset = 0x4, fixed_abs, tag = 'smem constant byte address 0x4 - core index']
  #allocation1 [shape = 'u32[144,128]{1,0:T(1,128)}', space=vmem, size = 0x12000, scoped, tag = 'internal scratch']
  %s0 = inlined_call_operand.vmem [shape: bf16[32,256], index: 0, kind: input, shape index: {}]
  %s1 = inlined_call_operand.vmem [shape: f32[1,256], index: 1, kind: input, shape index: {}]
  %s2 = inlined_call_operand.vmem [shape: f32[1,256], index: 2, kind: input, shape index: {}]
  %s3 = inlined_call_operand.vmem [shape: bf16[32,256], index: 3, kind: output, shape index: {}]
  %s4 = sld [smem:[#allocation0]]
  $region45: #{generator_forward.12} parent=0
    _
  %s6 = ssub.s32 1, %s4
  %s7 = scalar_select 0, %s6, %s4
  loop: start=0, step=1, limit=4
  $region2: #{generator_forward.12} parent=0 // loop_pre_header
    _
  $region3: #{generator_forward.12} parent=0 // loop_header
    %s9 = sphi 0, %s13
    %p10 = scmp.ge.s32.totalorder %s9, 4
    %s19 = sphi 0, %s21
    %s22 = sphi 0, %s19
    %s23 = sphi 0, %s22
    %s39 = sphi 0, %s23
    %s43 = sphi 0, %s43
    %s45 = sphi 0, %s43
    %s46 = sphi 0, %s45
    %s60 = sphi 0, %s46
    %s64 = sphi 0, %s64
    %s66 = sphi 0, %s64
    %s67 = sphi 0, %s66
    %s81 = sphi 0, %s67
    %s87 = sphi 0, %s89
    %s90 = sphi 0, %s87
    %s91 = sphi 0, %s90
    %s107 = sphi 0, %s91
  $region4: #{generator_forward.12} parent=0 // loop_header_branch
    %12 = sbr.rel (%p10) target = $region8
  $region5: #{generator_forward.12} parent=0 // loop_body
    %s14 = ssub.s32 %s9, 1
    %s15 = ssub.s32 %s9, 2
    %s16 = sadd.s32 %s9, 1
    %s17 = ssub.s32 %s9, %s16
    %p18 = scmp.eq.s32.totalorder %s17, 0
    %s20 = sadd.s32 %s19, 1
    %s21 = scalar_select %p18, %s19, %s20
    %p24 = pneg %p18
    %p25 = scmp.eq.s32.totalorder %s9, 1
    %p26 = por %p24, %p25
    %p27 = scmp.ne.s32.totalorder %s19, %s22
    %p28 = scmp.eq.s32.totalorder %s9, 0
    %p29 = por %p27, %p28
    %p30 = scmp.ne.s32.totalorder %s19, %s22
    %p31 = scmp.eq.s32.totalorder %s14, 1
    %p32 = por %p30, %p31
    %p33 = scmp.ne.s32.totalorder %s22, %s23
    %p34 = scmp.eq.s32.totalorder %s14, 0
    %p35 = por %p33, %p34
    %p36 = scmp.ne.s32.totalorder %s22, %s23
    %p37 = scmp.eq.s32.totalorder %s15, 1
    %p38 = por %p36, %p37
    %p40 = scmp.ne.s32.totalorder %s23, %s39
    %p41 = scmp.eq.s32.totalorder %s15, 0
    %p42 = por %p40, %p41
    %s44 = sadd.s32 %s43, 1
    %p47 = scmp.eq.s32.totalorder %s9, 1
    %p48 = scmp.ne.s32.totalorder %s43, %s45
    %p49 = scmp.eq.s32.totalorder %s9, 0
    %p50 = por %p48, %p49
    %p51 = scmp.ne.s32.totalorder %s43, %s45
    %p52 = scmp.eq.s32.totalorder %s14, 1
    %p53 = por %p51, %p52
    %p54 = scmp.ne.s32.totalorder %s45, %s46
    %p55 = scmp.eq.s32.totalorder %s14, 0
    %p56 = por %p54, %p55
    %p57 = scmp.ne.s32.totalorder %s45, %s46
    %p58 = scmp.eq.s32.totalorder %s15, 1
    %p59 = por %p57, %p58
    %p61 = scmp.ne.s32.totalorder %s46, %s60
    %p62 = scmp.eq.s32.totalorder %s15, 0
    %p63 = por %p61, %p62
    %s65 = sadd.s32 %s64, 1
    %p68 = scmp.eq.s32.totalorder %s9, 1
    %p69 = scmp.ne.s32.totalorder %s64, %s66
    %p70 = scmp.eq.s32.totalorder %s9, 0
    %p71 = por %p69, %p70
    %p72 = scmp.ne.s32.totalorder %s64, %s66
    %p73 = scmp.eq.s32.totalorder %s14, 1
    %p74 = por %p72, %p73
    %p75 = scmp.ne.s32.totalorder %s66, %s67
    %p76 = scmp.eq.s32.totalorder %s14, 0
    %p77 = por %p75, %p76
    %p78 = scmp.ne.s32.totalorder %s66, %s67
    %p79 = scmp.eq.s32.totalorder %s15, 1
    %p80 = por %p78, %p79
    %p82 = scmp.ne.s32.totalorder %s67, %s81
    %p83 = scmp.eq.s32.totalorder %s15, 0
    %p84 = por %p82, %p83
    %s85 = ssub.s32 %s9, %s16
    %p86 = scmp.eq.s32.totalorder %s85, 0
    %s88 = sadd.s32 %s87, 1
    %s89 = scalar_select %p86, %s87, %s88
    %p92 = pneg %p86
    %p93 = scmp.eq.s32.totalorder %s9, 1
    %p94 = por %p92, %p93
    %p95 = scmp.ne.s32.totalorder %s87, %s90
    %p96 = scmp.eq.s32.totalorder %s9, 0
    %p97 = por %p95, %p96
    %p98 = scmp.ne.s32.totalorder %s87, %s90
    %p99 = scmp.eq.s32.totalorder %s14, 1
    %p100 = por %p98, %p99
    %p101 = scmp.ne.s32.totalorder %s90, %s91
    %p102 = scmp.eq.s32.totalorder %s14, 0
    %p103 = por %p101, %p102
    %p104 = scmp.ne.s32.totalorder %s90, %s91
    %p105 = scmp.eq.s32.totalorder %s15, 1
    %p106 = por %p104, %p105
    %p108 = scmp.ne.s32.totalorder %s91, %s107
    %p109 = scmp.eq.s32.totalorder %s15, 0
    %p110 = por %p108, %p109
    %p111 = scmp.le.s32.totalorder 1, %s9
    %p112 = scmp.lt.s32.totalorder %s9, 3
    %p113 = pnand %p111, %p112
    %p114 = pneg %p113
    // Predicated region
    $region9: #{generator_forward.12} parent=5 // pred_check
      _
    $region10: #{generator_forward.12} parent=5 // pred_check_branch
      %116 = sbr.rel (%p113) target = $region12
    $region11: #{generator_forward.12} parent=5 // pred_region
      %s117 = ssub.s32 %s9, 1
      // Predicated region
      $region13: #{generator_forward.12} parent=11 // pred_check
        %p118 = pneg %p56
      $region14: #{generator_forward.12} parent=11 // pred_check_branch
        %120 = sbr.rel (%p118) target = $region16
      $region15: #{generator_forward.12} parent=11 // pred_region
        _
      $region16: #{generator_forward.12} parent=11 // pred_fallthru
        _
      // Predicated region
      $region17: #{generator_forward.12} parent=11 // pred_check
        %p121 = pneg %p77
      $region18: #{generator_forward.12} parent=11 // pred_check_branch
        %123 = sbr.rel (%p121) target = $region20
      $region19: #{generator_forward.12} parent=11 // pred_region
        _
      $region20: #{generator_forward.12} parent=11 // pred_fallthru
        _
    $region12: #{generator_forward.12} parent=5 // pred_fallthru
      _
    %p124 = scmp.lt.s32.totalorder %s9, 2
    // Predicated region
    $region21: #{generator_forward.12} parent=5 // pred_check
      %p125 = pneg %p124
    $region22: #{generator_forward.12} parent=5 // pred_check_branch
      %127 = sbr.rel (%p125) target = $region24
    $region23: #{generator_forward.12} parent=5 // pred_region
      // Predicated region
      $region25: #{generator_forward.12} parent=23 // pred_check
        %p128 = pneg %p29
      $region26: #{generator_forward.12} parent=23 // pred_check_branch
        %130 = sbr.rel (%p128) target = $region28
      $region27: #{generator_forward.12} parent=23 // pred_region
        %s131 = smul.u32 2, %s9
        %p132 = scmp.lt.s32.totalorder %s131, 3
        %s133 = scalar_select %p132, %s131, 3
        %s134 = smul.addr %s133, 2
        %s135 = smul.addr %s134, 4
        %s136 = scalar_lea.vmem %s0, %s135
        %s137 = smul.u32 2, %s9
      $region28: #{generator_forward.12} parent=23 // pred_fallthru
        _
    $region24: #{generator_forward.12} parent=5 // pred_fallthru
      _
    %p138 = scmp.le.s32.totalorder 1, %s9
    %p139 = scmp.lt.s32.totalorder %s9, 3
    %p140 = pnand %p138, %p139
    %p141 = pneg %p140
    // Predicated region
    $region29: #{generator_forward.12} parent=5 // pred_check
      _
    $region30: #{generator_forward.12} parent=5 // pred_check_branch
      %143 = sbr.rel (%p140) target = $region32
    $region31: #{generator_forward.12} parent=5 // pred_region
      %s144 = ssub.s32 %s9, 1
      %s145 = smul.u32 2, %s14
      %p146 = scmp.lt.s32.totalorder %s145, 3
      %s147 = scalar_select %p146, %s145, 3
      %s148 = smul.addr %s147, 2
      %s149 = smul.addr %s148, 4
      %s150 = scalar_lea.vmem %s0, %s149
      %p151 = pneg %p35
      %p152 = pneg %p32
      %p153 = pneg %p56
      %p154 = pneg %p53
      %p155 = pneg %p77
      %p156 = pneg %p74
      %p157 = pneg %p103
      %p158 = pneg %p100
      %s159 = smul.u32 2, %s14
      %p160 = scmp.lt.s32.totalorder %s159, 3
      %s161 = scalar_select %p160, %s159, 3
      %s162 = smul.addr %s161, 2
      %s163 = smul.addr %s162, 4
      %s164 = scalar_lea.vmem %s3, %s163
      %s165 = smul.u32 2, %s14
      %p166 = scmp.lt.s32.totalorder %s165, 3
      %s167 = scalar_select %p166, %s165, 3
      %s168 = smul.addr %s167, 2
      %s169 = smul.addr %s168, 4
      %s170 = scalar_lea.vmem %s0, %s169
      %s171 = smul.u32 2, %s14
      %s172 = smul.u32 2, %s14
      %p173 = scmp.lt.s32.totalorder %s172, 3
      %s174 = scalar_select %p173, %s172, 3
      %s175 = smul.addr %s174, 2
      %s176 = smul.addr %s175, 4
      %s177 = scalar_lea.vmem %s3, %s176
      %s178 = smul.u32 2, %s14
      %v179 = vld [vmem:[%s170] sm:$0xff]
      %v180 = vld [vmem:[%s170 + $0x8] sm:$0xff]
      %v181 = vunpack.c.l.bf16 %v179
      %v182 = vunpack.c.h.bf16 %v179
      %v183 = vunpack.c.l.bf16 %v180
      %v184 = vunpack.c.h.bf16 %v180
      %v185 = vld [vmem:[%s1] sm:$0x3]
      %v187 = vlaneseq
      %v188 = vshrl.u32 %v187, 7
      %v189 = vsub.s32 0, %v188
      %v190 = vrot.slane %v185, %v189
      %v191 = vlaneseq
      %v192 = vshrl.u32 %v191, 7
      %v193 = vsub.s32 1, %v192
      %v194 = vrot.slane %v185, %v193
      %v197 = vmul.f32 %v181, %v190
      %v198 = vmul.f32 %v182, %v194
      %v199 = vmul.f32 %v183, %v190
      %v200 = vmul.f32 %v184, %v194
      %v201 = vld [vmem:[%s2] sm:$0x3]
      %v203 = vlaneseq
      %v204 = vshrl.u32 %v203, 7
      %v205 = vsub.s32 0, %v204
      %v206 = vrot.slane %v201, %v205
      %v207 = vlaneseq
      %v208 = vshrl.u32 %v207, 7
      %v209 = vsub.s32 1, %v208
      %v210 = vrot.slane %v201, %v209
      %v213 = vadd.f32 %v197, %v206
      %v214 = vadd.f32 %v198, %v210
      %v215 = vadd.f32 %v199, %v206
      %v216 = vadd.f32 %v200, %v210
      %v217 = vmax.f32 %v213, 0.0
      %v218 = vmax.f32 %v214, 0.0
      %v219 = vmax.f32 %v215, 0.0
      %v220 = vmax.f32 %v216, 0.0
      %v221 = vpack.c.bf16 %v219, %v217
      %v222 = vpack.c.bf16 %v220, %v218
      %v225 = vunpack.c.l.b16 %v221
      %v226 = vunpack.c.l.b16 %v222
      %v227 = vunpack.c.h.b16 %v221
      %v228 = vunpack.c.h.b16 %v222
      %v229 = vpack.c.b16 %v226, %v225
      %v230 = vpack.c.b16 %v228, %v227
      %233 = vst [vmem:[%s177] sm:$0xff] %v229
      %234 = vst [vmem:[%s177 + $0x8] sm:$0xff] %v230
      %s235 = smul.u32 2, %s14
      %p236 = scmp.lt.s32.totalorder %s235, 3
      %s237 = scalar_select %p236, %s235, 3
      %s238 = smul.addr %s237, 2
      %s239 = smul.addr %s238, 4
      %s240 = scalar_lea.vmem %s3, %s239
      // Predicated region
      $region33: #{generator_forward.12} parent=31 // pred_check
        %p241 = pneg %p100
      $region34: #{generator_forward.12} parent=31 // pred_check_branch
        %243 = sbr.rel (%p241) target = $region36
      $region35: #{generator_forward.12} parent=31 // pred_region
        %s244 = smul.u32 2, %s14
      $region36: #{generator_forward.12} parent=31 // pred_fallthru
        _
    $region32: #{generator_forward.12} parent=5 // pred_fallthru
      _
    %p245 = scmp.le.s32.totalorder 2, %s9
    // Predicated region
    $region37: #{generator_forward.12} parent=5 // pred_check
      %p246 = pneg %p245
    $region38: #{generator_forward.12} parent=5 // pred_check_branch
      %248 = sbr.rel (%p246) target = $region40
    $region39: #{generator_forward.12} parent=5 // pred_region
      %s249 = ssub.s32 %s9, 2
      // Predicated region
      $region41: #{generator_forward.12} parent=39 // pred_check
        %p250 = pneg %p106
      $region42: #{generator_forward.12} parent=39 // pred_check_branch
        %252 = sbr.rel (%p250) target = $region44
      $region43: #{generator_forward.12} parent=39 // pred_region
        %s253 = smul.u32 2, %s15
        %p254 = scmp.lt.s32.totalorder %s253, 3
        %s255 = scalar_select %p254, %s253, 3
        %s256 = smul.addr %s255, 2
        %s257 = smul.addr %s256, 4
        %s258 = scalar_lea.vmem %s3, %s257
      $region44: #{generator_forward.12} parent=39 // pred_fallthru
        _
    $region40: #{generator_forward.12} parent=5 // pred_fallthru
      _
  $region6: #{generator_forward.12} parent=0 // loop_footer
    %s13 = sadd.s32 1, %s9
  $region7: #{generator_forward.12} parent=0 // loop_footer_branch
    %8 = sbr.rel target = $region3
  $region8: #{generator_forward.12} parent=0 // loop_exit
    _

// kernel: generator_forward.11
$region0: #{generator_forward.11}
  #allocation0 [shape = 'u32[]', space=smem, size = 0x4, offset = 0x4, fixed_abs, tag = 'smem constant byte address 0x4 - core index']
  #allocation1 [shape = 'u32[144,128]{1,0:T(1,128)}', space=vmem, size = 0x12000, scoped, tag = 'internal scratch']
  %s0 = inlined_call_operand.vmem [shape: bf16[32,1152], index: 0, kind: input, shape index: {}]
  %s1 = inlined_call_operand.vmem [shape: bf16[1152,256], index: 1, kind: input, shape index: {}]
  %s2 = inlined_call_operand.vmem [shape: bf16[32,256], index: 2, kind: output, shape index: {0}]
  %s3 = inlined_call_operand.vmem [shape: f32[16,256], index: 3, kind: output, shape index: {1}]
  %4 = xla_tuple %s2, %s3
  %s5 = sld [smem:[#allocation0]]
  $region49: #{generator_forward.11} parent=0
    _
  %s7 = ssub.s32 1, %s5
  %s8 = scalar_select 0, %s7, %s5
  loop: start=0, step=1, limit=4
  $region2: #{generator_forward.11} parent=0 // loop_pre_header
    _
  $region3: #{generator_forward.11} parent=0 // loop_header
    %s10 = sphi 0, %s14
    %p11 = scmp.ge.s32.totalorder %s10, 4
    %s20 = sphi 0, %s22
    %s23 = sphi 0, %s20
    %s24 = sphi 0, %s23
    %s40 = sphi 0, %s24
    %s44 = sphi 0, %s44
    %s46 = sphi 0, %s44
    %s47 = sphi 0, %s46
    %s61 = sphi 0, %s47
    %s67 = sphi 0, %s69
    %s70 = sphi 0, %s67
    %s71 = sphi 0, %s70
    %s87 = sphi 0, %s71
    %s93 = sphi 0, %s95
    %s96 = sphi 0, %s93
    %s97 = sphi 0, %s96
    %s113 = sphi 0, %s97
  $region4: #{generator_forward.11} parent=0 // loop_header_branch
    %13 = sbr.rel (%p11) target = $region8
  $region5: #{generator_forward.11} parent=0 // loop_body
    %s15 = ssub.s32 %s10, 1
    %s16 = ssub.s32 %s10, 2
    %s17 = sadd.s32 %s10, 1
    %s18 = ssub.s32 %s10, %s17
    %p19 = scmp.eq.s32.totalorder %s18, 0
    %s21 = sadd.s32 %s20, 1
    %s22 = scalar_select %p19, %s20, %s21
    %p25 = pneg %p19
    %p26 = scmp.eq.s32.totalorder %s10, 1
    %p27 = por %p25, %p26
    %p28 = scmp.ne.s32.totalorder %s20, %s23
    %p29 = scmp.eq.s32.totalorder %s10, 0
    %p30 = por %p28, %p29
    %p31 = scmp.ne.s32.totalorder %s20, %s23
    %p32 = scmp.eq.s32.totalorder %s15, 1
    %p33 = por %p31, %p32
    %p34 = scmp.ne.s32.totalorder %s23, %s24
    %p35 = scmp.eq.s32.totalorder %s15, 0
    %p36 = por %p34, %p35
    %p37 = scmp.ne.s32.totalorder %s23, %s24
    %p38 = scmp.eq.s32.totalorder %s16, 1
    %p39 = por %p37, %p38
    %p41 = scmp.ne.s32.totalorder %s24, %s40
    %p42 = scmp.eq.s32.totalorder %s16, 0
    %p43 = por %p41, %p42
    %s45 = sadd.s32 %s44, 1
    %p48 = scmp.eq.s32.totalorder %s10, 1
    %p49 = scmp.ne.s32.totalorder %s44, %s46
    %p50 = scmp.eq.s32.totalorder %s10, 0
    %p51 = por %p49, %p50
    %p52 = scmp.ne.s32.totalorder %s44, %s46
    %p53 = scmp.eq.s32.totalorder %s15, 1
    %p54 = por %p52, %p53
    %p55 = scmp.ne.s32.totalorder %s46, %s47
    %p56 = scmp.eq.s32.totalorder %s15, 0
    %p57 = por %p55, %p56
    %p58 = scmp.ne.s32.totalorder %s46, %s47
    %p59 = scmp.eq.s32.totalorder %s16, 1
    %p60 = por %p58, %p59
    %p62 = scmp.ne.s32.totalorder %s47, %s61
    %p63 = scmp.eq.s32.totalorder %s16, 0
    %p64 = por %p62, %p63
    %s65 = ssub.s32 %s10, %s17
    %p66 = scmp.eq.s32.totalorder %s65, 0
    %s68 = sadd.s32 %s67, 1
    %s69 = scalar_select %p66, %s67, %s68
    %p72 = pneg %p66
    %p73 = scmp.eq.s32.totalorder %s10, 1
    %p74 = por %p72, %p73
    %p75 = scmp.ne.s32.totalorder %s67, %s70
    %p76 = scmp.eq.s32.totalorder %s10, 0
    %p77 = por %p75, %p76
    %p78 = scmp.ne.s32.totalorder %s67, %s70
    %p79 = scmp.eq.s32.totalorder %s15, 1
    %p80 = por %p78, %p79
    %p81 = scmp.ne.s32.totalorder %s70, %s71
    %p82 = scmp.eq.s32.totalorder %s15, 0
    %p83 = por %p81, %p82
    %p84 = scmp.ne.s32.totalorder %s70, %s71
    %p85 = scmp.eq.s32.totalorder %s16, 1
    %p86 = por %p84, %p85
    %p88 = scmp.ne.s32.totalorder %s71, %s87
    %p89 = scmp.eq.s32.totalorder %s16, 0
    %p90 = por %p88, %p89
    %s91 = ssub.s32 %s10, %s17
    %p92 = scmp.eq.s32.totalorder %s91, 0
    %s94 = sadd.s32 %s93, 1
    %s95 = scalar_select %p92, %s93, %s94
    %p98 = pneg %p92
    %p99 = scmp.eq.s32.totalorder %s10, 1
    %p100 = por %p98, %p99
    %p101 = scmp.ne.s32.totalorder %s93, %s96
    %p102 = scmp.eq.s32.totalorder %s10, 0
    %p103 = por %p101, %p102
    %p104 = scmp.ne.s32.totalorder %s93, %s96
    %p105 = scmp.eq.s32.totalorder %s15, 1
    %p106 = por %p104, %p105
    %p107 = scmp.ne.s32.totalorder %s96, %s97
    %p108 = scmp.eq.s32.totalorder %s15, 0
    %p109 = por %p107, %p108
    %p110 = scmp.ne.s32.totalorder %s96, %s97
    %p111 = scmp.eq.s32.totalorder %s16, 1
    %p112 = por %p110, %p111
    %p114 = scmp.ne.s32.totalorder %s97, %s113
    %p115 = scmp.eq.s32.totalorder %s16, 0
    %p116 = por %p114, %p115
    %p117 = scmp.le.s32.totalorder 1, %s10
    %p118 = scmp.lt.s32.totalorder %s10, 3
    %p119 = pnand %p117, %p118
    %p120 = pneg %p119
    // Predicated region
    $region9: #{generator_forward.11} parent=5 // pred_check
      _
    $region10: #{generator_forward.11} parent=5 // pred_check_branch
      %122 = sbr.rel (%p119) target = $region12
    $region11: #{generator_forward.11} parent=5 // pred_region
      %s123 = ssub.s32 %s10, 1
      // Predicated region
      $region13: #{generator_forward.11} parent=11 // pred_check
        %p124 = pneg %p57
      $region14: #{generator_forward.11} parent=11 // pred_check_branch
        %126 = sbr.rel (%p124) target = $region16
      $region15: #{generator_forward.11} parent=11 // pred_region
        _
      $region16: #{generator_forward.11} parent=11 // pred_fallthru
        _
    $region12: #{generator_forward.11} parent=5 // pred_fallthru
      _
    %p127 = scmp.lt.s32.totalorder %s10, 2
    // Predicated region
    $region17: #{generator_forward.11} parent=5 // pred_check
      %p128 = pneg %p127
    $region18: #{generator_forward.11} parent=5 // pred_check_branch
      %130 = sbr.rel (%p128) target = $region20
    $region19: #{generator_forward.11} parent=5 // pred_region
      // Predicated region
      $region21: #{generator_forward.11} parent=19 // pred_check
        %p131 = pneg %p30
      $region22: #{generator_forward.11} parent=19 // pred_check_branch
        %133 = sbr.rel (%p131) target = $region24
      $region23: #{generator_forward.11} parent=19 // pred_region
        %s134 = smul.u32 2, %s10
        %p135 = scmp.lt.s32.totalorder %s134, 3
        %s136 = scalar_select %p135, %s134, 3
        %s137 = smul.addr %s136, 9
        %s138 = smul.addr %s137, 4
        %s139 = scalar_lea.vmem %s0, %s138
        %s140 = smul.u32 2, %s10
      $region24: #{generator_forward.11} parent=19 // pred_fallthru
        _
    $region20: #{generator_forward.11} parent=5 // pred_fallthru
      _
    %p141 = scmp.le.s32.totalorder 1, %s10
    %p142 = scmp.lt.s32.totalorder %s10, 3
    %p143 = pnand %p141, %p142
    %p144 = pneg %p143
    // Predicated region
    $region25: #{generator_forward.11} parent=5 // pred_check
      _
    $region26: #{generator_forward.11} parent=5 // pred_check_branch
      %146 = sbr.rel (%p143) target = $region28
    $region27: #{generator_forward.11} parent=5 // pred_region
      %s147 = ssub.s32 %s10, 1
      %s148 = smul.u32 2, %s15
      %p149 = scmp.lt.s32.totalorder %s148, 3
      %s150 = scalar_select %p149, %s148, 3
      %s151 = smul.addr %s150, 9
      %s152 = smul.addr %s151, 4
      %s153 = scalar_lea.vmem %s0, %s152
      %p154 = pneg %p36
      %p155 = pneg %p33
      %p156 = pneg %p57
      %p157 = pneg %p54
      %p158 = pneg %p83
      %p159 = pneg %p80
      %s160 = smul.u32 2, %s15
      %p161 = scmp.lt.s32.totalorder %s160, 3
      %s162 = scalar_select %p161, %s160, 3
      %s163 = smul.addr %s162, 2
      %s164 = smul.addr %s163, 4
      %s165 = scalar_lea.vmem %s2, %s164
      %p166 = pneg %p109
      %p167 = pneg %p106
      %p168 = scmp.lt.s32.totalorder %s15, 1
      %s169 = scalar_select %p168, %s15, 1
      %s170 = smul.addr %s169, 2
      %s171 = smul.addr %s170, 8
      %s172 = scalar_lea.vmem %s3, %s171
      %s173 = smul.u32 2, %s15
      %p174 = scmp.lt.s32.totalorder %s173, 3
      %s175 = scalar_select %p174, %s173, 3
      %s176 = smul.addr %s175, 9
      %s177 = smul.addr %s176, 4
      %s178 = scalar_lea.vmem %s0, %s177
      %s179 = smul.u32 2, %s15
      %s180 = smul.u32 2, %s15
      %p181 = scmp.lt.s32.totalorder %s180, 3
      %s182 = scalar_select %p181, %s180, 3
      %s183 = smul.addr %s182, 2
      %s184 = smul.addr %s183, 4
      %s185 = scalar_lea.vmem %s2, %s184
      %s186 = smul.u32 2, %s15
      %p187 = scmp.lt.s32.totalorder %s15, 1
      %s188 = scalar_select %p187, %s15, 1
      %s189 = smul.addr %s188, 2
      %s190 = smul.addr %s189, 8
      %s191 = scalar_lea.vmem %s3, %s190
      %v193 = vld [vmem:[%s178] sm:$0xff]
      %v194 = vld [vmem:[%s178 + $0x8] sm:$0xff]
      %v195 = vld [vmem:[%s178 + $0x10] sm:$0xff]
      %v196 = vld [vmem:[%s178 + $0x18] sm:$0xff]
      %v197 = vld [vmem:[%s178 + $0x20] sm:$0xf]
      %v198 = vld [vmem:[%s178 + $0x24] sm:$0xff]
      %v199 = vld [vmem:[%s178 + $0x2c] sm:$0xff]
      %v200 = vld [vmem:[%s178 + $0x34] sm:$0xff]
      %v201 = vld [vmem:[%s178 + $0x3c] sm:$0xff]
      %v202 = vld [vmem:[%s178 + $0x44] sm:$0xf]
      %v203 = vld [vmem:[%s1] sm:$0xff]
      %v204 = vld [vmem:[%s1 + $0x8] sm:$0xff]
      %v205 = vld [vmem:[%s1 + $0x10] sm:$0xff]
      %v206 = vld [vmem:[%s1 + $0x18] sm:$0xff]
      %v207 = vld [vmem:[%s1 + $0x20] sm:$0xff]
      %v208 = vld [vmem:[%s1 + $0x28] sm:$0xff]
      %v209 = vld [vmem:[%s1 + $0x30] sm:$0xff]
      %v210 = vld [vmem:[%s1 + $0x38] sm:$0xff]
      %v211 = vld [vmem:[%s1 + $0x40] sm:$0xff]
      %v212 = vld [vmem:[%s1 + $0x48] sm:$0xff]
      %v213 = vld [vmem:[%s1 + $0x50] sm:$0xff]
      %v214 = vld [vmem:[%s1 + $0x58] sm:$0xff]
      %v215 = vld [vmem:[%s1 + $0x60] sm:$0xff]
      %v216 = vld [vmem:[%s1 + $0x68] sm:$0xff]
      %v217 = vld [vmem:[%s1 + $0x70] sm:$0xff]
      %v218 = vld [vmem:[%s1 + $0x78] sm:$0xff]
      %v219 = vld [vmem:[%s1 + $0x80] sm:$0xff]
      %v220 = vld [vmem:[%s1 + $0x88] sm:$0xff]
      %v221 = vld [vmem:[%s1 + $0x90] sm:$0xff]
      %v222 = vld [vmem:[%s1 + $0x98] sm:$0xff]
      %v223 = vld [vmem:[%s1 + $0xa0] sm:$0xff]
      %v224 = vld [vmem:[%s1 + $0xa8] sm:$0xff]
      %v225 = vld [vmem:[%s1 + $0xb0] sm:$0xff]
      %v226 = vld [vmem:[%s1 + $0xb8] sm:$0xff]
      %v227 = vld [vmem:[%s1 + $0xc0] sm:$0xff]
      %v228 = vld [vmem:[%s1 + $0xc8] sm:$0xff]
      %v229 = vld [vmem:[%s1 + $0xd0] sm:$0xff]
      %v230 = vld [vmem:[%s1 + $0xd8] sm:$0xff]
      %v231 = vld [vmem:[%s1 + $0xe0] sm:$0xff]
      %v232 = vld [vmem:[%s1 + $0xe8] sm:$0xff]
      %v233 = vld [vmem:[%s1 + $0xf0] sm:$0xff]
      %v234 = vld [vmem:[%s1 + $0xf8] sm:$0xff]
      %v235 = vld [vmem:[%s1 + $0x100] sm:$0xff]
      %v236 = vld [vmem:[%s1 + $0x108] sm:$0xff]
      %v237 = vld [vmem:[%s1 + $0x110] sm:$0xff]
      %v238 = vld [vmem:[%s1 + $0x118] sm:$0xff]
      %v239 = vld [vmem:[%s1 + $0x120] sm:$0xff]
      %v240 = vld [vmem:[%s1 + $0x128] sm:$0xff]
      %v241 = vld [vmem:[%s1 + $0x130] sm:$0xff]
      %v242 = vld [vmem:[%s1 + $0x138] sm:$0xff]
      %v243 = vld [vmem:[%s1 + $0x140] sm:$0xff]
      %v244 = vld [vmem:[%s1 + $0x148] sm:$0xff]
      %v245 = vld [vmem:[%s1 + $0x150] sm:$0xff]
      %v246 = vld [vmem:[%s1 + $0x158] sm:$0xff]
      %v247 = vld [vmem:[%s1 + $0x160] sm:$0xff]
      %v248 = vld [vmem:[%s1 + $0x168] sm:$0xff]
      %v249 = vld [vmem:[%s1 + $0x170] sm:$0xff]
      %v250 = vld [vmem:[%s1 + $0x178] sm:$0xff]
      %v251 = vld [vmem:[%s1 + $0x180] sm:$0xff]
      %v252 = vld [vmem:[%s1 + $0x188] sm:$0xff]
      %v253 = vld [vmem:[%s1 + $0x190] sm:$0xff]
      %v254 = vld [vmem:[%s1 + $0x198] sm:$0xff]
      %v255 = vld [vmem:[%s1 + $0x1a0] sm:$0xff]
      %v256 = vld [vmem:[%s1 + $0x1a8] sm:$0xff]
      %v257 = vld [vmem:[%s1 + $0x1b0] sm:$0xff]
      %v258 = vld [vmem:[%s1 + $0x1b8] sm:$0xff]
      %v259 = vld [vmem:[%s1 + $0x1c0] sm:$0xff]
      %v260 = vld [vmem:[%s1 + $0x1c8] sm:$0xff]
      %v261 = vld [vmem:[%s1 + $0x1d0] sm:$0xff]
      %v262 = vld [vmem:[%s1 + $0x1d8] sm:$0xff]
      %v263 = vld [vmem:[%s1 + $0x1e0] sm:$0xff]
      %v264 = vld [vmem:[%s1 + $0x1e8] sm:$0xff]
      %v265 = vld [vmem:[%s1 + $0x1f0] sm:$0xff]
      %v266 = vld [vmem:[%s1 + $0x1f8] sm:$0xff]
      %v267 = vld [vmem:[%s1 + $0x200] sm:$0xff]
      %v268 = vld [vmem:[%s1 + $0x208] sm:$0xff]
      %v269 = vld [vmem:[%s1 + $0x210] sm:$0xff]
      %v270 = vld [vmem:[%s1 + $0x218] sm:$0xff]
      %v271 = vld [vmem:[%s1 + $0x220] sm:$0xff]
      %v272 = vld [vmem:[%s1 + $0x228] sm:$0xff]
      %v273 = vld [vmem:[%s1 + $0x230] sm:$0xff]
      %v274 = vld [vmem:[%s1 + $0x238] sm:$0xff]
      %v275 = vld [vmem:[%s1 + $0x240] sm:$0xff]
      %v276 = vld [vmem:[%s1 + $0x248] sm:$0xff]
      %v277 = vld [vmem:[%s1 + $0x250] sm:$0xff]
      %v278 = vld [vmem:[%s1 + $0x258] sm:$0xff]
      %v279 = vld [vmem:[%s1 + $0x260] sm:$0xff]
      %v280 = vld [vmem:[%s1 + $0x268] sm:$0xff]
      %v281 = vld [vmem:[%s1 + $0x270] sm:$0xff]
      %v282 = vld [vmem:[%s1 + $0x278] sm:$0xff]
      %v283 = vld [vmem:[%s1 + $0x280] sm:$0xff]
      %v284 = vld [vmem:[%s1 + $0x288] sm:$0xff]
      %v285 = vld [vmem:[%s1 + $0x290] sm:$0xff]
      %v286 = vld [vmem:[%s1 + $0x298] sm:$0xff]
      %v287 = vld [vmem:[%s1 + $0x2a0] sm:$0xff]
      %v288 = vld [vmem:[%s1 + $0x2a8] sm:$0xff]
      %v289 = vld [vmem:[%s1 + $0x2b0] sm:$0xff]
      %v290 = vld [vmem:[%s1 + $0x2b8] sm:$0xff]
      %v291 = vld [vmem:[%s1 + $0x2c0] sm:$0xff]
      %v292 = vld [vmem:[%s1 + $0x2c8] sm:$0xff]
      %v293 = vld [vmem:[%s1 + $0x2d0] sm:$0xff]
      %v294 = vld [vmem:[%s1 + $0x2d8] sm:$0xff]
      %v295 = vld [vmem:[%s1 + $0x2e0] sm:$0xff]
      %v296 = vld [vmem:[%s1 + $0x2e8] sm:$0xff]
      %v297 = vld [vmem:[%s1 + $0x2f0] sm:$0xff]
      %v298 = vld [vmem:[%s1 + $0x2f8] sm:$0xff]
      %v299 = vld [vmem:[%s1 + $0x300] sm:$0xff]
      %v300 = vld [vmem:[%s1 + $0x308] sm:$0xff]
      %v301 = vld [vmem:[%s1 + $0x310] sm:$0xff]
      %v302 = vld [vmem:[%s1 + $0x318] sm:$0xff]
      %v303 = vld [vmem:[%s1 + $0x320] sm:$0xff]
      %v304 = vld [vmem:[%s1 + $0x328] sm:$0xff]
      %v305 = vld [vmem:[%s1 + $0x330] sm:$0xff]
      %v306 = vld [vmem:[%s1 + $0x338] sm:$0xff]
      %v307 = vld [vmem:[%s1 + $0x340] sm:$0xff]
      %v308 = vld [vmem:[%s1 + $0x348] sm:$0xff]
      %v309 = vld [vmem:[%s1 + $0x350] sm:$0xff]
      %v310 = vld [vmem:[%s1 + $0x358] sm:$0xff]
      %v311 = vld [vmem:[%s1 + $0x360] sm:$0xff]
      %v312 = vld [vmem:[%s1 + $0x368] sm:$0xff]
      %v313 = vld [vmem:[%s1 + $0x370] sm:$0xff]
      %v314 = vld [vmem:[%s1 + $0x378] sm:$0xff]
      %v315 = vld [vmem:[%s1 + $0x380] sm:$0xff]
      %v316 = vld [vmem:[%s1 + $0x388] sm:$0xff]
      %v317 = vld [vmem:[%s1 + $0x390] sm:$0xff]
      %v318 = vld [vmem:[%s1 + $0x398] sm:$0xff]
      %v319 = vld [vmem:[%s1 + $0x3a0] sm:$0xff]
      %v320 = vld [vmem:[%s1 + $0x3a8] sm:$0xff]
      %v321 = vld [vmem:[%s1 + $0x3b0] sm:$0xff]
      %v322 = vld [vmem:[%s1 + $0x3b8] sm:$0xff]
      %v323 = vld [vmem:[%s1 + $0x3c0] sm:$0xff]
      %v324 = vld [vmem:[%s1 + $0x3c8] sm:$0xff]
      %v325 = vld [vmem:[%s1 + $0x3d0] sm:$0xff]
      %v326 = vld [vmem:[%s1 + $0x3d8] sm:$0xff]
      %v327 = vld [vmem:[%s1 + $0x3e0] sm:$0xff]
      %v328 = vld [vmem:[%s1 + $0x3e8] sm:$0xff]
      %v329 = vld [vmem:[%s1 + $0x3f0] sm:$0xff]
      %v330 = vld [vmem:[%s1 + $0x3f8] sm:$0xff]
      %v331 = vld [vmem:[%s1 + $0x400] sm:$0xff]
      %v332 = vld [vmem:[%s1 + $0x408] sm:$0xff]
      %v333 = vld [vmem:[%s1 + $0x410] sm:$0xff]
      %v334 = vld [vmem:[%s1 + $0x418] sm:$0xff]
      %v335 = vld [vmem:[%s1 + $0x420] sm:$0xff]
      %v336 = vld [vmem:[%s1 + $0x428] sm:$0xff]
      %v337 = vld [vmem:[%s1 + $0x430] sm:$0xff]
      %v338 = vld [vmem:[%s1 + $0x438] sm:$0xff]
      %v339 = vld [vmem:[%s1 + $0x440] sm:$0xff]
      %v340 = vld [vmem:[%s1 + $0x448] sm:$0xff]
      %v341 = vld [vmem:[%s1 + $0x450] sm:$0xff]
      %v342 = vld [vmem:[%s1 + $0x458] sm:$0xff]
      %v343 = vld [vmem:[%s1 + $0x460] sm:$0xff]
      %v344 = vld [vmem:[%s1 + $0x468] sm:$0xff]
      %v345 = vld [vmem:[%s1 + $0x470] sm:$0xff]
      %v346 = vld [vmem:[%s1 + $0x478] sm:$0xff]
      %v357 = vunpack.c.l.b16 %v193
      %v358 = vunpack.c.h.b16 %v193
      %v359 = vunpack.c.l.b16 %v194
      %v360 = vunpack.c.h.b16 %v194
      %v361 = vunpack.c.l.b16 %v195
      %v362 = vunpack.c.h.b16 %v195
      %v363 = vunpack.c.l.b16 %v196
      %v364 = vunpack.c.h.b16 %v196
      %v365 = vunpack.c.l.b16 %v197
      %v366 = vunpack.c.l.b16 %v198
      %v367 = vunpack.c.h.b16 %v198
      %v368 = vunpack.c.l.b16 %v199
      %v369 = vunpack.c.h.b16 %v199
      %v370 = vunpack.c.l.b16 %v200
      %v371 = vunpack.c.h.b16 %v200
      %v372 = vunpack.c.l.b16 %v201
      %v373 = vunpack.c.h.b16 %v201
      %v374 = vunpack.c.l.b16 %v202
      %v375 = vpack.c.b16 %v366, %v357
      %v376 = vpack.c.b16 %v367, %v358
      %v377 = vpack.c.b16 %v368, %v359
      %v378 = vpack.c.b16 %v369, %v360
      %v379 = vpack.c.b16 %v370, %v361
      %v380 = vpack.c.b16 %v371, %v362
      %v381 = vpack.c.b16 %v372, %v363
      %v382 = vpack.c.b16 %v373, %v364
      %v383 = vpack.c.b16 %v374, %v365
      %v537 = vunpack.c.l.b16 %v203
      %v538 = vunpack.c.h.b16 %v203
      %v539 = vunpack.c.l.b16 %v204
      %v540 = vunpack.c.h.b16 %v204
      %v541 = vunpack.c.l.b16 %v205
      %v542 = vunpack.c.h.b16 %v205
      %v543 = vunpack.c.l.b16 %v206
      %v544 = vunpack.c.h.b16 %v206
      %v545 = vunpack.c.l.b16 %v207
      %v546 = vunpack.c.h.b16 %v207
      %v547 = vunpack.c.l.b16 %v208
      %v548 = vunpack.c.h.b16 %v208
      %v549 = vunpack.c.l.b16 %v209
      %v550 = vunpack.c.h.b16 %v209
      %v551 = vunpack.c.l.b16 %v210
      %v552 = vunpack.c.h.b16 %v210
      %v553 = vunpack.c.l.b16 %v211
      %v554 = vunpack.c.h.b16 %v211
      %v555 = vunpack.c.l.b16 %v212
      %v556 = vunpack.c.h.b16 %v212
      %v557 = vunpack.c.l.b16 %v213
      %v558 = vunpack.c.h.b16 %v213
      %v559 = vunpack.c.l.b16 %v214
      %v560 = vunpack.c.h.b16 %v214
      %v561 = vunpack.c.l.b16 %v215
      %v562 = vunpack.c.h.b16 %v215
      %v563 = vunpack.c.l.b16 %v216
      %v564 = vunpack.c.h.b16 %v216
      %v565 = vunpack.c.l.b16 %v217
      %v566 = vunpack.c.h.b16 %v217
      %v567 = vunpack.c.l.b16 %v218
      %v568 = vunpack.c.h.b16 %v218
      %v569 = vunpack.c.l.b16 %v219
      %v570 = vunpack.c.h.b16 %v219
      %v571 = vunpack.c.l.b16 %v220
      %v572 = vunpack.c.h.b16 %v220
      %v573 = vunpack.c.l.b16 %v221
      %v574 = vunpack.c.h.b16 %v221
      %v575 = vunpack.c.l.b16 %v222
      %v576 = vunpack.c.h.b16 %v222
      %v577 = vunpack.c.l.b16 %v223
      %v578 = vunpack.c.h.b16 %v223
      %v579 = vunpack.c.l.b16 %v224
      %v580 = vunpack.c.h.b16 %v224
      %v581 = vunpack.c.l.b16 %v225
      %v582 = vunpack.c.h.b16 %v225
      %v583 = vunpack.c.l.b16 %v226
      %v584 = vunpack.c.h.b16 %v226
      %v585 = vunpack.c.l.b16 %v227
      %v586 = vunpack.c.h.b16 %v227
      %v587 = vunpack.c.l.b16 %v228
      %v588 = vunpack.c.h.b16 %v228
      %v589 = vunpack.c.l.b16 %v229
      %v590 = vunpack.c.h.b16 %v229
      %v591 = vunpack.c.l.b16 %v230
      %v592 = vunpack.c.h.b16 %v230
      %v593 = vunpack.c.l.b16 %v231
      %v594 = vunpack.c.h.b16 %v231
      %v595 = vunpack.c.l.b16 %v232
      %v596 = vunpack.c.h.b16 %v232
      %v597 = vunpack.c.l.b16 %v233
      %v598 = vunpack.c.h.b16 %v233
      %v599 = vunpack.c.l.b16 %v234
      %v600 = vunpack.c.h.b16 %v234
      %v601 = vunpack.c.l.b16 %v235
      %v602 = vunpack.c.h.b16 %v235
      %v603 = vunpack.c.l.b16 %v236
      %v604 = vunpack.c.h.b16 %v236
      %v605 = vunpack.c.l.b16 %v237
      %v606 = vunpack.c.h.b16 %v237
      %v607 = vunpack.c.l.b16 %v238
      %v608 = vunpack.c.h.b16 %v238
      %v609 = vunpack.c.l.b16 %v239
      %v610 = vunpack.c.h.b16 %v239
      %v611 = vunpack.c.l.b16 %v240
      %v612 = vunpack.c.h.b16 %v240
      %v613 = vunpack.c.l.b16 %v241
      %v614 = vunpack.c.h.b16 %v241
      %v615 = vunpack.c.l.b16 %v242
      %v616 = vunpack.c.h.b16 %v242
      %v617 = vunpack.c.l.b16 %v243
      %v618 = vunpack.c.h.b16 %v243
      %v619 = vunpack.c.l.b16 %v244
      %v620 = vunpack.c.h.b16 %v244
      %v621 = vunpack.c.l.b16 %v245
      %v622 = vunpack.c.h.b16 %v245
      %v623 = vunpack.c.l.b16 %v246
      %v624 = vunpack.c.h.b16 %v246
      %v625 = vunpack.c.l.b16 %v247
      %v626 = vunpack.c.h.b16 %v247
      %v627 = vunpack.c.l.b16 %v248
      %v628 = vunpack.c.h.b16 %v248
      %v629 = vunpack.c.l.b16 %v249
      %v630 = vunpack.c.h.b16 %v249
      %v631 = vunpack.c.l.b16 %v250
      %v632 = vunpack.c.h.b16 %v250
      %v633 = vunpack.c.l.b16 %v251
      %v634 = vunpack.c.h.b16 %v251
      %v635 = vunpack.c.l.b16 %v252
      %v636 = vunpack.c.h.b16 %v252
      %v637 = vunpack.c.l.b16 %v253
      %v638 = vunpack.c.h.b16 %v253
      %v639 = vunpack.c.l.b16 %v254
      %v640 = vunpack.c.h.b16 %v254
      %v641 = vunpack.c.l.b16 %v255
      %v642 = vunpack.c.h.b16 %v255
      %v643 = vunpack.c.l.b16 %v256
      %v644 = vunpack.c.h.b16 %v256
      %v645 = vunpack.c.l.b16 %v257
      %v646 = vunpack.c.h.b16 %v257
      %v647 = vunpack.c.l.b16 %v258
      %v648 = vunpack.c.h.b16 %v258
      %v649 = vunpack.c.l.b16 %v259
      %v650 = vunpack.c.h.b16 %v259
      %v651 = vunpack.c.l.b16 %v260
      %v652 = vunpack.c.h.b16 %v260
      %v653 = vunpack.c.l.b16 %v261
      %v654 = vunpack.c.h.b16 %v261
      %v655 = vunpack.c.l.b16 %v262
      %v656 = vunpack.c.h.b16 %v262
      %v657 = vunpack.c.l.b16 %v263
      %v658 = vunpack.c.h.b16 %v263
      %v659 = vunpack.c.l.b16 %v264
      %v660 = vunpack.c.h.b16 %v264
      %v661 = vunpack.c.l.b16 %v265
      %v662 = vunpack.c.h.b16 %v265
      %v663 = vunpack.c.l.b16 %v266
      %v664 = vunpack.c.h.b16 %v266
      %v665 = vunpack.c.l.b16 %v267
      %v666 = vunpack.c.h.b16 %v267
      %v667 = vunpack.c.l.b16 %v268
      %v668 = vunpack.c.h.b16 %v268
      %v669 = vunpack.c.l.b16 %v269
      %v670 = vunpack.c.h.b16 %v269
      %v671 = vunpack.c.l.b16 %v270
      %v672 = vunpack.c.h.b16 %v270
      %v673 = vunpack.c.l.b16 %v271
      %v674 = vunpack.c.h.b16 %v271
      %v675 = vunpack.c.l.b16 %v272
      %v676 = vunpack.c.h.b16 %v272
      %v677 = vunpack.c.l.b16 %v273
      %v678 = vunpack.c.h.b16 %v273
      %v679 = vunpack.c.l.b16 %v274
      %v680 = vunpack.c.h.b16 %v274
      %v681 = vunpack.c.l.b16 %v275
      %v682 = vunpack.c.h.b16 %v275
      %v683 = vunpack.c.l.b16 %v276
      %v684 = vunpack.c.h.b16 %v276
      %v685 = vunpack.c.l.b16 %v277
      %v686 = vunpack.c.h.b16 %v277
      %v687 = vunpack.c.l.b16 %v278
      %v688 = vunpack.c.h.b16 %v278
      %v689 = vunpack.c.l.b16 %v279
      %v690 = vunpack.c.h.b16 %v279
      %v691 = vunpack.c.l.b16 %v280
      %v692 = vunpack.c.h.b16 %v280
      %v693 = vunpack.c.l.b16 %v281
      %v694 = vunpack.c.h.b16 %v281
      %v695 = vunpack.c.l.b16 %v282
      %v696 = vunpack.c.h.b16 %v282
      %v697 = vunpack.c.l.b16 %v283
      %v698 = vunpack.c.h.b16 %v283
      %v699 = vunpack.c.l.b16 %v284
      %v700 = vunpack.c.h.b16 %v284
      %v701 = vunpack.c.l.b16 %v285
      %v702 = vunpack.c.h.b16 %v285
      %v703 = vunpack.c.l.b16 %v286
      %v704 = vunpack.c.h.b16 %v286
      %v705 = vunpack.c.l.b16 %v287
      %v706 = vunpack.c.h.b16 %v287
      %v707 = vunpack.c.l.b16 %v288
      %v708 = vunpack.c.h.b16 %v288
      %v709 = vunpack.c.l.b16 %v289
      %v710 = vunpack.c.h.b16 %v289
      %v711 = vunpack.c.l.b16 %v290
      %v712 = vunpack.c.h.b16 %v290
      %v713 = vunpack.c.l.b16 %v291
      %v714 = vunpack.c.h.b16 %v291
      %v715 = vunpack.c.l.b16 %v292
      %v716 = vunpack.c.h.b16 %v292
      %v717 = vunpack.c.l.b16 %v293
      %v718 = vunpack.c.h.b16 %v293
      %v719 = vunpack.c.l.b16 %v294
      %v720 = vunpack.c.h.b16 %v294
      %v721 = vunpack.c.l.b16 %v295
      %v722 = vunpack.c.h.b16 %v295
      %v723 = vunpack.c.l.b16 %v296
      %v724 = vunpack.c.h.b16 %v296
      %v725 = vunpack.c.l.b16 %v297
      %v726 = vunpack.c.h.b16 %v297
      %v727 = vunpack.c.l.b16 %v298
      %v728 = vunpack.c.h.b16 %v298
      %v729 = vunpack.c.l.b16 %v299
      %v730 = vunpack.c.h.b16 %v299
      %v731 = vunpack.c.l.b16 %v300
      %v732 = vunpack.c.h.b16 %v300
      %v733 = vunpack.c.l.b16 %v301
      %v734 = vunpack.c.h.b16 %v301
      %v735 = vunpack.c.l.b16 %v302
      %v736 = vunpack.c.h.b16 %v302
      %v737 = vunpack.c.l.b16 %v303
      %v738 = vunpack.c.h.b16 %v303
      %v739 = vunpack.c.l.b16 %v304
      %v740 = vunpack.c.h.b16 %v304
      %v741 = vunpack.c.l.b16 %v305
      %v742 = vunpack.c.h.b16 %v305
      %v743 = vunpack.c.l.b16 %v306
      %v744 = vunpack.c.h.b16 %v306
      %v745 = vunpack.c.l.b16 %v307
      %v746 = vunpack.c.h.b16 %v307
      %v747 = vunpack.c.l.b16 %v308
      %v748 = vunpack.c.h.b16 %v308
      %v749 = vunpack.c.l.b16 %v309
      %v750 = vunpack.c.h.b16 %v309
      %v751 = vunpack.c.l.b16 %v310
      %v752 = vunpack.c.h.b16 %v310
      %v753 = vunpack.c.l.b16 %v311
      %v754 = vunpack.c.h.b16 %v311
      %v755 = vunpack.c.l.b16 %v312
      %v756 = vunpack.c.h.b16 %v312
      %v757 = vunpack.c.l.b16 %v313
      %v758 = vunpack.c.h.b16 %v313
      %v759 = vunpack.c.l.b16 %v314
      %v760 = vunpack.c.h.b16 %v314
      %v761 = vunpack.c.l.b16 %v315
      %v762 = vunpack.c.h.b16 %v315
      %v763 = vunpack.c.l.b16 %v316
      %v764 = vunpack.c.h.b16 %v316
      %v765 = vunpack.c.l.b16 %v317
      %v766 = vunpack.c.h.b16 %v317
      %v767 = vunpack.c.l.b16 %v318
      %v768 = vunpack.c.h.b16 %v318
      %v769 = vunpack.c.l.b16 %v319
      %v770 = vunpack.c.h.b16 %v319
      %v771 = vunpack.c.l.b16 %v320
      %v772 = vunpack.c.h.b16 %v320
      %v773 = vunpack.c.l.b16 %v321
      %v774 = vunpack.c.h.b16 %v321
      %v775 = vunpack.c.l.b16 %v322
      %v776 = vunpack.c.h.b16 %v322
      %v777 = vunpack.c.l.b16 %v323
      %v778 = vunpack.c.h.b16 %v323
      %v779 = vunpack.c.l.b16 %v324
      %v780 = vunpack.c.h.b16 %v324
      %v781 = vunpack.c.l.b16 %v325
      %v782 = vunpack.c.h.b16 %v325
      %v783 = vunpack.c.l.b16 %v326
      %v784 = vunpack.c.h.b16 %v326
      %v785 = vunpack.c.l.b16 %v327
      %v786 = vunpack.c.h.b16 %v327
      %v787 = vunpack.c.l.b16 %v328
      %v788 = vunpack.c.h.b16 %v328
      %v789 = vunpack.c.l.b16 %v329
      %v790 = vunpack.c.h.b16 %v329
      %v791 = vunpack.c.l.b16 %v330
      %v792 = vunpack.c.h.b16 %v330
      %v793 = vunpack.c.l.b16 %v331
      %v794 = vunpack.c.h.b16 %v331
      %v795 = vunpack.c.l.b16 %v332
      %v796 = vunpack.c.h.b16 %v332
      %v797 = vunpack.c.l.b16 %v333
      %v798 = vunpack.c.h.b16 %v333
      %v799 = vunpack.c.l.b16 %v334
      %v800 = vunpack.c.h.b16 %v334
      %v801 = vunpack.c.l.b16 %v335
      %v802 = vunpack.c.h.b16 %v335
      %v803 = vunpack.c.l.b16 %v336
      %v804 = vunpack.c.h.b16 %v336
      %v805 = vunpack.c.l.b16 %v337
      %v806 = vunpack.c.h.b16 %v337
      %v807 = vunpack.c.l.b16 %v338
      %v808 = vunpack.c.h.b16 %v338
      %v809 = vunpack.c.l.b16 %v339
      %v810 = vunpack.c.h.b16 %v339
      %v811 = vunpack.c.l.b16 %v340
      %v812 = vunpack.c.h.b16 %v340
      %v813 = vunpack.c.l.b16 %v341
      %v814 = vunpack.c.h.b16 %v341
      %v815 = vunpack.c.l.b16 %v342
      %v816 = vunpack.c.h.b16 %v342
      %v817 = vunpack.c.l.b16 %v343
      %v818 = vunpack.c.h.b16 %v343
      %v819 = vunpack.c.l.b16 %v344
      %v820 = vunpack.c.h.b16 %v344
      %v821 = vunpack.c.l.b16 %v345
      %v822 = vunpack.c.h.b16 %v345
      %v823 = vunpack.c.l.b16 %v346
      %v824 = vunpack.c.h.b16 %v346
      %v825 = vpack.c.b16 %v539, %v537
      %v826 = vpack.c.b16 %v540, %v538
      %v827 = vpack.c.b16 %v543, %v541
      %v828 = vpack.c.b16 %v544, %v542
      %v829 = vpack.c.b16 %v547, %v545
      %v830 = vpack.c.b16 %v548, %v546
      %v831 = vpack.c.b16 %v551, %v549
      %v832 = vpack.c.b16 %v552, %v550
      %v833 = vpack.c.b16 %v555, %v553
      %v834 = vpack.c.b16 %v556, %v554
      %v835 = vpack.c.b16 %v559, %v557
      %v836 = vpack.c.b16 %v560, %v558
      %v837 = vpack.c.b16 %v563, %v561
      %v838 = vpack.c.b16 %v564, %v562
      %v839 = vpack.c.b16 %v567, %v565
      %v840 = vpack.c.b16 %v568, %v566
      %v841 = vpack.c.b16 %v571, %v569
      %v842 = vpack.c.b16 %v572, %v570
      %v843 = vpack.c.b16 %v575, %v573
      %v844 = vpack.c.b16 %v576, %v574
      %v845 = vpack.c.b16 %v579, %v577
      %v846 = vpack.c.b16 %v580, %v578
      %v847 = vpack.c.b16 %v583, %v581
      %v848 = vpack.c.b16 %v584, %v582
      %v849 = vpack.c.b16 %v587, %v585
      %v850 = vpack.c.b16 %v588, %v586
      %v851 = vpack.c.b16 %v591, %v589
      %v852 = vpack.c.b16 %v592, %v590
      %v853 = vpack.c.b16 %v595, %v593
      %v854 = vpack.c.b16 %v596, %v594
      %v855 = vpack.c.b16 %v599, %v597
      %v856 = vpack.c.b16 %v600, %v598
      %v857 = vpack.c.b16 %v603, %v601
      %v858 = vpack.c.b16 %v604, %v602
      %v859 = vpack.c.b16 %v607, %v605
      %v860 = vpack.c.b16 %v608, %v606
      %v861 = vpack.c.b16 %v611, %v609
      %v862 = vpack.c.b16 %v612, %v610
      %v863 = vpack.c.b16 %v615, %v613
      %v864 = vpack.c.b16 %v616, %v614
      %v865 = vpack.c.b16 %v619, %v617
      %v866 = vpack.c.b16 %v620, %v618
      %v867 = vpack.c.b16 %v623, %v621
      %v868 = vpack.c.b16 %v624, %v622
      %v869 = vpack.c.b16 %v627, %v625
      %v870 = vpack.c.b16 %v628, %v626
      %v871 = vpack.c.b16 %v631, %v629
      %v872 = vpack.c.b16 %v632, %v630
      %v873 = vpack.c.b16 %v635, %v633
      %v874 = vpack.c.b16 %v636, %v634
      %v875 = vpack.c.b16 %v639, %v637
      %v876 = vpack.c.b16 %v640, %v638
      %v877 = vpack.c.b16 %v643, %v641
      %v878 = vpack.c.b16 %v644, %v642
      %v879 = vpack.c.b16 %v647, %v645
      %v880 = vpack.c.b16 %v648, %v646
      %v881 = vpack.c.b16 %v651, %v649
      %v882 = vpack.c.b16 %v652, %v650
      %v883 = vpack.c.b16 %v655, %v653
      %v884 = vpack.c.b16 %v656, %v654
      %v885 = vpack.c.b16 %v659, %v657
      %v886 = vpack.c.b16 %v660, %v658
      %v887 = vpack.c.b16 %v663, %v661
      %v888 = vpack.c.b16 %v664, %v662
      %v889 = vpack.c.b16 %v667, %v665
      %v890 = vpack.c.b16 %v668, %v666
      %v891 = vpack.c.b16 %v671, %v669
      %v892 = vpack.c.b16 %v672, %v670
      %v893 = vpack.c.b16 %v675, %v673
      %v894 = vpack.c.b16 %v676, %v674
      %v895 = vpack.c.b16 %v679, %v677
      %v896 = vpack.c.b16 %v680, %v678
      %v897 = vpack.c.b16 %v683, %v681
      %v898 = vpack.c.b16 %v684, %v682
      %v899 = vpack.c.b16 %v687, %v685
      %v900 = vpack.c.b16 %v688, %v686
      %v901 = vpack.c.b16 %v691, %v689
      %v902 = vpack.c.b16 %v692, %v690
      %v903 = vpack.c.b16 %v695, %v693
      %v904 = vpack.c.b16 %v696, %v694
      %v905 = vpack.c.b16 %v699, %v697
      %v906 = vpack.c.b16 %v700, %v698
      %v907 = vpack.c.b16 %v703, %v701
      %v908 = vpack.c.b16 %v704, %v702
      %v909 = vpack.c.b16 %v707, %v705
      %v910 = vpack.c.b16 %v708, %v706
      %v911 = vpack.c.b16 %v711, %v709
      %v912 = vpack.c.b16 %v712, %v710
      %v913 = vpack.c.b16 %v715, %v713
      %v914 = vpack.c.b16 %v716, %v714
      %v915 = vpack.c.b16 %v719, %v717
      %v916 = vpack.c.b16 %v720, %v718
      %v917 = vpack.c.b16 %v723, %v721
      %v918 = vpack.c.b16 %v724, %v722
      %v919 = vpack.c.b16 %v727, %v725
      %v920 = vpack.c.b16 %v728, %v726
      %v921 = vpack.c.b16 %v731, %v729
      %v922 = vpack.c.b16 %v732, %v730
      %v923 = vpack.c.b16 %v735, %v733
      %v924 = vpack.c.b16 %v736, %v734
      %v925 = vpack.c.b16 %v739, %v737
      %v926 = vpack.c.b16 %v740, %v738
      %v927 = vpack.c.b16 %v743, %v741
      %v928 = vpack.c.b16 %v744, %v742
      %v929 = vpack.c.b16 %v747, %v745
      %v930 = vpack.c.b16 %v748, %v746
      %v931 = vpack.c.b16 %v751, %v749
      %v932 = vpack.c.b16 %v752, %v750
      %v933 = vpack.c.b16 %v755, %v753
      %v934 = vpack.c.b16 %v756, %v754
      %v935 = vpack.c.b16 %v759, %v757
      %v936 = vpack.c.b16 %v760, %v758
      %v937 = vpack.c.b16 %v763, %v761
      %v938 = vpack.c.b16 %v764, %v762
      %v939 = vpack.c.b16 %v767, %v765
      %v940 = vpack.c.b16 %v768, %v766
      %v941 = vpack.c.b16 %v771, %v769
      %v942 = vpack.c.b16 %v772, %v770
      %v943 = vpack.c.b16 %v775, %v773
      %v944 = vpack.c.b16 %v776, %v774
      %v945 = vpack.c.b16 %v779, %v777
      %v946 = vpack.c.b16 %v780, %v778
      %v947 = vpack.c.b16 %v783, %v781
      %v948 = vpack.c.b16 %v784, %v782
      %v949 = vpack.c.b16 %v787, %v785
      %v950 = vpack.c.b16 %v788, %v786
      %v951 = vpack.c.b16 %v791, %v789
      %v952 = vpack.c.b16 %v792, %v790
      %v953 = vpack.c.b16 %v795, %v793
      %v954 = vpack.c.b16 %v796, %v794
      %v955 = vpack.c.b16 %v799, %v797
      %v956 = vpack.c.b16 %v800, %v798
      %v957 = vpack.c.b16 %v803, %v801
      %v958 = vpack.c.b16 %v804, %v802
      %v959 = vpack.c.b16 %v807, %v805
      %v960 = vpack.c.b16 %v808, %v806
      %v961 = vpack.c.b16 %v811, %v809
      %v962 = vpack.c.b16 %v812, %v810
      %v963 = vpack.c.b16 %v815, %v813
      %v964 = vpack.c.b16 %v816, %v814
      %v965 = vpack.c.b16 %v819, %v817
      %v966 = vpack.c.b16 %v820, %v818
      %v967 = vpack.c.b16 %v823, %v821
      %v968 = vpack.c.b16 %v824, %v822
      %1113 = vmatprep.subr.bf16.mxu0 %v826
      %1114 = vmatpush1.bf16.msra.mxu0 %v825
      %1115 = vmatprep.subr.bf16.mxu0 %v828
      %1116 = vmatpush1.bf16.msra.mxu0 %v827
      %1117 = vmatprep.subr.bf16.mxu0 %v830
      %1118 = vmatpush1.bf16.msra.mxu0 %v829
      %1119 = vmatprep.subr.bf16.mxu0 %v832
      %1120 = vmatpush1.bf16.msra.mxu0 %v831
      %1121 = vmatprep.subr.bf16.mxu0 %v834
      %1122 = vmatpush1.bf16.msra.mxu0 %v833
      %1123 = vmatprep.subr.bf16.mxu0 %v836
      %1124 = vmatpush1.bf16.msra.mxu0 %v835
      %1125 = vmatprep.subr.bf16.mxu0 %v838
      %1126 = vmatpush1.bf16.msra.mxu0 %v837
      %1127 = vmatprep.subr.bf16.mxu0 %v840
      %1128 = vmatpush1.bf16.msra.mxu0 %v839
      %1129 = vmatprep.subr.bf16.mxu0 %v842
      %1130 = vmatpush1.bf16.msra.mxu0 %v841
      %1131 = vmatprep.subr.bf16.mxu0 %v844
      %1132 = vmatpush1.bf16.msra.mxu0 %v843
      %1133 = vmatprep.subr.bf16.mxu0 %v846
      %1134 = vmatpush1.bf16.msra.mxu0 %v845
      %1135 = vmatprep.subr.bf16.mxu0 %v848
      %1136 = vmatpush1.bf16.msra.mxu0 %v847
      %1137 = vmatprep.subr.bf16.mxu0 %v850
      %1138 = vmatpush1.bf16.msra.mxu0 %v849
      %1139 = vmatprep.subr.bf16.mxu0 %v852
      %1140 = vmatpush1.bf16.msra.mxu0 %v851
      %1141 = vmatprep.subr.bf16.mxu0 %v854
      %1142 = vmatpush1.bf16.msra.mxu0 %v853
      %1143 = vmatprep.subr.bf16.mxu0 %v856
      %1144 = vmatpush1.bf16.msra.mxu0 %v855
      %1145 = vmatprep.mubr.bf16.mxu0 %v376
      %1146 = vmatmul.mubr.bf16.gmra.mrb[0].mxu0 %v375
      %v1147 = vpop.f32.mrb[0].mxu0
      %v1148 = vadd.f32 0.0, %v1147
      %v1149 = vpop.f32.mrb[0].mxu0
      %v1150 = vadd.f32 0.0, %v1149
      %v1151 = vpop.f32.mrb[0].mxu0
      %v1152 = vadd.f32 0.0, %v1151
      %v1153 = vpop.f32.mrb[0].mxu0
      %v1154 = vadd.f32 0.0, %v1153
      %1155 = vdwg.mxu0
      %1156 = vmatprep.subr.bf16.mxu0 %v858
      %1157 = vmatpush1.bf16.msra.mxu0 %v857
      %1158 = vmatprep.subr.bf16.mxu0 %v860
      %1159 = vmatpush1.bf16.msra.mxu0 %v859
      %1160 = vmatprep.subr.bf16.mxu0 %v862
      %1161 = vmatpush1.bf16.msra.mxu0 %v861
      %1162 = vmatprep.subr.bf16.mxu0 %v864
      %1163 = vmatpush1.bf16.msra.mxu0 %v863
      %1164 = vmatprep.subr.bf16.mxu0 %v866
      %1165 = vmatpush1.bf16.msra.mxu0 %v865
      %1166 = vmatprep.subr.bf16.mxu0 %v868
      %1167 = vmatpush1.bf16.msra.mxu0 %v867
      %1168 = vmatprep.subr.bf16.mxu0 %v870
      %1169 = vmatpush1.bf16.msra.mxu0 %v869
      %1170 = vmatprep.subr.bf16.mxu0 %v872
      %1171 = vmatpush1.bf16.msra.mxu0 %v871
      %1172 = vmatprep.subr.bf16.mxu0 %v874
      %1173 = vmatpush1.bf16.msra.mxu0 %v873
      %1174 = vmatprep.subr.bf16.mxu0 %v876
      %1175 = vmatpush1.bf16.msra.mxu0 %v875
      %1176 = vmatprep.subr.bf16.mxu0 %v878
      %1177 = vmatpush1.bf16.msra.mxu0 %v877
      %1178 = vmatprep.subr.bf16.mxu0 %v880
      %1179 = vmatpush1.bf16.msra.mxu0 %v879
      %1180 = vmatprep.subr.bf16.mxu0 %v882
      %1181 = vmatpush1.bf16.msra.mxu0 %v881
      %1182 = vmatprep.subr.bf16.mxu0 %v884
      %1183 = vmatpush1.bf16.msra.mxu0 %v883
      %1184 = vmatprep.subr.bf16.mxu0 %v886
      %1185 = vmatpush1.bf16.msra.mxu0 %v885
      %1186 = vmatprep.subr.bf16.mxu0 %v888
      %1187 = vmatpush1.bf16.msra.mxu0 %v887
      %1188 = vmatprep.mubr.bf16.mxu0 %v378
      %1189 = vmatmul.mubr.bf16.gmra.mrb[0].mxu0 %v377
      %v1190 = vpop.f32.mrb[0].mxu0
      %v1191 = vadd.f32 %v1148, %v1190
      %v1192 = vpop.f32.mrb[0].mxu0
      %v1193 = vadd.f32 %v1150, %v1192
      %v1194 = vpop.f32.mrb[0].mxu0
      %v1195 = vadd.f32 %v1152, %v1194
      %v1196 = vpop.f32.mrb[0].mxu0
      %v1197 = vadd.f32 %v1154, %v1196
      %1198 = vdwg.mxu0
      %1199 = vmatprep.subr.bf16.mxu0 %v890
      %1200 = vmatpush1.bf16.msra.mxu0 %v889
      %1201 = vmatprep.subr.bf16.mxu0 %v892
      %1202 = vmatpush1.bf16.msra.mxu0 %v891
      %1203 = vmatprep.subr.bf16.mxu0 %v894
      %1204 = vmatpush1.bf16.msra.mxu0 %v893
      %1205 = vmatprep.subr.bf16.mxu0 %v896
      %1206 = vmatpush1.bf16.msra.mxu0 %v895
      %1207 = vmatprep.subr.bf16.mxu0 %v898
      %1208 = vmatpush1.bf16.msra.mxu0 %v897
      %1209 = vmatprep.subr.bf16.mxu0 %v900
      %1210 = vmatpush1.bf16.msra.mxu0 %v899
      %1211 = vmatprep.subr.bf16.mxu0 %v902
      %1212 = vmatpush1.bf16.msra.mxu0 %v901
      %1213 = vmatprep.subr.bf16.mxu0 %v904
      %1214 = vmatpush1.bf16.msra.mxu0 %v903
      %1215 = vmatprep.subr.bf16.mxu0 %v906
      %1216 = vmatpush1.bf16.msra.mxu0 %v905
      %1217 = vmatprep.subr.bf16.mxu0 %v908
      %1218 = vmatpush1.bf16.msra.mxu0 %v907
      %1219 = vmatprep.subr.bf16.mxu0 %v910
      %1220 = vmatpush1.bf16.msra.mxu0 %v909
      %1221 = vmatprep.subr.bf16.mxu0 %v912
      %1222 = vmatpush1.bf16.msra.mxu0 %v911
      %1223 = vmatprep.subr.bf16.mxu0 %v914
      %1224 = vmatpush1.bf16.msra.mxu0 %v913
      %1225 = vmatprep.subr.bf16.mxu0 %v916
      %1226 = vmatpush1.bf16.msra.mxu0 %v915
      %1227 = vmatprep.subr.bf16.mxu0 %v918
      %1228 = vmatpush1.bf16.msra.mxu0 %v917
      %1229 = vmatprep.subr.bf16.mxu0 %v920
      %1230 = vmatpush1.bf16.msra.mxu0 %v919
      %1231 = vmatprep.mubr.bf16.mxu0 %v380
      %1232 = vmatmul.mubr.bf16.gmra.mrb[0].mxu0 %v379
      %v1233 = vpop.f32.mrb[0].mxu0
      %v1234 = vadd.f32 %v1191, %v1233
      %v1235 = vpop.f32.mrb[0].mxu0
      %v1236 = vadd.f32 %v1193, %v1235
      %v1237 = vpop.f32.mrb[0].mxu0
      %v1238 = vadd.f32 %v1195, %v1237
      %v1239 = vpop.f32.mrb[0].mxu0
      %v1240 = vadd.f32 %v1197, %v1239
      %1241 = vdwg.mxu0
      %1242 = vmatprep.subr.bf16.mxu0 %v922
      %1243 = vmatpush1.bf16.msra.mxu0 %v921
      %1244 = vmatprep.subr.bf16.mxu0 %v924
      %1245 = vmatpush1.bf16.msra.mxu0 %v923
      %1246 = vmatprep.subr.bf16.mxu0 %v926
      %1247 = vmatpush1.bf16.msra.mxu0 %v925
      %1248 = vmatprep.subr.bf16.mxu0 %v928
      %1249 = vmatpush1.bf16.msra.mxu0 %v927
      %1250 = vmatprep.subr.bf16.mxu0 %v930
      %1251 = vmatpush1.bf16.msra.mxu0 %v929
      %1252 = vmatprep.subr.bf16.mxu0 %v932
      %1253 = vmatpush1.bf16.msra.mxu0 %v931
      %1254 = vmatprep.subr.bf16.mxu0 %v934
      %1255 = vmatpush1.bf16.msra.mxu0 %v933
      %1256 = vmatprep.subr.bf16.mxu0 %v936
      %1257 = vmatpush1.bf16.msra.mxu0 %v935
      %1258 = vmatprep.subr.bf16.mxu0 %v938
      %1259 = vmatpush1.bf16.msra.mxu0 %v937
      %1260 = vmatprep.subr.bf16.mxu0 %v940
      %1261 = vmatpush1.bf16.msra.mxu0 %v939
      %1262 = vmatprep.subr.bf16.mxu0 %v942
      %1263 = vmatpush1.bf16.msra.mxu0 %v941
      %1264 = vmatprep.subr.bf16.mxu0 %v944
      %1265 = vmatpush1.bf16.msra.mxu0 %v943
      %1266 = vmatprep.subr.bf16.mxu0 %v946
      %1267 = vmatpush1.bf16.msra.mxu0 %v945
      %1268 = vmatprep.subr.bf16.mxu0 %v948
      %1269 = vmatpush1.bf16.msra.mxu0 %v947
      %1270 = vmatprep.subr.bf16.mxu0 %v950
      %1271 = vmatpush1.bf16.msra.mxu0 %v949
      %1272 = vmatprep.subr.bf16.mxu0 %v952
      %1273 = vmatpush1.bf16.msra.mxu0 %v951
      %1274 = vmatprep.mubr.bf16.mxu0 %v382
      %1275 = vmatmul.mubr.bf16.gmra.mrb[0].mxu0 %v381
      %v1276 = vpop.f32.mrb[0].mxu0
      %v1277 = vadd.f32 %v1234, %v1276
      %v1278 = vpop.f32.mrb[0].mxu0
      %v1279 = vadd.f32 %v1236, %v1278
      %v1280 = vpop.f32.mrb[0].mxu0
      %v1281 = vadd.f32 %v1238, %v1280
      %v1282 = vpop.f32.mrb[0].mxu0
      %v1283 = vadd.f32 %v1240, %v1282
      %1284 = vdwg.mxu0
      %1285 = vmatprep.subr.bf16.mxu0 %v954
      %1286 = vmatpush1.bf16.msra.mxu0 %v953
      %1287 = vmatprep.subr.bf16.mxu0 %v956
      %1288 = vmatpush1.bf16.msra.mxu0 %v955
      %1289 = vmatprep.subr.bf16.mxu0 %v958
      %1290 = vmatpush1.bf16.msra.mxu0 %v957
      %1291 = vmatprep.subr.bf16.mxu0 %v960
      %1292 = vmatpush1.bf16.msra.mxu0 %v959
      %1293 = vmatprep.subr.bf16.mxu0 %v962
      %1294 = vmatpush1.bf16.msra.mxu0 %v961
      %1295 = vmatprep.subr.bf16.mxu0 %v964
      %1296 = vmatpush1.bf16.msra.mxu0 %v963
      %1297 = vmatprep.subr.bf16.mxu0 %v966
      %1298 = vmatpush1.bf16.msra.mxu0 %v965
      %1299 = vmatprep.subr.bf16.mxu0 %v968
      %1300 = vmatpush1.bf16.msra.mxu0 %v967
      %1301 = vmatprep.subr.bf16.mxu0 0
      %1302 = vmatpush1.bf16.msra.mxu0 0
      %1303 = vmatprep.subr.bf16.mxu0 0
      %1304 = vmatpush1.bf16.msra.mxu0 0
      %1305 = vmatprep.subr.bf16.mxu0 0
      %1306 = vmatpush1.bf16.msra.mxu0 0
      %1307 = vmatprep.subr.bf16.mxu0 0
      %1308 = vmatpush1.bf16.msra.mxu0 0
      %1309 = vmatprep.subr.bf16.mxu0 0
      %1310 = vmatpush1.bf16.msra.mxu0 0
      %1311 = vmatprep.subr.bf16.mxu0 0
      %1312 = vmatpush1.bf16.msra.mxu0 0
      %1313 = vmatprep.subr.bf16.mxu0 0
      %1314 = vmatpush1.bf16.msra.mxu0 0
      %1315 = vmatprep.subr.bf16.mxu0 0
      %1316 = vmatpush1.bf16.msra.mxu0 0
      %1317 = vmatprep.mubr.bf16.mxu0 0
      %1318 = vmatmul.mubr.bf16.gmra.mrb[0].mxu0 %v383
      %v1319 = vpop.f32.mrb[0].mxu0
      %v1320 = vadd.f32 %v1277, %v1319
      %v1321 = vpop.f32.mrb[0].mxu0
      %v1322 = vadd.f32 %v1279, %v1321
      %v1323 = vpop.f32.mrb[0].mxu0
      %v1324 = vadd.f32 %v1281, %v1323
      %v1325 = vpop.f32.mrb[0].mxu0
      %v1326 = vadd.f32 %v1283, %v1325
      %1327 = vdwg.mxu0
      %v1328 = vpack.c.bf16 %v1324, %v1320
      %v1329 = vpack.c.bf16 %v1326, %v1322
      %v1332 = vunpack.c.l.b16 %v1328
      %v1333 = vunpack.c.l.b16 %v1329
      %v1334 = vunpack.c.h.b16 %v1328
      %v1335 = vunpack.c.h.b16 %v1329
      %v1336 = vpack.c.b16 %v1333, %v1332
      %v1337 = vpack.c.b16 %v1335, %v1334
      %1340 = vst [vmem:[%s185] sm:$0xff] %v1336
      %1341 = vst [vmem:[%s185 + $0x8] sm:$0xff] %v1337
      %v1342 = vadd.f32 %v1320, %v1324
      %v1343 = vrot.slane %v1342, 4
      %v1344 = vadd.f32 %v1342, %v1343
      %v1345 = vrot.slane %v1344, 2
      %v1346 = vadd.f32 %v1344, %v1345
      %v1347 = vrot.slane %v1346, 1
      %v1348 = vadd.f32 %v1346, %v1347
      %v1349 = vadd.f32 %v1322, %v1326
      %v1350 = vrot.slane %v1349, 4
      %v1351 = vadd.f32 %v1349, %v1350
      %v1352 = vrot.slane %v1351, 2
      %v1353 = vadd.f32 %v1351, %v1352
      %v1354 = vrot.slane %v1353, 1
      %v1355 = vadd.f32 %v1353, %v1354
      %v1358 = vcombine.low %v1348, %v1355
      %v1360 = vunpack.c.l.s4 1966171168
      %v1361 = vunpack.c.0.s8 %v1360
      %v1362 = vlaneseq
      %v1363 = vshrl.u32 %v1362, 7
      %v1364 = vsub.s32 %v1361, %v1363
      %v1365 = vrot.slane %v1358, %v1364
      %v1367 = vunpack.c.l.s4 1966171168
      %v1368 = vunpack.c.0.s8 %v1367
      %v1369 = vlaneseq
      %v1370 = vshrl.u32 %v1369, 7
      %v1371 = vsub.s32 %v1368, %v1370
      %v1372 = vrot.slane %v1365, %v1371
      %v1374 = vlaneseq
      %vm1375 = vcmp.ge.s32.totalorder %v1374, 0
      %vm1376 = vcmp.lt.s32.totalorder %v1374, 256
      %vm1377 = vmand %vm1375, %vm1376
      %1378 = vst.msk [vmem:[%s191] ss:$8 sm:$0x3] %vm1377, %v1372
      %1379 = vst.msk [vmem:[%s191] ss:$8 sm:$0x0] %vm1377, %v1372
      %v1380 = vmul.f32 %v1320, %v1320
      %v1381 = vmul.f32 %v1322, %v1322
      %v1382 = vmul.f32 %v1324, %v1324
      %v1383 = vmul.f32 %v1326, %v1326
      %v1384 = vadd.f32 %v1380, %v1382
      %v1385 = vrot.slane %v1384, 4
      %v1386 = vadd.f32 %v1384, %v1385
      %v1387 = vrot.slane %v1386, 2
      %v1388 = vadd.f32 %v1386, %v1387
      %v1389 = vrot.slane %v1388, 1
      %v1390 = vadd.f32 %v1388, %v1389
      %v1391 = vadd.f32 %v1381, %v1383
      %v1392 = vrot.slane %v1391, 4
      %v1393 = vadd.f32 %v1391, %v1392
      %v1394 = vrot.slane %v1393, 2
      %v1395 = vadd.f32 %v1393, %v1394
      %v1396 = vrot.slane %v1395, 1
      %v1397 = vadd.f32 %v1395, %v1396
      %v1400 = vcombine.low %v1390, %v1397
      %v1402 = vunpack.c.l.s4 1966171168
      %v1403 = vunpack.c.0.s8 %v1402
      %v1404 = vlaneseq
      %v1405 = vshrl.u32 %v1404, 7
      %v1406 = vsub.s32 %v1403, %v1405
      %v1407 = vrot.slane %v1400, %v1406
      %v1409 = vunpack.c.l.s4 1966171168
      %v1410 = vunpack.c.0.s8 %v1409
      %v1411 = vlaneseq
      %v1412 = vshrl.u32 %v1411, 7
      %v1413 = vsub.s32 %v1410, %v1412
      %v1414 = vrot.slane %v1407, %v1413
      %s1416 = scalar_lea.vmem %s191, 1
      %1417 = vst.msk [vmem:[%s1416] ss:$8 sm:$0x3] %vm1377, %v1414
      %1418 = vst.msk [vmem:[%s1416] ss:$8 sm:$0x0] %vm1377, %v1414
      %s1419 = smul.u32 2, %s15
      %p1420 = scmp.lt.s32.totalorder %s1419, 3
      %s1421 = scalar_select %p1420, %s1419, 3
      %s1422 = smul.addr %s1421, 2
      %s1423 = smul.addr %s1422, 4
      %s1424 = scalar_lea.vmem %s2, %s1423
      %p1425 = scmp.lt.s32.totalorder %s15, 1
      %s1426 = scalar_select %p1425, %s15, 1
      %s1427 = smul.addr %s1426, 2
      %s1428 = smul.addr %s1427, 8
      %s1429 = scalar_lea.vmem %s3, %s1428
      // Predicated region
      $region29: #{generator_forward.11} parent=27 // pred_check
        %p1430 = pneg %p80
      $region30: #{generator_forward.11} parent=27 // pred_check_branch
        %1432 = sbr.rel (%p1430) target = $region32
      $region31: #{generator_forward.11} parent=27 // pred_region
        %s1433 = smul.u32 2, %s15
      $region32: #{generator_forward.11} parent=27 // pred_fallthru
        _
      // Predicated region
      $region33: #{generator_forward.11} parent=27 // pred_check
        %p1434 = pneg %p106
      $region34: #{generator_forward.11} parent=27 // pred_check_branch
        %1436 = sbr.rel (%p1434) target = $region36
      $region35: #{generator_forward.11} parent=27 // pred_region
        _
      $region36: #{generator_forward.11} parent=27 // pred_fallthru
        _
    $region28: #{generator_forward.11} parent=5 // pred_fallthru
      _
    %p1437 = scmp.le.s32.totalorder 2, %s10
    // Predicated region
    $region37: #{generator_forward.11} parent=5 // pred_check
      %p1438 = pneg %p1437
    $region38: #{generator_forward.11} parent=5 // pred_check_branch
      %1440 = sbr.rel (%p1438) target = $region40
    $region39: #{generator_forward.11} parent=5 // pred_region
      %s1441 = ssub.s32 %s10, 2
      // Predicated region
      $region41: #{generator_forward.11} parent=39 // pred_check
        %p1442 = pneg %p86
      $region42: #{generator_forward.11} parent=39 // pred_check_branch
        %1444 = sbr.rel (%p1442) target = $region44
      $region43: #{generator_forward.11} parent=39 // pred_region
        %s1445 = smul.u32 2, %s16
        %p1446 = scmp.lt.s32.totalorder %s1445, 3
        %s1447 = scalar_select %p1446, %s1445, 3
        %s1448 = smul.addr %s1447, 2
        %s1449 = smul.addr %s1448, 4
        %s1450 = scalar_lea.vmem %s2, %s1449
      $region44: #{generator_forward.11} parent=39 // pred_fallthru
        _
      // Predicated region
      $region45: #{generator_forward.11} parent=39 // pred_check
        %p1451 = pneg %p112
      $region46: #{generator_forward.11} parent=39 // pred_check_branch
        %1453 = sbr.rel (%p1451) target = $region48
      $region47: #{generator_forward.11} parent=39 // pred_region
        %p1454 = scmp.lt.s32.totalorder %s16, 1
        %s1455 = scalar_select %p1454, %s16, 1
        %s1456 = smul.addr %s1455, 2
        %s1457 = smul.addr %s1456, 8
        %s1458 = scalar_lea.vmem %s3, %s1457
      $region48: #{generator_forward.11} parent=39 // pred_fallthru
        _
    $region40: #{generator_forward.11} parent=5 // pred_fallthru
      _
  $region6: #{generator_forward.11} parent=0 // loop_footer
    %s14 = sadd.s32 1, %s10
  $region7: #{generator_forward.11} parent=0 // loop_footer_branch
    %9 = sbr.rel target = $region3
  $region8: #{generator_forward.11} parent=0 // loop_exit
    _

// kernel: generator_forward.13
$region0: #{generator_forward.13}
  #allocation0 [shape = 'u32[]', space=smem, size = 0x4, offset = 0x4, fixed_abs, tag = 'smem constant byte address 0x4 - core index']
  #allocation1 [shape = 'u32[144,128]{1,0:T(1,128)}', space=vmem, size = 0x12000, scoped, tag = 'internal scratch']
  %s0 = inlined_call_operand.vmem [shape: bf16[128,576], index: 0, kind: input, shape index: {}]
  %s1 = inlined_call_operand.vmem [shape: bf16[576,128], index: 1, kind: input, shape index: {}]
  %s2 = inlined_call_operand.vmem [shape: bf16[128,128], index: 2, kind: output, shape index: {0}]
  %s3 = inlined_call_operand.vmem [shape: f32[16,128], index: 3, kind: output, shape index: {1}]
  %4 = xla_tuple %s2, %s3
  %s5 = sld [smem:[#allocation0]]
  $region49: #{generator_forward.13} parent=0
    _
  %s7 = ssub.s32 1, %s5
  %s8 = scalar_select 0, %s7, %s5
  loop: start=0, step=1, limit=4
  $region2: #{generator_forward.13} parent=0 // loop_pre_header
    _
  $region3: #{generator_forward.13} parent=0 // loop_header
    %s10 = sphi 0, %s14
    %p11 = scmp.ge.s32.totalorder %s10, 4
    %s20 = sphi 0, %s22
    %s23 = sphi 0, %s20
    %s24 = sphi 0, %s23
    %s40 = sphi 0, %s24
    %s44 = sphi 0, %s44
    %s46 = sphi 0, %s44
    %s47 = sphi 0, %s46
    %s61 = sphi 0, %s47
    %s67 = sphi 0, %s69
    %s70 = sphi 0, %s67
    %s71 = sphi 0, %s70
    %s87 = sphi 0, %s71
    %s93 = sphi 0, %s95
    %s96 = sphi 0, %s93
    %s97 = sphi 0, %s96
    %s113 = sphi 0, %s97
  $region4: #{generator_forward.13} parent=0 // loop_header_branch
    %13 = sbr.rel (%p11) target = $region8
  $region5: #{generator_forward.13} parent=0 // loop_body
    %s15 = ssub.s32 %s10, 1
    %s16 = ssub.s32 %s10, 2
    %s17 = sadd.s32 %s10, 1
    %s18 = ssub.s32 %s10, %s17
    %p19 = scmp.eq.s32.totalorder %s18, 0
    %s21 = sadd.s32 %s20, 1
    %s22 = scalar_select %p19, %s20, %s21
    %p25 = pneg %p19
    %p26 = scmp.eq.s32.totalorder %s10, 1
    %p27 = por %p25, %p26
    %p28 = scmp.ne.s32.totalorder %s20, %s23
    %p29 = scmp.eq.s32.totalorder %s10, 0
    %p30 = por %p28, %p29
    %p31 = scmp.ne.s32.totalorder %s20, %s23
    %p32 = scmp.eq.s32.totalorder %s15, 1
    %p33 = por %p31, %p32
    %p34 = scmp.ne.s32.totalorder %s23, %s24
    %p35 = scmp.eq.s32.totalorder %s15, 0
    %p36 = por %p34, %p35
    %p37 = scmp.ne.s32.totalorder %s23, %s24
    %p38 = scmp.eq.s32.totalorder %s16, 1
    %p39 = por %p37, %p38
    %p41 = scmp.ne.s32.totalorder %s24, %s40
    %p42 = scmp.eq.s32.totalorder %s16, 0
    %p43 = por %p41, %p42
    %s45 = sadd.s32 %s44, 1
    %p48 = scmp.eq.s32.totalorder %s10, 1
    %p49 = scmp.ne.s32.totalorder %s44, %s46
    %p50 = scmp.eq.s32.totalorder %s10, 0
    %p51 = por %p49, %p50
    %p52 = scmp.ne.s32.totalorder %s44, %s46
    %p53 = scmp.eq.s32.totalorder %s15, 1
    %p54 = por %p52, %p53
    %p55 = scmp.ne.s32.totalorder %s46, %s47
    %p56 = scmp.eq.s32.totalorder %s15, 0
    %p57 = por %p55, %p56
    %p58 = scmp.ne.s32.totalorder %s46, %s47
    %p59 = scmp.eq.s32.totalorder %s16, 1
    %p60 = por %p58, %p59
    %p62 = scmp.ne.s32.totalorder %s47, %s61
    %p63 = scmp.eq.s32.totalorder %s16, 0
    %p64 = por %p62, %p63
    %s65 = ssub.s32 %s10, %s17
    %p66 = scmp.eq.s32.totalorder %s65, 0
    %s68 = sadd.s32 %s67, 1
    %s69 = scalar_select %p66, %s67, %s68
    %p72 = pneg %p66
    %p73 = scmp.eq.s32.totalorder %s10, 1
    %p74 = por %p72, %p73
    %p75 = scmp.ne.s32.totalorder %s67, %s70
    %p76 = scmp.eq.s32.totalorder %s10, 0
    %p77 = por %p75, %p76
    %p78 = scmp.ne.s32.totalorder %s67, %s70
    %p79 = scmp.eq.s32.totalorder %s15, 1
    %p80 = por %p78, %p79
    %p81 = scmp.ne.s32.totalorder %s70, %s71
    %p82 = scmp.eq.s32.totalorder %s15, 0
    %p83 = por %p81, %p82
    %p84 = scmp.ne.s32.totalorder %s70, %s71
    %p85 = scmp.eq.s32.totalorder %s16, 1
    %p86 = por %p84, %p85
    %p88 = scmp.ne.s32.totalorder %s71, %s87
    %p89 = scmp.eq.s32.totalorder %s16, 0
    %p90 = por %p88, %p89
    %s91 = ssub.s32 %s10, %s17
    %p92 = scmp.eq.s32.totalorder %s91, 0
    %s94 = sadd.s32 %s93, 1
    %s95 = scalar_select %p92, %s93, %s94
    %p98 = pneg %p92
    %p99 = scmp.eq.s32.totalorder %s10, 1
    %p100 = por %p98, %p99
    %p101 = scmp.ne.s32.totalorder %s93, %s96
    %p102 = scmp.eq.s32.totalorder %s10, 0
    %p103 = por %p101, %p102
    %p104 = scmp.ne.s32.totalorder %s93, %s96
    %p105 = scmp.eq.s32.totalorder %s15, 1
    %p106 = por %p104, %p105
    %p107 = scmp.ne.s32.totalorder %s96, %s97
    %p108 = scmp.eq.s32.totalorder %s15, 0
    %p109 = por %p107, %p108
    %p110 = scmp.ne.s32.totalorder %s96, %s97
    %p111 = scmp.eq.s32.totalorder %s16, 1
    %p112 = por %p110, %p111
    %p114 = scmp.ne.s32.totalorder %s97, %s113
    %p115 = scmp.eq.s32.totalorder %s16, 0
    %p116 = por %p114, %p115
    %p117 = scmp.le.s32.totalorder 1, %s10
    %p118 = scmp.lt.s32.totalorder %s10, 3
    %p119 = pnand %p117, %p118
    %p120 = pneg %p119
    // Predicated region
    $region9: #{generator_forward.13} parent=5 // pred_check
      _
    $region10: #{generator_forward.13} parent=5 // pred_check_branch
      %122 = sbr.rel (%p119) target = $region12
    $region11: #{generator_forward.13} parent=5 // pred_region
      %s123 = ssub.s32 %s10, 1
      // Predicated region
      $region13: #{generator_forward.13} parent=11 // pred_check
        %p124 = pneg %p57
      $region14: #{generator_forward.13} parent=11 // pred_check_branch
        %126 = sbr.rel (%p124) target = $region16
      $region15: #{generator_forward.13} parent=11 // pred_region
        _
      $region16: #{generator_forward.13} parent=11 // pred_fallthru
        _
    $region12: #{generator_forward.13} parent=5 // pred_fallthru
      _
    %p127 = scmp.lt.s32.totalorder %s10, 2
    // Predicated region
    $region17: #{generator_forward.13} parent=5 // pred_check
      %p128 = pneg %p127
    $region18: #{generator_forward.13} parent=5 // pred_check_branch
      %130 = sbr.rel (%p128) target = $region20
    $region19: #{generator_forward.13} parent=5 // pred_region
      // Predicated region
      $region21: #{generator_forward.13} parent=19 // pred_check
        %p131 = pneg %p30
      $region22: #{generator_forward.13} parent=19 // pred_check_branch
        %133 = sbr.rel (%p131) target = $region24
      $region23: #{generator_forward.13} parent=19 // pred_region
        %s134 = smul.u32 8, %s10
        %p135 = scmp.lt.s32.totalorder %s134, 15
        %s136 = scalar_select %p135, %s134, 15
        %s137 = smul.addr %s136, 5
        %s138 = smul.addr %s137, 4
        %s139 = scalar_lea.vmem %s0, %s138
        %s140 = smul.u32 8, %s10
      $region24: #{generator_forward.13} parent=19 // pred_fallthru
        _
    $region20: #{generator_forward.13} parent=5 // pred_fallthru
      _
    %p141 = scmp.le.s32.totalorder 1, %s10
    %p142 = scmp.lt.s32.totalorder %s10, 3
    %p143 = pnand %p141, %p142
    %p144 = pneg %p143
    // Predicated region
    $region25: #{generator_forward.13} parent=5 // pred_check
      _
    $region26: #{generator_forward.13} parent=5 // pred_check_branch
      %146 = sbr.rel (%p143) target = $region28
    $region27: #{generator_forward.13} parent=5 // pred_region
      %s147 = ssub.s32 %s10, 1
      %s148 = smul.u32 8, %s15
      %p149 = scmp.lt.s32.totalorder %s148, 15
      %s150 = scalar_select %p149, %s148, 15
      %s151 = smul.addr %s150, 5
      %s152 = smul.addr %s151, 4
      %s153 = scalar_lea.vmem %s0, %s152
      %p154 = pneg %p36
      %p155 = pneg %p33
      %p156 = pneg %p57
      %p157 = pneg %p54
      %p158 = pneg %p83
      %p159 = pneg %p80
      %s160 = smul.u32 8, %s15
      %p161 = scmp.lt.s32.totalorder %s160, 15
      %s162 = scalar_select %p161, %s160, 15
      %s163 = smul.addr %s162, 4
      %s164 = scalar_lea.vmem %s2, %s163
      %p165 = pneg %p109
      %p166 = pneg %p106
      %p167 = scmp.lt.s32.totalorder %s15, 1
      %s168 = scalar_select %p167, %s15, 1
      %s169 = smul.addr %s168, 8
      %s170 = scalar_lea.vmem %s3, %s169
      %s171 = smul.u32 8, %s15
      %p172 = scmp.lt.s32.totalorder %s171, 15
      %s173 = scalar_select %p172, %s171, 15
      %s174 = smul.addr %s173, 5
      %s175 = smul.addr %s174, 4
      %s176 = scalar_lea.vmem %s0, %s175
      %s177 = smul.u32 8, %s15
      %s178 = smul.u32 8, %s15
      %p179 = scmp.lt.s32.totalorder %s178, 15
      %s180 = scalar_select %p179, %s178, 15
      %s181 = smul.addr %s180, 4
      %s182 = scalar_lea.vmem %s2, %s181
      %s183 = smul.u32 8, %s15
      %p184 = scmp.lt.s32.totalorder %s15, 1
      %s185 = scalar_select %p184, %s15, 1
      %s186 = smul.addr %s185, 8
      %s187 = scalar_lea.vmem %s3, %s186
      %v189 = vld [vmem:[%s176] sm:$0xff]
      %v190 = vld [vmem:[%s176 + $0x8] sm:$0xff]
      %v191 = vld [vmem:[%s176 + $0x10] sm:$0xf]
      %v192 = vld [vmem:[%s176 + $0x14] sm:$0xff]
      %v193 = vld [vmem:[%s176 + $0x1c] sm:$0xff]
      %v194 = vld [vmem:[%s176 + $0x24] sm:$0xf]
      %v195 = vld [vmem:[%s176 + $0x28] sm:$0xff]
      %v196 = vld [vmem:[%s176 + $0x30] sm:$0xff]
      %v197 = vld [vmem:[%s176 + $0x38] sm:$0xf]
      %v198 = vld [vmem:[%s176 + $0x3c] sm:$0xff]
      %v199 = vld [vmem:[%s176 + $0x44] sm:$0xff]
      %v200 = vld [vmem:[%s176 + $0x4c] sm:$0xf]
      %v201 = vld [vmem:[%s176 + $0x50] sm:$0xff]
      %v202 = vld [vmem:[%s176 + $0x58] sm:$0xff]
      %v203 = vld [vmem:[%s176 + $0x60] sm:$0xf]
      %v204 = vld [vmem:[%s176 + $0x64] sm:$0xff]
      %v205 = vld [vmem:[%s176 + $0x6c] sm:$0xff]
      %v206 = vld [vmem:[%s176 + $0x74] sm:$0xf]
      %v207 = vld [vmem:[%s176 + $0x78] sm:$0xff]
      %v208 = vld [vmem:[%s176 + $0x80] sm:$0xff]
      %v209 = vld [vmem:[%s176 + $0x88] sm:$0xf]
      %v210 = vld [vmem:[%s176 + $0x8c] sm:$0xff]
      %v211 = vld [vmem:[%s176 + $0x94] sm:$0xff]
      %v212 = vld [vmem:[%s176 + $0x9c] sm:$0xf]
      %v213 = vld [vmem:[%s1] sm:$0xf]
      %v214 = vld [vmem:[%s1 + $0x4] sm:$0xf]
      %v215 = vld [vmem:[%s1 + $0x8] sm:$0xf]
      %v216 = vld [vmem:[%s1 + $0xc] sm:$0xf]
      %v217 = vld [vmem:[%s1 + $0x10] sm:$0xf]
      %v218 = vld [vmem:[%s1 + $0x14] sm:$0xf]
      %v219 = vld [vmem:[%s1 + $0x18] sm:$0xf]
      %v220 = vld [vmem:[%s1 + $0x1c] sm:$0xf]
      %v221 = vld [vmem:[%s1 + $0x20] sm:$0xf]
      %v222 = vld [vmem:[%s1 + $0x24] sm:$0xf]
      %v223 = vld [vmem:[%s1 + $0x28] sm:$0xf]
      %v224 = vld [vmem:[%s1 + $0x2c] sm:$0xf]
      %v225 = vld [vmem:[%s1 + $0x30] sm:$0xf]
      %v226 = vld [vmem:[%s1 + $0x34] sm:$0xf]
      %v227 = vld [vmem:[%s1 + $0x38] sm:$0xf]
      %v228 = vld [vmem:[%s1 + $0x3c] sm:$0xf]
      %v229 = vld [vmem:[%s1 + $0x40] sm:$0xf]
      %v230 = vld [vmem:[%s1 + $0x44] sm:$0xf]
      %v231 = vld [vmem:[%s1 + $0x48] sm:$0xf]
      %v232 = vld [vmem:[%s1 + $0x4c] sm:$0xf]
      %v233 = vld [vmem:[%s1 + $0x50] sm:$0xf]
      %v234 = vld [vmem:[%s1 + $0x54] sm:$0xf]
      %v235 = vld [vmem:[%s1 + $0x58] sm:$0xf]
      %v236 = vld [vmem:[%s1 + $0x5c] sm:$0xf]
      %v237 = vld [vmem:[%s1 + $0x60] sm:$0xf]
      %v238 = vld [vmem:[%s1 + $0x64] sm:$0xf]
      %v239 = vld [vmem:[%s1 + $0x68] sm:$0xf]
      %v240 = vld [vmem:[%s1 + $0x6c] sm:$0xf]
      %v241 = vld [vmem:[%s1 + $0x70] sm:$0xf]
      %v242 = vld [vmem:[%s1 + $0x74] sm:$0xf]
      %v243 = vld [vmem:[%s1 + $0x78] sm:$0xf]
      %v244 = vld [vmem:[%s1 + $0x7c] sm:$0xf]
      %v245 = vld [vmem:[%s1 + $0x80] sm:$0xf]
      %v246 = vld [vmem:[%s1 + $0x84] sm:$0xf]
      %v247 = vld [vmem:[%s1 + $0x88] sm:$0xf]
      %v248 = vld [vmem:[%s1 + $0x8c] sm:$0xf]
      %v249 = vld [vmem:[%s1 + $0x90] sm:$0xf]
      %v250 = vld [vmem:[%s1 + $0x94] sm:$0xf]
      %v251 = vld [vmem:[%s1 + $0x98] sm:$0xf]
      %v252 = vld [vmem:[%s1 + $0x9c] sm:$0xf]
      %v253 = vld [vmem:[%s1 + $0xa0] sm:$0xf]
      %v254 = vld [vmem:[%s1 + $0xa4] sm:$0xf]
      %v255 = vld [vmem:[%s1 + $0xa8] sm:$0xf]
      %v256 = vld [vmem:[%s1 + $0xac] sm:$0xf]
      %v257 = vld [vmem:[%s1 + $0xb0] sm:$0xf]
      %v258 = vld [vmem:[%s1 + $0xb4] sm:$0xf]
      %v259 = vld [vmem:[%s1 + $0xb8] sm:$0xf]
      %v260 = vld [vmem:[%s1 + $0xbc] sm:$0xf]
      %v261 = vld [vmem:[%s1 + $0xc0] sm:$0xf]
      %v262 = vld [vmem:[%s1 + $0xc4] sm:$0xf]
      %v263 = vld [vmem:[%s1 + $0xc8] sm:$0xf]
      %v264 = vld [vmem:[%s1 + $0xcc] sm:$0xf]
      %v265 = vld [vmem:[%s1 + $0xd0] sm:$0xf]
      %v266 = vld [vmem:[%s1 + $0xd4] sm:$0xf]
      %v267 = vld [vmem:[%s1 + $0xd8] sm:$0xf]
      %v268 = vld [vmem:[%s1 + $0xdc] sm:$0xf]
      %v269 = vld [vmem:[%s1 + $0xe0] sm:$0xf]
      %v270 = vld [vmem:[%s1 + $0xe4] sm:$0xf]
      %v271 = vld [vmem:[%s1 + $0xe8] sm:$0xf]
      %v272 = vld [vmem:[%s1 + $0xec] sm:$0xf]
      %v273 = vld [vmem:[%s1 + $0xf0] sm:$0xf]
      %v274 = vld [vmem:[%s1 + $0xf4] sm:$0xf]
      %v275 = vld [vmem:[%s1 + $0xf8] sm:$0xf]
      %v276 = vld [vmem:[%s1 + $0xfc] sm:$0xf]
      %v277 = vld [vmem:[%s1 + $0x100] sm:$0xf]
      %v278 = vld [vmem:[%s1 + $0x104] sm:$0xf]
      %v279 = vld [vmem:[%s1 + $0x108] sm:$0xf]
      %v280 = vld [vmem:[%s1 + $0x10c] sm:$0xf]
      %v281 = vld [vmem:[%s1 + $0x110] sm:$0xf]
      %v282 = vld [vmem:[%s1 + $0x114] sm:$0xf]
      %v283 = vld [vmem:[%s1 + $0x118] sm:$0xf]
      %v284 = vld [vmem:[%s1 + $0x11c] sm:$0xf]
      %v309 = vunpack.c.l.b16 %v189
      %v310 = vunpack.c.h.b16 %v189
      %v311 = vunpack.c.l.b16 %v190
      %v312 = vunpack.c.h.b16 %v190
      %v313 = vunpack.c.l.b16 %v191
      %v314 = vunpack.c.l.b16 %v192
      %v315 = vunpack.c.h.b16 %v192
      %v316 = vunpack.c.l.b16 %v193
      %v317 = vunpack.c.h.b16 %v193
      %v318 = vunpack.c.l.b16 %v194
      %v319 = vunpack.c.l.b16 %v195
      %v320 = vunpack.c.h.b16 %v195
      %v321 = vunpack.c.l.b16 %v196
      %v322 = vunpack.c.h.b16 %v196
      %v323 = vunpack.c.l.b16 %v197
      %v324 = vunpack.c.l.b16 %v198
      %v325 = vunpack.c.h.b16 %v198
      %v326 = vunpack.c.l.b16 %v199
      %v327 = vunpack.c.h.b16 %v199
      %v328 = vunpack.c.l.b16 %v200
      %v329 = vunpack.c.l.b16 %v201
      %v330 = vunpack.c.h.b16 %v201
      %v331 = vunpack.c.l.b16 %v202
      %v332 = vunpack.c.h.b16 %v202
      %v333 = vunpack.c.l.b16 %v203
      %v334 = vunpack.c.l.b16 %v204
      %v335 = vunpack.c.h.b16 %v204
      %v336 = vunpack.c.l.b16 %v205
      %v337 = vunpack.c.h.b16 %v205
      %v338 = vunpack.c.l.b16 %v206
      %v339 = vunpack.c.l.b16 %v207
      %v340 = vunpack.c.h.b16 %v207
      %v341 = vunpack.c.l.b16 %v208
      %v342 = vunpack.c.h.b16 %v208
      %v343 = vunpack.c.l.b16 %v209
      %v344 = vunpack.c.l.b16 %v210
      %v345 = vunpack.c.h.b16 %v210
      %v346 = vunpack.c.l.b16 %v211
      %v347 = vunpack.c.h.b16 %v211
      %v348 = vunpack.c.l.b16 %v212
      %v349 = vpack.c.b16 %v314, %v309
      %v350 = vpack.c.b16 %v315, %v310
      %v351 = vpack.c.b16 %v316, %v311
      %v352 = vpack.c.b16 %v317, %v312
      %v353 = vpack.c.b16 %v318, %v313
      %v354 = vpack.c.b16 %v324, %v319
      %v355 = vpack.c.b16 %v325, %v320
      %v356 = vpack.c.b16 %v326, %v321
      %v357 = vpack.c.b16 %v327, %v322
      %v358 = vpack.c.b16 %v328, %v323
      %v359 = vpack.c.b16 %v334, %v329
      %v360 = vpack.c.b16 %v335, %v330
      %v361 = vpack.c.b16 %v336, %v331
      %v362 = vpack.c.b16 %v337, %v332
      %v363 = vpack.c.b16 %v338, %v333
      %v364 = vpack.c.b16 %v344, %v339
      %v365 = vpack.c.b16 %v345, %v340
      %v366 = vpack.c.b16 %v346, %v341
      %v367 = vpack.c.b16 %v347, %v342
      %v368 = vpack.c.b16 %v348, %v343
      %v457 = vunpack.c.l.b16 %v213
      %v458 = vunpack.c.l.b16 %v214
      %v459 = vunpack.c.l.b16 %v215
      %v460 = vunpack.c.l.b16 %v216
      %v461 = vunpack.c.l.b16 %v217
      %v462 = vunpack.c.l.b16 %v218
      %v463 = vunpack.c.l.b16 %v219
      %v464 = vunpack.c.l.b16 %v220
      %v465 = vunpack.c.l.b16 %v221
      %v466 = vunpack.c.l.b16 %v222
      %v467 = vunpack.c.l.b16 %v223
      %v468 = vunpack.c.l.b16 %v224
      %v469 = vunpack.c.l.b16 %v225
      %v470 = vunpack.c.l.b16 %v226
      %v471 = vunpack.c.l.b16 %v227
      %v472 = vunpack.c.l.b16 %v228
      %v473 = vunpack.c.l.b16 %v229
      %v474 = vunpack.c.l.b16 %v230
      %v475 = vunpack.c.l.b16 %v231
      %v476 = vunpack.c.l.b16 %v232
      %v477 = vunpack.c.l.b16 %v233
      %v478 = vunpack.c.l.b16 %v234
      %v479 = vunpack.c.l.b16 %v235
      %v480 = vunpack.c.l.b16 %v236
      %v481 = vunpack.c.l.b16 %v237
      %v482 = vunpack.c.l.b16 %v238
      %v483 = vunpack.c.l.b16 %v239
      %v484 = vunpack.c.l.b16 %v240
      %v485 = vunpack.c.l.b16 %v241
      %v486 = vunpack.c.l.b16 %v242
      %v487 = vunpack.c.l.b16 %v243
      %v488 = vunpack.c.l.b16 %v244
      %v489 = vunpack.c.l.b16 %v245
      %v490 = vunpack.c.l.b16 %v246
      %v491 = vunpack.c.l.b16 %v247
      %v492 = vunpack.c.l.b16 %v248
      %v493 = vunpack.c.l.b16 %v249
      %v494 = vunpack.c.l.b16 %v250
      %v495 = vunpack.c.l.b16 %v251
      %v496 = vunpack.c.l.b16 %v252
      %v497 = vunpack.c.l.b16 %v253
      %v498 = vunpack.c.l.b16 %v254
      %v499 = vunpack.c.l.b16 %v255
      %v500 = vunpack.c.l.b16 %v256
      %v501 = vunpack.c.l.b16 %v257
      %v502 = vunpack.c.l.b16 %v258
      %v503 = vunpack.c.l.b16 %v259
      %v504 = vunpack.c.l.b16 %v260
      %v505 = vunpack.c.l.b16 %v261
      %v506 = vunpack.c.l.b16 %v262
      %v507 = vunpack.c.l.b16 %v263
      %v508 = vunpack.c.l.b16 %v264
      %v509 = vunpack.c.l.b16 %v265
      %v510 = vunpack.c.l.b16 %v266
      %v511 = vunpack.c.l.b16 %v267
      %v512 = vunpack.c.l.b16 %v268
      %v513 = vunpack.c.l.b16 %v269
      %v514 = vunpack.c.l.b16 %v270
      %v515 = vunpack.c.l.b16 %v271
      %v516 = vunpack.c.l.b16 %v272
      %v517 = vunpack.c.l.b16 %v273
      %v518 = vunpack.c.l.b16 %v274
      %v519 = vunpack.c.l.b16 %v275
      %v520 = vunpack.c.l.b16 %v276
      %v521 = vunpack.c.l.b16 %v277
      %v522 = vunpack.c.l.b16 %v278
      %v523 = vunpack.c.l.b16 %v279
      %v524 = vunpack.c.l.b16 %v280
      %v525 = vunpack.c.l.b16 %v281
      %v526 = vunpack.c.l.b16 %v282
      %v527 = vunpack.c.l.b16 %v283
      %v528 = vunpack.c.l.b16 %v284
      %v529 = vpack.c.b16 %v458, %v457
      %v530 = vpack.c.b16 %v460, %v459
      %v531 = vpack.c.b16 %v462, %v461
      %v532 = vpack.c.b16 %v464, %v463
      %v533 = vpack.c.b16 %v466, %v465
      %v534 = vpack.c.b16 %v468, %v467
      %v535 = vpack.c.b16 %v470, %v469
      %v536 = vpack.c.b16 %v472, %v471
      %v537 = vpack.c.b16 %v474, %v473
      %v538 = vpack.c.b16 %v476, %v475
      %v539 = vpack.c.b16 %v478, %v477
      %v540 = vpack.c.b16 %v480, %v479
      %v541 = vpack.c.b16 %v482, %v481
      %v542 = vpack.c.b16 %v484, %v483
      %v543 = vpack.c.b16 %v486, %v485
      %v544 = vpack.c.b16 %v488, %v487
      %v545 = vpack.c.b16 %v490, %v489
      %v546 = vpack.c.b16 %v492, %v491
      %v547 = vpack.c.b16 %v494, %v493
      %v548 = vpack.c.b16 %v496, %v495
      %v549 = vpack.c.b16 %v498, %v497
      %v550 = vpack.c.b16 %v500, %v499
      %v551 = vpack.c.b16 %v502, %v501
      %v552 = vpack.c.b16 %v504, %v503
      %v553 = vpack.c.b16 %v506, %v505
      %v554 = vpack.c.b16 %v508, %v507
      %v555 = vpack.c.b16 %v510, %v509
      %v556 = vpack.c.b16 %v512, %v511
      %v557 = vpack.c.b16 %v514, %v513
      %v558 = vpack.c.b16 %v516, %v515
      %v559 = vpack.c.b16 %v518, %v517
      %v560 = vpack.c.b16 %v520, %v519
      %v561 = vpack.c.b16 %v522, %v521
      %v562 = vpack.c.b16 %v524, %v523
      %v563 = vpack.c.b16 %v526, %v525
      %v564 = vpack.c.b16 %v528, %v527
      %vm601 = vcmask 523264
      %v603 = vsel %vm601, %v353, 0
      %v606 = vsel %vm601, %v358, 0
      %v609 = vsel %vm601, %v363, 0
      %v612 = vsel %vm601, %v368, 0
      %614 = vmatprep.subr.bf16.mxu0 0
      %615 = vmatpush1.bf16.msra.mxu0 %v529
      %616 = vmatprep.subr.bf16.mxu0 0
      %617 = vmatpush1.bf16.msra.mxu0 %v530
      %618 = vmatprep.subr.bf16.mxu0 0
      %619 = vmatpush1.bf16.msra.mxu0 %v531
      %620 = vmatprep.subr.bf16.mxu0 0
      %621 = vmatpush1.bf16.msra.mxu0 %v532
      %622 = vmatprep.subr.bf16.mxu0 0
      %623 = vmatpush1.bf16.msra.mxu0 %v533
      %624 = vmatprep.subr.bf16.mxu0 0
      %625 = vmatpush1.bf16.msra.mxu0 %v534
      %626 = vmatprep.subr.bf16.mxu0 0
      %627 = vmatpush1.bf16.msra.mxu0 %v535
      %628 = vmatprep.subr.bf16.mxu0 0
      %629 = vmatpush1.bf16.msra.mxu0 %v536
      %630 = vmatprep.subr.bf16.mxu0 0
      %631 = vmatpush1.bf16.msra.mxu0 %v537
      %632 = vmatprep.subr.bf16.mxu0 0
      %633 = vmatpush1.bf16.msra.mxu0 %v538
      %634 = vmatprep.subr.bf16.mxu0 0
      %635 = vmatpush1.bf16.msra.mxu0 %v539
      %636 = vmatprep.subr.bf16.mxu0 0
      %637 = vmatpush1.bf16.msra.mxu0 %v540
      %638 = vmatprep.subr.bf16.mxu0 0
      %639 = vmatpush1.bf16.msra.mxu0 %v541
      %640 = vmatprep.subr.bf16.mxu0 0
      %641 = vmatpush1.bf16.msra.mxu0 %v542
      %642 = vmatprep.subr.bf16.mxu0 0
      %643 = vmatpush1.bf16.msra.mxu0 %v543
      %644 = vmatprep.subr.bf16.mxu0 0
      %645 = vmatpush1.bf16.msra.mxu0 %v544
      %646 = vmatprep.mubr.bf16.mxu0 %v350
      %647 = vmatmul.mubr.bf16.gmra.mrb[0].mxu0 %v349
      %v648 = vpop.f32.mrb[0].mxu0
      %v649 = vadd.f32 0.0, %v648
      %v650 = vpop.f32.mrb[0].mxu0
      %v651 = vpop.f32.mrb[0].mxu0
      %v652 = vadd.f32 0.0, %v651
      %v653 = vpop.f32.mrb[0].mxu0
      %654 = vmatprep.mubr.bf16.mxu0 %v355
      %655 = vmatmul.mubr.bf16.gmra.mrb[0].mxu0 %v354
      %v656 = vpop.f32.mrb[0].mxu0
      %v657 = vadd.f32 0.0, %v656
      %v658 = vpop.f32.mrb[0].mxu0
      %v659 = vpop.f32.mrb[0].mxu0
      %v660 = vadd.f32 0.0, %v659
      %v661 = vpop.f32.mrb[0].mxu0
      %662 = vmatprep.mubr.bf16.mxu0 %v360
      %663 = vmatmul.mubr.bf16.gmra.mrb[0].mxu0 %v359
      %v664 = vpop.f32.mrb[0].mxu0
      %v665 = vadd.f32 0.0, %v664
      %v666 = vpop.f32.mrb[0].mxu0
      %v667 = vpop.f32.mrb[0].mxu0
      %v668 = vadd.f32 0.0, %v667
      %v669 = vpop.f32.mrb[0].mxu0
      %670 = vmatprep.mubr.bf16.mxu0 %v365
      %671 = vmatmul.mubr.bf16.gmra.mrb[0].mxu0 %v364
      %v672 = vpop.f32.mrb[0].mxu0
      %v673 = vadd.f32 0.0, %v672
      %v674 = vpop.f32.mrb[0].mxu0
      %v675 = vpop.f32.mrb[0].mxu0
      %v676 = vadd.f32 0.0, %v675
      %v677 = vpop.f32.mrb[0].mxu0
      %678 = vdwg.mxu0
      %679 = vmatprep.subr.bf16.mxu0 0
      %680 = vmatpush1.bf16.msra.mxu0 %v545
      %681 = vmatprep.subr.bf16.mxu0 0
      %682 = vmatpush1.bf16.msra.mxu0 %v546
      %683 = vmatprep.subr.bf16.mxu0 0
      %684 = vmatpush1.bf16.msra.mxu0 %v547
      %685 = vmatprep.subr.bf16.mxu0 0
      %686 = vmatpush1.bf16.msra.mxu0 %v548
      %687 = vmatprep.subr.bf16.mxu0 0
      %688 = vmatpush1.bf16.msra.mxu0 %v549
      %689 = vmatprep.subr.bf16.mxu0 0
      %690 = vmatpush1.bf16.msra.mxu0 %v550
      %691 = vmatprep.subr.bf16.mxu0 0
      %692 = vmatpush1.bf16.msra.mxu0 %v551
      %693 = vmatprep.subr.bf16.mxu0 0
      %694 = vmatpush1.bf16.msra.mxu0 %v552
      %695 = vmatprep.subr.bf16.mxu0 0
      %696 = vmatpush1.bf16.msra.mxu0 %v553
      %697 = vmatprep.subr.bf16.mxu0 0
      %698 = vmatpush1.bf16.msra.mxu0 %v554
      %699 = vmatprep.subr.bf16.mxu0 0
      %700 = vmatpush1.bf16.msra.mxu0 %v555
      %701 = vmatprep.subr.bf16.mxu0 0
      %702 = vmatpush1.bf16.msra.mxu0 %v556
      %703 = vmatprep.subr.bf16.mxu0 0
      %704 = vmatpush1.bf16.msra.mxu0 %v557
      %705 = vmatprep.subr.bf16.mxu0 0
      %706 = vmatpush1.bf16.msra.mxu0 %v558
      %707 = vmatprep.subr.bf16.mxu0 0
      %708 = vmatpush1.bf16.msra.mxu0 %v559
      %709 = vmatprep.subr.bf16.mxu0 0
      %710 = vmatpush1.bf16.msra.mxu0 %v560
      %711 = vmatprep.mubr.bf16.mxu0 %v352
      %712 = vmatmul.mubr.bf16.gmra.mrb[0].mxu0 %v351
      %v713 = vpop.f32.mrb[0].mxu0
      %v714 = vadd.f32 %v649, %v713
      %v715 = vpop.f32.mrb[0].mxu0
      %v716 = vpop.f32.mrb[0].mxu0
      %v717 = vadd.f32 %v652, %v716
      %v718 = vpop.f32.mrb[0].mxu0
      %719 = vmatprep.mubr.bf16.mxu0 %v357
      %720 = vmatmul.mubr.bf16.gmra.mrb[0].mxu0 %v356
      %v721 = vpop.f32.mrb[0].mxu0
      %v722 = vadd.f32 %v657, %v721
      %v723 = vpop.f32.mrb[0].mxu0
      %v724 = vpop.f32.mrb[0].mxu0
      %v725 = vadd.f32 %v660, %v724
      %v726 = vpop.f32.mrb[0].mxu0
      %727 = vmatprep.mubr.bf16.mxu0 %v362
      %728 = vmatmul.mubr.bf16.gmra.mrb[0].mxu0 %v361
      %v729 = vpop.f32.mrb[0].mxu0
      %v730 = vadd.f32 %v665, %v729
      %v731 = vpop.f32.mrb[0].mxu0
      %v732 = vpop.f32.mrb[0].mxu0
      %v733 = vadd.f32 %v668, %v732
      %v734 = vpop.f32.mrb[0].mxu0
      %735 = vmatprep.mubr.bf16.mxu0 %v367
      %736 = vmatmul.mubr.bf16.gmra.mrb[0].mxu0 %v366
      %v737 = vpop.f32.mrb[0].mxu0
      %v738 = vadd.f32 %v673, %v737
      %v739 = vpop.f32.mrb[0].mxu0
      %v740 = vpop.f32.mrb[0].mxu0
      %v741 = vadd.f32 %v676, %v740
      %v742 = vpop.f32.mrb[0].mxu0
      %743 = vdwg.mxu0
      %744 = vmatprep.subr.bf16.mxu0 0
      %745 = vmatpush1.bf16.msra.mxu0 %v561
      %746 = vmatprep.subr.bf16.mxu0 0
      %747 = vmatpush1.bf16.msra.mxu0 %v562
      %748 = vmatprep.subr.bf16.mxu0 0
      %749 = vmatpush1.bf16.msra.mxu0 %v563
      %750 = vmatprep.subr.bf16.mxu0 0
      %751 = vmatpush1.bf16.msra.mxu0 %v564
      %752 = vmatprep.subr.bf16.mxu0 0
      %753 = vmatpush1.bf16.msra.mxu0 0
      %754 = vmatprep.subr.bf16.mxu0 0
      %755 = vmatpush1.bf16.msra.mxu0 0
      %756 = vmatprep.subr.bf16.mxu0 0
      %757 = vmatpush1.bf16.msra.mxu0 0
      %758 = vmatprep.subr.bf16.mxu0 0
      %759 = vmatpush1.bf16.msra.mxu0 0
      %760 = vmatprep.subr.bf16.mxu0 0
      %761 = vmatpush1.bf16.msra.mxu0 0
      %762 = vmatprep.subr.bf16.mxu0 0
      %763 = vmatpush1.bf16.msra.mxu0 0
      %764 = vmatprep.subr.bf16.mxu0 0
      %765 = vmatpush1.bf16.msra.mxu0 0
      %766 = vmatprep.subr.bf16.mxu0 0
      %767 = vmatpush1.bf16.msra.mxu0 0
      %768 = vmatprep.subr.bf16.mxu0 0
      %769 = vmatpush1.bf16.msra.mxu0 0
      %770 = vmatprep.subr.bf16.mxu0 0
      %771 = vmatpush1.bf16.msra.mxu0 0
      %772 = vmatprep.subr.bf16.mxu0 0
      %773 = vmatpush1.bf16.msra.mxu0 0
      %774 = vmatprep.subr.bf16.mxu0 0
      %775 = vmatpush1.bf16.msra.mxu0 0
      %776 = vmatprep.mubr.bf16.mxu0 0
      %777 = vmatmul.mubr.bf16.gmra.mrb[0].mxu0 %v603
      %v778 = vpop.f32.mrb[0].mxu0
      %v779 = vadd.f32 %v714, %v778
      %v780 = vpop.f32.mrb[0].mxu0
      %v781 = vpop.f32.mrb[0].mxu0
      %v782 = vadd.f32 %v717, %v781
      %v783 = vpop.f32.mrb[0].mxu0
      %784 = vmatprep.mubr.bf16.mxu0 0
      %785 = vmatmul.mubr.bf16.gmra.mrb[0].mxu0 %v606
      %v786 = vpop.f32.mrb[0].mxu0
      %v787 = vadd.f32 %v722, %v786
      %v788 = vpop.f32.mrb[0].mxu0
      %v789 = vpop.f32.mrb[0].mxu0
      %v790 = vadd.f32 %v725, %v789
      %v791 = vpop.f32.mrb[0].mxu0
      %792 = vmatprep.mubr.bf16.mxu0 0
      %793 = vmatmul.mubr.bf16.gmra.mrb[0].mxu0 %v609
      %v794 = vpop.f32.mrb[0].mxu0
      %v795 = vadd.f32 %v730, %v794
      %v796 = vpop.f32.mrb[0].mxu0
      %v797 = vpop.f32.mrb[0].mxu0
      %v798 = vadd.f32 %v733, %v797
      %v799 = vpop.f32.mrb[0].mxu0
      %800 = vmatprep.mubr.bf16.mxu0 0
      %801 = vmatmul.mubr.bf16.gmra.mrb[0].mxu0 %v612
      %v802 = vpop.f32.mrb[0].mxu0
      %v803 = vadd.f32 %v738, %v802
      %v804 = vpop.f32.mrb[0].mxu0
      %v805 = vpop.f32.mrb[0].mxu0
      %v806 = vadd.f32 %v741, %v805
      %v807 = vpop.f32.mrb[0].mxu0
      %808 = vdwg.mxu0
      %v809 = vpack.c.bf16 %v782, %v779
      %v810 = vpack.c.bf16 %v790, %v787
      %v811 = vpack.c.bf16 %v798, %v795
      %v812 = vpack.c.bf16 %v806, %v803
      %v817 = vunpack.c.l.b16 %v809
      %v818 = vunpack.c.h.b16 %v809
      %v819 = vunpack.c.l.b16 %v810
      %v820 = vunpack.c.h.b16 %v810
      %v821 = vunpack.c.l.b16 %v811
      %v822 = vunpack.c.h.b16 %v811
      %v823 = vunpack.c.l.b16 %v812
      %v824 = vunpack.c.h.b16 %v812
      %v825 = vpack.c.b16 %v817, %v817
      %v826 = vpack.c.b16 %v818, %v818
      %v827 = vpack.c.b16 %v819, %v819
      %v828 = vpack.c.b16 %v820, %v820
      %v829 = vpack.c.b16 %v821, %v821
      %v830 = vpack.c.b16 %v822, %v822
      %v831 = vpack.c.b16 %v823, %v823
      %v832 = vpack.c.b16 %v824, %v824
      %841 = vst [vmem:[%s182] sm:$0xf] %v825
      %842 = vst [vmem:[%s182 + $0x4] sm:$0xf] %v826
      %843 = vst [vmem:[%s182 + $0x8] sm:$0xf] %v827
      %844 = vst [vmem:[%s182 + $0xc] sm:$0xf] %v828
      %845 = vst [vmem:[%s182 + $0x10] sm:$0xf] %v829
      %846 = vst [vmem:[%s182 + $0x14] sm:$0xf] %v830
      %847 = vst [vmem:[%s182 + $0x18] sm:$0xf] %v831
      %848 = vst [vmem:[%s182 + $0x1c] sm:$0xf] %v832
      %v849 = vadd.f32 %v779, %v782
      %v850 = vadd.f32 %v849, %v787
      %v851 = vadd.f32 %v850, %v790
      %v852 = vadd.f32 %v851, %v795
      %v853 = vadd.f32 %v852, %v798
      %v854 = vadd.f32 %v853, %v803
      %v855 = vadd.f32 %v854, %v806
      %v856 = vrot.slane %v855, 4
      %v857 = vadd.f32 %v855, %v856
      %v858 = vrot.slane %v857, 2
      %v859 = vadd.f32 %v857, %v858
      %v860 = vrot.slane %v859, 1
      %v861 = vadd.f32 %v859, %v860
      %862 = vst [vmem:[%s187] sm:$0x1] %v861
      %v863 = vmul.f32 %v779, %v779
      %v864 = vmul.f32 %v782, %v782
      %v865 = vmul.f32 %v787, %v787
      %v866 = vmul.f32 %v790, %v790
      %v867 = vmul.f32 %v795, %v795
      %v868 = vmul.f32 %v798, %v798
      %v869 = vmul.f32 %v803, %v803
      %v870 = vmul.f32 %v806, %v806
      %v871 = vadd.f32 %v863, %v864
      %v872 = vadd.f32 %v871, %v865
      %v873 = vadd.f32 %v872, %v866
      %v874 = vadd.f32 %v873, %v867
      %v875 = vadd.f32 %v874, %v868
      %v876 = vadd.f32 %v875, %v869
      %v877 = vadd.f32 %v876, %v870
      %v878 = vrot.slane %v877, 4
      %v879 = vadd.f32 %v877, %v878
      %v880 = vrot.slane %v879, 2
      %v881 = vadd.f32 %v879, %v880
      %v882 = vrot.slane %v881, 1
      %v883 = vadd.f32 %v881, %v882
      %884 = vst [vmem:[%s187 + $0x1] sm:$0x1] %v883
      %s885 = smul.u32 8, %s15
      %p886 = scmp.lt.s32.totalorder %s885, 15
      %s887 = scalar_select %p886, %s885, 15
      %s888 = smul.addr %s887, 4
      %s889 = scalar_lea.vmem %s2, %s888
      %p890 = scmp.lt.s32.totalorder %s15, 1
      %s891 = scalar_select %p890, %s15, 1
      %s892 = smul.addr %s891, 8
      %s893 = scalar_lea.vmem %s3, %s892
      // Predicated region
      $region29: #{generator_forward.13} parent=27 // pred_check
        %p894 = pneg %p80
      $region30: #{generator_forward.13} parent=27 // pred_check_branch
        %896 = sbr.rel (%p894) target = $region32
      $region31: #{generator_forward.13} parent=27 // pred_region
        %s897 = smul.u32 8, %s15
      $region32: #{generator_forward.13} parent=27 // pred_fallthru
        _
      // Predicated region
      $region33: #{generator_forward.13} parent=27 // pred_check
        %p898 = pneg %p106
      $region34: #{generator_forward.13} parent=27 // pred_check_branch
        %900 = sbr.rel (%p898) target = $region36
      $region35: #{generator_forward.13} parent=27 // pred_region
        _
      $region36: #{generator_forward.13} parent=27 // pred_fallthru
        _
    $region28: #{generator_forward.13} parent=5 // pred_fallthru
      _
    %p901 = scmp.le.s32.totalorder 2, %s10
    // Predicated region
    $region37: #{generator_forward.13} parent=5 // pred_check
      %p902 = pneg %p901
    $region38: #{generator_forward.13} parent=5 // pred_check_branch
      %904 = sbr.rel (%p902) target = $region40
    $region39: #{generator_forward.13} parent=5 // pred_region
      %s905 = ssub.s32 %s10, 2
      // Predicated region
      $region41: #{generator_forward.13} parent=39 // pred_check
        %p906 = pneg %p86
      $region42: #{generator_forward.13} parent=39 // pred_check_branch
        %908 = sbr.rel (%p906) target = $region44
      $region43: #{generator_forward.13} parent=39 // pred_region
        %s909 = smul.u32 8, %s16
        %p910 = scmp.lt.s32.totalorder %s909, 15
        %s911 = scalar_select %p910, %s909, 15
        %s912 = smul.addr %s911, 4
        %s913 = scalar_lea.vmem %s2, %s912
      $region44: #{generator_forward.13} parent=39 // pred_fallthru
        _
      // Predicated region
      $region45: #{generator_forward.13} parent=39 // pred_check
        %p914 = pneg %p112
      $region46: #{generator_forward.13} parent=39 // pred_check_branch
        %916 = sbr.rel (%p914) target = $region48
      $region47: #{generator_forward.13} parent=39 // pred_region
        %p917 = scmp.lt.s32.totalorder %s16, 1
        %s918 = scalar_select %p917, %s16, 1
        %s919 = smul.addr %s918, 8
        %s920 = scalar_lea.vmem %s3, %s919
      $region48: #{generator_forward.13} parent=39 // pred_fallthru
        _
    $region40: #{generator_forward.13} parent=5 // pred_fallthru
      _
  $region6: #{generator_forward.13} parent=0 // loop_footer
    %s14 = sadd.s32 1, %s10
  $region7: #{generator_forward.13} parent=0 // loop_footer_branch
    %9 = sbr.rel target = $region3
  $region8: #{generator_forward.13} parent=0 // loop_exit
    _

// kernel: tile.68
$region0: #{tile.68}
  #allocation0 [shape = 's32[1]{0}', space=sflag, size = 0x4, scoped, tag = 'scoped memory for tile.68']
  %s0 = inlined_call_operand.vmem [shape: f32[32], index: 0, kind: input, shape index: {}]
  %s1 = inlined_call_operand.vmem [shape: f32[4,32], index: 1, kind: output, shape index: {}]
  // Predicated region
  $region2: #{tile.68} parent=0 // pred_check
    _
  $region3: #{tile.68} parent=0 // pred_check_branch
    %3 = sbr.rel (0) target = $region5
  $region4: #{tile.68} parent=0 // pred_region
    _
  $region5: #{tile.68} parent=0 // pred_fallthru
    _
  %v4 = vld [vmem:[%s0] ss:$0 sm:$0xff]
  %5 = vst [vmem:[%s1] sm:$0xf] %v4

// kernel: generator_forward.14
$region0: #{generator_forward.14}
  #allocation0 [shape = 'u32[]', space=smem, size = 0x4, offset = 0x4, fixed_abs, tag = 'smem constant byte address 0x4 - core index']
  #allocation1 [shape = 'u32[144,128]{1,0:T(1,128)}', space=vmem, size = 0x12000, scoped, tag = 'internal scratch']
  %s0 = inlined_call_operand.vmem [shape: bf16[128,128], index: 0, kind: input, shape index: {}]
  %s1 = inlined_call_operand.vmem [shape: f32[1,128], index: 1, kind: input, shape index: {}]
  %s2 = inlined_call_operand.vmem [shape: f32[1,128], index: 2, kind: input, shape index: {}]
  %s3 = inlined_call_operand.vmem [shape: bf16[128,128], index: 3, kind: output, shape index: {}]
  %s4 = sld [smem:[#allocation0]]
  $region45: #{generator_forward.14} parent=0
    _
  %s6 = ssub.s32 1, %s4
  %s7 = scalar_select 0, %s6, %s4
  loop: start=0, step=1, limit=4
  $region2: #{generator_forward.14} parent=0 // loop_pre_header
    _
  $region3: #{generator_forward.14} parent=0 // loop_header
    %s9 = sphi 0, %s13
    %p10 = scmp.ge.s32.totalorder %s9, 4
    %s19 = sphi 0, %s21
    %s22 = sphi 0, %s19
    %s23 = sphi 0, %s22
    %s39 = sphi 0, %s23
    %s43 = sphi 0, %s43
    %s45 = sphi 0, %s43
    %s46 = sphi 0, %s45
    %s60 = sphi 0, %s46
    %s64 = sphi 0, %s64
    %s66 = sphi 0, %s64
    %s67 = sphi 0, %s66
    %s81 = sphi 0, %s67
    %s87 = sphi 0, %s89
    %s90 = sphi 0, %s87
    %s91 = sphi 0, %s90
    %s107 = sphi 0, %s91
  $region4: #{generator_forward.14} parent=0 // loop_header_branch
    %12 = sbr.rel (%p10) target = $region8
  $region5: #{generator_forward.14} parent=0 // loop_body
    %s14 = ssub.s32 %s9, 1
    %s15 = ssub.s32 %s9, 2
    %s16 = sadd.s32 %s9, 1
    %s17 = ssub.s32 %s9, %s16
    %p18 = scmp.eq.s32.totalorder %s17, 0
    %s20 = sadd.s32 %s19, 1
    %s21 = scalar_select %p18, %s19, %s20
    %p24 = pneg %p18
    %p25 = scmp.eq.s32.totalorder %s9, 1
    %p26 = por %p24, %p25
    %p27 = scmp.ne.s32.totalorder %s19, %s22
    %p28 = scmp.eq.s32.totalorder %s9, 0
    %p29 = por %p27, %p28
    %p30 = scmp.ne.s32.totalorder %s19, %s22
    %p31 = scmp.eq.s32.totalorder %s14, 1
    %p32 = por %p30, %p31
    %p33 = scmp.ne.s32.totalorder %s22, %s23
    %p34 = scmp.eq.s32.totalorder %s14, 0
    %p35 = por %p33, %p34
    %p36 = scmp.ne.s32.totalorder %s22, %s23
    %p37 = scmp.eq.s32.totalorder %s15, 1
    %p38 = por %p36, %p37
    %p40 = scmp.ne.s32.totalorder %s23, %s39
    %p41 = scmp.eq.s32.totalorder %s15, 0
    %p42 = por %p40, %p41
    %s44 = sadd.s32 %s43, 1
    %p47 = scmp.eq.s32.totalorder %s9, 1
    %p48 = scmp.ne.s32.totalorder %s43, %s45
    %p49 = scmp.eq.s32.totalorder %s9, 0
    %p50 = por %p48, %p49
    %p51 = scmp.ne.s32.totalorder %s43, %s45
    %p52 = scmp.eq.s32.totalorder %s14, 1
    %p53 = por %p51, %p52
    %p54 = scmp.ne.s32.totalorder %s45, %s46
    %p55 = scmp.eq.s32.totalorder %s14, 0
    %p56 = por %p54, %p55
    %p57 = scmp.ne.s32.totalorder %s45, %s46
    %p58 = scmp.eq.s32.totalorder %s15, 1
    %p59 = por %p57, %p58
    %p61 = scmp.ne.s32.totalorder %s46, %s60
    %p62 = scmp.eq.s32.totalorder %s15, 0
    %p63 = por %p61, %p62
    %s65 = sadd.s32 %s64, 1
    %p68 = scmp.eq.s32.totalorder %s9, 1
    %p69 = scmp.ne.s32.totalorder %s64, %s66
    %p70 = scmp.eq.s32.totalorder %s9, 0
    %p71 = por %p69, %p70
    %p72 = scmp.ne.s32.totalorder %s64, %s66
    %p73 = scmp.eq.s32.totalorder %s14, 1
    %p74 = por %p72, %p73
    %p75 = scmp.ne.s32.totalorder %s66, %s67
    %p76 = scmp.eq.s32.totalorder %s14, 0
    %p77 = por %p75, %p76
    %p78 = scmp.ne.s32.totalorder %s66, %s67
    %p79 = scmp.eq.s32.totalorder %s15, 1
    %p80 = por %p78, %p79
    %p82 = scmp.ne.s32.totalorder %s67, %s81
    %p83 = scmp.eq.s32.totalorder %s15, 0
    %p84 = por %p82, %p83
    %s85 = ssub.s32 %s9, %s16
    %p86 = scmp.eq.s32.totalorder %s85, 0
    %s88 = sadd.s32 %s87, 1
    %s89 = scalar_select %p86, %s87, %s88
    %p92 = pneg %p86
    %p93 = scmp.eq.s32.totalorder %s9, 1
    %p94 = por %p92, %p93
    %p95 = scmp.ne.s32.totalorder %s87, %s90
    %p96 = scmp.eq.s32.totalorder %s9, 0
    %p97 = por %p95, %p96
    %p98 = scmp.ne.s32.totalorder %s87, %s90
    %p99 = scmp.eq.s32.totalorder %s14, 1
    %p100 = por %p98, %p99
    %p101 = scmp.ne.s32.totalorder %s90, %s91
    %p102 = scmp.eq.s32.totalorder %s14, 0
    %p103 = por %p101, %p102
    %p104 = scmp.ne.s32.totalorder %s90, %s91
    %p105 = scmp.eq.s32.totalorder %s15, 1
    %p106 = por %p104, %p105
    %p108 = scmp.ne.s32.totalorder %s91, %s107
    %p109 = scmp.eq.s32.totalorder %s15, 0
    %p110 = por %p108, %p109
    %p111 = scmp.le.s32.totalorder 1, %s9
    %p112 = scmp.lt.s32.totalorder %s9, 3
    %p113 = pnand %p111, %p112
    %p114 = pneg %p113
    // Predicated region
    $region9: #{generator_forward.14} parent=5 // pred_check
      _
    $region10: #{generator_forward.14} parent=5 // pred_check_branch
      %116 = sbr.rel (%p113) target = $region12
    $region11: #{generator_forward.14} parent=5 // pred_region
      %s117 = ssub.s32 %s9, 1
      // Predicated region
      $region13: #{generator_forward.14} parent=11 // pred_check
        %p118 = pneg %p56
      $region14: #{generator_forward.14} parent=11 // pred_check_branch
        %120 = sbr.rel (%p118) target = $region16
      $region15: #{generator_forward.14} parent=11 // pred_region
        _
      $region16: #{generator_forward.14} parent=11 // pred_fallthru
        _
      // Predicated region
      $region17: #{generator_forward.14} parent=11 // pred_check
        %p121 = pneg %p77
      $region18: #{generator_forward.14} parent=11 // pred_check_branch
        %123 = sbr.rel (%p121) target = $region20
      $region19: #{generator_forward.14} parent=11 // pred_region
        _
      $region20: #{generator_forward.14} parent=11 // pred_fallthru
        _
    $region12: #{generator_forward.14} parent=5 // pred_fallthru
      _
    %p124 = scmp.lt.s32.totalorder %s9, 2
    // Predicated region
    $region21: #{generator_forward.14} parent=5 // pred_check
      %p125 = pneg %p124
    $region22: #{generator_forward.14} parent=5 // pred_check_branch
      %127 = sbr.rel (%p125) target = $region24
    $region23: #{generator_forward.14} parent=5 // pred_region
      // Predicated region
      $region25: #{generator_forward.14} parent=23 // pred_check
        %p128 = pneg %p29
      $region26: #{generator_forward.14} parent=23 // pred_check_branch
        %130 = sbr.rel (%p128) target = $region28
      $region27: #{generator_forward.14} parent=23 // pred_region
        %s131 = smul.u32 8, %s9
        %p132 = scmp.lt.s32.totalorder %s131, 15
        %s133 = scalar_select %p132, %s131, 15
        %s134 = smul.addr %s133, 4
        %s135 = scalar_lea.vmem %s0, %s134
        %s136 = smul.u32 8, %s9
      $region28: #{generator_forward.14} parent=23 // pred_fallthru
        _
    $region24: #{generator_forward.14} parent=5 // pred_fallthru
      _
    %p137 = scmp.le.s32.totalorder 1, %s9
    %p138 = scmp.lt.s32.totalorder %s9, 3
    %p139 = pnand %p137, %p138
    %p140 = pneg %p139
    // Predicated region
    $region29: #{generator_forward.14} parent=5 // pred_check
      _
    $region30: #{generator_forward.14} parent=5 // pred_check_branch
      %142 = sbr.rel (%p139) target = $region32
    $region31: #{generator_forward.14} parent=5 // pred_region
      %s143 = ssub.s32 %s9, 1
      %s144 = smul.u32 8, %s14
      %p145 = scmp.lt.s32.totalorder %s144, 15
      %s146 = scalar_select %p145, %s144, 15
      %s147 = smul.addr %s146, 4
      %s148 = scalar_lea.vmem %s0, %s147
      %p149 = pneg %p35
      %p150 = pneg %p32
      %p151 = pneg %p56
      %p152 = pneg %p53
      %p153 = pneg %p77
      %p154 = pneg %p74
      %p155 = pneg %p103
      %p156 = pneg %p100
      %s157 = smul.u32 8, %s14
      %p158 = scmp.lt.s32.totalorder %s157, 15
      %s159 = scalar_select %p158, %s157, 15
      %s160 = smul.addr %s159, 4
      %s161 = scalar_lea.vmem %s3, %s160
      %s162 = smul.u32 8, %s14
      %p163 = scmp.lt.s32.totalorder %s162, 15
      %s164 = scalar_select %p163, %s162, 15
      %s165 = smul.addr %s164, 4
      %s166 = scalar_lea.vmem %s0, %s165
      %s167 = smul.u32 8, %s14
      %s168 = smul.u32 8, %s14
      %p169 = scmp.lt.s32.totalorder %s168, 15
      %s170 = scalar_select %p169, %s168, 15
      %s171 = smul.addr %s170, 4
      %s172 = scalar_lea.vmem %s3, %s171
      %s173 = smul.u32 8, %s14
      %v174 = vld [vmem:[%s166] sm:$0xf]
      %v175 = vld [vmem:[%s166 + $0x4] sm:$0xf]
      %v176 = vld [vmem:[%s166 + $0x8] sm:$0xf]
      %v177 = vld [vmem:[%s166 + $0xc] sm:$0xf]
      %v178 = vld [vmem:[%s166 + $0x10] sm:$0xf]
      %v179 = vld [vmem:[%s166 + $0x14] sm:$0xf]
      %v180 = vld [vmem:[%s166 + $0x18] sm:$0xf]
      %v181 = vld [vmem:[%s166 + $0x1c] sm:$0xf]
      %v182 = vunpack.c.l.bf16 %v174
      %v183 = vunpack.c.l.bf16 %v175
      %v184 = vunpack.c.l.bf16 %v176
      %v185 = vunpack.c.l.bf16 %v177
      %v186 = vunpack.c.l.bf16 %v178
      %v187 = vunpack.c.l.bf16 %v179
      %v188 = vunpack.c.l.bf16 %v180
      %v189 = vunpack.c.l.bf16 %v181
      %v190 = vld [vmem:[%s1] sm:$0x1]
      %v192 = vlaneseq
      %v193 = vshrl.u32 %v192, 7
      %v194 = vsub.s32 0, %v193
      %v195 = vrot.slane %v190, %v194
      %v197 = vmul.f32 %v182, %v195
      %v198 = vmul.f32 %v183, %v195
      %v199 = vmul.f32 %v184, %v195
      %v200 = vmul.f32 %v185, %v195
      %v201 = vmul.f32 %v186, %v195
      %v202 = vmul.f32 %v187, %v195
      %v203 = vmul.f32 %v188, %v195
      %v204 = vmul.f32 %v189, %v195
      %v205 = vld [vmem:[%s2] sm:$0x1]
      %v207 = vlaneseq
      %v208 = vshrl.u32 %v207, 7
      %v209 = vsub.s32 0, %v208
      %v210 = vrot.slane %v205, %v209
      %v212 = vadd.f32 %v197, %v210
      %v213 = vadd.f32 %v198, %v210
      %v214 = vadd.f32 %v199, %v210
      %v215 = vadd.f32 %v200, %v210
      %v216 = vadd.f32 %v201, %v210
      %v217 = vadd.f32 %v202, %v210
      %v218 = vadd.f32 %v203, %v210
      %v219 = vadd.f32 %v204, %v210
      %v220 = vmax.f32 %v212, 0.0
      %v221 = vmax.f32 %v213, 0.0
      %v222 = vmax.f32 %v214, 0.0
      %v223 = vmax.f32 %v215, 0.0
      %v224 = vmax.f32 %v216, 0.0
      %v225 = vmax.f32 %v217, 0.0
      %v226 = vmax.f32 %v218, 0.0
      %v227 = vmax.f32 %v219, 0.0
      %v228 = vpack.c.bf16 %v221, %v220
      %v229 = vpack.c.bf16 %v223, %v222
      %v230 = vpack.c.bf16 %v225, %v224
      %v231 = vpack.c.bf16 %v227, %v226
      %v236 = vunpack.c.l.b16 %v228
      %v237 = vunpack.c.h.b16 %v228
      %v238 = vunpack.c.l.b16 %v229
      %v239 = vunpack.c.h.b16 %v229
      %v240 = vunpack.c.l.b16 %v230
      %v241 = vunpack.c.h.b16 %v230
      %v242 = vunpack.c.l.b16 %v231
      %v243 = vunpack.c.h.b16 %v231
      %v244 = vpack.c.b16 %v236, %v236
      %v245 = vpack.c.b16 %v237, %v237
      %v246 = vpack.c.b16 %v238, %v238
      %v247 = vpack.c.b16 %v239, %v239
      %v248 = vpack.c.b16 %v240, %v240
      %v249 = vpack.c.b16 %v241, %v241
      %v250 = vpack.c.b16 %v242, %v242
      %v251 = vpack.c.b16 %v243, %v243
      %260 = vst [vmem:[%s172] sm:$0xf] %v244
      %261 = vst [vmem:[%s172 + $0x4] sm:$0xf] %v245
      %262 = vst [vmem:[%s172 + $0x8] sm:$0xf] %v246
      %263 = vst [vmem:[%s172 + $0xc] sm:$0xf] %v247
      %264 = vst [vmem:[%s172 + $0x10] sm:$0xf] %v248
      %265 = vst [vmem:[%s172 + $0x14] sm:$0xf] %v249
      %266 = vst [vmem:[%s172 + $0x18] sm:$0xf] %v250
      %267 = vst [vmem:[%s172 + $0x1c] sm:$0xf] %v251
      %s268 = smul.u32 8, %s14
      %p269 = scmp.lt.s32.totalorder %s268, 15
      %s270 = scalar_select %p269, %s268, 15
      %s271 = smul.addr %s270, 4
      %s272 = scalar_lea.vmem %s3, %s271
      // Predicated region
      $region33: #{generator_forward.14} parent=31 // pred_check
        %p273 = pneg %p100
      $region34: #{generator_forward.14} parent=31 // pred_check_branch
        %275 = sbr.rel (%p273) target = $region36
      $region35: #{generator_forward.14} parent=31 // pred_region
        %s276 = smul.u32 8, %s14
      $region36: #{generator_forward.14} parent=31 // pred_fallthru
        _
    $region32: #{generator_forward.14} parent=5 // pred_fallthru
      _
    %p277 = scmp.le.s32.totalorder 2, %s9
    // Predicated region
    $region37: #{generator_forward.14} parent=5 // pred_check
      %p278 = pneg %p277
    $region38: #{generator_forward.14} parent=5 // pred_check_branch
      %280 = sbr.rel (%p278) target = $region40
    $region39: #{generator_forward.14} parent=5 // pred_region
      %s281 = ssub.s32 %s9, 2
      // Predicated region
      $region41: #{generator_forward.14} parent=39 // pred_check
        %p282 = pneg %p106
      $region42: #{generator_forward.14} parent=39 // pred_check_branch
        %284 = sbr.rel (%p282) target = $region44
      $region43: #{generator_forward.14} parent=39 // pred_region
        %s285 = smul.u32 8, %s15
        %p286 = scmp.lt.s32.totalorder %s285, 15
        %s287 = scalar_select %p286, %s285, 15
        %s288 = smul.addr %s287, 4
        %s289 = scalar_lea.vmem %s3, %s288
      $region44: #{generator_forward.14} parent=39 // pred_fallthru
        _
    $region40: #{generator_forward.14} parent=5 // pred_fallthru
      _
  $region6: #{generator_forward.14} parent=0 // loop_footer
    %s13 = sadd.s32 1, %s9
  $region7: #{generator_forward.14} parent=0 // loop_footer_branch
    %8 = sbr.rel target = $region3
  $region8: #{generator_forward.14} parent=0 // loop_exit
    _

// kernel: tile.78
$region0: #{tile.78}
  #allocation0 [shape = 's32[1]{0}', space=sflag, size = 0x4, scoped, tag = 'scoped memory for tile.78']
  %s0 = inlined_call_operand.vmem [shape: f32[16], index: 0, kind: input, shape index: {}]
  %s1 = inlined_call_operand.vmem [shape: f32[4,16], index: 1, kind: output, shape index: {}]
  // Predicated region
  $region2: #{tile.78} parent=0 // pred_check
    _
  $region3: #{tile.78} parent=0 // pred_check_branch
    %3 = sbr.rel (0) target = $region5
  $region4: #{tile.78} parent=0 // pred_region
    _
  $region5: #{tile.78} parent=0 // pred_fallthru
    _
  %v4 = vld [vmem:[%s0] ss:$0 sm:$0xff]
  %5 = vst [vmem:[%s1] sm:$0xf] %v4

// kernel: tile.79
$region0: #{tile.79}
  %s0 = inlined_call_operand.vmem [shape: f32[4,16], index: 0, kind: input, shape index: {}]
  %s1 = inlined_call_operand.vmem [shape: f32[64], index: 1, kind: output, shape index: {}]
  $region1: #{tile.79} parent=0
    #allocation0 [shape = 'u8[4096]{0}', space=vmem, size = 0x1000, scoped, tag = 'scoped mem for output reshape']
    #allocation1 [shape = 'u8[4096]{0}', space=vmem, size = 0x1000, scoped, tag = 'scoped mem for input reshape']
    %s3 = sshllo.u32 0, 4
    %v4 = vld [vmem:[%s0] sm:%s3]
    %5 = vst [vmem:[#allocation1] sm:%s3] %v4
    %v6 = vld [vmem:[#allocation1] sm:$0x1]
    %vm7 = vcmask 130048
    %8 = vst.msk [vmem:[#allocation0] sm:$0x1] %vm7, %v6
    %s9 = scalar_lea.vmem [#allocation1], 3
    %v10 = vld [vmem:[%s9] sm:$0x1]
    %11 = vrot.lane.b32.xlu0 %v10, 48
    %v12 = vpop.permute.xlu0 %11
    %vm13 = vcmask 523648
    %14 = vst.msk [vmem:[#allocation0] sm:$0x1] %vm13, %v12
    %s15 = scalar_lea.vmem [#allocation1], 2
    %v16 = vld [vmem:[%s15] sm:$0x1]
    %17 = vrot.lane.b32.xlu0 %v16, 32
    %v18 = vpop.permute.xlu0 %17
    %vm19 = vcmask 392448
    %20 = vst.msk [vmem:[#allocation0] sm:$0x1] %vm19, %v18
    %s21 = scalar_lea.vmem [#allocation1], 1
    %v22 = vld [vmem:[%s21] sm:$0x1]
    %23 = vrot.lane.b32.xlu0 %v22, 16
    %v24 = vpop.permute.xlu0 %23
    %vm25 = vcmask 261248
    %26 = vst.msk [vmem:[#allocation0] sm:$0x1] %vm25, %v24
    %s28 = sshllo.u32 0, 1
    %v30 = vld [vmem:[#allocation0] sm:%s28]
    %s31 = sshllo.u32 0, 1
    %32 = vst [vmem:[%s1] sm:%s31] %v30

// kernel: generator_forward.15
$region0: #{generator_forward.15}
  #allocation0 [shape = 'u32[]', space=smem, size = 0x4, offset = 0x4, fixed_abs, tag = 'smem constant byte address 0x4 - core index']
  #allocation1 [shape = 'u32[144,128]{1,0:T(1,128)}', space=vmem, size = 0x12000, scoped, tag = 'internal scratch']
  %s0 = inlined_call_operand.vmem [shape: bf16[512,288], index: 0, kind: input, shape index: {}]
  %s1 = inlined_call_operand.vmem [shape: bf16[288,128], index: 1, kind: input, shape index: {}]
  %s2 = inlined_call_operand.vmem [shape: bf16[512,128], index: 2, kind: output, shape index: {0}]
  %s3 = inlined_call_operand.vmem [shape: f32[16,128], index: 3, kind: output, shape index: {1}]
  %4 = xla_tuple %s2, %s3
  %s5 = sld [smem:[#allocation0]]
  $region49: #{generator_forward.15} parent=0
    _
  %s7 = ssub.s32 1, %s5
  %s8 = scalar_select 0, %s7, %s5
  loop: start=0, step=1, limit=4
  $region2: #{generator_forward.15} parent=0 // loop_pre_header
    _
  $region3: #{generator_forward.15} parent=0 // loop_header
    %s10 = sphi 0, %s14
    %p11 = scmp.ge.s32.totalorder %s10, 4
    %s20 = sphi 0, %s22
    %s23 = sphi 0, %s20
    %s24 = sphi 0, %s23
    %s40 = sphi 0, %s24
    %s44 = sphi 0, %s44
    %s46 = sphi 0, %s44
    %s47 = sphi 0, %s46
    %s61 = sphi 0, %s47
    %s67 = sphi 0, %s69
    %s70 = sphi 0, %s67
    %s71 = sphi 0, %s70
    %s87 = sphi 0, %s71
    %s93 = sphi 0, %s95
    %s96 = sphi 0, %s93
    %s97 = sphi 0, %s96
    %s113 = sphi 0, %s97
  $region4: #{generator_forward.15} parent=0 // loop_header_branch
    %13 = sbr.rel (%p11) target = $region8
  $region5: #{generator_forward.15} parent=0 // loop_body
    %s15 = ssub.s32 %s10, 1
    %s16 = ssub.s32 %s10, 2
    %s17 = sadd.s32 %s10, 1
    %s18 = ssub.s32 %s10, %s17
    %p19 = scmp.eq.s32.totalorder %s18, 0
    %s21 = sadd.s32 %s20, 1
    %s22 = scalar_select %p19, %s20, %s21
    %p25 = pneg %p19
    %p26 = scmp.eq.s32.totalorder %s10, 1
    %p27 = por %p25, %p26
    %p28 = scmp.ne.s32.totalorder %s20, %s23
    %p29 = scmp.eq.s32.totalorder %s10, 0
    %p30 = por %p28, %p29
    %p31 = scmp.ne.s32.totalorder %s20, %s23
    %p32 = scmp.eq.s32.totalorder %s15, 1
    %p33 = por %p31, %p32
    %p34 = scmp.ne.s32.totalorder %s23, %s24
    %p35 = scmp.eq.s32.totalorder %s15, 0
    %p36 = por %p34, %p35
    %p37 = scmp.ne.s32.totalorder %s23, %s24
    %p38 = scmp.eq.s32.totalorder %s16, 1
    %p39 = por %p37, %p38
    %p41 = scmp.ne.s32.totalorder %s24, %s40
    %p42 = scmp.eq.s32.totalorder %s16, 0
    %p43 = por %p41, %p42
    %s45 = sadd.s32 %s44, 1
    %p48 = scmp.eq.s32.totalorder %s10, 1
    %p49 = scmp.ne.s32.totalorder %s44, %s46
    %p50 = scmp.eq.s32.totalorder %s10, 0
    %p51 = por %p49, %p50
    %p52 = scmp.ne.s32.totalorder %s44, %s46
    %p53 = scmp.eq.s32.totalorder %s15, 1
    %p54 = por %p52, %p53
    %p55 = scmp.ne.s32.totalorder %s46, %s47
    %p56 = scmp.eq.s32.totalorder %s15, 0
    %p57 = por %p55, %p56
    %p58 = scmp.ne.s32.totalorder %s46, %s47
    %p59 = scmp.eq.s32.totalorder %s16, 1
    %p60 = por %p58, %p59
    %p62 = scmp.ne.s32.totalorder %s47, %s61
    %p63 = scmp.eq.s32.totalorder %s16, 0
    %p64 = por %p62, %p63
    %s65 = ssub.s32 %s10, %s17
    %p66 = scmp.eq.s32.totalorder %s65, 0
    %s68 = sadd.s32 %s67, 1
    %s69 = scalar_select %p66, %s67, %s68
    %p72 = pneg %p66
    %p73 = scmp.eq.s32.totalorder %s10, 1
    %p74 = por %p72, %p73
    %p75 = scmp.ne.s32.totalorder %s67, %s70
    %p76 = scmp.eq.s32.totalorder %s10, 0
    %p77 = por %p75, %p76
    %p78 = scmp.ne.s32.totalorder %s67, %s70
    %p79 = scmp.eq.s32.totalorder %s15, 1
    %p80 = por %p78, %p79
    %p81 = scmp.ne.s32.totalorder %s70, %s71
    %p82 = scmp.eq.s32.totalorder %s15, 0
    %p83 = por %p81, %p82
    %p84 = scmp.ne.s32.totalorder %s70, %s71
    %p85 = scmp.eq.s32.totalorder %s16, 1
    %p86 = por %p84, %p85
    %p88 = scmp.ne.s32.totalorder %s71, %s87
    %p89 = scmp.eq.s32.totalorder %s16, 0
    %p90 = por %p88, %p89
    %s91 = ssub.s32 %s10, %s17
    %p92 = scmp.eq.s32.totalorder %s91, 0
    %s94 = sadd.s32 %s93, 1
    %s95 = scalar_select %p92, %s93, %s94
    %p98 = pneg %p92
    %p99 = scmp.eq.s32.totalorder %s10, 1
    %p100 = por %p98, %p99
    %p101 = scmp.ne.s32.totalorder %s93, %s96
    %p102 = scmp.eq.s32.totalorder %s10, 0
    %p103 = por %p101, %p102
    %p104 = scmp.ne.s32.totalorder %s93, %s96
    %p105 = scmp.eq.s32.totalorder %s15, 1
    %p106 = por %p104, %p105
    %p107 = scmp.ne.s32.totalorder %s96, %s97
    %p108 = scmp.eq.s32.totalorder %s15, 0
    %p109 = por %p107, %p108
    %p110 = scmp.ne.s32.totalorder %s96, %s97
    %p111 = scmp.eq.s32.totalorder %s16, 1
    %p112 = por %p110, %p111
    %p114 = scmp.ne.s32.totalorder %s97, %s113
    %p115 = scmp.eq.s32.totalorder %s16, 0
    %p116 = por %p114, %p115
    %p117 = scmp.le.s32.totalorder 1, %s10
    %p118 = scmp.lt.s32.totalorder %s10, 3
    %p119 = pnand %p117, %p118
    %p120 = pneg %p119
    // Predicated region
    $region9: #{generator_forward.15} parent=5 // pred_check
      _
    $region10: #{generator_forward.15} parent=5 // pred_check_branch
      %122 = sbr.rel (%p119) target = $region12
    $region11: #{generator_forward.15} parent=5 // pred_region
      %s123 = ssub.s32 %s10, 1
      // Predicated region
      $region13: #{generator_forward.15} parent=11 // pred_check
        %p124 = pneg %p57
      $region14: #{generator_forward.15} parent=11 // pred_check_branch
        %126 = sbr.rel (%p124) target = $region16
      $region15: #{generator_forward.15} parent=11 // pred_region
        _
      $region16: #{generator_forward.15} parent=11 // pred_fallthru
        _
    $region12: #{generator_forward.15} parent=5 // pred_fallthru
      _
    %p127 = scmp.lt.s32.totalorder %s10, 2
    // Predicated region
    $region17: #{generator_forward.15} parent=5 // pred_check
      %p128 = pneg %p127
    $region18: #{generator_forward.15} parent=5 // pred_check_branch
      %130 = sbr.rel (%p128) target = $region20
    $region19: #{generator_forward.15} parent=5 // pred_region
      // Predicated region
      $region21: #{generator_forward.15} parent=19 // pred_check
        %p131 = pneg %p30
      $region22: #{generator_forward.15} parent=19 // pred_check_branch
        %133 = sbr.rel (%p131) target = $region24
      $region23: #{generator_forward.15} parent=19 // pred_region
        %s134 = smul.u32 32, %s10
        %p135 = scmp.lt.s32.totalorder %s134, 63
        %s136 = scalar_select %p135, %s134, 63
        %s137 = smul.addr %s136, 3
        %s138 = smul.addr %s137, 4
        %s139 = scalar_lea.vmem %s0, %s138
        %s140 = smul.u32 32, %s10
      $region24: #{generator_forward.15} parent=19 // pred_fallthru
        _
    $region20: #{generator_forward.15} parent=5 // pred_fallthru
      _
    %p141 = scmp.le.s32.totalorder 1, %s10
    %p142 = scmp.lt.s32.totalorder %s10, 3
    %p143 = pnand %p141, %p142
    %p144 = pneg %p143
    // Predicated region
    $region25: #{generator_forward.15} parent=5 // pred_check
      _
    $region26: #{generator_forward.15} parent=5 // pred_check_branch
      %146 = sbr.rel (%p143) target = $region28
    $region27: #{generator_forward.15} parent=5 // pred_region
      %s147 = ssub.s32 %s10, 1
      %s148 = smul.u32 32, %s15
      %p149 = scmp.lt.s32.totalorder %s148, 63
      %s150 = scalar_select %p149, %s148, 63
      %s151 = smul.addr %s150, 3
      %s152 = smul.addr %s151, 4
      %s153 = scalar_lea.vmem %s0, %s152
      %p154 = pneg %p36
      %p155 = pneg %p33
      %p156 = pneg %p57
      %p157 = pneg %p54
      %p158 = pneg %p83
      %p159 = pneg %p80
      %s160 = smul.u32 32, %s15
      %p161 = scmp.lt.s32.totalorder %s160, 63
      %s162 = scalar_select %p161, %s160, 63
      %s163 = smul.addr %s162, 4
      %s164 = scalar_lea.vmem %s2, %s163
      %p165 = pneg %p109
      %p166 = pneg %p106
      %p167 = scmp.lt.s32.totalorder %s15, 1
      %s168 = scalar_select %p167, %s15, 1
      %s169 = smul.addr %s168, 8
      %s170 = scalar_lea.vmem %s3, %s169
      %s171 = smul.u32 32, %s15
      %p172 = scmp.lt.s32.totalorder %s171, 63
      %s173 = scalar_select %p172, %s171, 63
      %s174 = smul.addr %s173, 3
      %s175 = smul.addr %s174, 4
      %s176 = scalar_lea.vmem %s0, %s175
      %s177 = smul.u32 32, %s15
      %s178 = smul.u32 32, %s15
      %p179 = scmp.lt.s32.totalorder %s178, 63
      %s180 = scalar_select %p179, %s178, 63
      %s181 = smul.addr %s180, 4
      %s182 = scalar_lea.vmem %s2, %s181
      %s183 = smul.u32 32, %s15
      %p184 = scmp.lt.s32.totalorder %s15, 1
      %s185 = scalar_select %p184, %s15, 1
      %s186 = smul.addr %s185, 8
      %s187 = scalar_lea.vmem %s3, %s186
      %v189 = vld [vmem:[%s176] sm:$0xff]
      %v190 = vld [vmem:[%s176 + $0x8] sm:$0xf]
      %v191 = vld [vmem:[%s176 + $0xc] sm:$0xff]
      %v192 = vld [vmem:[%s176 + $0x14] sm:$0xf]
      %v193 = vld [vmem:[%s176 + $0x18] sm:$0xff]
      %v194 = vld [vmem:[%s176 + $0x20] sm:$0xf]
      %v195 = vld [vmem:[%s176 + $0x24] sm:$0xff]
      %v196 = vld [vmem:[%s176 + $0x2c] sm:$0xf]
      %v197 = vld [vmem:[%s176 + $0x30] sm:$0xff]
      %v198 = vld [vmem:[%s176 + $0x38] sm:$0xf]
      %v199 = vld [vmem:[%s176 + $0x3c] sm:$0xff]
      %v200 = vld [vmem:[%s176 + $0x44] sm:$0xf]
      %v201 = vld [vmem:[%s176 + $0x48] sm:$0xff]
      %v202 = vld [vmem:[%s176 + $0x50] sm:$0xf]
      %v203 = vld [vmem:[%s176 + $0x54] sm:$0xff]
      %v204 = vld [vmem:[%s176 + $0x5c] sm:$0xf]
      %v205 = vld [vmem:[%s176 + $0x60] sm:$0xff]
      %v206 = vld [vmem:[%s176 + $0x68] sm:$0xf]
      %v207 = vld [vmem:[%s176 + $0x6c] sm:$0xff]
      %v208 = vld [vmem:[%s176 + $0x74] sm:$0xf]
      %v209 = vld [vmem:[%s176 + $0x78] sm:$0xff]
      %v210 = vld [vmem:[%s176 + $0x80] sm:$0xf]
      %v211 = vld [vmem:[%s176 + $0x84] sm:$0xff]
      %v212 = vld [vmem:[%s176 + $0x8c] sm:$0xf]
      %v213 = vld [vmem:[%s176 + $0x90] sm:$0xff]
      %v214 = vld [vmem:[%s176 + $0x98] sm:$0xf]
      %v215 = vld [vmem:[%s176 + $0x9c] sm:$0xff]
      %v216 = vld [vmem:[%s176 + $0xa4] sm:$0xf]
      %v217 = vld [vmem:[%s176 + $0xa8] sm:$0xff]
      %v218 = vld [vmem:[%s176 + $0xb0] sm:$0xf]
      %v219 = vld [vmem:[%s176 + $0xb4] sm:$0xff]
      %v220 = vld [vmem:[%s176 + $0xbc] sm:$0xf]
      %v221 = vld [vmem:[%s176 + $0xc0] sm:$0xff]
      %v222 = vld [vmem:[%s176 + $0xc8] sm:$0xf]
      %v223 = vld [vmem:[%s176 + $0xcc] sm:$0xff]
      %v224 = vld [vmem:[%s176 + $0xd4] sm:$0xf]
      %v225 = vld [vmem:[%s176 + $0xd8] sm:$0xff]
      %v226 = vld [vmem:[%s176 + $0xe0] sm:$0xf]
      %v227 = vld [vmem:[%s176 + $0xe4] sm:$0xff]
      %v228 = vld [vmem:[%s176 + $0xec] sm:$0xf]
      %v229 = vld [vmem:[%s176 + $0xf0] sm:$0xff]
      %v230 = vld [vmem:[%s176 + $0xf8] sm:$0xf]
      %v231 = vld [vmem:[%s176 + $0xfc] sm:$0xff]
      %v232 = vld [vmem:[%s176 + $0x104] sm:$0xf]
      %v233 = vld [vmem:[%s176 + $0x108] sm:$0xff]
      %v234 = vld [vmem:[%s176 + $0x110] sm:$0xf]
      %v235 = vld [vmem:[%s176 + $0x114] sm:$0xff]
      %v236 = vld [vmem:[%s176 + $0x11c] sm:$0xf]
      %v237 = vld [vmem:[%s176 + $0x120] sm:$0xff]
      %v238 = vld [vmem:[%s176 + $0x128] sm:$0xf]
      %v239 = vld [vmem:[%s176 + $0x12c] sm:$0xff]
      %v240 = vld [vmem:[%s176 + $0x134] sm:$0xf]
      %v241 = vld [vmem:[%s176 + $0x138] sm:$0xff]
      %v242 = vld [vmem:[%s176 + $0x140] sm:$0xf]
      %v243 = vld [vmem:[%s176 + $0x144] sm:$0xff]
      %v244 = vld [vmem:[%s176 + $0x14c] sm:$0xf]
      %v245 = vld [vmem:[%s176 + $0x150] sm:$0xff]
      %v246 = vld [vmem:[%s176 + $0x158] sm:$0xf]
      %v247 = vld [vmem:[%s176 + $0x15c] sm:$0xff]
      %v248 = vld [vmem:[%s176 + $0x164] sm:$0xf]
      %v249 = vld [vmem:[%s176 + $0x168] sm:$0xff]
      %v250 = vld [vmem:[%s176 + $0x170] sm:$0xf]
      %v251 = vld [vmem:[%s176 + $0x174] sm:$0xff]
      %v252 = vld [vmem:[%s176 + $0x17c] sm:$0xf]
      %v253 = vld [vmem:[%s1] sm:$0xf]
      %v254 = vld [vmem:[%s1 + $0x4] sm:$0xf]
      %v255 = vld [vmem:[%s1 + $0x8] sm:$0xf]
      %v256 = vld [vmem:[%s1 + $0xc] sm:$0xf]
      %v257 = vld [vmem:[%s1 + $0x10] sm:$0xf]
      %v258 = vld [vmem:[%s1 + $0x14] sm:$0xf]
      %v259 = vld [vmem:[%s1 + $0x18] sm:$0xf]
      %v260 = vld [vmem:[%s1 + $0x1c] sm:$0xf]
      %v261 = vld [vmem:[%s1 + $0x20] sm:$0xf]
      %v262 = vld [vmem:[%s1 + $0x24] sm:$0xf]
      %v263 = vld [vmem:[%s1 + $0x28] sm:$0xf]
      %v264 = vld [vmem:[%s1 + $0x2c] sm:$0xf]
      %v265 = vld [vmem:[%s1 + $0x30] sm:$0xf]
      %v266 = vld [vmem:[%s1 + $0x34] sm:$0xf]
      %v267 = vld [vmem:[%s1 + $0x38] sm:$0xf]
      %v268 = vld [vmem:[%s1 + $0x3c] sm:$0xf]
      %v269 = vld [vmem:[%s1 + $0x40] sm:$0xf]
      %v270 = vld [vmem:[%s1 + $0x44] sm:$0xf]
      %v271 = vld [vmem:[%s1 + $0x48] sm:$0xf]
      %v272 = vld [vmem:[%s1 + $0x4c] sm:$0xf]
      %v273 = vld [vmem:[%s1 + $0x50] sm:$0xf]
      %v274 = vld [vmem:[%s1 + $0x54] sm:$0xf]
      %v275 = vld [vmem:[%s1 + $0x58] sm:$0xf]
      %v276 = vld [vmem:[%s1 + $0x5c] sm:$0xf]
      %v277 = vld [vmem:[%s1 + $0x60] sm:$0xf]
      %v278 = vld [vmem:[%s1 + $0x64] sm:$0xf]
      %v279 = vld [vmem:[%s1 + $0x68] sm:$0xf]
      %v280 = vld [vmem:[%s1 + $0x6c] sm:$0xf]
      %v281 = vld [vmem:[%s1 + $0x70] sm:$0xf]
      %v282 = vld [vmem:[%s1 + $0x74] sm:$0xf]
      %v283 = vld [vmem:[%s1 + $0x78] sm:$0xf]
      %v284 = vld [vmem:[%s1 + $0x7c] sm:$0xf]
      %v285 = vld [vmem:[%s1 + $0x80] sm:$0xf]
      %v286 = vld [vmem:[%s1 + $0x84] sm:$0xf]
      %v287 = vld [vmem:[%s1 + $0x88] sm:$0xf]
      %v288 = vld [vmem:[%s1 + $0x8c] sm:$0xf]
      %v353 = vunpack.c.l.b16 %v189
      %v354 = vunpack.c.h.b16 %v189
      %v355 = vunpack.c.l.b16 %v190
      %v356 = vunpack.c.l.b16 %v191
      %v357 = vunpack.c.h.b16 %v191
      %v358 = vunpack.c.l.b16 %v192
      %v359 = vunpack.c.l.b16 %v193
      %v360 = vunpack.c.h.b16 %v193
      %v361 = vunpack.c.l.b16 %v194
      %v362 = vunpack.c.l.b16 %v195
      %v363 = vunpack.c.h.b16 %v195
      %v364 = vunpack.c.l.b16 %v196
      %v365 = vunpack.c.l.b16 %v197
      %v366 = vunpack.c.h.b16 %v197
      %v367 = vunpack.c.l.b16 %v198
      %v368 = vunpack.c.l.b16 %v199
      %v369 = vunpack.c.h.b16 %v199
      %v370 = vunpack.c.l.b16 %v200
      %v371 = vunpack.c.l.b16 %v201
      %v372 = vunpack.c.h.b16 %v201
      %v373 = vunpack.c.l.b16 %v202
      %v374 = vunpack.c.l.b16 %v203
      %v375 = vunpack.c.h.b16 %v203
      %v376 = vunpack.c.l.b16 %v204
      %v377 = vunpack.c.l.b16 %v205
      %v378 = vunpack.c.h.b16 %v205
      %v379 = vunpack.c.l.b16 %v206
      %v380 = vunpack.c.l.b16 %v207
      %v381 = vunpack.c.h.b16 %v207
      %v382 = vunpack.c.l.b16 %v208
      %v383 = vunpack.c.l.b16 %v209
      %v384 = vunpack.c.h.b16 %v209
      %v385 = vunpack.c.l.b16 %v210
      %v386 = vunpack.c.l.b16 %v211
      %v387 = vunpack.c.h.b16 %v211
      %v388 = vunpack.c.l.b16 %v212
      %v389 = vunpack.c.l.b16 %v213
      %v390 = vunpack.c.h.b16 %v213
      %v391 = vunpack.c.l.b16 %v214
      %v392 = vunpack.c.l.b16 %v215
      %v393 = vunpack.c.h.b16 %v215
      %v394 = vunpack.c.l.b16 %v216
      %v395 = vunpack.c.l.b16 %v217
      %v396 = vunpack.c.h.b16 %v217
      %v397 = vunpack.c.l.b16 %v218
      %v398 = vunpack.c.l.b16 %v219
      %v399 = vunpack.c.h.b16 %v219
      %v400 = vunpack.c.l.b16 %v220
      %v401 = vunpack.c.l.b16 %v221
      %v402 = vunpack.c.h.b16 %v221
      %v403 = vunpack.c.l.b16 %v222
      %v404 = vunpack.c.l.b16 %v223
      %v405 = vunpack.c.h.b16 %v223
      %v406 = vunpack.c.l.b16 %v224
      %v407 = vunpack.c.l.b16 %v225
      %v408 = vunpack.c.h.b16 %v225
      %v409 = vunpack.c.l.b16 %v226
      %v410 = vunpack.c.l.b16 %v227
      %v411 = vunpack.c.h.b16 %v227
      %v412 = vunpack.c.l.b16 %v228
      %v413 = vunpack.c.l.b16 %v229
      %v414 = vunpack.c.h.b16 %v229
      %v415 = vunpack.c.l.b16 %v230
      %v416 = vunpack.c.l.b16 %v231
      %v417 = vunpack.c.h.b16 %v231
      %v418 = vunpack.c.l.b16 %v232
      %v419 = vunpack.c.l.b16 %v233
      %v420 = vunpack.c.h.b16 %v233
      %v421 = vunpack.c.l.b16 %v234
      %v422 = vunpack.c.l.b16 %v235
      %v423 = vunpack.c.h.b16 %v235
      %v424 = vunpack.c.l.b16 %v236
      %v425 = vunpack.c.l.b16 %v237
      %v426 = vunpack.c.h.b16 %v237
      %v427 = vunpack.c.l.b16 %v238
      %v428 = vunpack.c.l.b16 %v239
      %v429 = vunpack.c.h.b16 %v239
      %v430 = vunpack.c.l.b16 %v240
      %v431 = vunpack.c.l.b16 %v241
      %v432 = vunpack.c.h.b16 %v241
      %v433 = vunpack.c.l.b16 %v242
      %v434 = vunpack.c.l.b16 %v243
      %v435 = vunpack.c.h.b16 %v243
      %v436 = vunpack.c.l.b16 %v244
      %v437 = vunpack.c.l.b16 %v245
      %v438 = vunpack.c.h.b16 %v245
      %v439 = vunpack.c.l.b16 %v246
      %v440 = vunpack.c.l.b16 %v247
      %v441 = vunpack.c.h.b16 %v247
      %v442 = vunpack.c.l.b16 %v248
      %v443 = vunpack.c.l.b16 %v249
      %v444 = vunpack.c.h.b16 %v249
      %v445 = vunpack.c.l.b16 %v250
      %v446 = vunpack.c.l.b16 %v251
      %v447 = vunpack.c.h.b16 %v251
      %v448 = vunpack.c.l.b16 %v252
      %v449 = vpack.c.b16 %v356, %v353
      %v450 = vpack.c.b16 %v357, %v354
      %v451 = vpack.c.b16 %v358, %v355
      %v452 = vpack.c.b16 %v362, %v359
      %v453 = vpack.c.b16 %v363, %v360
      %v454 = vpack.c.b16 %v364, %v361
      %v455 = vpack.c.b16 %v368, %v365
      %v456 = vpack.c.b16 %v369, %v366
      %v457 = vpack.c.b16 %v370, %v367
      %v458 = vpack.c.b16 %v374, %v371
      %v459 = vpack.c.b16 %v375, %v372
      %v460 = vpack.c.b16 %v376, %v373
      %v461 = vpack.c.b16 %v380, %v377
      %v462 = vpack.c.b16 %v381, %v378
      %v463 = vpack.c.b16 %v382, %v379
      %v464 = vpack.c.b16 %v386, %v383
      %v465 = vpack.c.b16 %v387, %v384
      %v466 = vpack.c.b16 %v388, %v385
      %v467 = vpack.c.b16 %v392, %v389
      %v468 = vpack.c.b16 %v393, %v390
      %v469 = vpack.c.b16 %v394, %v391
      %v470 = vpack.c.b16 %v398, %v395
      %v471 = vpack.c.b16 %v399, %v396
      %v472 = vpack.c.b16 %v400, %v397
      %v473 = vpack.c.b16 %v404, %v401
      %v474 = vpack.c.b16 %v405, %v402
      %v475 = vpack.c.b16 %v406, %v403
      %v476 = vpack.c.b16 %v410, %v407
      %v477 = vpack.c.b16 %v411, %v408
      %v478 = vpack.c.b16 %v412, %v409
      %v479 = vpack.c.b16 %v416, %v413
      %v480 = vpack.c.b16 %v417, %v414
      %v481 = vpack.c.b16 %v418, %v415
      %v482 = vpack.c.b16 %v422, %v419
      %v483 = vpack.c.b16 %v423, %v420
      %v484 = vpack.c.b16 %v424, %v421
      %v485 = vpack.c.b16 %v428, %v425
      %v486 = vpack.c.b16 %v429, %v426
      %v487 = vpack.c.b16 %v430, %v427
      %v488 = vpack.c.b16 %v434, %v431
      %v489 = vpack.c.b16 %v435, %v432
      %v490 = vpack.c.b16 %v436, %v433
      %v491 = vpack.c.b16 %v440, %v437
      %v492 = vpack.c.b16 %v441, %v438
      %v493 = vpack.c.b16 %v442, %v439
      %v494 = vpack.c.b16 %v446, %v443
      %v495 = vpack.c.b16 %v447, %v444
      %v496 = vpack.c.b16 %v448, %v445
      %v565 = vunpack.c.l.b16 %v253
      %v566 = vunpack.c.l.b16 %v254
      %v567 = vunpack.c.l.b16 %v255
      %v568 = vunpack.c.l.b16 %v256
      %v569 = vunpack.c.l.b16 %v257
      %v570 = vunpack.c.l.b16 %v258
      %v571 = vunpack.c.l.b16 %v259
      %v572 = vunpack.c.l.b16 %v260
      %v573 = vunpack.c.l.b16 %v261
      %v574 = vunpack.c.l.b16 %v262
      %v575 = vunpack.c.l.b16 %v263
      %v576 = vunpack.c.l.b16 %v264
      %v577 = vunpack.c.l.b16 %v265
      %v578 = vunpack.c.l.b16 %v266
      %v579 = vunpack.c.l.b16 %v267
      %v580 = vunpack.c.l.b16 %v268
      %v581 = vunpack.c.l.b16 %v269
      %v582 = vunpack.c.l.b16 %v270
      %v583 = vunpack.c.l.b16 %v271
      %v584 = vunpack.c.l.b16 %v272
      %v585 = vunpack.c.l.b16 %v273
      %v586 = vunpack.c.l.b16 %v274
      %v587 = vunpack.c.l.b16 %v275
      %v588 = vunpack.c.l.b16 %v276
      %v589 = vunpack.c.l.b16 %v277
      %v590 = vunpack.c.l.b16 %v278
      %v591 = vunpack.c.l.b16 %v279
      %v592 = vunpack.c.l.b16 %v280
      %v593 = vunpack.c.l.b16 %v281
      %v594 = vunpack.c.l.b16 %v282
      %v595 = vunpack.c.l.b16 %v283
      %v596 = vunpack.c.l.b16 %v284
      %v597 = vunpack.c.l.b16 %v285
      %v598 = vunpack.c.l.b16 %v286
      %v599 = vunpack.c.l.b16 %v287
      %v600 = vunpack.c.l.b16 %v288
      %v601 = vpack.c.b16 %v566, %v565
      %v602 = vpack.c.b16 %v568, %v567
      %v603 = vpack.c.b16 %v570, %v569
      %v604 = vpack.c.b16 %v572, %v571
      %v605 = vpack.c.b16 %v574, %v573
      %v606 = vpack.c.b16 %v576, %v575
      %v607 = vpack.c.b16 %v578, %v577
      %v608 = vpack.c.b16 %v580, %v579
      %v609 = vpack.c.b16 %v582, %v581
      %v610 = vpack.c.b16 %v584, %v583
      %v611 = vpack.c.b16 %v586, %v585
      %v612 = vpack.c.b16 %v588, %v587
      %v613 = vpack.c.b16 %v590, %v589
      %v614 = vpack.c.b16 %v592, %v591
      %v615 = vpack.c.b16 %v594, %v593
      %v616 = vpack.c.b16 %v596, %v595
      %v617 = vpack.c.b16 %v598, %v597
      %v618 = vpack.c.b16 %v600, %v599
      %vm637 = vcmask 261120
      %v639 = vsel %vm637, %v451, 0
      %v642 = vsel %vm637, %v454, 0
      %v645 = vsel %vm637, %v457, 0
      %v648 = vsel %vm637, %v460, 0
      %v651 = vsel %vm637, %v463, 0
      %v654 = vsel %vm637, %v466, 0
      %v657 = vsel %vm637, %v469, 0
      %v660 = vsel %vm637, %v472, 0
      %v663 = vsel %vm637, %v475, 0
      %v666 = vsel %vm637, %v478, 0
      %v669 = vsel %vm637, %v481, 0
      %v672 = vsel %vm637, %v484, 0
      %v675 = vsel %vm637, %v487, 0
      %v678 = vsel %vm637, %v490, 0
      %v681 = vsel %vm637, %v493, 0
      %v684 = vsel %vm637, %v496, 0
      %686 = vmatprep.subr.bf16.mxu0 0
      %687 = vmatpush1.bf16.msra.mxu0 %v601
      %688 = vmatprep.subr.bf16.mxu0 0
      %689 = vmatpush1.bf16.msra.mxu0 %v602
      %690 = vmatprep.subr.bf16.mxu0 0
      %691 = vmatpush1.bf16.msra.mxu0 %v603
      %692 = vmatprep.subr.bf16.mxu0 0
      %693 = vmatpush1.bf16.msra.mxu0 %v604
      %694 = vmatprep.subr.bf16.mxu0 0
      %695 = vmatpush1.bf16.msra.mxu0 %v605
      %696 = vmatprep.subr.bf16.mxu0 0
      %697 = vmatpush1.bf16.msra.mxu0 %v606
      %698 = vmatprep.subr.bf16.mxu0 0
      %699 = vmatpush1.bf16.msra.mxu0 %v607
      %700 = vmatprep.subr.bf16.mxu0 0
      %701 = vmatpush1.bf16.msra.mxu0 %v608
      %702 = vmatprep.subr.bf16.mxu0 0
      %703 = vmatpush1.bf16.msra.mxu0 %v609
      %704 = vmatprep.subr.bf16.mxu0 0
      %705 = vmatpush1.bf16.msra.mxu0 %v610
      %706 = vmatprep.subr.bf16.mxu0 0
      %707 = vmatpush1.bf16.msra.mxu0 %v611
      %708 = vmatprep.subr.bf16.mxu0 0
      %709 = vmatpush1.bf16.msra.mxu0 %v612
      %710 = vmatprep.subr.bf16.mxu0 0
      %711 = vmatpush1.bf16.msra.mxu0 %v613
      %712 = vmatprep.subr.bf16.mxu0 0
      %713 = vmatpush1.bf16.msra.mxu0 %v614
      %714 = vmatprep.subr.bf16.mxu0 0
      %715 = vmatpush1.bf16.msra.mxu0 %v615
      %716 = vmatprep.subr.bf16.mxu0 0
      %717 = vmatpush1.bf16.msra.mxu0 %v616
      %718 = vmatprep.mubr.bf16.mxu0 %v450
      %719 = vmatmul.mubr.bf16.gmra.mrb[0].mxu0 %v449
      %v720 = vpop.f32.mrb[0].mxu0
      %v721 = vadd.f32 0.0, %v720
      %v722 = vpop.f32.mrb[0].mxu0
      %v723 = vpop.f32.mrb[0].mxu0
      %v724 = vadd.f32 0.0, %v723
      %v725 = vpop.f32.mrb[0].mxu0
      %726 = vmatprep.mubr.bf16.mxu0 %v453
      %727 = vmatmul.mubr.bf16.gmra.mrb[0].mxu0 %v452
      %v728 = vpop.f32.mrb[0].mxu0
      %v729 = vadd.f32 0.0, %v728
      %v730 = vpop.f32.mrb[0].mxu0
      %v731 = vpop.f32.mrb[0].mxu0
      %v732 = vadd.f32 0.0, %v731
      %v733 = vpop.f32.mrb[0].mxu0
      %734 = vmatprep.mubr.bf16.mxu0 %v456
      %735 = vmatmul.mubr.bf16.gmra.mrb[0].mxu0 %v455
      %v736 = vpop.f32.mrb[0].mxu0
      %v737 = vadd.f32 0.0, %v736
      %v738 = vpop.f32.mrb[0].mxu0
      %v739 = vpop.f32.mrb[0].mxu0
      %v740 = vadd.f32 0.0, %v739
      %v741 = vpop.f32.mrb[0].mxu0
      %742 = vmatprep.mubr.bf16.mxu0 %v459
      %743 = vmatmul.mubr.bf16.gmra.mrb[0].mxu0 %v458
      %v744 = vpop.f32.mrb[0].mxu0
      %v745 = vadd.f32 0.0, %v744
      %v746 = vpop.f32.mrb[0].mxu0
      %v747 = vpop.f32.mrb[0].mxu0
      %v748 = vadd.f32 0.0, %v747
      %v749 = vpop.f32.mrb[0].mxu0
      %750 = vmatprep.mubr.bf16.mxu0 %v462
      %751 = vmatmul.mubr.bf16.gmra.mrb[0].mxu0 %v461
      %v752 = vpop.f32.mrb[0].mxu0
      %v753 = vadd.f32 0.0, %v752
      %v754 = vpop.f32.mrb[0].mxu0
      %v755 = vpop.f32.mrb[0].mxu0
      %v756 = vadd.f32 0.0, %v755
      %v757 = vpop.f32.mrb[0].mxu0
      %758 = vmatprep.mubr.bf16.mxu0 %v465
      %759 = vmatmul.mubr.bf16.gmra.mrb[0].mxu0 %v464
      %v760 = vpop.f32.mrb[0].mxu0
      %v761 = vadd.f32 0.0, %v760
      %v762 = vpop.f32.mrb[0].mxu0
      %v763 = vpop.f32.mrb[0].mxu0
      %v764 = vadd.f32 0.0, %v763
      %v765 = vpop.f32.mrb[0].mxu0
      %766 = vmatprep.mubr.bf16.mxu0 %v468
      %767 = vmatmul.mubr.bf16.gmra.mrb[0].mxu0 %v467
      %v768 = vpop.f32.mrb[0].mxu0
      %v769 = vadd.f32 0.0, %v768
      %v770 = vpop.f32.mrb[0].mxu0
      %v771 = vpop.f32.mrb[0].mxu0
      %v772 = vadd.f32 0.0, %v771
      %v773 = vpop.f32.mrb[0].mxu0
      %774 = vmatprep.mubr.bf16.mxu0 %v471
      %775 = vmatmul.mubr.bf16.gmra.mrb[0].mxu0 %v470
      %v776 = vpop.f32.mrb[0].mxu0
      %v777 = vadd.f32 0.0, %v776
      %v778 = vpop.f32.mrb[0].mxu0
      %v779 = vpop.f32.mrb[0].mxu0
      %v780 = vadd.f32 0.0, %v779
      %v781 = vpop.f32.mrb[0].mxu0
      %782 = vmatprep.mubr.bf16.mxu0 %v474
      %783 = vmatmul.mubr.bf16.gmra.mrb[0].mxu0 %v473
      %v784 = vpop.f32.mrb[0].mxu0
      %v785 = vadd.f32 0.0, %v784
      %v786 = vpop.f32.mrb[0].mxu0
      %v787 = vpop.f32.mrb[0].mxu0
      %v788 = vadd.f32 0.0, %v787
      %v789 = vpop.f32.mrb[0].mxu0
      %790 = vmatprep.mubr.bf16.mxu0 %v477
      %791 = vmatmul.mubr.bf16.gmra.mrb[0].mxu0 %v476
      %v792 = vpop.f32.mrb[0].mxu0
      %v793 = vadd.f32 0.0, %v792
      %v794 = vpop.f32.mrb[0].mxu0
      %v795 = vpop.f32.mrb[0].mxu0
      %v796 = vadd.f32 0.0, %v795
      %v797 = vpop.f32.mrb[0].mxu0
      %798 = vmatprep.mubr.bf16.mxu0 %v480
      %799 = vmatmul.mubr.bf16.gmra.mrb[0].mxu0 %v479
      %v800 = vpop.f32.mrb[0].mxu0
      %v801 = vadd.f32 0.0, %v800
      %v802 = vpop.f32.mrb[0].mxu0
      %v803 = vpop.f32.mrb[0].mxu0
      %v804 = vadd.f32 0.0, %v803
      %v805 = vpop.f32.mrb[0].mxu0
      %806 = vmatprep.mubr.bf16.mxu0 %v483
      %807 = vmatmul.mubr.bf16.gmra.mrb[0].mxu0 %v482
      %v808 = vpop.f32.mrb[0].mxu0
      %v809 = vadd.f32 0.0, %v808
      %v810 = vpop.f32.mrb[0].mxu0
      %v811 = vpop.f32.mrb[0].mxu0
      %v812 = vadd.f32 0.0, %v811
      %v813 = vpop.f32.mrb[0].mxu0
      %814 = vmatprep.mubr.bf16.mxu0 %v486
      %815 = vmatmul.mubr.bf16.gmra.mrb[0].mxu0 %v485
      %v816 = vpop.f32.mrb[0].mxu0
      %v817 = vadd.f32 0.0, %v816
      %v818 = vpop.f32.mrb[0].mxu0
      %v819 = vpop.f32.mrb[0].mxu0
      %v820 = vadd.f32 0.0, %v819
      %v821 = vpop.f32.mrb[0].mxu0
      %822 = vmatprep.mubr.bf16.mxu0 %v489
      %823 = vmatmul.mubr.bf16.gmra.mrb[0].mxu0 %v488
      %v824 = vpop.f32.mrb[0].mxu0
      %v825 = vadd.f32 0.0, %v824
      %v826 = vpop.f32.mrb[0].mxu0
      %v827 = vpop.f32.mrb[0].mxu0
      %v828 = vadd.f32 0.0, %v827
      %v829 = vpop.f32.mrb[0].mxu0
      %830 = vmatprep.mubr.bf16.mxu0 %v492
      %831 = vmatmul.mubr.bf16.gmra.mrb[0].mxu0 %v491
      %v832 = vpop.f32.mrb[0].mxu0
      %v833 = vadd.f32 0.0, %v832
      %v834 = vpop.f32.mrb[0].mxu0
      %v835 = vpop.f32.mrb[0].mxu0
      %v836 = vadd.f32 0.0, %v835
      %v837 = vpop.f32.mrb[0].mxu0
      %838 = vmatprep.mubr.bf16.mxu0 %v495
      %839 = vmatmul.mubr.bf16.gmra.mrb[0].mxu0 %v494
      %v840 = vpop.f32.mrb[0].mxu0
      %v841 = vadd.f32 0.0, %v840
      %v842 = vpop.f32.mrb[0].mxu0
      %v843 = vpop.f32.mrb[0].mxu0
      %v844 = vadd.f32 0.0, %v843
      %v845 = vpop.f32.mrb[0].mxu0
      %846 = vdwg.mxu0
      %847 = vmatprep.subr.bf16.mxu0 0
      %848 = vmatpush1.bf16.msra.mxu0 %v617
      %849 = vmatprep.subr.bf16.mxu0 0
      %850 = vmatpush1.bf16.msra.mxu0 %v618
      %851 = vmatprep.subr.bf16.mxu0 0
      %852 = vmatpush1.bf16.msra.mxu0 0
      %853 = vmatprep.subr.bf16.mxu0 0
      %854 = vmatpush1.bf16.msra.mxu0 0
      %855 = vmatprep.subr.bf16.mxu0 0
      %856 = vmatpush1.bf16.msra.mxu0 0
      %857 = vmatprep.subr.bf16.mxu0 0
      %858 = vmatpush1.bf16.msra.mxu0 0
      %859 = vmatprep.subr.bf16.mxu0 0
      %860 = vmatpush1.bf16.msra.mxu0 0
      %861 = vmatprep.subr.bf16.mxu0 0
      %862 = vmatpush1.bf16.msra.mxu0 0
      %863 = vmatprep.subr.bf16.mxu0 0
      %864 = vmatpush1.bf16.msra.mxu0 0
      %865 = vmatprep.subr.bf16.mxu0 0
      %866 = vmatpush1.bf16.msra.mxu0 0
      %867 = vmatprep.subr.bf16.mxu0 0
      %868 = vmatpush1.bf16.msra.mxu0 0
      %869 = vmatprep.subr.bf16.mxu0 0
      %870 = vmatpush1.bf16.msra.mxu0 0
      %871 = vmatprep.subr.bf16.mxu0 0
      %872 = vmatpush1.bf16.msra.mxu0 0
      %873 = vmatprep.subr.bf16.mxu0 0
      %874 = vmatpush1.bf16.msra.mxu0 0
      %875 = vmatprep.subr.bf16.mxu0 0
      %876 = vmatpush1.bf16.msra.mxu0 0
      %877 = vmatprep.subr.bf16.mxu0 0
      %878 = vmatpush1.bf16.msra.mxu0 0
      %879 = vmatprep.mubr.bf16.mxu0 0
      %880 = vmatmul.mubr.bf16.gmra.mrb[0].mxu0 %v639
      %v881 = vpop.f32.mrb[0].mxu0
      %v882 = vadd.f32 %v721, %v881
      %v883 = vpop.f32.mrb[0].mxu0
      %v884 = vpop.f32.mrb[0].mxu0
      %v885 = vadd.f32 %v724, %v884
      %v886 = vpop.f32.mrb[0].mxu0
      %887 = vmatprep.mubr.bf16.mxu0 0
      %888 = vmatmul.mubr.bf16.gmra.mrb[0].mxu0 %v642
      %v889 = vpop.f32.mrb[0].mxu0
      %v890 = vadd.f32 %v729, %v889
      %v891 = vpop.f32.mrb[0].mxu0
      %v892 = vpop.f32.mrb[0].mxu0
      %v893 = vadd.f32 %v732, %v892
      %v894 = vpop.f32.mrb[0].mxu0
      %895 = vmatprep.mubr.bf16.mxu0 0
      %896 = vmatmul.mubr.bf16.gmra.mrb[0].mxu0 %v645
      %v897 = vpop.f32.mrb[0].mxu0
      %v898 = vadd.f32 %v737, %v897
      %v899 = vpop.f32.mrb[0].mxu0
      %v900 = vpop.f32.mrb[0].mxu0
      %v901 = vadd.f32 %v740, %v900
      %v902 = vpop.f32.mrb[0].mxu0
      %903 = vmatprep.mubr.bf16.mxu0 0
      %904 = vmatmul.mubr.bf16.gmra.mrb[0].mxu0 %v648
      %v905 = vpop.f32.mrb[0].mxu0
      %v906 = vadd.f32 %v745, %v905
      %v907 = vpop.f32.mrb[0].mxu0
      %v908 = vpop.f32.mrb[0].mxu0
      %v909 = vadd.f32 %v748, %v908
      %v910 = vpop.f32.mrb[0].mxu0
      %911 = vmatprep.mubr.bf16.mxu0 0
      %912 = vmatmul.mubr.bf16.gmra.mrb[0].mxu0 %v651
      %v913 = vpop.f32.mrb[0].mxu0
      %v914 = vadd.f32 %v753, %v913
      %v915 = vpop.f32.mrb[0].mxu0
      %v916 = vpop.f32.mrb[0].mxu0
      %v917 = vadd.f32 %v756, %v916
      %v918 = vpop.f32.mrb[0].mxu0
      %919 = vmatprep.mubr.bf16.mxu0 0
      %920 = vmatmul.mubr.bf16.gmra.mrb[0].mxu0 %v654
      %v921 = vpop.f32.mrb[0].mxu0
      %v922 = vadd.f32 %v761, %v921
      %v923 = vpop.f32.mrb[0].mxu0
      %v924 = vpop.f32.mrb[0].mxu0
      %v925 = vadd.f32 %v764, %v924
      %v926 = vpop.f32.mrb[0].mxu0
      %927 = vmatprep.mubr.bf16.mxu0 0
      %928 = vmatmul.mubr.bf16.gmra.mrb[0].mxu0 %v657
      %v929 = vpop.f32.mrb[0].mxu0
      %v930 = vadd.f32 %v769, %v929
      %v931 = vpop.f32.mrb[0].mxu0
      %v932 = vpop.f32.mrb[0].mxu0
      %v933 = vadd.f32 %v772, %v932
      %v934 = vpop.f32.mrb[0].mxu0
      %935 = vmatprep.mubr.bf16.mxu0 0
      %936 = vmatmul.mubr.bf16.gmra.mrb[0].mxu0 %v660
      %v937 = vpop.f32.mrb[0].mxu0
      %v938 = vadd.f32 %v777, %v937
      %v939 = vpop.f32.mrb[0].mxu0
      %v940 = vpop.f32.mrb[0].mxu0
      %v941 = vadd.f32 %v780, %v940
      %v942 = vpop.f32.mrb[0].mxu0
      %943 = vmatprep.mubr.bf16.mxu0 0
      %944 = vmatmul.mubr.bf16.gmra.mrb[0].mxu0 %v663
      %v945 = vpop.f32.mrb[0].mxu0
      %v946 = vadd.f32 %v785, %v945
      %v947 = vpop.f32.mrb[0].mxu0
      %v948 = vpop.f32.mrb[0].mxu0
      %v949 = vadd.f32 %v788, %v948
      %v950 = vpop.f32.mrb[0].mxu0
      %951 = vmatprep.mubr.bf16.mxu0 0
      %952 = vmatmul.mubr.bf16.gmra.mrb[0].mxu0 %v666
      %v953 = vpop.f32.mrb[0].mxu0
      %v954 = vadd.f32 %v793, %v953
      %v955 = vpop.f32.mrb[0].mxu0
      %v956 = vpop.f32.mrb[0].mxu0
      %v957 = vadd.f32 %v796, %v956
      %v958 = vpop.f32.mrb[0].mxu0
      %959 = vmatprep.mubr.bf16.mxu0 0
      %960 = vmatmul.mubr.bf16.gmra.mrb[0].mxu0 %v669
      %v961 = vpop.f32.mrb[0].mxu0
      %v962 = vadd.f32 %v801, %v961
      %v963 = vpop.f32.mrb[0].mxu0
      %v964 = vpop.f32.mrb[0].mxu0
      %v965 = vadd.f32 %v804, %v964
      %v966 = vpop.f32.mrb[0].mxu0
      %967 = vmatprep.mubr.bf16.mxu0 0
      %968 = vmatmul.mubr.bf16.gmra.mrb[0].mxu0 %v672
      %v969 = vpop.f32.mrb[0].mxu0
      %v970 = vadd.f32 %v809, %v969
      %v971 = vpop.f32.mrb[0].mxu0
      %v972 = vpop.f32.mrb[0].mxu0
      %v973 = vadd.f32 %v812, %v972
      %v974 = vpop.f32.mrb[0].mxu0
      %975 = vmatprep.mubr.bf16.mxu0 0
      %976 = vmatmul.mubr.bf16.gmra.mrb[0].mxu0 %v675
      %v977 = vpop.f32.mrb[0].mxu0
      %v978 = vadd.f32 %v817, %v977
      %v979 = vpop.f32.mrb[0].mxu0
      %v980 = vpop.f32.mrb[0].mxu0
      %v981 = vadd.f32 %v820, %v980
      %v982 = vpop.f32.mrb[0].mxu0
      %983 = vmatprep.mubr.bf16.mxu0 0
      %984 = vmatmul.mubr.bf16.gmra.mrb[0].mxu0 %v678
      %v985 = vpop.f32.mrb[0].mxu0
      %v986 = vadd.f32 %v825, %v985
      %v987 = vpop.f32.mrb[0].mxu0
      %v988 = vpop.f32.mrb[0].mxu0
      %v989 = vadd.f32 %v828, %v988
      %v990 = vpop.f32.mrb[0].mxu0
      %991 = vmatprep.mubr.bf16.mxu0 0
      %992 = vmatmul.mubr.bf16.gmra.mrb[0].mxu0 %v681
      %v993 = vpop.f32.mrb[0].mxu0
      %v994 = vadd.f32 %v833, %v993
      %v995 = vpop.f32.mrb[0].mxu0
      %v996 = vpop.f32.mrb[0].mxu0
      %v997 = vadd.f32 %v836, %v996
      %v998 = vpop.f32.mrb[0].mxu0
      %999 = vmatprep.mubr.bf16.mxu0 0
      %1000 = vmatmul.mubr.bf16.gmra.mrb[0].mxu0 %v684
      %v1001 = vpop.f32.mrb[0].mxu0
      %v1002 = vadd.f32 %v841, %v1001
      %v1003 = vpop.f32.mrb[0].mxu0
      %v1004 = vpop.f32.mrb[0].mxu0
      %v1005 = vadd.f32 %v844, %v1004
      %v1006 = vpop.f32.mrb[0].mxu0
      %1007 = vdwg.mxu0
      %v1008 = vpack.c.bf16 %v885, %v882
      %v1009 = vpack.c.bf16 %v893, %v890
      %v1010 = vpack.c.bf16 %v901, %v898
      %v1011 = vpack.c.bf16 %v909, %v906
      %v1012 = vpack.c.bf16 %v917, %v914
      %v1013 = vpack.c.bf16 %v925, %v922
      %v1014 = vpack.c.bf16 %v933, %v930
      %v1015 = vpack.c.bf16 %v941, %v938
      %v1016 = vpack.c.bf16 %v949, %v946
      %v1017 = vpack.c.bf16 %v957, %v954
      %v1018 = vpack.c.bf16 %v965, %v962
      %v1019 = vpack.c.bf16 %v973, %v970
      %v1020 = vpack.c.bf16 %v981, %v978
      %v1021 = vpack.c.bf16 %v989, %v986
      %v1022 = vpack.c.bf16 %v997, %v994
      %v1023 = vpack.c.bf16 %v1005, %v1002
      %v1040 = vunpack.c.l.b16 %v1008
      %v1041 = vunpack.c.h.b16 %v1008
      %v1042 = vunpack.c.l.b16 %v1009
      %v1043 = vunpack.c.h.b16 %v1009
      %v1044 = vunpack.c.l.b16 %v1010
      %v1045 = vunpack.c.h.b16 %v1010
      %v1046 = vunpack.c.l.b16 %v1011
      %v1047 = vunpack.c.h.b16 %v1011
      %v1048 = vunpack.c.l.b16 %v1012
      %v1049 = vunpack.c.h.b16 %v1012
      %v1050 = vunpack.c.l.b16 %v1013
      %v1051 = vunpack.c.h.b16 %v1013
      %v1052 = vunpack.c.l.b16 %v1014
      %v1053 = vunpack.c.h.b16 %v1014
      %v1054 = vunpack.c.l.b16 %v1015
      %v1055 = vunpack.c.h.b16 %v1015
      %v1056 = vunpack.c.l.b16 %v1016
      %v1057 = vunpack.c.h.b16 %v1016
      %v1058 = vunpack.c.l.b16 %v1017
      %v1059 = vunpack.c.h.b16 %v1017
      %v1060 = vunpack.c.l.b16 %v1018
      %v1061 = vunpack.c.h.b16 %v1018
      %v1062 = vunpack.c.l.b16 %v1019
      %v1063 = vunpack.c.h.b16 %v1019
      %v1064 = vunpack.c.l.b16 %v1020
      %v1065 = vunpack.c.h.b16 %v1020
      %v1066 = vunpack.c.l.b16 %v1021
      %v1067 = vunpack.c.h.b16 %v1021
      %v1068 = vunpack.c.l.b16 %v1022
      %v1069 = vunpack.c.h.b16 %v1022
      %v1070 = vunpack.c.l.b16 %v1023
      %v1071 = vunpack.c.h.b16 %v1023
      %v1072 = vpack.c.b16 %v1040, %v1040
      %v1073 = vpack.c.b16 %v1041, %v1041
      %v1074 = vpack.c.b16 %v1042, %v1042
      %v1075 = vpack.c.b16 %v1043, %v1043
      %v1076 = vpack.c.b16 %v1044, %v1044
      %v1077 = vpack.c.b16 %v1045, %v1045
      %v1078 = vpack.c.b16 %v1046, %v1046
      %v1079 = vpack.c.b16 %v1047, %v1047
      %v1080 = vpack.c.b16 %v1048, %v1048
      %v1081 = vpack.c.b16 %v1049, %v1049
      %v1082 = vpack.c.b16 %v1050, %v1050
      %v1083 = vpack.c.b16 %v1051, %v1051
      %v1084 = vpack.c.b16 %v1052, %v1052
      %v1085 = vpack.c.b16 %v1053, %v1053
      %v1086 = vpack.c.b16 %v1054, %v1054
      %v1087 = vpack.c.b16 %v1055, %v1055
      %v1088 = vpack.c.b16 %v1056, %v1056
      %v1089 = vpack.c.b16 %v1057, %v1057
      %v1090 = vpack.c.b16 %v1058, %v1058
      %v1091 = vpack.c.b16 %v1059, %v1059
      %v1092 = vpack.c.b16 %v1060, %v1060
      %v1093 = vpack.c.b16 %v1061, %v1061
      %v1094 = vpack.c.b16 %v1062, %v1062
      %v1095 = vpack.c.b16 %v1063, %v1063
      %v1096 = vpack.c.b16 %v1064, %v1064
      %v1097 = vpack.c.b16 %v1065, %v1065
      %v1098 = vpack.c.b16 %v1066, %v1066
      %v1099 = vpack.c.b16 %v1067, %v1067
      %v1100 = vpack.c.b16 %v1068, %v1068
      %v1101 = vpack.c.b16 %v1069, %v1069
      %v1102 = vpack.c.b16 %v1070, %v1070
      %v1103 = vpack.c.b16 %v1071, %v1071
      %1136 = vst [vmem:[%s182] sm:$0xf] %v1072
      %1137 = vst [vmem:[%s182 + $0x4] sm:$0xf] %v1073
      %1138 = vst [vmem:[%s182 + $0x8] sm:$0xf] %v1074
      %1139 = vst [vmem:[%s182 + $0xc] sm:$0xf] %v1075
      %1140 = vst [vmem:[%s182 + $0x10] sm:$0xf] %v1076
      %1141 = vst [vmem:[%s182 + $0x14] sm:$0xf] %v1077
      %1142 = vst [vmem:[%s182 + $0x18] sm:$0xf] %v1078
      %1143 = vst [vmem:[%s182 + $0x1c] sm:$0xf] %v1079
      %1144 = vst [vmem:[%s182 + $0x20] sm:$0xf] %v1080
      %1145 = vst [vmem:[%s182 + $0x24] sm:$0xf] %v1081
      %1146 = vst [vmem:[%s182 + $0x28] sm:$0xf] %v1082
      %1147 = vst [vmem:[%s182 + $0x2c] sm:$0xf] %v1083
      %1148 = vst [vmem:[%s182 + $0x30] sm:$0xf] %v1084
      %1149 = vst [vmem:[%s182 + $0x34] sm:$0xf] %v1085
      %1150 = vst [vmem:[%s182 + $0x38] sm:$0xf] %v1086
      %1151 = vst [vmem:[%s182 + $0x3c] sm:$0xf] %v1087
      %1152 = vst [vmem:[%s182 + $0x40] sm:$0xf] %v1088
      %1153 = vst [vmem:[%s182 + $0x44] sm:$0xf] %v1089
      %1154 = vst [vmem:[%s182 + $0x48] sm:$0xf] %v1090
      %1155 = vst [vmem:[%s182 + $0x4c] sm:$0xf] %v1091
      %1156 = vst [vmem:[%s182 + $0x50] sm:$0xf] %v1092
      %1157 = vst [vmem:[%s182 + $0x54] sm:$0xf] %v1093
      %1158 = vst [vmem:[%s182 + $0x58] sm:$0xf] %v1094
      %1159 = vst [vmem:[%s182 + $0x5c] sm:$0xf] %v1095
      %1160 = vst [vmem:[%s182 + $0x60] sm:$0xf] %v1096
      %1161 = vst [vmem:[%s182 + $0x64] sm:$0xf] %v1097
      %1162 = vst [vmem:[%s182 + $0x68] sm:$0xf] %v1098
      %1163 = vst [vmem:[%s182 + $0x6c] sm:$0xf] %v1099
      %1164 = vst [vmem:[%s182 + $0x70] sm:$0xf] %v1100
      %1165 = vst [vmem:[%s182 + $0x74] sm:$0xf] %v1101
      %1166 = vst [vmem:[%s182 + $0x78] sm:$0xf] %v1102
      %1167 = vst [vmem:[%s182 + $0x7c] sm:$0xf] %v1103
      %v1168 = vadd.f32 %v882, %v885
      %v1169 = vadd.f32 %v1168, %v890
      %v1170 = vadd.f32 %v1169, %v893
      %v1171 = vadd.f32 %v1170, %v898
      %v1172 = vadd.f32 %v1171, %v901
      %v1173 = vadd.f32 %v1172, %v906
      %v1174 = vadd.f32 %v1173, %v909
      %v1175 = vadd.f32 %v1174, %v914
      %v1176 = vadd.f32 %v1175, %v917
      %v1177 = vadd.f32 %v1176, %v922
      %v1178 = vadd.f32 %v1177, %v925
      %v1179 = vadd.f32 %v1178, %v930
      %v1180 = vadd.f32 %v1179, %v933
      %v1181 = vadd.f32 %v1180, %v938
      %v1182 = vadd.f32 %v1181, %v941
      %v1183 = vadd.f32 %v1182, %v946
      %v1184 = vadd.f32 %v1183, %v949
      %v1185 = vadd.f32 %v1184, %v954
      %v1186 = vadd.f32 %v1185, %v957
      %v1187 = vadd.f32 %v1186, %v962
      %v1188 = vadd.f32 %v1187, %v965
      %v1189 = vadd.f32 %v1188, %v970
      %v1190 = vadd.f32 %v1189, %v973
      %v1191 = vadd.f32 %v1190, %v978
      %v1192 = vadd.f32 %v1191, %v981
      %v1193 = vadd.f32 %v1192, %v986
      %v1194 = vadd.f32 %v1193, %v989
      %v1195 = vadd.f32 %v1194, %v994
      %v1196 = vadd.f32 %v1195, %v997
      %v1197 = vadd.f32 %v1196, %v1002
      %v1198 = vadd.f32 %v1197, %v1005
      %v1199 = vrot.slane %v1198, 4
      %v1200 = vadd.f32 %v1198, %v1199
      %v1201 = vrot.slane %v1200, 2
      %v1202 = vadd.f32 %v1200, %v1201
      %v1203 = vrot.slane %v1202, 1
      %v1204 = vadd.f32 %v1202, %v1203
      %1205 = vst [vmem:[%s187] sm:$0x1] %v1204
      %v1206 = vmul.f32 %v882, %v882
      %v1207 = vmul.f32 %v885, %v885
      %v1208 = vmul.f32 %v890, %v890
      %v1209 = vmul.f32 %v893, %v893
      %v1210 = vmul.f32 %v898, %v898
      %v1211 = vmul.f32 %v901, %v901
      %v1212 = vmul.f32 %v906, %v906
      %v1213 = vmul.f32 %v909, %v909
      %v1214 = vmul.f32 %v914, %v914
      %v1215 = vmul.f32 %v917, %v917
      %v1216 = vmul.f32 %v922, %v922
      %v1217 = vmul.f32 %v925, %v925
      %v1218 = vmul.f32 %v930, %v930
      %v1219 = vmul.f32 %v933, %v933
      %v1220 = vmul.f32 %v938, %v938
      %v1221 = vmul.f32 %v941, %v941
      %v1222 = vmul.f32 %v946, %v946
      %v1223 = vmul.f32 %v949, %v949
      %v1224 = vmul.f32 %v954, %v954
      %v1225 = vmul.f32 %v957, %v957
      %v1226 = vmul.f32 %v962, %v962
      %v1227 = vmul.f32 %v965, %v965
      %v1228 = vmul.f32 %v970, %v970
      %v1229 = vmul.f32 %v973, %v973
      %v1230 = vmul.f32 %v978, %v978
      %v1231 = vmul.f32 %v981, %v981
      %v1232 = vmul.f32 %v986, %v986
      %v1233 = vmul.f32 %v989, %v989
      %v1234 = vmul.f32 %v994, %v994
      %v1235 = vmul.f32 %v997, %v997
      %v1236 = vmul.f32 %v1002, %v1002
      %v1237 = vmul.f32 %v1005, %v1005
      %v1238 = vadd.f32 %v1206, %v1207
      %v1239 = vadd.f32 %v1238, %v1208
      %v1240 = vadd.f32 %v1239, %v1209
      %v1241 = vadd.f32 %v1240, %v1210
      %v1242 = vadd.f32 %v1241, %v1211
      %v1243 = vadd.f32 %v1242, %v1212
      %v1244 = vadd.f32 %v1243, %v1213
      %v1245 = vadd.f32 %v1244, %v1214
      %v1246 = vadd.f32 %v1245, %v1215
      %v1247 = vadd.f32 %v1246, %v1216
      %v1248 = vadd.f32 %v1247, %v1217
      %v1249 = vadd.f32 %v1248, %v1218
      %v1250 = vadd.f32 %v1249, %v1219
      %v1251 = vadd.f32 %v1250, %v1220
      %v1252 = vadd.f32 %v1251, %v1221
      %v1253 = vadd.f32 %v1252, %v1222
      %v1254 = vadd.f32 %v1253, %v1223
      %v1255 = vadd.f32 %v1254, %v1224
      %v1256 = vadd.f32 %v1255, %v1225
      %v1257 = vadd.f32 %v1256, %v1226
      %v1258 = vadd.f32 %v1257, %v1227
      %v1259 = vadd.f32 %v1258, %v1228
      %v1260 = vadd.f32 %v1259, %v1229
      %v1261 = vadd.f32 %v1260, %v1230
      %v1262 = vadd.f32 %v1261, %v1231
      %v1263 = vadd.f32 %v1262, %v1232
      %v1264 = vadd.f32 %v1263, %v1233
      %v1265 = vadd.f32 %v1264, %v1234
      %v1266 = vadd.f32 %v1265, %v1235
      %v1267 = vadd.f32 %v1266, %v1236
      %v1268 = vadd.f32 %v1267, %v1237
      %v1269 = vrot.slane %v1268, 4
      %v1270 = vadd.f32 %v1268, %v1269
      %v1271 = vrot.slane %v1270, 2
      %v1272 = vadd.f32 %v1270, %v1271
      %v1273 = vrot.slane %v1272, 1
      %v1274 = vadd.f32 %v1272, %v1273
      %1275 = vst [vmem:[%s187 + $0x1] sm:$0x1] %v1274
      %s1276 = smul.u32 32, %s15
      %p1277 = scmp.lt.s32.totalorder %s1276, 63
      %s1278 = scalar_select %p1277, %s1276, 63
      %s1279 = smul.addr %s1278, 4
      %s1280 = scalar_lea.vmem %s2, %s1279
      %p1281 = scmp.lt.s32.totalorder %s15, 1
      %s1282 = scalar_select %p1281, %s15, 1
      %s1283 = smul.addr %s1282, 8
      %s1284 = scalar_lea.vmem %s3, %s1283
      // Predicated region
      $region29: #{generator_forward.15} parent=27 // pred_check
        %p1285 = pneg %p80
      $region30: #{generator_forward.15} parent=27 // pred_check_branch
        %1287 = sbr.rel (%p1285) target = $region32
      $region31: #{generator_forward.15} parent=27 // pred_region
        %s1288 = smul.u32 32, %s15
      $region32: #{generator_forward.15} parent=27 // pred_fallthru
        _
      // Predicated region
      $region33: #{generator_forward.15} parent=27 // pred_check
        %p1289 = pneg %p106
      $region34: #{generator_forward.15} parent=27 // pred_check_branch
        %1291 = sbr.rel (%p1289) target = $region36
      $region35: #{generator_forward.15} parent=27 // pred_region
        _
      $region36: #{generator_forward.15} parent=27 // pred_fallthru
        _
    $region28: #{generator_forward.15} parent=5 // pred_fallthru
      _
    %p1292 = scmp.le.s32.totalorder 2, %s10
    // Predicated region
    $region37: #{generator_forward.15} parent=5 // pred_check
      %p1293 = pneg %p1292
    $region38: #{generator_forward.15} parent=5 // pred_check_branch
      %1295 = sbr.rel (%p1293) target = $region40
    $region39: #{generator_forward.15} parent=5 // pred_region
      %s1296 = ssub.s32 %s10, 2
      // Predicated region
      $region41: #{generator_forward.15} parent=39 // pred_check
        %p1297 = pneg %p86
      $region42: #{generator_forward.15} parent=39 // pred_check_branch
        %1299 = sbr.rel (%p1297) target = $region44
      $region43: #{generator_forward.15} parent=39 // pred_region
        %s1300 = smul.u32 32, %s16
        %p1301 = scmp.lt.s32.totalorder %s1300, 63
        %s1302 = scalar_select %p1301, %s1300, 63
        %s1303 = smul.addr %s1302, 4
        %s1304 = scalar_lea.vmem %s2, %s1303
      $region44: #{generator_forward.15} parent=39 // pred_fallthru
        _
      // Predicated region
      $region45: #{generator_forward.15} parent=39 // pred_check
        %p1305 = pneg %p112
      $region46: #{generator_forward.15} parent=39 // pred_check_branch
        %1307 = sbr.rel (%p1305) target = $region48
      $region47: #{generator_forward.15} parent=39 // pred_region
        %p1308 = scmp.lt.s32.totalorder %s16, 1
        %s1309 = scalar_select %p1308, %s16, 1
        %s1310 = smul.addr %s1309, 8
        %s1311 = scalar_lea.vmem %s3, %s1310
      $region48: #{generator_forward.15} parent=39 // pred_fallthru
        _
    $region40: #{generator_forward.15} parent=5 // pred_fallthru
      _
  $region6: #{generator_forward.15} parent=0 // loop_footer
    %s14 = sadd.s32 1, %s10
  $region7: #{generator_forward.15} parent=0 // loop_footer_branch
    %9 = sbr.rel target = $region3
  $region8: #{generator_forward.15} parent=0 // loop_exit
    _

// kernel: generator_forward.16
$region0: #{generator_forward.16}
  #allocation0 [shape = 'u32[]', space=smem, size = 0x4, offset = 0x4, fixed_abs, tag = 'smem constant byte address 0x4 - core index']
  #allocation1 [shape = 'u32[144,128]{1,0:T(1,128)}', space=vmem, size = 0x12000, scoped, tag = 'internal scratch']
  %s0 = inlined_call_operand.vmem [shape: bf16[512,128], index: 0, kind: input, shape index: {}]
  %s1 = inlined_call_operand.vmem [shape: f32[1,128], index: 1, kind: input, shape index: {}]
  %s2 = inlined_call_operand.vmem [shape: f32[1,128], index: 2, kind: input, shape index: {}]
  %s3 = inlined_call_operand.vmem [shape: bf16[512,128], index: 3, kind: output, shape index: {}]
  %s4 = sld [smem:[#allocation0]]
  $region45: #{generator_forward.16} parent=0
    _
  %s6 = ssub.s32 1, %s4
  %s7 = scalar_select 0, %s6, %s4
  loop: start=0, step=1, limit=4
  $region2: #{generator_forward.16} parent=0 // loop_pre_header
    _
  $region3: #{generator_forward.16} parent=0 // loop_header
    %s9 = sphi 0, %s13
    %p10 = scmp.ge.s32.totalorder %s9, 4
    %s19 = sphi 0, %s21
    %s22 = sphi 0, %s19
    %s23 = sphi 0, %s22
    %s39 = sphi 0, %s23
    %s43 = sphi 0, %s43
    %s45 = sphi 0, %s43
    %s46 = sphi 0, %s45
    %s60 = sphi 0, %s46
    %s64 = sphi 0, %s64
    %s66 = sphi 0, %s64
    %s67 = sphi 0, %s66
    %s81 = sphi 0, %s67
    %s87 = sphi 0, %s89
    %s90 = sphi 0, %s87
    %s91 = sphi 0, %s90
    %s107 = sphi 0, %s91
  $region4: #{generator_forward.16} parent=0 // loop_header_branch
    %12 = sbr.rel (%p10) target = $region8
  $region5: #{generator_forward.16} parent=0 // loop_body
    %s14 = ssub.s32 %s9, 1
    %s15 = ssub.s32 %s9, 2
    %s16 = sadd.s32 %s9, 1
    %s17 = ssub.s32 %s9, %s16
    %p18 = scmp.eq.s32.totalorder %s17, 0
    %s20 = sadd.s32 %s19, 1
    %s21 = scalar_select %p18, %s19, %s20
    %p24 = pneg %p18
    %p25 = scmp.eq.s32.totalorder %s9, 1
    %p26 = por %p24, %p25
    %p27 = scmp.ne.s32.totalorder %s19, %s22
    %p28 = scmp.eq.s32.totalorder %s9, 0
    %p29 = por %p27, %p28
    %p30 = scmp.ne.s32.totalorder %s19, %s22
    %p31 = scmp.eq.s32.totalorder %s14, 1
    %p32 = por %p30, %p31
    %p33 = scmp.ne.s32.totalorder %s22, %s23
    %p34 = scmp.eq.s32.totalorder %s14, 0
    %p35 = por %p33, %p34
    %p36 = scmp.ne.s32.totalorder %s22, %s23
    %p37 = scmp.eq.s32.totalorder %s15, 1
    %p38 = por %p36, %p37
    %p40 = scmp.ne.s32.totalorder %s23, %s39
    %p41 = scmp.eq.s32.totalorder %s15, 0
    %p42 = por %p40, %p41
    %s44 = sadd.s32 %s43, 1
    %p47 = scmp.eq.s32.totalorder %s9, 1
    %p48 = scmp.ne.s32.totalorder %s43, %s45
    %p49 = scmp.eq.s32.totalorder %s9, 0
    %p50 = por %p48, %p49
    %p51 = scmp.ne.s32.totalorder %s43, %s45
    %p52 = scmp.eq.s32.totalorder %s14, 1
    %p53 = por %p51, %p52
    %p54 = scmp.ne.s32.totalorder %s45, %s46
    %p55 = scmp.eq.s32.totalorder %s14, 0
    %p56 = por %p54, %p55
    %p57 = scmp.ne.s32.totalorder %s45, %s46
    %p58 = scmp.eq.s32.totalorder %s15, 1
    %p59 = por %p57, %p58
    %p61 = scmp.ne.s32.totalorder %s46, %s60
    %p62 = scmp.eq.s32.totalorder %s15, 0
    %p63 = por %p61, %p62
    %s65 = sadd.s32 %s64, 1
    %p68 = scmp.eq.s32.totalorder %s9, 1
    %p69 = scmp.ne.s32.totalorder %s64, %s66
    %p70 = scmp.eq.s32.totalorder %s9, 0
    %p71 = por %p69, %p70
    %p72 = scmp.ne.s32.totalorder %s64, %s66
    %p73 = scmp.eq.s32.totalorder %s14, 1
    %p74 = por %p72, %p73
    %p75 = scmp.ne.s32.totalorder %s66, %s67
    %p76 = scmp.eq.s32.totalorder %s14, 0
    %p77 = por %p75, %p76
    %p78 = scmp.ne.s32.totalorder %s66, %s67
    %p79 = scmp.eq.s32.totalorder %s15, 1
    %p80 = por %p78, %p79
    %p82 = scmp.ne.s32.totalorder %s67, %s81
    %p83 = scmp.eq.s32.totalorder %s15, 0
    %p84 = por %p82, %p83
    %s85 = ssub.s32 %s9, %s16
    %p86 = scmp.eq.s32.totalorder %s85, 0
    %s88 = sadd.s32 %s87, 1
    %s89 = scalar_select %p86, %s87, %s88
    %p92 = pneg %p86
    %p93 = scmp.eq.s32.totalorder %s9, 1
    %p94 = por %p92, %p93
    %p95 = scmp.ne.s32.totalorder %s87, %s90
    %p96 = scmp.eq.s32.totalorder %s9, 0
    %p97 = por %p95, %p96
    %p98 = scmp.ne.s32.totalorder %s87, %s90
    %p99 = scmp.eq.s32.totalorder %s14, 1
    %p100 = por %p98, %p99
    %p101 = scmp.ne.s32.totalorder %s90, %s91
    %p102 = scmp.eq.s32.totalorder %s14, 0
    %p103 = por %p101, %p102
    %p104 = scmp.ne.s32.totalorder %s90, %s91
    %p105 = scmp.eq.s32.totalorder %s15, 1
    %p106 = por %p104, %p105
    %p108 = scmp.ne.s32.totalorder %s91, %s107
    %p109 = scmp.eq.s32.totalorder %s15, 0
    %p110 = por %p108, %p109
    %p111 = scmp.le.s32.totalorder 1, %s9
    %p112 = scmp.lt.s32.totalorder %s9, 3
    %p113 = pnand %p111, %p112
    %p114 = pneg %p113
    // Predicated region
    $region9: #{generator_forward.16} parent=5 // pred_check
      _
    $region10: #{generator_forward.16} parent=5 // pred_check_branch
      %116 = sbr.rel (%p113) target = $region12
    $region11: #{generator_forward.16} parent=5 // pred_region
      %s117 = ssub.s32 %s9, 1
      // Predicated region
      $region13: #{generator_forward.16} parent=11 // pred_check
        %p118 = pneg %p56
      $region14: #{generator_forward.16} parent=11 // pred_check_branch
        %120 = sbr.rel (%p118) target = $region16
      $region15: #{generator_forward.16} parent=11 // pred_region
        _
      $region16: #{generator_forward.16} parent=11 // pred_fallthru
        _
      // Predicated region
      $region17: #{generator_forward.16} parent=11 // pred_check
        %p121 = pneg %p77
      $region18: #{generator_forward.16} parent=11 // pred_check_branch
        %123 = sbr.rel (%p121) target = $region20
      $region19: #{generator_forward.16} parent=11 // pred_region
        _
      $region20: #{generator_forward.16} parent=11 // pred_fallthru
        _
    $region12: #{generator_forward.16} parent=5 // pred_fallthru
      _
    %p124 = scmp.lt.s32.totalorder %s9, 2
    // Predicated region
    $region21: #{generator_forward.16} parent=5 // pred_check
      %p125 = pneg %p124
    $region22: #{generator_forward.16} parent=5 // pred_check_branch
      %127 = sbr.rel (%p125) target = $region24
    $region23: #{generator_forward.16} parent=5 // pred_region
      // Predicated region
      $region25: #{generator_forward.16} parent=23 // pred_check
        %p128 = pneg %p29
      $region26: #{generator_forward.16} parent=23 // pred_check_branch
        %130 = sbr.rel (%p128) target = $region28
      $region27: #{generator_forward.16} parent=23 // pred_region
        %s131 = smul.u32 32, %s9
        %p132 = scmp.lt.s32.totalorder %s131, 63
        %s133 = scalar_select %p132, %s131, 63
        %s134 = smul.addr %s133, 4
        %s135 = scalar_lea.vmem %s0, %s134
        %s136 = smul.u32 32, %s9
      $region28: #{generator_forward.16} parent=23 // pred_fallthru
        _
    $region24: #{generator_forward.16} parent=5 // pred_fallthru
      _
    %p137 = scmp.le.s32.totalorder 1, %s9
    %p138 = scmp.lt.s32.totalorder %s9, 3
    %p139 = pnand %p137, %p138
    %p140 = pneg %p139
    // Predicated region
    $region29: #{generator_forward.16} parent=5 // pred_check
      _
    $region30: #{generator_forward.16} parent=5 // pred_check_branch
      %142 = sbr.rel (%p139) target = $region32
    $region31: #{generator_forward.16} parent=5 // pred_region
      %s143 = ssub.s32 %s9, 1
      %s144 = smul.u32 32, %s14
      %p145 = scmp.lt.s32.totalorder %s144, 63
      %s146 = scalar_select %p145, %s144, 63
      %s147 = smul.addr %s146, 4
      %s148 = scalar_lea.vmem %s0, %s147
      %p149 = pneg %p35
      %p150 = pneg %p32
      %p151 = pneg %p56
      %p152 = pneg %p53
      %p153 = pneg %p77
      %p154 = pneg %p74
      %p155 = pneg %p103
      %p156 = pneg %p100
      %s157 = smul.u32 32, %s14
      %p158 = scmp.lt.s32.totalorder %s157, 63
      %s159 = scalar_select %p158, %s157, 63
      %s160 = smul.addr %s159, 4
      %s161 = scalar_lea.vmem %s3, %s160
      %s162 = smul.u32 32, %s14
      %p163 = scmp.lt.s32.totalorder %s162, 63
      %s164 = scalar_select %p163, %s162, 63
      %s165 = smul.addr %s164, 4
      %s166 = scalar_lea.vmem %s0, %s165
      %s167 = smul.u32 32, %s14
      %s168 = smul.u32 32, %s14
      %p169 = scmp.lt.s32.totalorder %s168, 63
      %s170 = scalar_select %p169, %s168, 63
      %s171 = smul.addr %s170, 4
      %s172 = scalar_lea.vmem %s3, %s171
      %s173 = smul.u32 32, %s14
      %v174 = vld [vmem:[%s166] sm:$0xf]
      %v175 = vld [vmem:[%s166 + $0x4] sm:$0xf]
      %v176 = vld [vmem:[%s166 + $0x8] sm:$0xf]
      %v177 = vld [vmem:[%s166 + $0xc] sm:$0xf]
      %v178 = vld [vmem:[%s166 + $0x10] sm:$0xf]
      %v179 = vld [vmem:[%s166 + $0x14] sm:$0xf]
      %v180 = vld [vmem:[%s166 + $0x18] sm:$0xf]
      %v181 = vld [vmem:[%s166 + $0x1c] sm:$0xf]
      %v182 = vld [vmem:[%s166 + $0x20] sm:$0xf]
      %v183 = vld [vmem:[%s166 + $0x24] sm:$0xf]
      %v184 = vld [vmem:[%s166 + $0x28] sm:$0xf]
      %v185 = vld [vmem:[%s166 + $0x2c] sm:$0xf]
      %v186 = vld [vmem:[%s166 + $0x30] sm:$0xf]
      %v187 = vld [vmem:[%s166 + $0x34] sm:$0xf]
      %v188 = vld [vmem:[%s166 + $0x38] sm:$0xf]
      %v189 = vld [vmem:[%s166 + $0x3c] sm:$0xf]
      %v190 = vld [vmem:[%s166 + $0x40] sm:$0xf]
      %v191 = vld [vmem:[%s166 + $0x44] sm:$0xf]
      %v192 = vld [vmem:[%s166 + $0x48] sm:$0xf]
      %v193 = vld [vmem:[%s166 + $0x4c] sm:$0xf]
      %v194 = vld [vmem:[%s166 + $0x50] sm:$0xf]
      %v195 = vld [vmem:[%s166 + $0x54] sm:$0xf]
      %v196 = vld [vmem:[%s166 + $0x58] sm:$0xf]
      %v197 = vld [vmem:[%s166 + $0x5c] sm:$0xf]
      %v198 = vld [vmem:[%s166 + $0x60] sm:$0xf]
      %v199 = vld [vmem:[%s166 + $0x64] sm:$0xf]
      %v200 = vld [vmem:[%s166 + $0x68] sm:$0xf]
      %v201 = vld [vmem:[%s166 + $0x6c] sm:$0xf]
      %v202 = vld [vmem:[%s166 + $0x70] sm:$0xf]
      %v203 = vld [vmem:[%s166 + $0x74] sm:$0xf]
      %v204 = vld [vmem:[%s166 + $0x78] sm:$0xf]
      %v205 = vld [vmem:[%s166 + $0x7c] sm:$0xf]
      %v206 = vunpack.c.l.bf16 %v174
      %v207 = vunpack.c.l.bf16 %v175
      %v208 = vunpack.c.l.bf16 %v176
      %v209 = vunpack.c.l.bf16 %v177
      %v210 = vunpack.c.l.bf16 %v178
      %v211 = vunpack.c.l.bf16 %v179
      %v212 = vunpack.c.l.bf16 %v180
      %v213 = vunpack.c.l.bf16 %v181
      %v214 = vunpack.c.l.bf16 %v182
      %v215 = vunpack.c.l.bf16 %v183
      %v216 = vunpack.c.l.bf16 %v184
      %v217 = vunpack.c.l.bf16 %v185
      %v218 = vunpack.c.l.bf16 %v186
      %v219 = vunpack.c.l.bf16 %v187
      %v220 = vunpack.c.l.bf16 %v188
      %v221 = vunpack.c.l.bf16 %v189
      %v222 = vunpack.c.l.bf16 %v190
      %v223 = vunpack.c.l.bf16 %v191
      %v224 = vunpack.c.l.bf16 %v192
      %v225 = vunpack.c.l.bf16 %v193
      %v226 = vunpack.c.l.bf16 %v194
      %v227 = vunpack.c.l.bf16 %v195
      %v228 = vunpack.c.l.bf16 %v196
      %v229 = vunpack.c.l.bf16 %v197
      %v230 = vunpack.c.l.bf16 %v198
      %v231 = vunpack.c.l.bf16 %v199
      %v232 = vunpack.c.l.bf16 %v200
      %v233 = vunpack.c.l.bf16 %v201
      %v234 = vunpack.c.l.bf16 %v202
      %v235 = vunpack.c.l.bf16 %v203
      %v236 = vunpack.c.l.bf16 %v204
      %v237 = vunpack.c.l.bf16 %v205
      %v238 = vld [vmem:[%s1] sm:$0x1]
      %v240 = vlaneseq
      %v241 = vshrl.u32 %v240, 7
      %v242 = vsub.s32 0, %v241
      %v243 = vrot.slane %v238, %v242
      %v245 = vmul.f32 %v206, %v243
      %v246 = vmul.f32 %v207, %v243
      %v247 = vmul.f32 %v208, %v243
      %v248 = vmul.f32 %v209, %v243
      %v249 = vmul.f32 %v210, %v243
      %v250 = vmul.f32 %v211, %v243
      %v251 = vmul.f32 %v212, %v243
      %v252 = vmul.f32 %v213, %v243
      %v253 = vmul.f32 %v214, %v243
      %v254 = vmul.f32 %v215, %v243
      %v255 = vmul.f32 %v216, %v243
      %v256 = vmul.f32 %v217, %v243
      %v257 = vmul.f32 %v218, %v243
      %v258 = vmul.f32 %v219, %v243
      %v259 = vmul.f32 %v220, %v243
      %v260 = vmul.f32 %v221, %v243
      %v261 = vmul.f32 %v222, %v243
      %v262 = vmul.f32 %v223, %v243
      %v263 = vmul.f32 %v224, %v243
      %v264 = vmul.f32 %v225, %v243
      %v265 = vmul.f32 %v226, %v243
      %v266 = vmul.f32 %v227, %v243
      %v267 = vmul.f32 %v228, %v243
      %v268 = vmul.f32 %v229, %v243
      %v269 = vmul.f32 %v230, %v243
      %v270 = vmul.f32 %v231, %v243
      %v271 = vmul.f32 %v232, %v243
      %v272 = vmul.f32 %v233, %v243
      %v273 = vmul.f32 %v234, %v243
      %v274 = vmul.f32 %v235, %v243
      %v275 = vmul.f32 %v236, %v243
      %v276 = vmul.f32 %v237, %v243
      %v277 = vld [vmem:[%s2] sm:$0x1]
      %v279 = vlaneseq
      %v280 = vshrl.u32 %v279, 7
      %v281 = vsub.s32 0, %v280
      %v282 = vrot.slane %v277, %v281
      %v284 = vadd.f32 %v245, %v282
      %v285 = vadd.f32 %v246, %v282
      %v286 = vadd.f32 %v247, %v282
      %v287 = vadd.f32 %v248, %v282
      %v288 = vadd.f32 %v249, %v282
      %v289 = vadd.f32 %v250, %v282
      %v290 = vadd.f32 %v251, %v282
      %v291 = vadd.f32 %v252, %v282
      %v292 = vadd.f32 %v253, %v282
      %v293 = vadd.f32 %v254, %v282
      %v294 = vadd.f32 %v255, %v282
      %v295 = vadd.f32 %v256, %v282
      %v296 = vadd.f32 %v257, %v282
      %v297 = vadd.f32 %v258, %v282
      %v298 = vadd.f32 %v259, %v282
      %v299 = vadd.f32 %v260, %v282
      %v300 = vadd.f32 %v261, %v282
      %v301 = vadd.f32 %v262, %v282
      %v302 = vadd.f32 %v263, %v282
      %v303 = vadd.f32 %v264, %v282
      %v304 = vadd.f32 %v265, %v282
      %v305 = vadd.f32 %v266, %v282
      %v306 = vadd.f32 %v267, %v282
      %v307 = vadd.f32 %v268, %v282
      %v308 = vadd.f32 %v269, %v282
      %v309 = vadd.f32 %v270, %v282
      %v310 = vadd.f32 %v271, %v282
      %v311 = vadd.f32 %v272, %v282
      %v312 = vadd.f32 %v273, %v282
      %v313 = vadd.f32 %v274, %v282
      %v314 = vadd.f32 %v275, %v282
      %v315 = vadd.f32 %v276, %v282
      %v316 = vmax.f32 %v284, 0.0
      %v317 = vmax.f32 %v285, 0.0
      %v318 = vmax.f32 %v286, 0.0
      %v319 = vmax.f32 %v287, 0.0
      %v320 = vmax.f32 %v288, 0.0
      %v321 = vmax.f32 %v289, 0.0
      %v322 = vmax.f32 %v290, 0.0
      %v323 = vmax.f32 %v291, 0.0
      %v324 = vmax.f32 %v292, 0.0
      %v325 = vmax.f32 %v293, 0.0
      %v326 = vmax.f32 %v294, 0.0
      %v327 = vmax.f32 %v295, 0.0
      %v328 = vmax.f32 %v296, 0.0
      %v329 = vmax.f32 %v297, 0.0
      %v330 = vmax.f32 %v298, 0.0
      %v331 = vmax.f32 %v299, 0.0
      %v332 = vmax.f32 %v300, 0.0
      %v333 = vmax.f32 %v301, 0.0
      %v334 = vmax.f32 %v302, 0.0
      %v335 = vmax.f32 %v303, 0.0
      %v336 = vmax.f32 %v304, 0.0
      %v337 = vmax.f32 %v305, 0.0
      %v338 = vmax.f32 %v306, 0.0
      %v339 = vmax.f32 %v307, 0.0
      %v340 = vmax.f32 %v308, 0.0
      %v341 = vmax.f32 %v309, 0.0
      %v342 = vmax.f32 %v310, 0.0
      %v343 = vmax.f32 %v311, 0.0
      %v344 = vmax.f32 %v312, 0.0
      %v345 = vmax.f32 %v313, 0.0
      %v346 = vmax.f32 %v314, 0.0
      %v347 = vmax.f32 %v315, 0.0
      %v348 = vpack.c.bf16 %v317, %v316
      %v349 = vpack.c.bf16 %v319, %v318
      %v350 = vpack.c.bf16 %v321, %v320
      %v351 = vpack.c.bf16 %v323, %v322
      %v352 = vpack.c.bf16 %v325, %v324
      %v353 = vpack.c.bf16 %v327, %v326
      %v354 = vpack.c.bf16 %v329, %v328
      %v355 = vpack.c.bf16 %v331, %v330
      %v356 = vpack.c.bf16 %v333, %v332
      %v357 = vpack.c.bf16 %v335, %v334
      %v358 = vpack.c.bf16 %v337, %v336
      %v359 = vpack.c.bf16 %v339, %v338
      %v360 = vpack.c.bf16 %v341, %v340
      %v361 = vpack.c.bf16 %v343, %v342
      %v362 = vpack.c.bf16 %v345, %v344
      %v363 = vpack.c.bf16 %v347, %v346
      %v380 = vunpack.c.l.b16 %v348
      %v381 = vunpack.c.h.b16 %v348
      %v382 = vunpack.c.l.b16 %v349
      %v383 = vunpack.c.h.b16 %v349
      %v384 = vunpack.c.l.b16 %v350
      %v385 = vunpack.c.h.b16 %v350
      %v386 = vunpack.c.l.b16 %v351
      %v387 = vunpack.c.h.b16 %v351
      %v388 = vunpack.c.l.b16 %v352
      %v389 = vunpack.c.h.b16 %v352
      %v390 = vunpack.c.l.b16 %v353
      %v391 = vunpack.c.h.b16 %v353
      %v392 = vunpack.c.l.b16 %v354
      %v393 = vunpack.c.h.b16 %v354
      %v394 = vunpack.c.l.b16 %v355
      %v395 = vunpack.c.h.b16 %v355
      %v396 = vunpack.c.l.b16 %v356
      %v397 = vunpack.c.h.b16 %v356
      %v398 = vunpack.c.l.b16 %v357
      %v399 = vunpack.c.h.b16 %v357
      %v400 = vunpack.c.l.b16 %v358
      %v401 = vunpack.c.h.b16 %v358
      %v402 = vunpack.c.l.b16 %v359
      %v403 = vunpack.c.h.b16 %v359
      %v404 = vunpack.c.l.b16 %v360
      %v405 = vunpack.c.h.b16 %v360
      %v406 = vunpack.c.l.b16 %v361
      %v407 = vunpack.c.h.b16 %v361
      %v408 = vunpack.c.l.b16 %v362
      %v409 = vunpack.c.h.b16 %v362
      %v410 = vunpack.c.l.b16 %v363
      %v411 = vunpack.c.h.b16 %v363
      %v412 = vpack.c.b16 %v380, %v380
      %v413 = vpack.c.b16 %v381, %v381
      %v414 = vpack.c.b16 %v382, %v382
      %v415 = vpack.c.b16 %v383, %v383
      %v416 = vpack.c.b16 %v384, %v384
      %v417 = vpack.c.b16 %v385, %v385
      %v418 = vpack.c.b16 %v386, %v386
      %v419 = vpack.c.b16 %v387, %v387
      %v420 = vpack.c.b16 %v388, %v388
      %v421 = vpack.c.b16 %v389, %v389
      %v422 = vpack.c.b16 %v390, %v390
      %v423 = vpack.c.b16 %v391, %v391
      %v424 = vpack.c.b16 %v392, %v392
      %v425 = vpack.c.b16 %v393, %v393
      %v426 = vpack.c.b16 %v394, %v394
      %v427 = vpack.c.b16 %v395, %v395
      %v428 = vpack.c.b16 %v396, %v396
      %v429 = vpack.c.b16 %v397, %v397
      %v430 = vpack.c.b16 %v398, %v398
      %v431 = vpack.c.b16 %v399, %v399
      %v432 = vpack.c.b16 %v400, %v400
      %v433 = vpack.c.b16 %v401, %v401
      %v434 = vpack.c.b16 %v402, %v402
      %v435 = vpack.c.b16 %v403, %v403
      %v436 = vpack.c.b16 %v404, %v404
      %v437 = vpack.c.b16 %v405, %v405
      %v438 = vpack.c.b16 %v406, %v406
      %v439 = vpack.c.b16 %v407, %v407
      %v440 = vpack.c.b16 %v408, %v408
      %v441 = vpack.c.b16 %v409, %v409
      %v442 = vpack.c.b16 %v410, %v410
      %v443 = vpack.c.b16 %v411, %v411
      %476 = vst [vmem:[%s172] sm:$0xf] %v412
      %477 = vst [vmem:[%s172 + $0x4] sm:$0xf] %v413
      %478 = vst [vmem:[%s172 + $0x8] sm:$0xf] %v414
      %479 = vst [vmem:[%s172 + $0xc] sm:$0xf] %v415
      %480 = vst [vmem:[%s172 + $0x10] sm:$0xf] %v416
      %481 = vst [vmem:[%s172 + $0x14] sm:$0xf] %v417
      %482 = vst [vmem:[%s172 + $0x18] sm:$0xf] %v418
      %483 = vst [vmem:[%s172 + $0x1c] sm:$0xf] %v419
      %484 = vst [vmem:[%s172 + $0x20] sm:$0xf] %v420
      %485 = vst [vmem:[%s172 + $0x24] sm:$0xf] %v421
      %486 = vst [vmem:[%s172 + $0x28] sm:$0xf] %v422
      %487 = vst [vmem:[%s172 + $0x2c] sm:$0xf] %v423
      %488 = vst [vmem:[%s172 + $0x30] sm:$0xf] %v424
      %489 = vst [vmem:[%s172 + $0x34] sm:$0xf] %v425
      %490 = vst [vmem:[%s172 + $0x38] sm:$0xf] %v426
      %491 = vst [vmem:[%s172 + $0x3c] sm:$0xf] %v427
      %492 = vst [vmem:[%s172 + $0x40] sm:$0xf] %v428
      %493 = vst [vmem:[%s172 + $0x44] sm:$0xf] %v429
      %494 = vst [vmem:[%s172 + $0x48] sm:$0xf] %v430
      %495 = vst [vmem:[%s172 + $0x4c] sm:$0xf] %v431
      %496 = vst [vmem:[%s172 + $0x50] sm:$0xf] %v432
      %497 = vst [vmem:[%s172 + $0x54] sm:$0xf] %v433
      %498 = vst [vmem:[%s172 + $0x58] sm:$0xf] %v434
      %499 = vst [vmem:[%s172 + $0x5c] sm:$0xf] %v435
      %500 = vst [vmem:[%s172 + $0x60] sm:$0xf] %v436
      %501 = vst [vmem:[%s172 + $0x64] sm:$0xf] %v437
      %502 = vst [vmem:[%s172 + $0x68] sm:$0xf] %v438
      %503 = vst [vmem:[%s172 + $0x6c] sm:$0xf] %v439
      %504 = vst [vmem:[%s172 + $0x70] sm:$0xf] %v440
      %505 = vst [vmem:[%s172 + $0x74] sm:$0xf] %v441
      %506 = vst [vmem:[%s172 + $0x78] sm:$0xf] %v442
      %507 = vst [vmem:[%s172 + $0x7c] sm:$0xf] %v443
      %s508 = smul.u32 32, %s14
      %p509 = scmp.lt.s32.totalorder %s508, 63
      %s510 = scalar_select %p509, %s508, 63
      %s511 = smul.addr %s510, 4
      %s512 = scalar_lea.vmem %s3, %s511
      // Predicated region
      $region33: #{generator_forward.16} parent=31 // pred_check
        %p513 = pneg %p100
      $region34: #{generator_forward.16} parent=31 // pred_check_branch
        %515 = sbr.rel (%p513) target = $region36
      $region35: #{generator_forward.16} parent=31 // pred_region
        %s516 = smul.u32 32, %s14
      $region36: #{generator_forward.16} parent=31 // pred_fallthru
        _
    $region32: #{generator_forward.16} parent=5 // pred_fallthru
      _
    %p517 = scmp.le.s32.totalorder 2, %s9
    // Predicated region
    $region37: #{generator_forward.16} parent=5 // pred_check
      %p518 = pneg %p517
    $region38: #{generator_forward.16} parent=5 // pred_check_branch
      %520 = sbr.rel (%p518) target = $region40
    $region39: #{generator_forward.16} parent=5 // pred_region
      %s521 = ssub.s32 %s9, 2
      // Predicated region
      $region41: #{generator_forward.16} parent=39 // pred_check
        %p522 = pneg %p106
      $region42: #{generator_forward.16} parent=39 // pred_check_branch
        %524 = sbr.rel (%p522) target = $region44
      $region43: #{generator_forward.16} parent=39 // pred_region
        %s525 = smul.u32 32, %s15
        %p526 = scmp.lt.s32.totalorder %s525, 63
        %s527 = scalar_select %p526, %s525, 63
        %s528 = smul.addr %s527, 4
        %s529 = scalar_lea.vmem %s3, %s528
      $region44: #{generator_forward.16} parent=39 // pred_fallthru
        _
    $region40: #{generator_forward.16} parent=5 // pred_fallthru
      _
  $region6: #{generator_forward.16} parent=0 // loop_footer
    %s13 = sadd.s32 1, %s9
  $region7: #{generator_forward.16} parent=0 // loop_footer_branch
    %8 = sbr.rel target = $region3
  $region8: #{generator_forward.16} parent=0 // loop_exit
    _

// kernel: tile.88
$region0: #{tile.88}
  #allocation0 [shape = 's32[1]{0}', space=sflag, size = 0x4, scoped, tag = 'scoped memory for tile.88']
  %s0 = inlined_call_operand.vmem [shape: f32[3], index: 0, kind: input, shape index: {}]
  %s1 = inlined_call_operand.vmem [shape: f32[4,3], index: 1, kind: output, shape index: {}]
  // Predicated region
  $region2: #{tile.88} parent=0 // pred_check
    _
  $region3: #{tile.88} parent=0 // pred_check_branch
    %3 = sbr.rel (0) target = $region5
  $region4: #{tile.88} parent=0 // pred_region
    _
  $region5: #{tile.88} parent=0 // pred_fallthru
    _
  %v4 = vld [vmem:[%s0] ss:$0 sm:$0xff]
  %5 = vst [vmem:[%s1] sm:$0xf] %v4

// kernel: tile.89
$region0: #{tile.89}
  %s0 = inlined_call_operand.vmem [shape: f32[4,3], index: 0, kind: input, shape index: {}]
  %s1 = inlined_call_operand.vmem [shape: f32[12], index: 1, kind: output, shape index: {}]
  $region1: #{tile.89} parent=0
    #allocation0 [shape = 'u8[4096]{0}', space=vmem, size = 0x1000, scoped, tag = 'scoped mem for output reshape']
    #allocation1 [shape = 'u8[4096]{0}', space=vmem, size = 0x1000, scoped, tag = 'scoped mem for input reshape']
    %s3 = sshllo.u32 0, 4
    %v4 = vld [vmem:[%s0] sm:%s3]
    %5 = vst [vmem:[#allocation1] sm:%s3] %v4
    %v6 = vld [vmem:[#allocation1] sm:$0x1]
    %vm7 = vcmask 23552
    %8 = vst.msk [vmem:[#allocation0] sm:$0x1] %vm7, %v6
    %s9 = scalar_lea.vmem [#allocation1], 3
    %v10 = vld [vmem:[%s9] sm:$0x1]
    %11 = vrot.lane.b32.xlu0 %v10, 9
    %v12 = vpop.permute.xlu0 %11
    %vm13 = vcmask 97352
    %14 = vst.msk [vmem:[#allocation0] sm:$0x1] %vm13, %v12
    %s15 = scalar_lea.vmem [#allocation1], 2
    %v16 = vld [vmem:[%s15] sm:$0x1]
    %17 = vrot.lane.b32.xlu0 %v16, 6
    %v18 = vpop.permute.xlu0 %17
    %vm19 = vcmask 72752
    %20 = vst.msk [vmem:[#allocation0] sm:$0x1] %vm19, %v18
    %s21 = scalar_lea.vmem [#allocation1], 1
    %v22 = vld [vmem:[%s21] sm:$0x1]
    %23 = vrot.lane.b32.xlu0 %v22, 3
    %v24 = vpop.permute.xlu0 %23
    %vm25 = vcmask 48152
    %26 = vst.msk [vmem:[#allocation0] sm:$0x1] %vm25, %v24
    %s28 = sshllo.u32 0, 1
    %v30 = vld [vmem:[#allocation0] sm:%s28]
    %s31 = sshllo.u32 0, 1
    %32 = vst [vmem:[%s1] sm:%s31] %v30

// kernel: generator_forward.17
$region0: #{generator_forward.17}
  #allocation0 [shape = 'u32[]', space=smem, size = 0x4, offset = 0x4, fixed_abs, tag = 'smem constant byte address 0x4 - core index']
  #allocation1 [shape = 'u32[144,128]{1,0:T(1,128)}', space=vmem, size = 0x12000, scoped, tag = 'internal scratch']
  %s0 = inlined_call_operand.vmem [shape: bf16[2048,144], index: 0, kind: input, shape index: {}]
  %s1 = inlined_call_operand.vmem [shape: bf16[144,128], index: 1, kind: input, shape index: {}]
  %s2 = inlined_call_operand.vmem [shape: f32[1,128], index: 2, kind: input, shape index: {}]
  %s3 = inlined_call_operand.vmem [shape: bf16[2048,128], index: 3, kind: output, shape index: {}]
  %s4 = sld [smem:[#allocation0]]
  $region45: #{generator_forward.17} parent=0
    _
  %s6 = ssub.s32 1, %s4
  %s7 = scalar_select 0, %s6, %s4
  loop: start=0, step=1, limit=4
  $region2: #{generator_forward.17} parent=0 // loop_pre_header
    _
  $region3: #{generator_forward.17} parent=0 // loop_header
    %s9 = sphi 0, %s13
    %p10 = scmp.ge.s32.totalorder %s9, 4
    %s19 = sphi 0, %s21
    %s22 = sphi 0, %s19
    %s23 = sphi 0, %s22
    %s39 = sphi 0, %s23
    %s43 = sphi 0, %s43
    %s45 = sphi 0, %s43
    %s46 = sphi 0, %s45
    %s60 = sphi 0, %s46
    %s64 = sphi 0, %s64
    %s66 = sphi 0, %s64
    %s67 = sphi 0, %s66
    %s81 = sphi 0, %s67
    %s87 = sphi 0, %s89
    %s90 = sphi 0, %s87
    %s91 = sphi 0, %s90
    %s107 = sphi 0, %s91
  $region4: #{generator_forward.17} parent=0 // loop_header_branch
    %12 = sbr.rel (%p10) target = $region8
  $region5: #{generator_forward.17} parent=0 // loop_body
    %s14 = ssub.s32 %s9, 1
    %s15 = ssub.s32 %s9, 2
    %s16 = sadd.s32 %s9, 1
    %s17 = ssub.s32 %s9, %s16
    %p18 = scmp.eq.s32.totalorder %s17, 0
    %s20 = sadd.s32 %s19, 1
    %s21 = scalar_select %p18, %s19, %s20
    %p24 = pneg %p18
    %p25 = scmp.eq.s32.totalorder %s9, 1
    %p26 = por %p24, %p25
    %p27 = scmp.ne.s32.totalorder %s19, %s22
    %p28 = scmp.eq.s32.totalorder %s9, 0
    %p29 = por %p27, %p28
    %p30 = scmp.ne.s32.totalorder %s19, %s22
    %p31 = scmp.eq.s32.totalorder %s14, 1
    %p32 = por %p30, %p31
    %p33 = scmp.ne.s32.totalorder %s22, %s23
    %p34 = scmp.eq.s32.totalorder %s14, 0
    %p35 = por %p33, %p34
    %p36 = scmp.ne.s32.totalorder %s22, %s23
    %p37 = scmp.eq.s32.totalorder %s15, 1
    %p38 = por %p36, %p37
    %p40 = scmp.ne.s32.totalorder %s23, %s39
    %p41 = scmp.eq.s32.totalorder %s15, 0
    %p42 = por %p40, %p41
    %s44 = sadd.s32 %s43, 1
    %p47 = scmp.eq.s32.totalorder %s9, 1
    %p48 = scmp.ne.s32.totalorder %s43, %s45
    %p49 = scmp.eq.s32.totalorder %s9, 0
    %p50 = por %p48, %p49
    %p51 = scmp.ne.s32.totalorder %s43, %s45
    %p52 = scmp.eq.s32.totalorder %s14, 1
    %p53 = por %p51, %p52
    %p54 = scmp.ne.s32.totalorder %s45, %s46
    %p55 = scmp.eq.s32.totalorder %s14, 0
    %p56 = por %p54, %p55
    %p57 = scmp.ne.s32.totalorder %s45, %s46
    %p58 = scmp.eq.s32.totalorder %s15, 1
    %p59 = por %p57, %p58
    %p61 = scmp.ne.s32.totalorder %s46, %s60
    %p62 = scmp.eq.s32.totalorder %s15, 0
    %p63 = por %p61, %p62
    %s65 = sadd.s32 %s64, 1
    %p68 = scmp.eq.s32.totalorder %s9, 1
    %p69 = scmp.ne.s32.totalorder %s64, %s66
    %p70 = scmp.eq.s32.totalorder %s9, 0
    %p71 = por %p69, %p70
    %p72 = scmp.ne.s32.totalorder %s64, %s66
    %p73 = scmp.eq.s32.totalorder %s14, 1
    %p74 = por %p72, %p73
    %p75 = scmp.ne.s32.totalorder %s66, %s67
    %p76 = scmp.eq.s32.totalorder %s14, 0
    %p77 = por %p75, %p76
    %p78 = scmp.ne.s32.totalorder %s66, %s67
    %p79 = scmp.eq.s32.totalorder %s15, 1
    %p80 = por %p78, %p79
    %p82 = scmp.ne.s32.totalorder %s67, %s81
    %p83 = scmp.eq.s32.totalorder %s15, 0
    %p84 = por %p82, %p83
    %s85 = ssub.s32 %s9, %s16
    %p86 = scmp.eq.s32.totalorder %s85, 0
    %s88 = sadd.s32 %s87, 1
    %s89 = scalar_select %p86, %s87, %s88
    %p92 = pneg %p86
    %p93 = scmp.eq.s32.totalorder %s9, 1
    %p94 = por %p92, %p93
    %p95 = scmp.ne.s32.totalorder %s87, %s90
    %p96 = scmp.eq.s32.totalorder %s9, 0
    %p97 = por %p95, %p96
    %p98 = scmp.ne.s32.totalorder %s87, %s90
    %p99 = scmp.eq.s32.totalorder %s14, 1
    %p100 = por %p98, %p99
    %p101 = scmp.ne.s32.totalorder %s90, %s91
    %p102 = scmp.eq.s32.totalorder %s14, 0
    %p103 = por %p101, %p102
    %p104 = scmp.ne.s32.totalorder %s90, %s91
    %p105 = scmp.eq.s32.totalorder %s15, 1
    %p106 = por %p104, %p105
    %p108 = scmp.ne.s32.totalorder %s91, %s107
    %p109 = scmp.eq.s32.totalorder %s15, 0
    %p110 = por %p108, %p109
    %p111 = scmp.le.s32.totalorder 1, %s9
    %p112 = scmp.lt.s32.totalorder %s9, 3
    %p113 = pnand %p111, %p112
    %p114 = pneg %p113
    // Predicated region
    $region9: #{generator_forward.17} parent=5 // pred_check
      _
    $region10: #{generator_forward.17} parent=5 // pred_check_branch
      %116 = sbr.rel (%p113) target = $region12
    $region11: #{generator_forward.17} parent=5 // pred_region
      %s117 = ssub.s32 %s9, 1
      // Predicated region
      $region13: #{generator_forward.17} parent=11 // pred_check
        %p118 = pneg %p56
      $region14: #{generator_forward.17} parent=11 // pred_check_branch
        %120 = sbr.rel (%p118) target = $region16
      $region15: #{generator_forward.17} parent=11 // pred_region
        _
      $region16: #{generator_forward.17} parent=11 // pred_fallthru
        _
      // Predicated region
      $region17: #{generator_forward.17} parent=11 // pred_check
        %p121 = pneg %p77
      $region18: #{generator_forward.17} parent=11 // pred_check_branch
        %123 = sbr.rel (%p121) target = $region20
      $region19: #{generator_forward.17} parent=11 // pred_region
        _
      $region20: #{generator_forward.17} parent=11 // pred_fallthru
        _
    $region12: #{generator_forward.17} parent=5 // pred_fallthru
      _
    %p124 = scmp.lt.s32.totalorder %s9, 2
    // Predicated region
    $region21: #{generator_forward.17} parent=5 // pred_check
      %p125 = pneg %p124
    $region22: #{generator_forward.17} parent=5 // pred_check_branch
      %127 = sbr.rel (%p125) target = $region24
    $region23: #{generator_forward.17} parent=5 // pred_region
      // Predicated region
      $region25: #{generator_forward.17} parent=23 // pred_check
        %p128 = pneg %p29
      $region26: #{generator_forward.17} parent=23 // pred_check_branch
        %130 = sbr.rel (%p128) target = $region28
      $region27: #{generator_forward.17} parent=23 // pred_region
        %s131 = smul.u32 128, %s9
        %p132 = scmp.lt.s32.totalorder %s131, 255
        %s133 = scalar_select %p132, %s131, 255
        %s134 = smul.addr %s133, 2
        %s135 = smul.addr %s134, 4
        %s136 = scalar_lea.vmem %s0, %s135
        %s137 = smul.u32 128, %s9
      $region28: #{generator_forward.17} parent=23 // pred_fallthru
        _
    $region24: #{generator_forward.17} parent=5 // pred_fallthru
      _
    %p138 = scmp.le.s32.totalorder 1, %s9
    %p139 = scmp.lt.s32.totalorder %s9, 3
    %p140 = pnand %p138, %p139
    %p141 = pneg %p140
    // Predicated region
    $region29: #{generator_forward.17} parent=5 // pred_check
      _
    $region30: #{generator_forward.17} parent=5 // pred_check_branch
      %143 = sbr.rel (%p140) target = $region32
    $region31: #{generator_forward.17} parent=5 // pred_region
      %s144 = ssub.s32 %s9, 1
      %s145 = smul.u32 128, %s14
      %p146 = scmp.lt.s32.totalorder %s145, 255
      %s147 = scalar_select %p146, %s145, 255
      %s148 = smul.addr %s147, 2
      %s149 = smul.addr %s148, 4
      %s150 = scalar_lea.vmem %s0, %s149
      %p151 = pneg %p35
      %p152 = pneg %p32
      %p153 = pneg %p56
      %p154 = pneg %p53
      %p155 = pneg %p77
      %p156 = pneg %p74
      %p157 = pneg %p103
      %p158 = pneg %p100
      %s159 = smul.u32 128, %s14
      %p160 = scmp.lt.s32.totalorder %s159, 255
      %s161 = scalar_select %p160, %s159, 255
      %s162 = smul.addr %s161, 4
      %s163 = scalar_lea.vmem %s3, %s162
      %s164 = smul.u32 128, %s14
      %p165 = scmp.lt.s32.totalorder %s164, 255
      %s166 = scalar_select %p165, %s164, 255
      %s167 = smul.addr %s166, 2
      %s168 = smul.addr %s167, 4
      %s169 = scalar_lea.vmem %s0, %s168
      %s170 = smul.u32 128, %s14
      %s171 = smul.u32 128, %s14
      %p172 = scmp.lt.s32.totalorder %s171, 255
      %s173 = scalar_select %p172, %s171, 255
      %s174 = smul.addr %s173, 4
      %s175 = scalar_lea.vmem %s3, %s174
      %s176 = smul.u32 128, %s14
      %v178 = vld [vmem:[%s169] sm:$0xff]
      %v179 = vld [vmem:[%s169 + $0x8] sm:$0xff]
      %v180 = vld [vmem:[%s169 + $0x10] sm:$0xff]
      %v181 = vld [vmem:[%s169 + $0x18] sm:$0xff]
      %v182 = vld [vmem:[%s169 + $0x20] sm:$0xff]
      %v183 = vld [vmem:[%s169 + $0x28] sm:$0xff]
      %v184 = vld [vmem:[%s169 + $0x30] sm:$0xff]
      %v185 = vld [vmem:[%s169 + $0x38] sm:$0xff]
      %v186 = vld [vmem:[%s169 + $0x40] sm:$0xff]
      %v187 = vld [vmem:[%s169 + $0x48] sm:$0xff]
      %v188 = vld [vmem:[%s169 + $0x50] sm:$0xff]
      %v189 = vld [vmem:[%s169 + $0x58] sm:$0xff]
      %v190 = vld [vmem:[%s169 + $0x60] sm:$0xff]
      %v191 = vld [vmem:[%s169 + $0x68] sm:$0xff]
      %v192 = vld [vmem:[%s169 + $0x70] sm:$0xff]
      %v193 = vld [vmem:[%s169 + $0x78] sm:$0xff]
      %v194 = vld [vmem:[%s169 + $0x80] sm:$0xff]
      %v195 = vld [vmem:[%s169 + $0x88] sm:$0xff]
      %v196 = vld [vmem:[%s169 + $0x90] sm:$0xff]
      %v197 = vld [vmem:[%s169 + $0x98] sm:$0xff]
      %v198 = vld [vmem:[%s169 + $0xa0] sm:$0xff]
      %v199 = vld [vmem:[%s169 + $0xa8] sm:$0xff]
      %v200 = vld [vmem:[%s169 + $0xb0] sm:$0xff]
      %v201 = vld [vmem:[%s169 + $0xb8] sm:$0xff]
      %v202 = vld [vmem:[%s169 + $0xc0] sm:$0xff]
      %v203 = vld [vmem:[%s169 + $0xc8] sm:$0xff]
      %v204 = vld [vmem:[%s169 + $0xd0] sm:$0xff]
      %v205 = vld [vmem:[%s169 + $0xd8] sm:$0xff]
      %v206 = vld [vmem:[%s169 + $0xe0] sm:$0xff]
      %v207 = vld [vmem:[%s169 + $0xe8] sm:$0xff]
      %v208 = vld [vmem:[%s169 + $0xf0] sm:$0xff]
      %v209 = vld [vmem:[%s169 + $0xf8] sm:$0xff]
      %v210 = vld [vmem:[%s169 + $0x100] sm:$0xff]
      %v211 = vld [vmem:[%s169 + $0x108] sm:$0xff]
      %v212 = vld [vmem:[%s169 + $0x110] sm:$0xff]
      %v213 = vld [vmem:[%s169 + $0x118] sm:$0xff]
      %v214 = vld [vmem:[%s169 + $0x120] sm:$0xff]
      %v215 = vld [vmem:[%s169 + $0x128] sm:$0xff]
      %v216 = vld [vmem:[%s169 + $0x130] sm:$0xff]
      %v217 = vld [vmem:[%s169 + $0x138] sm:$0xff]
      %v218 = vld [vmem:[%s169 + $0x140] sm:$0xff]
      %v219 = vld [vmem:[%s169 + $0x148] sm:$0xff]
      %v220 = vld [vmem:[%s169 + $0x150] sm:$0xff]
      %v221 = vld [vmem:[%s169 + $0x158] sm:$0xff]
      %v222 = vld [vmem:[%s169 + $0x160] sm:$0xff]
      %v223 = vld [vmem:[%s169 + $0x168] sm:$0xff]
      %v224 = vld [vmem:[%s169 + $0x170] sm:$0xff]
      %v225 = vld [vmem:[%s169 + $0x178] sm:$0xff]
      %v226 = vld [vmem:[%s169 + $0x180] sm:$0xff]
      %v227 = vld [vmem:[%s169 + $0x188] sm:$0xff]
      %v228 = vld [vmem:[%s169 + $0x190] sm:$0xff]
      %v229 = vld [vmem:[%s169 + $0x198] sm:$0xff]
      %v230 = vld [vmem:[%s169 + $0x1a0] sm:$0xff]
      %v231 = vld [vmem:[%s169 + $0x1a8] sm:$0xff]
      %v232 = vld [vmem:[%s169 + $0x1b0] sm:$0xff]
      %v233 = vld [vmem:[%s169 + $0x1b8] sm:$0xff]
      %v234 = vld [vmem:[%s169 + $0x1c0] sm:$0xff]
      %v235 = vld [vmem:[%s169 + $0x1c8] sm:$0xff]
      %v236 = vld [vmem:[%s169 + $0x1d0] sm:$0xff]
      %v237 = vld [vmem:[%s169 + $0x1d8] sm:$0xff]
      %v238 = vld [vmem:[%s169 + $0x1e0] sm:$0xff]
      %v239 = vld [vmem:[%s169 + $0x1e8] sm:$0xff]
      %v240 = vld [vmem:[%s169 + $0x1f0] sm:$0xff]
      %v241 = vld [vmem:[%s169 + $0x1f8] sm:$0xff]
      %v242 = vld [vmem:[%s169 + $0x200] sm:$0xff]
      %v243 = vld [vmem:[%s169 + $0x208] sm:$0xff]
      %v244 = vld [vmem:[%s169 + $0x210] sm:$0xff]
      %v245 = vld [vmem:[%s169 + $0x218] sm:$0xff]
      %v246 = vld [vmem:[%s169 + $0x220] sm:$0xff]
      %v247 = vld [vmem:[%s169 + $0x228] sm:$0xff]
      %v248 = vld [vmem:[%s169 + $0x230] sm:$0xff]
      %v249 = vld [vmem:[%s169 + $0x238] sm:$0xff]
      %v250 = vld [vmem:[%s169 + $0x240] sm:$0xff]
      %v251 = vld [vmem:[%s169 + $0x248] sm:$0xff]
      %v252 = vld [vmem:[%s169 + $0x250] sm:$0xff]
      %v253 = vld [vmem:[%s169 + $0x258] sm:$0xff]
      %v254 = vld [vmem:[%s169 + $0x260] sm:$0xff]
      %v255 = vld [vmem:[%s169 + $0x268] sm:$0xff]
      %v256 = vld [vmem:[%s169 + $0x270] sm:$0xff]
      %v257 = vld [vmem:[%s169 + $0x278] sm:$0xff]
      %v258 = vld [vmem:[%s169 + $0x280] sm:$0xff]
      %v259 = vld [vmem:[%s169 + $0x288] sm:$0xff]
      %v260 = vld [vmem:[%s169 + $0x290] sm:$0xff]
      %v261 = vld [vmem:[%s169 + $0x298] sm:$0xff]
      %v262 = vld [vmem:[%s169 + $0x2a0] sm:$0xff]
      %v263 = vld [vmem:[%s169 + $0x2a8] sm:$0xff]
      %v264 = vld [vmem:[%s169 + $0x2b0] sm:$0xff]
      %v265 = vld [vmem:[%s169 + $0x2b8] sm:$0xff]
      %v266 = vld [vmem:[%s169 + $0x2c0] sm:$0xff]
      %v267 = vld [vmem:[%s169 + $0x2c8] sm:$0xff]
      %v268 = vld [vmem:[%s169 + $0x2d0] sm:$0xff]
      %v269 = vld [vmem:[%s169 + $0x2d8] sm:$0xff]
      %v270 = vld [vmem:[%s169 + $0x2e0] sm:$0xff]
      %v271 = vld [vmem:[%s169 + $0x2e8] sm:$0xff]
      %v272 = vld [vmem:[%s169 + $0x2f0] sm:$0xff]
      %v273 = vld [vmem:[%s169 + $0x2f8] sm:$0xff]
      %v274 = vld [vmem:[%s169 + $0x300] sm:$0xff]
      %v275 = vld [vmem:[%s169 + $0x308] sm:$0xff]
      %v276 = vld [vmem:[%s169 + $0x310] sm:$0xff]
      %v277 = vld [vmem:[%s169 + $0x318] sm:$0xff]
      %v278 = vld [vmem:[%s169 + $0x320] sm:$0xff]
      %v279 = vld [vmem:[%s169 + $0x328] sm:$0xff]
      %v280 = vld [vmem:[%s169 + $0x330] sm:$0xff]
      %v281 = vld [vmem:[%s169 + $0x338] sm:$0xff]
      %v282 = vld [vmem:[%s169 + $0x340] sm:$0xff]
      %v283 = vld [vmem:[%s169 + $0x348] sm:$0xff]
      %v284 = vld [vmem:[%s169 + $0x350] sm:$0xff]
      %v285 = vld [vmem:[%s169 + $0x358] sm:$0xff]
      %v286 = vld [vmem:[%s169 + $0x360] sm:$0xff]
      %v287 = vld [vmem:[%s169 + $0x368] sm:$0xff]
      %v288 = vld [vmem:[%s169 + $0x370] sm:$0xff]
      %v289 = vld [vmem:[%s169 + $0x378] sm:$0xff]
      %v290 = vld [vmem:[%s169 + $0x380] sm:$0xff]
      %v291 = vld [vmem:[%s169 + $0x388] sm:$0xff]
      %v292 = vld [vmem:[%s169 + $0x390] sm:$0xff]
      %v293 = vld [vmem:[%s169 + $0x398] sm:$0xff]
      %v294 = vld [vmem:[%s169 + $0x3a0] sm:$0xff]
      %v295 = vld [vmem:[%s169 + $0x3a8] sm:$0xff]
      %v296 = vld [vmem:[%s169 + $0x3b0] sm:$0xff]
      %v297 = vld [vmem:[%s169 + $0x3b8] sm:$0xff]
      %v298 = vld [vmem:[%s169 + $0x3c0] sm:$0xff]
      %v299 = vld [vmem:[%s169 + $0x3c8] sm:$0xff]
      %v300 = vld [vmem:[%s169 + $0x3d0] sm:$0xff]
      %v301 = vld [vmem:[%s169 + $0x3d8] sm:$0xff]
      %v302 = vld [vmem:[%s169 + $0x3e0] sm:$0xff]
      %v303 = vld [vmem:[%s169 + $0x3e8] sm:$0xff]
      %v304 = vld [vmem:[%s169 + $0x3f0] sm:$0xff]
      %v305 = vld [vmem:[%s169 + $0x3f8] sm:$0xff]
      %v306 = vld [vmem:[%s1] sm:$0xf]
      %v307 = vld [vmem:[%s1 + $0x4] sm:$0xf]
      %v308 = vld [vmem:[%s1 + $0x8] sm:$0xf]
      %v309 = vld [vmem:[%s1 + $0xc] sm:$0xf]
      %v310 = vld [vmem:[%s1 + $0x10] sm:$0xf]
      %v311 = vld [vmem:[%s1 + $0x14] sm:$0xf]
      %v312 = vld [vmem:[%s1 + $0x18] sm:$0xf]
      %v313 = vld [vmem:[%s1 + $0x1c] sm:$0xf]
      %v314 = vld [vmem:[%s1 + $0x20] sm:$0xf]
      %v315 = vld [vmem:[%s1 + $0x24] sm:$0xf]
      %v316 = vld [vmem:[%s1 + $0x28] sm:$0xf]
      %v317 = vld [vmem:[%s1 + $0x2c] sm:$0xf]
      %v318 = vld [vmem:[%s1 + $0x30] sm:$0xf]
      %v319 = vld [vmem:[%s1 + $0x34] sm:$0xf]
      %v320 = vld [vmem:[%s1 + $0x38] sm:$0xf]
      %v321 = vld [vmem:[%s1 + $0x3c] sm:$0xf]
      %v322 = vld [vmem:[%s1 + $0x40] sm:$0xf]
      %v323 = vld [vmem:[%s1 + $0x44] sm:$0xf]
      %v324 = vld [vmem:[%s2] sm:$0x1]
      %v326 = vlaneseq
      %v327 = vshrl.u32 %v326, 7
      %v328 = vsub.s32 0, %v327
      %v329 = vrot.slane %v324, %v328
      %v459 = vunpack.c.l.b16 %v178
      %v460 = vunpack.c.h.b16 %v178
      %v461 = vunpack.c.l.b16 %v179
      %v462 = vunpack.c.h.b16 %v179
      %v463 = vunpack.c.l.b16 %v180
      %v464 = vunpack.c.h.b16 %v180
      %v465 = vunpack.c.l.b16 %v181
      %v466 = vunpack.c.h.b16 %v181
      %v467 = vunpack.c.l.b16 %v182
      %v468 = vunpack.c.h.b16 %v182
      %v469 = vunpack.c.l.b16 %v183
      %v470 = vunpack.c.h.b16 %v183
      %v471 = vunpack.c.l.b16 %v184
      %v472 = vunpack.c.h.b16 %v184
      %v473 = vunpack.c.l.b16 %v185
      %v474 = vunpack.c.h.b16 %v185
      %v475 = vunpack.c.l.b16 %v186
      %v476 = vunpack.c.h.b16 %v186
      %v477 = vunpack.c.l.b16 %v187
      %v478 = vunpack.c.h.b16 %v187
      %v479 = vunpack.c.l.b16 %v188
      %v480 = vunpack.c.h.b16 %v188
      %v481 = vunpack.c.l.b16 %v189
      %v482 = vunpack.c.h.b16 %v189
      %v483 = vunpack.c.l.b16 %v190
      %v484 = vunpack.c.h.b16 %v190
      %v485 = vunpack.c.l.b16 %v191
      %v486 = vunpack.c.h.b16 %v191
      %v487 = vunpack.c.l.b16 %v192
      %v488 = vunpack.c.h.b16 %v192
      %v489 = vunpack.c.l.b16 %v193
      %v490 = vunpack.c.h.b16 %v193
      %v491 = vunpack.c.l.b16 %v194
      %v492 = vunpack.c.h.b16 %v194
      %v493 = vunpack.c.l.b16 %v195
      %v494 = vunpack.c.h.b16 %v195
      %v495 = vunpack.c.l.b16 %v196
      %v496 = vunpack.c.h.b16 %v196
      %v497 = vunpack.c.l.b16 %v197
      %v498 = vunpack.c.h.b16 %v197
      %v499 = vunpack.c.l.b16 %v198
      %v500 = vunpack.c.h.b16 %v198
      %v501 = vunpack.c.l.b16 %v199
      %v502 = vunpack.c.h.b16 %v199
      %v503 = vunpack.c.l.b16 %v200
      %v504 = vunpack.c.h.b16 %v200
      %v505 = vunpack.c.l.b16 %v201
      %v506 = vunpack.c.h.b16 %v201
      %v507 = vunpack.c.l.b16 %v202
      %v508 = vunpack.c.h.b16 %v202
      %v509 = vunpack.c.l.b16 %v203
      %v510 = vunpack.c.h.b16 %v203
      %v511 = vunpack.c.l.b16 %v204
      %v512 = vunpack.c.h.b16 %v204
      %v513 = vunpack.c.l.b16 %v205
      %v514 = vunpack.c.h.b16 %v205
      %v515 = vunpack.c.l.b16 %v206
      %v516 = vunpack.c.h.b16 %v206
      %v517 = vunpack.c.l.b16 %v207
      %v518 = vunpack.c.h.b16 %v207
      %v519 = vunpack.c.l.b16 %v208
      %v520 = vunpack.c.h.b16 %v208
      %v521 = vunpack.c.l.b16 %v209
      %v522 = vunpack.c.h.b16 %v209
      %v523 = vunpack.c.l.b16 %v210
      %v524 = vunpack.c.h.b16 %v210
      %v525 = vunpack.c.l.b16 %v211
      %v526 = vunpack.c.h.b16 %v211
      %v527 = vunpack.c.l.b16 %v212
      %v528 = vunpack.c.h.b16 %v212
      %v529 = vunpack.c.l.b16 %v213
      %v530 = vunpack.c.h.b16 %v213
      %v531 = vunpack.c.l.b16 %v214
      %v532 = vunpack.c.h.b16 %v214
      %v533 = vunpack.c.l.b16 %v215
      %v534 = vunpack.c.h.b16 %v215
      %v535 = vunpack.c.l.b16 %v216
      %v536 = vunpack.c.h.b16 %v216
      %v537 = vunpack.c.l.b16 %v217
      %v538 = vunpack.c.h.b16 %v217
      %v539 = vunpack.c.l.b16 %v218
      %v540 = vunpack.c.h.b16 %v218
      %v541 = vunpack.c.l.b16 %v219
      %v542 = vunpack.c.h.b16 %v219
      %v543 = vunpack.c.l.b16 %v220
      %v544 = vunpack.c.h.b16 %v220
      %v545 = vunpack.c.l.b16 %v221
      %v546 = vunpack.c.h.b16 %v221
      %v547 = vunpack.c.l.b16 %v222
      %v548 = vunpack.c.h.b16 %v222
      %v549 = vunpack.c.l.b16 %v223
      %v550 = vunpack.c.h.b16 %v223
      %v551 = vunpack.c.l.b16 %v224
      %v552 = vunpack.c.h.b16 %v224
      %v553 = vunpack.c.l.b16 %v225
      %v554 = vunpack.c.h.b16 %v225
      %v555 = vunpack.c.l.b16 %v226
      %v556 = vunpack.c.h.b16 %v226
      %v557 = vunpack.c.l.b16 %v227
      %v558 = vunpack.c.h.b16 %v227
      %v559 = vunpack.c.l.b16 %v228
      %v560 = vunpack.c.h.b16 %v228
      %v561 = vunpack.c.l.b16 %v229
      %v562 = vunpack.c.h.b16 %v229
      %v563 = vunpack.c.l.b16 %v230
      %v564 = vunpack.c.h.b16 %v230
      %v565 = vunpack.c.l.b16 %v231
      %v566 = vunpack.c.h.b16 %v231
      %v567 = vunpack.c.l.b16 %v232
      %v568 = vunpack.c.h.b16 %v232
      %v569 = vunpack.c.l.b16 %v233
      %v570 = vunpack.c.h.b16 %v233
      %v571 = vunpack.c.l.b16 %v234
      %v572 = vunpack.c.h.b16 %v234
      %v573 = vunpack.c.l.b16 %v235
      %v574 = vunpack.c.h.b16 %v235
      %v575 = vunpack.c.l.b16 %v236
      %v576 = vunpack.c.h.b16 %v236
      %v577 = vunpack.c.l.b16 %v237
      %v578 = vunpack.c.h.b16 %v237
      %v579 = vunpack.c.l.b16 %v238
      %v580 = vunpack.c.h.b16 %v238
      %v581 = vunpack.c.l.b16 %v239
      %v582 = vunpack.c.h.b16 %v239
      %v583 = vunpack.c.l.b16 %v240
      %v584 = vunpack.c.h.b16 %v240
      %v585 = vunpack.c.l.b16 %v241
      %v586 = vunpack.c.h.b16 %v241
      %v587 = vunpack.c.l.b16 %v242
      %v588 = vunpack.c.h.b16 %v242
      %v589 = vunpack.c.l.b16 %v243
      %v590 = vunpack.c.h.b16 %v243
      %v591 = vunpack.c.l.b16 %v244
      %v592 = vunpack.c.h.b16 %v244
      %v593 = vunpack.c.l.b16 %v245
      %v594 = vunpack.c.h.b16 %v245
      %v595 = vunpack.c.l.b16 %v246
      %v596 = vunpack.c.h.b16 %v246
      %v597 = vunpack.c.l.b16 %v247
      %v598 = vunpack.c.h.b16 %v247
      %v599 = vunpack.c.l.b16 %v248
      %v600 = vunpack.c.h.b16 %v248
      %v601 = vunpack.c.l.b16 %v249
      %v602 = vunpack.c.h.b16 %v249
      %v603 = vunpack.c.l.b16 %v250
      %v604 = vunpack.c.h.b16 %v250
      %v605 = vunpack.c.l.b16 %v251
      %v606 = vunpack.c.h.b16 %v251
      %v607 = vunpack.c.l.b16 %v252
      %v608 = vunpack.c.h.b16 %v252
      %v609 = vunpack.c.l.b16 %v253
      %v610 = vunpack.c.h.b16 %v253
      %v611 = vunpack.c.l.b16 %v254
      %v612 = vunpack.c.h.b16 %v254
      %v613 = vunpack.c.l.b16 %v255
      %v614 = vunpack.c.h.b16 %v255
      %v615 = vunpack.c.l.b16 %v256
      %v616 = vunpack.c.h.b16 %v256
      %v617 = vunpack.c.l.b16 %v257
      %v618 = vunpack.c.h.b16 %v257
      %v619 = vunpack.c.l.b16 %v258
      %v620 = vunpack.c.h.b16 %v258
      %v621 = vunpack.c.l.b16 %v259
      %v622 = vunpack.c.h.b16 %v259
      %v623 = vunpack.c.l.b16 %v260
      %v624 = vunpack.c.h.b16 %v260
      %v625 = vunpack.c.l.b16 %v261
      %v626 = vunpack.c.h.b16 %v261
      %v627 = vunpack.c.l.b16 %v262
      %v628 = vunpack.c.h.b16 %v262
      %v629 = vunpack.c.l.b16 %v263
      %v630 = vunpack.c.h.b16 %v263
      %v631 = vunpack.c.l.b16 %v264
      %v632 = vunpack.c.h.b16 %v264
      %v633 = vunpack.c.l.b16 %v265
      %v634 = vunpack.c.h.b16 %v265
      %v635 = vunpack.c.l.b16 %v266
      %v636 = vunpack.c.h.b16 %v266
      %v637 = vunpack.c.l.b16 %v267
      %v638 = vunpack.c.h.b16 %v267
      %v639 = vunpack.c.l.b16 %v268
      %v640 = vunpack.c.h.b16 %v268
      %v641 = vunpack.c.l.b16 %v269
      %v642 = vunpack.c.h.b16 %v269
      %v643 = vunpack.c.l.b16 %v270
      %v644 = vunpack.c.h.b16 %v270
      %v645 = vunpack.c.l.b16 %v271
      %v646 = vunpack.c.h.b16 %v271
      %v647 = vunpack.c.l.b16 %v272
      %v648 = vunpack.c.h.b16 %v272
      %v649 = vunpack.c.l.b16 %v273
      %v650 = vunpack.c.h.b16 %v273
      %v651 = vunpack.c.l.b16 %v274
      %v652 = vunpack.c.h.b16 %v274
      %v653 = vunpack.c.l.b16 %v275
      %v654 = vunpack.c.h.b16 %v275
      %v655 = vunpack.c.l.b16 %v276
      %v656 = vunpack.c.h.b16 %v276
      %v657 = vunpack.c.l.b16 %v277
      %v658 = vunpack.c.h.b16 %v277
      %v659 = vunpack.c.l.b16 %v278
      %v660 = vunpack.c.h.b16 %v278
      %v661 = vunpack.c.l.b16 %v279
      %v662 = vunpack.c.h.b16 %v279
      %v663 = vunpack.c.l.b16 %v280
      %v664 = vunpack.c.h.b16 %v280
      %v665 = vunpack.c.l.b16 %v281
      %v666 = vunpack.c.h.b16 %v281
      %v667 = vunpack.c.l.b16 %v282
      %v668 = vunpack.c.h.b16 %v282
      %v669 = vunpack.c.l.b16 %v283
      %v670 = vunpack.c.h.b16 %v283
      %v671 = vunpack.c.l.b16 %v284
      %v672 = vunpack.c.h.b16 %v284
      %v673 = vunpack.c.l.b16 %v285
      %v674 = vunpack.c.h.b16 %v285
      %v675 = vunpack.c.l.b16 %v286
      %v676 = vunpack.c.h.b16 %v286
      %v677 = vunpack.c.l.b16 %v287
      %v678 = vunpack.c.h.b16 %v287
      %v679 = vunpack.c.l.b16 %v288
      %v680 = vunpack.c.h.b16 %v288
      %v681 = vunpack.c.l.b16 %v289
      %v682 = vunpack.c.h.b16 %v289
      %v683 = vunpack.c.l.b16 %v290
      %v684 = vunpack.c.h.b16 %v290
      %v685 = vunpack.c.l.b16 %v291
      %v686 = vunpack.c.h.b16 %v291
      %v687 = vunpack.c.l.b16 %v292
      %v688 = vunpack.c.h.b16 %v292
      %v689 = vunpack.c.l.b16 %v293
      %v690 = vunpack.c.h.b16 %v293
      %v691 = vunpack.c.l.b16 %v294
      %v692 = vunpack.c.h.b16 %v294
      %v693 = vunpack.c.l.b16 %v295
      %v694 = vunpack.c.h.b16 %v295
      %v695 = vunpack.c.l.b16 %v296
      %v696 = vunpack.c.h.b16 %v296
      %v697 = vunpack.c.l.b16 %v297
      %v698 = vunpack.c.h.b16 %v297
      %v699 = vunpack.c.l.b16 %v298
      %v700 = vunpack.c.h.b16 %v298
      %v701 = vunpack.c.l.b16 %v299
      %v702 = vunpack.c.h.b16 %v299
      %v703 = vunpack.c.l.b16 %v300
      %v704 = vunpack.c.h.b16 %v300
      %v705 = vunpack.c.l.b16 %v301
      %v706 = vunpack.c.h.b16 %v301
      %v707 = vunpack.c.l.b16 %v302
      %v708 = vunpack.c.h.b16 %v302
      %v709 = vunpack.c.l.b16 %v303
      %v710 = vunpack.c.h.b16 %v303
      %v711 = vunpack.c.l.b16 %v304
      %v712 = vunpack.c.h.b16 %v304
      %v713 = vunpack.c.l.b16 %v305
      %v714 = vunpack.c.h.b16 %v305
      %v715 = vpack.c.b16 %v461, %v459
      %v716 = vpack.c.b16 %v462, %v460
      %v717 = vpack.c.b16 %v465, %v463
      %v718 = vpack.c.b16 %v466, %v464
      %v719 = vpack.c.b16 %v469, %v467
      %v720 = vpack.c.b16 %v470, %v468
      %v721 = vpack.c.b16 %v473, %v471
      %v722 = vpack.c.b16 %v474, %v472
      %v723 = vpack.c.b16 %v477, %v475
      %v724 = vpack.c.b16 %v478, %v476
      %v725 = vpack.c.b16 %v481, %v479
      %v726 = vpack.c.b16 %v482, %v480
      %v727 = vpack.c.b16 %v485, %v483
      %v728 = vpack.c.b16 %v486, %v484
      %v729 = vpack.c.b16 %v489, %v487
      %v730 = vpack.c.b16 %v490, %v488
      %v731 = vpack.c.b16 %v493, %v491
      %v732 = vpack.c.b16 %v494, %v492
      %v733 = vpack.c.b16 %v497, %v495
      %v734 = vpack.c.b16 %v498, %v496
      %v735 = vpack.c.b16 %v501, %v499
      %v736 = vpack.c.b16 %v502, %v500
      %v737 = vpack.c.b16 %v505, %v503
      %v738 = vpack.c.b16 %v506, %v504
      %v739 = vpack.c.b16 %v509, %v507
      %v740 = vpack.c.b16 %v510, %v508
      %v741 = vpack.c.b16 %v513, %v511
      %v742 = vpack.c.b16 %v514, %v512
      %v743 = vpack.c.b16 %v517, %v515
      %v744 = vpack.c.b16 %v518, %v516
      %v745 = vpack.c.b16 %v521, %v519
      %v746 = vpack.c.b16 %v522, %v520
      %v747 = vpack.c.b16 %v525, %v523
      %v748 = vpack.c.b16 %v526, %v524
      %v749 = vpack.c.b16 %v529, %v527
      %v750 = vpack.c.b16 %v530, %v528
      %v751 = vpack.c.b16 %v533, %v531
      %v752 = vpack.c.b16 %v534, %v532
      %v753 = vpack.c.b16 %v537, %v535
      %v754 = vpack.c.b16 %v538, %v536
      %v755 = vpack.c.b16 %v541, %v539
      %v756 = vpack.c.b16 %v542, %v540
      %v757 = vpack.c.b16 %v545, %v543
      %v758 = vpack.c.b16 %v546, %v544
      %v759 = vpack.c.b16 %v549, %v547
      %v760 = vpack.c.b16 %v550, %v548
      %v761 = vpack.c.b16 %v553, %v551
      %v762 = vpack.c.b16 %v554, %v552
      %v763 = vpack.c.b16 %v557, %v555
      %v764 = vpack.c.b16 %v558, %v556
      %v765 = vpack.c.b16 %v561, %v559
      %v766 = vpack.c.b16 %v562, %v560
      %v767 = vpack.c.b16 %v565, %v563
      %v768 = vpack.c.b16 %v566, %v564
      %v769 = vpack.c.b16 %v569, %v567
      %v770 = vpack.c.b16 %v570, %v568
      %v771 = vpack.c.b16 %v573, %v571
      %v772 = vpack.c.b16 %v574, %v572
      %v773 = vpack.c.b16 %v577, %v575
      %v774 = vpack.c.b16 %v578, %v576
      %v775 = vpack.c.b16 %v581, %v579
      %v776 = vpack.c.b16 %v582, %v580
      %v777 = vpack.c.b16 %v585, %v583
      %v778 = vpack.c.b16 %v586, %v584
      %v779 = vpack.c.b16 %v589, %v587
      %v780 = vpack.c.b16 %v590, %v588
      %v781 = vpack.c.b16 %v593, %v591
      %v782 = vpack.c.b16 %v594, %v592
      %v783 = vpack.c.b16 %v597, %v595
      %v784 = vpack.c.b16 %v598, %v596
      %v785 = vpack.c.b16 %v601, %v599
      %v786 = vpack.c.b16 %v602, %v600
      %v787 = vpack.c.b16 %v605, %v603
      %v788 = vpack.c.b16 %v606, %v604
      %v789 = vpack.c.b16 %v609, %v607
      %v790 = vpack.c.b16 %v610, %v608
      %v791 = vpack.c.b16 %v613, %v611
      %v792 = vpack.c.b16 %v614, %v612
      %v793 = vpack.c.b16 %v617, %v615
      %v794 = vpack.c.b16 %v618, %v616
      %v795 = vpack.c.b16 %v621, %v619
      %v796 = vpack.c.b16 %v622, %v620
      %v797 = vpack.c.b16 %v625, %v623
      %v798 = vpack.c.b16 %v626, %v624
      %v799 = vpack.c.b16 %v629, %v627
      %v800 = vpack.c.b16 %v630, %v628
      %v801 = vpack.c.b16 %v633, %v631
      %v802 = vpack.c.b16 %v634, %v632
      %v803 = vpack.c.b16 %v637, %v635
      %v804 = vpack.c.b16 %v638, %v636
      %v805 = vpack.c.b16 %v641, %v639
      %v806 = vpack.c.b16 %v642, %v640
      %v807 = vpack.c.b16 %v645, %v643
      %v808 = vpack.c.b16 %v646, %v644
      %v809 = vpack.c.b16 %v649, %v647
      %v810 = vpack.c.b16 %v650, %v648
      %v811 = vpack.c.b16 %v653, %v651
      %v812 = vpack.c.b16 %v654, %v652
      %v813 = vpack.c.b16 %v657, %v655
      %v814 = vpack.c.b16 %v658, %v656
      %v815 = vpack.c.b16 %v661, %v659
      %v816 = vpack.c.b16 %v662, %v660
      %v817 = vpack.c.b16 %v665, %v663
      %v818 = vpack.c.b16 %v666, %v664
      %v819 = vpack.c.b16 %v669, %v667
      %v820 = vpack.c.b16 %v670, %v668
      %v821 = vpack.c.b16 %v673, %v671
      %v822 = vpack.c.b16 %v674, %v672
      %v823 = vpack.c.b16 %v677, %v675
      %v824 = vpack.c.b16 %v678, %v676
      %v825 = vpack.c.b16 %v681, %v679
      %v826 = vpack.c.b16 %v682, %v680
      %v827 = vpack.c.b16 %v685, %v683
      %v828 = vpack.c.b16 %v686, %v684
      %v829 = vpack.c.b16 %v689, %v687
      %v830 = vpack.c.b16 %v690, %v688
      %v831 = vpack.c.b16 %v693, %v691
      %v832 = vpack.c.b16 %v694, %v692
      %v833 = vpack.c.b16 %v697, %v695
      %v834 = vpack.c.b16 %v698, %v696
      %v835 = vpack.c.b16 %v701, %v699
      %v836 = vpack.c.b16 %v702, %v700
      %v837 = vpack.c.b16 %v705, %v703
      %v838 = vpack.c.b16 %v706, %v704
      %v839 = vpack.c.b16 %v709, %v707
      %v840 = vpack.c.b16 %v710, %v708
      %v841 = vpack.c.b16 %v713, %v711
      %v842 = vpack.c.b16 %v714, %v712
      %v925 = vunpack.c.l.b16 %v306
      %v926 = vunpack.c.l.b16 %v307
      %v927 = vunpack.c.l.b16 %v308
      %v928 = vunpack.c.l.b16 %v309
      %v929 = vunpack.c.l.b16 %v310
      %v930 = vunpack.c.l.b16 %v311
      %v931 = vunpack.c.l.b16 %v312
      %v932 = vunpack.c.l.b16 %v313
      %v933 = vunpack.c.l.b16 %v314
      %v934 = vunpack.c.l.b16 %v315
      %v935 = vunpack.c.l.b16 %v316
      %v936 = vunpack.c.l.b16 %v317
      %v937 = vunpack.c.l.b16 %v318
      %v938 = vunpack.c.l.b16 %v319
      %v939 = vunpack.c.l.b16 %v320
      %v940 = vunpack.c.l.b16 %v321
      %v941 = vunpack.c.l.b16 %v322
      %v942 = vunpack.c.l.b16 %v323
      %v943 = vpack.c.b16 %v926, %v925
      %v944 = vpack.c.b16 %v928, %v927
      %v945 = vpack.c.b16 %v930, %v929
      %v946 = vpack.c.b16 %v932, %v931
      %v947 = vpack.c.b16 %v934, %v933
      %v948 = vpack.c.b16 %v936, %v935
      %v949 = vpack.c.b16 %v938, %v937
      %v950 = vpack.c.b16 %v940, %v939
      %v951 = vpack.c.b16 %v942, %v941
      %vm961 = vcmask 130048
      %v963 = vsel %vm961, %v716, 0
      %v966 = vsel %vm961, %v718, 0
      %v969 = vsel %vm961, %v720, 0
      %v972 = vsel %vm961, %v722, 0
      %v975 = vsel %vm961, %v724, 0
      %v978 = vsel %vm961, %v726, 0
      %v981 = vsel %vm961, %v728, 0
      %v984 = vsel %vm961, %v730, 0
      %v987 = vsel %vm961, %v732, 0
      %v990 = vsel %vm961, %v734, 0
      %v993 = vsel %vm961, %v736, 0
      %v996 = vsel %vm961, %v738, 0
      %v999 = vsel %vm961, %v740, 0
      %v1002 = vsel %vm961, %v742, 0
      %v1005 = vsel %vm961, %v744, 0
      %v1008 = vsel %vm961, %v746, 0
      %v1011 = vsel %vm961, %v748, 0
      %v1014 = vsel %vm961, %v750, 0
      %v1017 = vsel %vm961, %v752, 0
      %v1020 = vsel %vm961, %v754, 0
      %v1023 = vsel %vm961, %v756, 0
      %v1026 = vsel %vm961, %v758, 0
      %v1029 = vsel %vm961, %v760, 0
      %v1032 = vsel %vm961, %v762, 0
      %v1035 = vsel %vm961, %v764, 0
      %v1038 = vsel %vm961, %v766, 0
      %v1041 = vsel %vm961, %v768, 0
      %v1044 = vsel %vm961, %v770, 0
      %v1047 = vsel %vm961, %v772, 0
      %v1050 = vsel %vm961, %v774, 0
      %v1053 = vsel %vm961, %v776, 0
      %v1056 = vsel %vm961, %v778, 0
      %v1059 = vsel %vm961, %v780, 0
      %v1062 = vsel %vm961, %v782, 0
      %v1065 = vsel %vm961, %v784, 0
      %v1068 = vsel %vm961, %v786, 0
      %v1071 = vsel %vm961, %v788, 0
      %v1074 = vsel %vm961, %v790, 0
      %v1077 = vsel %vm961, %v792, 0
      %v1080 = vsel %vm961, %v794, 0
      %v1083 = vsel %vm961, %v796, 0
      %v1086 = vsel %vm961, %v798, 0
      %v1089 = vsel %vm961, %v800, 0
      %v1092 = vsel %vm961, %v802, 0
      %v1095 = vsel %vm961, %v804, 0
      %v1098 = vsel %vm961, %v806, 0
      %v1101 = vsel %vm961, %v808, 0
      %v1104 = vsel %vm961, %v810, 0
      %v1107 = vsel %vm961, %v812, 0
      %v1110 = vsel %vm961, %v814, 0
      %v1113 = vsel %vm961, %v816, 0
      %v1116 = vsel %vm961, %v818, 0
      %v1119 = vsel %vm961, %v820, 0
      %v1122 = vsel %vm961, %v822, 0
      %v1125 = vsel %vm961, %v824, 0
      %v1128 = vsel %vm961, %v826, 0
      %v1131 = vsel %vm961, %v828, 0
      %v1134 = vsel %vm961, %v830, 0
      %v1137 = vsel %vm961, %v832, 0
      %v1140 = vsel %vm961, %v834, 0
      %v1143 = vsel %vm961, %v836, 0
      %v1146 = vsel %vm961, %v838, 0
      %v1149 = vsel %vm961, %v840, 0
      %v1152 = vsel %vm961, %v842, 0
      %1154 = vmatprep.subr.bf16.mxu0 0
      %1155 = vmatpush1.bf16.msra.mxu0 %v943
      %1156 = vmatprep.subr.bf16.mxu0 0
      %1157 = vmatpush1.bf16.msra.mxu0 %v944
      %1158 = vmatprep.subr.bf16.mxu0 0
      %1159 = vmatpush1.bf16.msra.mxu0 %v945
      %1160 = vmatprep.subr.bf16.mxu0 0
      %1161 = vmatpush1.bf16.msra.mxu0 %v946
      %1162 = vmatprep.subr.bf16.mxu0 0
      %1163 = vmatpush1.bf16.msra.mxu0 %v947
      %1164 = vmatprep.subr.bf16.mxu0 0
      %1165 = vmatpush1.bf16.msra.mxu0 %v948
      %1166 = vmatprep.subr.bf16.mxu0 0
      %1167 = vmatpush1.bf16.msra.mxu0 %v949
      %1168 = vmatprep.subr.bf16.mxu0 0
      %1169 = vmatpush1.bf16.msra.mxu0 %v950
      %1170 = vmatprep.subr.bf16.mxu0 0
      %1171 = vmatpush1.bf16.msra.mxu0 %v951
      %1172 = vmatprep.subr.bf16.mxu0 0
      %1173 = vmatpush1.bf16.msra.mxu0 0
      %1174 = vmatprep.subr.bf16.mxu0 0
      %1175 = vmatpush1.bf16.msra.mxu0 0
      %1176 = vmatprep.subr.bf16.mxu0 0
      %1177 = vmatpush1.bf16.msra.mxu0 0
      %1178 = vmatprep.subr.bf16.mxu0 0
      %1179 = vmatpush1.bf16.msra.mxu0 0
      %1180 = vmatprep.subr.bf16.mxu0 0
      %1181 = vmatpush1.bf16.msra.mxu0 0
      %1182 = vmatprep.subr.bf16.mxu0 0
      %1183 = vmatpush1.bf16.msra.mxu0 0
      %1184 = vmatprep.subr.bf16.mxu0 0
      %1185 = vmatpush1.bf16.msra.mxu0 0
      %1186 = vmatprep.mubr.bf16.mxu0 %v963
      %1187 = vmatmul.mubr.bf16.gmra.mrb[0].mxu0 %v715
      %v1188 = vpop.f32.mrb[0].mxu0
      %v1189 = vadd.f32 %v329, %v1188
      %v1190 = vpop.f32.mrb[0].mxu0
      %v1191 = vpop.f32.mrb[0].mxu0
      %v1192 = vadd.f32 %v329, %v1191
      %v1193 = vpop.f32.mrb[0].mxu0
      %1194 = vmatprep.mubr.bf16.mxu0 %v966
      %1195 = vmatmul.mubr.bf16.gmra.mrb[0].mxu0 %v717
      %v1196 = vpop.f32.mrb[0].mxu0
      %v1197 = vadd.f32 %v329, %v1196
      %v1198 = vpop.f32.mrb[0].mxu0
      %v1199 = vpop.f32.mrb[0].mxu0
      %v1200 = vadd.f32 %v329, %v1199
      %v1201 = vpop.f32.mrb[0].mxu0
      %1202 = vmatprep.mubr.bf16.mxu0 %v969
      %1203 = vmatmul.mubr.bf16.gmra.mrb[0].mxu0 %v719
      %v1204 = vpop.f32.mrb[0].mxu0
      %v1205 = vadd.f32 %v329, %v1204
      %v1206 = vpop.f32.mrb[0].mxu0
      %v1207 = vpop.f32.mrb[0].mxu0
      %v1208 = vadd.f32 %v329, %v1207
      %v1209 = vpop.f32.mrb[0].mxu0
      %1210 = vmatprep.mubr.bf16.mxu0 %v972
      %1211 = vmatmul.mubr.bf16.gmra.mrb[0].mxu0 %v721
      %v1212 = vpop.f32.mrb[0].mxu0
      %v1213 = vadd.f32 %v329, %v1212
      %v1214 = vpop.f32.mrb[0].mxu0
      %v1215 = vpop.f32.mrb[0].mxu0
      %v1216 = vadd.f32 %v329, %v1215
      %v1217 = vpop.f32.mrb[0].mxu0
      %1218 = vmatprep.mubr.bf16.mxu0 %v975
      %1219 = vmatmul.mubr.bf16.gmra.mrb[0].mxu0 %v723
      %v1220 = vpop.f32.mrb[0].mxu0
      %v1221 = vadd.f32 %v329, %v1220
      %v1222 = vpop.f32.mrb[0].mxu0
      %v1223 = vpop.f32.mrb[0].mxu0
      %v1224 = vadd.f32 %v329, %v1223
      %v1225 = vpop.f32.mrb[0].mxu0
      %1226 = vmatprep.mubr.bf16.mxu0 %v978
      %1227 = vmatmul.mubr.bf16.gmra.mrb[0].mxu0 %v725
      %v1228 = vpop.f32.mrb[0].mxu0
      %v1229 = vadd.f32 %v329, %v1228
      %v1230 = vpop.f32.mrb[0].mxu0
      %v1231 = vpop.f32.mrb[0].mxu0
      %v1232 = vadd.f32 %v329, %v1231
      %v1233 = vpop.f32.mrb[0].mxu0
      %1234 = vmatprep.mubr.bf16.mxu0 %v981
      %1235 = vmatmul.mubr.bf16.gmra.mrb[0].mxu0 %v727
      %v1236 = vpop.f32.mrb[0].mxu0
      %v1237 = vadd.f32 %v329, %v1236
      %v1238 = vpop.f32.mrb[0].mxu0
      %v1239 = vpop.f32.mrb[0].mxu0
      %v1240 = vadd.f32 %v329, %v1239
      %v1241 = vpop.f32.mrb[0].mxu0
      %1242 = vmatprep.mubr.bf16.mxu0 %v984
      %1243 = vmatmul.mubr.bf16.gmra.mrb[0].mxu0 %v729
      %v1244 = vpop.f32.mrb[0].mxu0
      %v1245 = vadd.f32 %v329, %v1244
      %v1246 = vpop.f32.mrb[0].mxu0
      %v1247 = vpop.f32.mrb[0].mxu0
      %v1248 = vadd.f32 %v329, %v1247
      %v1249 = vpop.f32.mrb[0].mxu0
      %1250 = vmatprep.mubr.bf16.mxu0 %v987
      %1251 = vmatmul.mubr.bf16.gmra.mrb[0].mxu0 %v731
      %v1252 = vpop.f32.mrb[0].mxu0
      %v1253 = vadd.f32 %v329, %v1252
      %v1254 = vpop.f32.mrb[0].mxu0
      %v1255 = vpop.f32.mrb[0].mxu0
      %v1256 = vadd.f32 %v329, %v1255
      %v1257 = vpop.f32.mrb[0].mxu0
      %1258 = vmatprep.mubr.bf16.mxu0 %v990
      %1259 = vmatmul.mubr.bf16.gmra.mrb[0].mxu0 %v733
      %v1260 = vpop.f32.mrb[0].mxu0
      %v1261 = vadd.f32 %v329, %v1260
      %v1262 = vpop.f32.mrb[0].mxu0
      %v1263 = vpop.f32.mrb[0].mxu0
      %v1264 = vadd.f32 %v329, %v1263
      %v1265 = vpop.f32.mrb[0].mxu0
      %1266 = vmatprep.mubr.bf16.mxu0 %v993
      %1267 = vmatmul.mubr.bf16.gmra.mrb[0].mxu0 %v735
      %v1268 = vpop.f32.mrb[0].mxu0
      %v1269 = vadd.f32 %v329, %v1268
      %v1270 = vpop.f32.mrb[0].mxu0
      %v1271 = vpop.f32.mrb[0].mxu0
      %v1272 = vadd.f32 %v329, %v1271
      %v1273 = vpop.f32.mrb[0].mxu0
      %1274 = vmatprep.mubr.bf16.mxu0 %v996
      %1275 = vmatmul.mubr.bf16.gmra.mrb[0].mxu0 %v737
      %v1276 = vpop.f32.mrb[0].mxu0
      %v1277 = vadd.f32 %v329, %v1276
      %v1278 = vpop.f32.mrb[0].mxu0
      %v1279 = vpop.f32.mrb[0].mxu0
      %v1280 = vadd.f32 %v329, %v1279
      %v1281 = vpop.f32.mrb[0].mxu0
      %1282 = vmatprep.mubr.bf16.mxu0 %v999
      %1283 = vmatmul.mubr.bf16.gmra.mrb[0].mxu0 %v739
      %v1284 = vpop.f32.mrb[0].mxu0
      %v1285 = vadd.f32 %v329, %v1284
      %v1286 = vpop.f32.mrb[0].mxu0
      %v1287 = vpop.f32.mrb[0].mxu0
      %v1288 = vadd.f32 %v329, %v1287
      %v1289 = vpop.f32.mrb[0].mxu0
      %1290 = vmatprep.mubr.bf16.mxu0 %v1002
      %1291 = vmatmul.mubr.bf16.gmra.mrb[0].mxu0 %v741
      %v1292 = vpop.f32.mrb[0].mxu0
      %v1293 = vadd.f32 %v329, %v1292
      %v1294 = vpop.f32.mrb[0].mxu0
      %v1295 = vpop.f32.mrb[0].mxu0
      %v1296 = vadd.f32 %v329, %v1295
      %v1297 = vpop.f32.mrb[0].mxu0
      %1298 = vmatprep.mubr.bf16.mxu0 %v1005
      %1299 = vmatmul.mubr.bf16.gmra.mrb[0].mxu0 %v743
      %v1300 = vpop.f32.mrb[0].mxu0
      %v1301 = vadd.f32 %v329, %v1300
      %v1302 = vpop.f32.mrb[0].mxu0
      %v1303 = vpop.f32.mrb[0].mxu0
      %v1304 = vadd.f32 %v329, %v1303
      %v1305 = vpop.f32.mrb[0].mxu0
      %1306 = vmatprep.mubr.bf16.mxu0 %v1008
      %1307 = vmatmul.mubr.bf16.gmra.mrb[0].mxu0 %v745
      %v1308 = vpop.f32.mrb[0].mxu0
      %v1309 = vadd.f32 %v329, %v1308
      %v1310 = vpop.f32.mrb[0].mxu0
      %v1311 = vpop.f32.mrb[0].mxu0
      %v1312 = vadd.f32 %v329, %v1311
      %v1313 = vpop.f32.mrb[0].mxu0
      %1314 = vmatprep.mubr.bf16.mxu0 %v1011
      %1315 = vmatmul.mubr.bf16.gmra.mrb[0].mxu0 %v747
      %v1316 = vpop.f32.mrb[0].mxu0
      %v1317 = vadd.f32 %v329, %v1316
      %v1318 = vpop.f32.mrb[0].mxu0
      %v1319 = vpop.f32.mrb[0].mxu0
      %v1320 = vadd.f32 %v329, %v1319
      %v1321 = vpop.f32.mrb[0].mxu0
      %1322 = vmatprep.mubr.bf16.mxu0 %v1014
      %1323 = vmatmul.mubr.bf16.gmra.mrb[0].mxu0 %v749
      %v1324 = vpop.f32.mrb[0].mxu0
      %v1325 = vadd.f32 %v329, %v1324
      %v1326 = vpop.f32.mrb[0].mxu0
      %v1327 = vpop.f32.mrb[0].mxu0
      %v1328 = vadd.f32 %v329, %v1327
      %v1329 = vpop.f32.mrb[0].mxu0
      %1330 = vmatprep.mubr.bf16.mxu0 %v1017
      %1331 = vmatmul.mubr.bf16.gmra.mrb[0].mxu0 %v751
      %v1332 = vpop.f32.mrb[0].mxu0
      %v1333 = vadd.f32 %v329, %v1332
      %v1334 = vpop.f32.mrb[0].mxu0
      %v1335 = vpop.f32.mrb[0].mxu0
      %v1336 = vadd.f32 %v329, %v1335
      %v1337 = vpop.f32.mrb[0].mxu0
      %1338 = vmatprep.mubr.bf16.mxu0 %v1020
      %1339 = vmatmul.mubr.bf16.gmra.mrb[0].mxu0 %v753
      %v1340 = vpop.f32.mrb[0].mxu0
      %v1341 = vadd.f32 %v329, %v1340
      %v1342 = vpop.f32.mrb[0].mxu0
      %v1343 = vpop.f32.mrb[0].mxu0
      %v1344 = vadd.f32 %v329, %v1343
      %v1345 = vpop.f32.mrb[0].mxu0
      %1346 = vmatprep.mubr.bf16.mxu0 %v1023
      %1347 = vmatmul.mubr.bf16.gmra.mrb[0].mxu0 %v755
      %v1348 = vpop.f32.mrb[0].mxu0
      %v1349 = vadd.f32 %v329, %v1348
      %v1350 = vpop.f32.mrb[0].mxu0
      %v1351 = vpop.f32.mrb[0].mxu0
      %v1352 = vadd.f32 %v329, %v1351
      %v1353 = vpop.f32.mrb[0].mxu0
      %1354 = vmatprep.mubr.bf16.mxu0 %v1026
      %1355 = vmatmul.mubr.bf16.gmra.mrb[0].mxu0 %v757
      %v1356 = vpop.f32.mrb[0].mxu0
      %v1357 = vadd.f32 %v329, %v1356
      %v1358 = vpop.f32.mrb[0].mxu0
      %v1359 = vpop.f32.mrb[0].mxu0
      %v1360 = vadd.f32 %v329, %v1359
      %v1361 = vpop.f32.mrb[0].mxu0
      %1362 = vmatprep.mubr.bf16.mxu0 %v1029
      %1363 = vmatmul.mubr.bf16.gmra.mrb[0].mxu0 %v759
      %v1364 = vpop.f32.mrb[0].mxu0
      %v1365 = vadd.f32 %v329, %v1364
      %v1366 = vpop.f32.mrb[0].mxu0
      %v1367 = vpop.f32.mrb[0].mxu0
      %v1368 = vadd.f32 %v329, %v1367
      %v1369 = vpop.f32.mrb[0].mxu0
      %1370 = vmatprep.mubr.bf16.mxu0 %v1032
      %1371 = vmatmul.mubr.bf16.gmra.mrb[0].mxu0 %v761
      %v1372 = vpop.f32.mrb[0].mxu0
      %v1373 = vadd.f32 %v329, %v1372
      %v1374 = vpop.f32.mrb[0].mxu0
      %v1375 = vpop.f32.mrb[0].mxu0
      %v1376 = vadd.f32 %v329, %v1375
      %v1377 = vpop.f32.mrb[0].mxu0
      %1378 = vmatprep.mubr.bf16.mxu0 %v1035
      %1379 = vmatmul.mubr.bf16.gmra.mrb[0].mxu0 %v763
      %v1380 = vpop.f32.mrb[0].mxu0
      %v1381 = vadd.f32 %v329, %v1380
      %v1382 = vpop.f32.mrb[0].mxu0
      %v1383 = vpop.f32.mrb[0].mxu0
      %v1384 = vadd.f32 %v329, %v1383
      %v1385 = vpop.f32.mrb[0].mxu0
      %1386 = vmatprep.mubr.bf16.mxu0 %v1038
      %1387 = vmatmul.mubr.bf16.gmra.mrb[0].mxu0 %v765
      %v1388 = vpop.f32.mrb[0].mxu0
      %v1389 = vadd.f32 %v329, %v1388
      %v1390 = vpop.f32.mrb[0].mxu0
      %v1391 = vpop.f32.mrb[0].mxu0
      %v1392 = vadd.f32 %v329, %v1391
      %v1393 = vpop.f32.mrb[0].mxu0
      %1394 = vmatprep.mubr.bf16.mxu0 %v1041
      %1395 = vmatmul.mubr.bf16.gmra.mrb[0].mxu0 %v767
      %v1396 = vpop.f32.mrb[0].mxu0
      %v1397 = vadd.f32 %v329, %v1396
      %v1398 = vpop.f32.mrb[0].mxu0
      %v1399 = vpop.f32.mrb[0].mxu0
      %v1400 = vadd.f32 %v329, %v1399
      %v1401 = vpop.f32.mrb[0].mxu0
      %1402 = vmatprep.mubr.bf16.mxu0 %v1044
      %1403 = vmatmul.mubr.bf16.gmra.mrb[0].mxu0 %v769
      %v1404 = vpop.f32.mrb[0].mxu0
      %v1405 = vadd.f32 %v329, %v1404
      %v1406 = vpop.f32.mrb[0].mxu0
      %v1407 = vpop.f32.mrb[0].mxu0
      %v1408 = vadd.f32 %v329, %v1407
      %v1409 = vpop.f32.mrb[0].mxu0
      %1410 = vmatprep.mubr.bf16.mxu0 %v1047
      %1411 = vmatmul.mubr.bf16.gmra.mrb[0].mxu0 %v771
      %v1412 = vpop.f32.mrb[0].mxu0
      %v1413 = vadd.f32 %v329, %v1412
      %v1414 = vpop.f32.mrb[0].mxu0
      %v1415 = vpop.f32.mrb[0].mxu0
      %v1416 = vadd.f32 %v329, %v1415
      %v1417 = vpop.f32.mrb[0].mxu0
      %1418 = vmatprep.mubr.bf16.mxu0 %v1050
      %1419 = vmatmul.mubr.bf16.gmra.mrb[0].mxu0 %v773
      %v1420 = vpop.f32.mrb[0].mxu0
      %v1421 = vadd.f32 %v329, %v1420
      %v1422 = vpop.f32.mrb[0].mxu0
      %v1423 = vpop.f32.mrb[0].mxu0
      %v1424 = vadd.f32 %v329, %v1423
      %v1425 = vpop.f32.mrb[0].mxu0
      %1426 = vmatprep.mubr.bf16.mxu0 %v1053
      %1427 = vmatmul.mubr.bf16.gmra.mrb[0].mxu0 %v775
      %v1428 = vpop.f32.mrb[0].mxu0
      %v1429 = vadd.f32 %v329, %v1428
      %v1430 = vpop.f32.mrb[0].mxu0
      %v1431 = vpop.f32.mrb[0].mxu0
      %v1432 = vadd.f32 %v329, %v1431
      %v1433 = vpop.f32.mrb[0].mxu0
      %1434 = vmatprep.mubr.bf16.mxu0 %v1056
      %1435 = vmatmul.mubr.bf16.gmra.mrb[0].mxu0 %v777
      %v1436 = vpop.f32.mrb[0].mxu0
      %v1437 = vadd.f32 %v329, %v1436
      %v1438 = vpop.f32.mrb[0].mxu0
      %v1439 = vpop.f32.mrb[0].mxu0
      %v1440 = vadd.f32 %v329, %v1439
      %v1441 = vpop.f32.mrb[0].mxu0
      %1442 = vmatprep.mubr.bf16.mxu0 %v1059
      %1443 = vmatmul.mubr.bf16.gmra.mrb[0].mxu0 %v779
      %v1444 = vpop.f32.mrb[0].mxu0
      %v1445 = vadd.f32 %v329, %v1444
      %v1446 = vpop.f32.mrb[0].mxu0
      %v1447 = vpop.f32.mrb[0].mxu0
      %v1448 = vadd.f32 %v329, %v1447
      %v1449 = vpop.f32.mrb[0].mxu0
      %1450 = vmatprep.mubr.bf16.mxu0 %v1062
      %1451 = vmatmul.mubr.bf16.gmra.mrb[0].mxu0 %v781
      %v1452 = vpop.f32.mrb[0].mxu0
      %v1453 = vadd.f32 %v329, %v1452
      %v1454 = vpop.f32.mrb[0].mxu0
      %v1455 = vpop.f32.mrb[0].mxu0
      %v1456 = vadd.f32 %v329, %v1455
      %v1457 = vpop.f32.mrb[0].mxu0
      %1458 = vmatprep.mubr.bf16.mxu0 %v1065
      %1459 = vmatmul.mubr.bf16.gmra.mrb[0].mxu0 %v783
      %v1460 = vpop.f32.mrb[0].mxu0
      %v1461 = vadd.f32 %v329, %v1460
      %v1462 = vpop.f32.mrb[0].mxu0
      %v1463 = vpop.f32.mrb[0].mxu0
      %v1464 = vadd.f32 %v329, %v1463
      %v1465 = vpop.f32.mrb[0].mxu0
      %1466 = vmatprep.mubr.bf16.mxu0 %v1068
      %1467 = vmatmul.mubr.bf16.gmra.mrb[0].mxu0 %v785
      %v1468 = vpop.f32.mrb[0].mxu0
      %v1469 = vadd.f32 %v329, %v1468
      %v1470 = vpop.f32.mrb[0].mxu0
      %v1471 = vpop.f32.mrb[0].mxu0
      %v1472 = vadd.f32 %v329, %v1471
      %v1473 = vpop.f32.mrb[0].mxu0
      %1474 = vmatprep.mubr.bf16.mxu0 %v1071
      %1475 = vmatmul.mubr.bf16.gmra.mrb[0].mxu0 %v787
      %v1476 = vpop.f32.mrb[0].mxu0
      %v1477 = vadd.f32 %v329, %v1476
      %v1478 = vpop.f32.mrb[0].mxu0
      %v1479 = vpop.f32.mrb[0].mxu0
      %v1480 = vadd.f32 %v329, %v1479
      %v1481 = vpop.f32.mrb[0].mxu0
      %1482 = vmatprep.mubr.bf16.mxu0 %v1074
      %1483 = vmatmul.mubr.bf16.gmra.mrb[0].mxu0 %v789
      %v1484 = vpop.f32.mrb[0].mxu0
      %v1485 = vadd.f32 %v329, %v1484
      %v1486 = vpop.f32.mrb[0].mxu0
      %v1487 = vpop.f32.mrb[0].mxu0
      %v1488 = vadd.f32 %v329, %v1487
      %v1489 = vpop.f32.mrb[0].mxu0
      %1490 = vmatprep.mubr.bf16.mxu0 %v1077
      %1491 = vmatmul.mubr.bf16.gmra.mrb[0].mxu0 %v791
      %v1492 = vpop.f32.mrb[0].mxu0
      %v1493 = vadd.f32 %v329, %v1492
      %v1494 = vpop.f32.mrb[0].mxu0
      %v1495 = vpop.f32.mrb[0].mxu0
      %v1496 = vadd.f32 %v329, %v1495
      %v1497 = vpop.f32.mrb[0].mxu0
      %1498 = vmatprep.mubr.bf16.mxu0 %v1080
      %1499 = vmatmul.mubr.bf16.gmra.mrb[0].mxu0 %v793
      %v1500 = vpop.f32.mrb[0].mxu0
      %v1501 = vadd.f32 %v329, %v1500
      %v1502 = vpop.f32.mrb[0].mxu0
      %v1503 = vpop.f32.mrb[0].mxu0
      %v1504 = vadd.f32 %v329, %v1503
      %v1505 = vpop.f32.mrb[0].mxu0
      %1506 = vmatprep.mubr.bf16.mxu0 %v1083
      %1507 = vmatmul.mubr.bf16.gmra.mrb[0].mxu0 %v795
      %v1508 = vpop.f32.mrb[0].mxu0
      %v1509 = vadd.f32 %v329, %v1508
      %v1510 = vpop.f32.mrb[0].mxu0
      %v1511 = vpop.f32.mrb[0].mxu0
      %v1512 = vadd.f32 %v329, %v1511
      %v1513 = vpop.f32.mrb[0].mxu0
      %1514 = vmatprep.mubr.bf16.mxu0 %v1086
      %1515 = vmatmul.mubr.bf16.gmra.mrb[0].mxu0 %v797
      %v1516 = vpop.f32.mrb[0].mxu0
      %v1517 = vadd.f32 %v329, %v1516
      %v1518 = vpop.f32.mrb[0].mxu0
      %v1519 = vpop.f32.mrb[0].mxu0
      %v1520 = vadd.f32 %v329, %v1519
      %v1521 = vpop.f32.mrb[0].mxu0
      %1522 = vmatprep.mubr.bf16.mxu0 %v1089
      %1523 = vmatmul.mubr.bf16.gmra.mrb[0].mxu0 %v799
      %v1524 = vpop.f32.mrb[0].mxu0
      %v1525 = vadd.f32 %v329, %v1524
      %v1526 = vpop.f32.mrb[0].mxu0
      %v1527 = vpop.f32.mrb[0].mxu0
      %v1528 = vadd.f32 %v329, %v1527
      %v1529 = vpop.f32.mrb[0].mxu0
      %1530 = vmatprep.mubr.bf16.mxu0 %v1092
      %1531 = vmatmul.mubr.bf16.gmra.mrb[0].mxu0 %v801
      %v1532 = vpop.f32.mrb[0].mxu0
      %v1533 = vadd.f32 %v329, %v1532
      %v1534 = vpop.f32.mrb[0].mxu0
      %v1535 = vpop.f32.mrb[0].mxu0
      %v1536 = vadd.f32 %v329, %v1535
      %v1537 = vpop.f32.mrb[0].mxu0
      %1538 = vmatprep.mubr.bf16.mxu0 %v1095
      %1539 = vmatmul.mubr.bf16.gmra.mrb[0].mxu0 %v803
      %v1540 = vpop.f32.mrb[0].mxu0
      %v1541 = vadd.f32 %v329, %v1540
      %v1542 = vpop.f32.mrb[0].mxu0
      %v1543 = vpop.f32.mrb[0].mxu0
      %v1544 = vadd.f32 %v329, %v1543
      %v1545 = vpop.f32.mrb[0].mxu0
      %1546 = vmatprep.mubr.bf16.mxu0 %v1098
      %1547 = vmatmul.mubr.bf16.gmra.mrb[0].mxu0 %v805
      %v1548 = vpop.f32.mrb[0].mxu0
      %v1549 = vadd.f32 %v329, %v1548
      %v1550 = vpop.f32.mrb[0].mxu0
      %v1551 = vpop.f32.mrb[0].mxu0
      %v1552 = vadd.f32 %v329, %v1551
      %v1553 = vpop.f32.mrb[0].mxu0
      %1554 = vmatprep.mubr.bf16.mxu0 %v1101
      %1555 = vmatmul.mubr.bf16.gmra.mrb[0].mxu0 %v807
      %v1556 = vpop.f32.mrb[0].mxu0
      %v1557 = vadd.f32 %v329, %v1556
      %v1558 = vpop.f32.mrb[0].mxu0
      %v1559 = vpop.f32.mrb[0].mxu0
      %v1560 = vadd.f32 %v329, %v1559
      %v1561 = vpop.f32.mrb[0].mxu0
      %1562 = vmatprep.mubr.bf16.mxu0 %v1104
      %1563 = vmatmul.mubr.bf16.gmra.mrb[0].mxu0 %v809
      %v1564 = vpop.f32.mrb[0].mxu0
      %v1565 = vadd.f32 %v329, %v1564
      %v1566 = vpop.f32.mrb[0].mxu0
      %v1567 = vpop.f32.mrb[0].mxu0
      %v1568 = vadd.f32 %v329, %v1567
      %v1569 = vpop.f32.mrb[0].mxu0
      %1570 = vmatprep.mubr.bf16.mxu0 %v1107
      %1571 = vmatmul.mubr.bf16.gmra.mrb[0].mxu0 %v811
      %v1572 = vpop.f32.mrb[0].mxu0
      %v1573 = vadd.f32 %v329, %v1572
      %v1574 = vpop.f32.mrb[0].mxu0
      %v1575 = vpop.f32.mrb[0].mxu0
      %v1576 = vadd.f32 %v329, %v1575
      %v1577 = vpop.f32.mrb[0].mxu0
      %1578 = vmatprep.mubr.bf16.mxu0 %v1110
      %1579 = vmatmul.mubr.bf16.gmra.mrb[0].mxu0 %v813
      %v1580 = vpop.f32.mrb[0].mxu0
      %v1581 = vadd.f32 %v329, %v1580
      %v1582 = vpop.f32.mrb[0].mxu0
      %v1583 = vpop.f32.mrb[0].mxu0
      %v1584 = vadd.f32 %v329, %v1583
      %v1585 = vpop.f32.mrb[0].mxu0
      %1586 = vmatprep.mubr.bf16.mxu0 %v1113
      %1587 = vmatmul.mubr.bf16.gmra.mrb[0].mxu0 %v815
      %v1588 = vpop.f32.mrb[0].mxu0
      %v1589 = vadd.f32 %v329, %v1588
      %v1590 = vpop.f32.mrb[0].mxu0
      %v1591 = vpop.f32.mrb[0].mxu0
      %v1592 = vadd.f32 %v329, %v1591
      %v1593 = vpop.f32.mrb[0].mxu0
      %1594 = vmatprep.mubr.bf16.mxu0 %v1116
      %1595 = vmatmul.mubr.bf16.gmra.mrb[0].mxu0 %v817
      %v1596 = vpop.f32.mrb[0].mxu0
      %v1597 = vadd.f32 %v329, %v1596
      %v1598 = vpop.f32.mrb[0].mxu0
      %v1599 = vpop.f32.mrb[0].mxu0
      %v1600 = vadd.f32 %v329, %v1599
      %v1601 = vpop.f32.mrb[0].mxu0
      %1602 = vmatprep.mubr.bf16.mxu0 %v1119
      %1603 = vmatmul.mubr.bf16.gmra.mrb[0].mxu0 %v819
      %v1604 = vpop.f32.mrb[0].mxu0
      %v1605 = vadd.f32 %v329, %v1604
      %v1606 = vpop.f32.mrb[0].mxu0
      %v1607 = vpop.f32.mrb[0].mxu0
      %v1608 = vadd.f32 %v329, %v1607
      %v1609 = vpop.f32.mrb[0].mxu0
      %1610 = vmatprep.mubr.bf16.mxu0 %v1122
      %1611 = vmatmul.mubr.bf16.gmra.mrb[0].mxu0 %v821
      %v1612 = vpop.f32.mrb[0].mxu0
      %v1613 = vadd.f32 %v329, %v1612
      %v1614 = vpop.f32.mrb[0].mxu0
      %v1615 = vpop.f32.mrb[0].mxu0
      %v1616 = vadd.f32 %v329, %v1615
      %v1617 = vpop.f32.mrb[0].mxu0
      %1618 = vmatprep.mubr.bf16.mxu0 %v1125
      %1619 = vmatmul.mubr.bf16.gmra.mrb[0].mxu0 %v823
      %v1620 = vpop.f32.mrb[0].mxu0
      %v1621 = vadd.f32 %v329, %v1620
      %v1622 = vpop.f32.mrb[0].mxu0
      %v1623 = vpop.f32.mrb[0].mxu0
      %v1624 = vadd.f32 %v329, %v1623
      %v1625 = vpop.f32.mrb[0].mxu0
      %1626 = vmatprep.mubr.bf16.mxu0 %v1128
      %1627 = vmatmul.mubr.bf16.gmra.mrb[0].mxu0 %v825
      %v1628 = vpop.f32.mrb[0].mxu0
      %v1629 = vadd.f32 %v329, %v1628
      %v1630 = vpop.f32.mrb[0].mxu0
      %v1631 = vpop.f32.mrb[0].mxu0
      %v1632 = vadd.f32 %v329, %v1631
      %v1633 = vpop.f32.mrb[0].mxu0
      %1634 = vmatprep.mubr.bf16.mxu0 %v1131
      %1635 = vmatmul.mubr.bf16.gmra.mrb[0].mxu0 %v827
      %v1636 = vpop.f32.mrb[0].mxu0
      %v1637 = vadd.f32 %v329, %v1636
      %v1638 = vpop.f32.mrb[0].mxu0
      %v1639 = vpop.f32.mrb[0].mxu0
      %v1640 = vadd.f32 %v329, %v1639
      %v1641 = vpop.f32.mrb[0].mxu0
      %1642 = vmatprep.mubr.bf16.mxu0 %v1134
      %1643 = vmatmul.mubr.bf16.gmra.mrb[0].mxu0 %v829
      %v1644 = vpop.f32.mrb[0].mxu0
      %v1645 = vadd.f32 %v329, %v1644
      %v1646 = vpop.f32.mrb[0].mxu0
      %v1647 = vpop.f32.mrb[0].mxu0
      %v1648 = vadd.f32 %v329, %v1647
      %v1649 = vpop.f32.mrb[0].mxu0
      %1650 = vmatprep.mubr.bf16.mxu0 %v1137
      %1651 = vmatmul.mubr.bf16.gmra.mrb[0].mxu0 %v831
      %v1652 = vpop.f32.mrb[0].mxu0
      %v1653 = vadd.f32 %v329, %v1652
      %v1654 = vpop.f32.mrb[0].mxu0
      %v1655 = vpop.f32.mrb[0].mxu0
      %v1656 = vadd.f32 %v329, %v1655
      %v1657 = vpop.f32.mrb[0].mxu0
      %1658 = vmatprep.mubr.bf16.mxu0 %v1140
      %1659 = vmatmul.mubr.bf16.gmra.mrb[0].mxu0 %v833
      %v1660 = vpop.f32.mrb[0].mxu0
      %v1661 = vadd.f32 %v329, %v1660
      %v1662 = vpop.f32.mrb[0].mxu0
      %v1663 = vpop.f32.mrb[0].mxu0
      %v1664 = vadd.f32 %v329, %v1663
      %v1665 = vpop.f32.mrb[0].mxu0
      %1666 = vmatprep.mubr.bf16.mxu0 %v1143
      %1667 = vmatmul.mubr.bf16.gmra.mrb[0].mxu0 %v835
      %v1668 = vpop.f32.mrb[0].mxu0
      %v1669 = vadd.f32 %v329, %v1668
      %v1670 = vpop.f32.mrb[0].mxu0
      %v1671 = vpop.f32.mrb[0].mxu0
      %v1672 = vadd.f32 %v329, %v1671
      %v1673 = vpop.f32.mrb[0].mxu0
      %1674 = vmatprep.mubr.bf16.mxu0 %v1146
      %1675 = vmatmul.mubr.bf16.gmra.mrb[0].mxu0 %v837
      %v1676 = vpop.f32.mrb[0].mxu0
      %v1677 = vadd.f32 %v329, %v1676
      %v1678 = vpop.f32.mrb[0].mxu0
      %v1679 = vpop.f32.mrb[0].mxu0
      %v1680 = vadd.f32 %v329, %v1679
      %v1681 = vpop.f32.mrb[0].mxu0
      %1682 = vmatprep.mubr.bf16.mxu0 %v1149
      %1683 = vmatmul.mubr.bf16.gmra.mrb[0].mxu0 %v839
      %v1684 = vpop.f32.mrb[0].mxu0
      %v1685 = vadd.f32 %v329, %v1684
      %v1686 = vpop.f32.mrb[0].mxu0
      %v1687 = vpop.f32.mrb[0].mxu0
      %v1688 = vadd.f32 %v329, %v1687
      %v1689 = vpop.f32.mrb[0].mxu0
      %1690 = vmatprep.mubr.bf16.mxu0 %v1152
      %1691 = vmatmul.mubr.bf16.gmra.mrb[0].mxu0 %v841
      %v1692 = vpop.f32.mrb[0].mxu0
      %v1693 = vadd.f32 %v329, %v1692
      %v1694 = vpop.f32.mrb[0].mxu0
      %v1695 = vpop.f32.mrb[0].mxu0
      %v1696 = vadd.f32 %v329, %v1695
      %v1697 = vpop.f32.mrb[0].mxu0
      %1698 = vdwg.mxu0
      %v1699 = vtanh.pop %v1189
      %v1700 = vtanh.pop %v1192
      %v1701 = vtanh.pop %v1197
      %v1702 = vtanh.pop %v1200
      %v1703 = vtanh.pop %v1205
      %v1704 = vtanh.pop %v1208
      %v1705 = vtanh.pop %v1213
      %v1706 = vtanh.pop %v1216
      %v1707 = vtanh.pop %v1221
      %v1708 = vtanh.pop %v1224
      %v1709 = vtanh.pop %v1229
      %v1710 = vtanh.pop %v1232
      %v1711 = vtanh.pop %v1237
      %v1712 = vtanh.pop %v1240
      %v1713 = vtanh.pop %v1245
      %v1714 = vtanh.pop %v1248
      %v1715 = vtanh.pop %v1253
      %v1716 = vtanh.pop %v1256
      %v1717 = vtanh.pop %v1261
      %v1718 = vtanh.pop %v1264
      %v1719 = vtanh.pop %v1269
      %v1720 = vtanh.pop %v1272
      %v1721 = vtanh.pop %v1277
      %v1722 = vtanh.pop %v1280
      %v1723 = vtanh.pop %v1285
      %v1724 = vtanh.pop %v1288
      %v1725 = vtanh.pop %v1293
      %v1726 = vtanh.pop %v1296
      %v1727 = vtanh.pop %v1301
      %v1728 = vtanh.pop %v1304
      %v1729 = vtanh.pop %v1309
      %v1730 = vtanh.pop %v1312
      %v1731 = vtanh.pop %v1317
      %v1732 = vtanh.pop %v1320
      %v1733 = vtanh.pop %v1325
      %v1734 = vtanh.pop %v1328
      %v1735 = vtanh.pop %v1333
      %v1736 = vtanh.pop %v1336
      %v1737 = vtanh.pop %v1341
      %v1738 = vtanh.pop %v1344
      %v1739 = vtanh.pop %v1349
      %v1740 = vtanh.pop %v1352
      %v1741 = vtanh.pop %v1357
      %v1742 = vtanh.pop %v1360
      %v1743 = vtanh.pop %v1365
      %v1744 = vtanh.pop %v1368
      %v1745 = vtanh.pop %v1373
      %v1746 = vtanh.pop %v1376
      %v1747 = vtanh.pop %v1381
      %v1748 = vtanh.pop %v1384
      %v1749 = vtanh.pop %v1389
      %v1750 = vtanh.pop %v1392
      %v1751 = vtanh.pop %v1397
      %v1752 = vtanh.pop %v1400
      %v1753 = vtanh.pop %v1405
      %v1754 = vtanh.pop %v1408
      %v1755 = vtanh.pop %v1413
      %v1756 = vtanh.pop %v1416
      %v1757 = vtanh.pop %v1421
      %v1758 = vtanh.pop %v1424
      %v1759 = vtanh.pop %v1429
      %v1760 = vtanh.pop %v1432
      %v1761 = vtanh.pop %v1437
      %v1762 = vtanh.pop %v1440
      %v1763 = vtanh.pop %v1445
      %v1764 = vtanh.pop %v1448
      %v1765 = vtanh.pop %v1453
      %v1766 = vtanh.pop %v1456
      %v1767 = vtanh.pop %v1461
      %v1768 = vtanh.pop %v1464
      %v1769 = vtanh.pop %v1469
      %v1770 = vtanh.pop %v1472
      %v1771 = vtanh.pop %v1477
      %v1772 = vtanh.pop %v1480
      %v1773 = vtanh.pop %v1485
      %v1774 = vtanh.pop %v1488
      %v1775 = vtanh.pop %v1493
      %v1776 = vtanh.pop %v1496
      %v1777 = vtanh.pop %v1501
      %v1778 = vtanh.pop %v1504
      %v1779 = vtanh.pop %v1509
      %v1780 = vtanh.pop %v1512
      %v1781 = vtanh.pop %v1517
      %v1782 = vtanh.pop %v1520
      %v1783 = vtanh.pop %v1525
      %v1784 = vtanh.pop %v1528
      %v1785 = vtanh.pop %v1533
      %v1786 = vtanh.pop %v1536
      %v1787 = vtanh.pop %v1541
      %v1788 = vtanh.pop %v1544
      %v1789 = vtanh.pop %v1549
      %v1790 = vtanh.pop %v1552
      %v1791 = vtanh.pop %v1557
      %v1792 = vtanh.pop %v1560
      %v1793 = vtanh.pop %v1565
      %v1794 = vtanh.pop %v1568
      %v1795 = vtanh.pop %v1573
      %v1796 = vtanh.pop %v1576
      %v1797 = vtanh.pop %v1581
      %v1798 = vtanh.pop %v1584
      %v1799 = vtanh.pop %v1589
      %v1800 = vtanh.pop %v1592
      %v1801 = vtanh.pop %v1597
      %v1802 = vtanh.pop %v1600
      %v1803 = vtanh.pop %v1605
      %v1804 = vtanh.pop %v1608
      %v1805 = vtanh.pop %v1613
      %v1806 = vtanh.pop %v1616
      %v1807 = vtanh.pop %v1621
      %v1808 = vtanh.pop %v1624
      %v1809 = vtanh.pop %v1629
      %v1810 = vtanh.pop %v1632
      %v1811 = vtanh.pop %v1637
      %v1812 = vtanh.pop %v1640
      %v1813 = vtanh.pop %v1645
      %v1814 = vtanh.pop %v1648
      %v1815 = vtanh.pop %v1653
      %v1816 = vtanh.pop %v1656
      %v1817 = vtanh.pop %v1661
      %v1818 = vtanh.pop %v1664
      %v1819 = vtanh.pop %v1669
      %v1820 = vtanh.pop %v1672
      %v1821 = vtanh.pop %v1677
      %v1822 = vtanh.pop %v1680
      %v1823 = vtanh.pop %v1685
      %v1824 = vtanh.pop %v1688
      %v1825 = vtanh.pop %v1693
      %v1826 = vtanh.pop %v1696
      %v1827 = vpack.c.bf16 %v1700, %v1699
      %v1828 = vpack.c.bf16 %v1702, %v1701
      %v1829 = vpack.c.bf16 %v1704, %v1703
      %v1830 = vpack.c.bf16 %v1706, %v1705
      %v1831 = vpack.c.bf16 %v1708, %v1707
      %v1832 = vpack.c.bf16 %v1710, %v1709
      %v1833 = vpack.c.bf16 %v1712, %v1711
      %v1834 = vpack.c.bf16 %v1714, %v1713
      %v1835 = vpack.c.bf16 %v1716, %v1715
      %v1836 = vpack.c.bf16 %v1718, %v1717
      %v1837 = vpack.c.bf16 %v1720, %v1719
      %v1838 = vpack.c.bf16 %v1722, %v1721
      %v1839 = vpack.c.bf16 %v1724, %v1723
      %v1840 = vpack.c.bf16 %v1726, %v1725
      %v1841 = vpack.c.bf16 %v1728, %v1727
      %v1842 = vpack.c.bf16 %v1730, %v1729
      %v1843 = vpack.c.bf16 %v1732, %v1731
      %v1844 = vpack.c.bf16 %v1734, %v1733
      %v1845 = vpack.c.bf16 %v1736, %v1735
      %v1846 = vpack.c.bf16 %v1738, %v1737
      %v1847 = vpack.c.bf16 %v1740, %v1739
      %v1848 = vpack.c.bf16 %v1742, %v1741
      %v1849 = vpack.c.bf16 %v1744, %v1743
      %v1850 = vpack.c.bf16 %v1746, %v1745
      %v1851 = vpack.c.bf16 %v1748, %v1747
      %v1852 = vpack.c.bf16 %v1750, %v1749
      %v1853 = vpack.c.bf16 %v1752, %v1751
      %v1854 = vpack.c.bf16 %v1754, %v1753
      %v1855 = vpack.c.bf16 %v1756, %v1755
      %v1856 = vpack.c.bf16 %v1758, %v1757
      %v1857 = vpack.c.bf16 %v1760, %v1759
      %v1858 = vpack.c.bf16 %v1762, %v1761
      %v1859 = vpack.c.bf16 %v1764, %v1763
      %v1860 = vpack.c.bf16 %v1766, %v1765
      %v1861 = vpack.c.bf16 %v1768, %v1767
      %v1862 = vpack.c.bf16 %v1770, %v1769
      %v1863 = vpack.c.bf16 %v1772, %v1771
      %v1864 = vpack.c.bf16 %v1774, %v1773
      %v1865 = vpack.c.bf16 %v1776, %v1775
      %v1866 = vpack.c.bf16 %v1778, %v1777
      %v1867 = vpack.c.bf16 %v1780, %v1779
      %v1868 = vpack.c.bf16 %v1782, %v1781
      %v1869 = vpack.c.bf16 %v1784, %v1783
      %v1870 = vpack.c.bf16 %v1786, %v1785
      %v1871 = vpack.c.bf16 %v1788, %v1787
      %v1872 = vpack.c.bf16 %v1790, %v1789
      %v1873 = vpack.c.bf16 %v1792, %v1791
      %v1874 = vpack.c.bf16 %v1794, %v1793
      %v1875 = vpack.c.bf16 %v1796, %v1795
      %v1876 = vpack.c.bf16 %v1798, %v1797
      %v1877 = vpack.c.bf16 %v1800, %v1799
      %v1878 = vpack.c.bf16 %v1802, %v1801
      %v1879 = vpack.c.bf16 %v1804, %v1803
      %v1880 = vpack.c.bf16 %v1806, %v1805
      %v1881 = vpack.c.bf16 %v1808, %v1807
      %v1882 = vpack.c.bf16 %v1810, %v1809
      %v1883 = vpack.c.bf16 %v1812, %v1811
      %v1884 = vpack.c.bf16 %v1814, %v1813
      %v1885 = vpack.c.bf16 %v1816, %v1815
      %v1886 = vpack.c.bf16 %v1818, %v1817
      %v1887 = vpack.c.bf16 %v1820, %v1819
      %v1888 = vpack.c.bf16 %v1822, %v1821
      %v1889 = vpack.c.bf16 %v1824, %v1823
      %v1890 = vpack.c.bf16 %v1826, %v1825
      %v1955 = vunpack.c.l.b16 %v1827
      %v1956 = vunpack.c.h.b16 %v1827
      %v1957 = vunpack.c.l.b16 %v1828
      %v1958 = vunpack.c.h.b16 %v1828
      %v1959 = vunpack.c.l.b16 %v1829
      %v1960 = vunpack.c.h.b16 %v1829
      %v1961 = vunpack.c.l.b16 %v1830
      %v1962 = vunpack.c.h.b16 %v1830
      %v1963 = vunpack.c.l.b16 %v1831
      %v1964 = vunpack.c.h.b16 %v1831
      %v1965 = vunpack.c.l.b16 %v1832
      %v1966 = vunpack.c.h.b16 %v1832
      %v1967 = vunpack.c.l.b16 %v1833
      %v1968 = vunpack.c.h.b16 %v1833
      %v1969 = vunpack.c.l.b16 %v1834
      %v1970 = vunpack.c.h.b16 %v1834
      %v1971 = vunpack.c.l.b16 %v1835
      %v1972 = vunpack.c.h.b16 %v1835
      %v1973 = vunpack.c.l.b16 %v1836
      %v1974 = vunpack.c.h.b16 %v1836
      %v1975 = vunpack.c.l.b16 %v1837
      %v1976 = vunpack.c.h.b16 %v1837
      %v1977 = vunpack.c.l.b16 %v1838
      %v1978 = vunpack.c.h.b16 %v1838
      %v1979 = vunpack.c.l.b16 %v1839
      %v1980 = vunpack.c.h.b16 %v1839
      %v1981 = vunpack.c.l.b16 %v1840
      %v1982 = vunpack.c.h.b16 %v1840
      %v1983 = vunpack.c.l.b16 %v1841
      %v1984 = vunpack.c.h.b16 %v1841
      %v1985 = vunpack.c.l.b16 %v1842
      %v1986 = vunpack.c.h.b16 %v1842
      %v1987 = vunpack.c.l.b16 %v1843
      %v1988 = vunpack.c.h.b16 %v1843
      %v1989 = vunpack.c.l.b16 %v1844
      %v1990 = vunpack.c.h.b16 %v1844
      %v1991 = vunpack.c.l.b16 %v1845
      %v1992 = vunpack.c.h.b16 %v1845
      %v1993 = vunpack.c.l.b16 %v1846
      %v1994 = vunpack.c.h.b16 %v1846
      %v1995 = vunpack.c.l.b16 %v1847
      %v1996 = vunpack.c.h.b16 %v1847
      %v1997 = vunpack.c.l.b16 %v1848
      %v1998 = vunpack.c.h.b16 %v1848
      %v1999 = vunpack.c.l.b16 %v1849
      %v2000 = vunpack.c.h.b16 %v1849
      %v2001 = vunpack.c.l.b16 %v1850
      %v2002 = vunpack.c.h.b16 %v1850
      %v2003 = vunpack.c.l.b16 %v1851
      %v2004 = vunpack.c.h.b16 %v1851
      %v2005 = vunpack.c.l.b16 %v1852
      %v2006 = vunpack.c.h.b16 %v1852
      %v2007 = vunpack.c.l.b16 %v1853
      %v2008 = vunpack.c.h.b16 %v1853
      %v2009 = vunpack.c.l.b16 %v1854
      %v2010 = vunpack.c.h.b16 %v1854
      %v2011 = vunpack.c.l.b16 %v1855
      %v2012 = vunpack.c.h.b16 %v1855
      %v2013 = vunpack.c.l.b16 %v1856
      %v2014 = vunpack.c.h.b16 %v1856
      %v2015 = vunpack.c.l.b16 %v1857
      %v2016 = vunpack.c.h.b16 %v1857
      %v2017 = vunpack.c.l.b16 %v1858
      %v2018 = vunpack.c.h.b16 %v1858
      %v2019 = vunpack.c.l.b16 %v1859
      %v2020 = vunpack.c.h.b16 %v1859
      %v2021 = vunpack.c.l.b16 %v1860
      %v2022 = vunpack.c.h.b16 %v1860
      %v2023 = vunpack.c.l.b16 %v1861
      %v2024 = vunpack.c.h.b16 %v1861
      %v2025 = vunpack.c.l.b16 %v1862
      %v2026 = vunpack.c.h.b16 %v1862
      %v2027 = vunpack.c.l.b16 %v1863
      %v2028 = vunpack.c.h.b16 %v1863
      %v2029 = vunpack.c.l.b16 %v1864
      %v2030 = vunpack.c.h.b16 %v1864
      %v2031 = vunpack.c.l.b16 %v1865
      %v2032 = vunpack.c.h.b16 %v1865
      %v2033 = vunpack.c.l.b16 %v1866
      %v2034 = vunpack.c.h.b16 %v1866
      %v2035 = vunpack.c.l.b16 %v1867
      %v2036 = vunpack.c.h.b16 %v1867
      %v2037 = vunpack.c.l.b16 %v1868
      %v2038 = vunpack.c.h.b16 %v1868
      %v2039 = vunpack.c.l.b16 %v1869
      %v2040 = vunpack.c.h.b16 %v1869
      %v2041 = vunpack.c.l.b16 %v1870
      %v2042 = vunpack.c.h.b16 %v1870
      %v2043 = vunpack.c.l.b16 %v1871
      %v2044 = vunpack.c.h.b16 %v1871
      %v2045 = vunpack.c.l.b16 %v1872
      %v2046 = vunpack.c.h.b16 %v1872
      %v2047 = vunpack.c.l.b16 %v1873
      %v2048 = vunpack.c.h.b16 %v1873
      %v2049 = vunpack.c.l.b16 %v1874
      %v2050 = vunpack.c.h.b16 %v1874
      %v2051 = vunpack.c.l.b16 %v1875
      %v2052 = vunpack.c.h.b16 %v1875
      %v2053 = vunpack.c.l.b16 %v1876
      %v2054 = vunpack.c.h.b16 %v1876
      %v2055 = vunpack.c.l.b16 %v1877
      %v2056 = vunpack.c.h.b16 %v1877
      %v2057 = vunpack.c.l.b16 %v1878
      %v2058 = vunpack.c.h.b16 %v1878
      %v2059 = vunpack.c.l.b16 %v1879
      %v2060 = vunpack.c.h.b16 %v1879
      %v2061 = vunpack.c.l.b16 %v1880
      %v2062 = vunpack.c.h.b16 %v1880
      %v2063 = vunpack.c.l.b16 %v1881
      %v2064 = vunpack.c.h.b16 %v1881
      %v2065 = vunpack.c.l.b16 %v1882
      %v2066 = vunpack.c.h.b16 %v1882
      %v2067 = vunpack.c.l.b16 %v1883
      %v2068 = vunpack.c.h.b16 %v1883
      %v2069 = vunpack.c.l.b16 %v1884
      %v2070 = vunpack.c.h.b16 %v1884
      %v2071 = vunpack.c.l.b16 %v1885
      %v2072 = vunpack.c.h.b16 %v1885
      %v2073 = vunpack.c.l.b16 %v1886
      %v2074 = vunpack.c.h.b16 %v1886
      %v2075 = vunpack.c.l.b16 %v1887
      %v2076 = vunpack.c.h.b16 %v1887
      %v2077 = vunpack.c.l.b16 %v1888
      %v2078 = vunpack.c.h.b16 %v1888
      %v2079 = vunpack.c.l.b16 %v1889
      %v2080 = vunpack.c.h.b16 %v1889
      %v2081 = vunpack.c.l.b16 %v1890
      %v2082 = vunpack.c.h.b16 %v1890
      %v2083 = vpack.c.b16 %v1955, %v1955
      %v2084 = vpack.c.b16 %v1956, %v1956
      %v2085 = vpack.c.b16 %v1957, %v1957
      %v2086 = vpack.c.b16 %v1958, %v1958
      %v2087 = vpack.c.b16 %v1959, %v1959
      %v2088 = vpack.c.b16 %v1960, %v1960
      %v2089 = vpack.c.b16 %v1961, %v1961
      %v2090 = vpack.c.b16 %v1962, %v1962
      %v2091 = vpack.c.b16 %v1963, %v1963
      %v2092 = vpack.c.b16 %v1964, %v1964
      %v2093 = vpack.c.b16 %v1965, %v1965
      %v2094 = vpack.c.b16 %v1966, %v1966
      %v2095 = vpack.c.b16 %v1967, %v1967
      %v2096 = vpack.c.b16 %v1968, %v1968
      %v2097 = vpack.c.b16 %v1969, %v1969
      %v2098 = vpack.c.b16 %v1970, %v1970
      %v2099 = vpack.c.b16 %v1971, %v1971
      %v2100 = vpack.c.b16 %v1972, %v1972
      %v2101 = vpack.c.b16 %v1973, %v1973
      %v2102 = vpack.c.b16 %v1974, %v1974
      %v2103 = vpack.c.b16 %v1975, %v1975
      %v2104 = vpack.c.b16 %v1976, %v1976
      %v2105 = vpack.c.b16 %v1977, %v1977
      %v2106 = vpack.c.b16 %v1978, %v1978
      %v2107 = vpack.c.b16 %v1979, %v1979
      %v2108 = vpack.c.b16 %v1980, %v1980
      %v2109 = vpack.c.b16 %v1981, %v1981
      %v2110 = vpack.c.b16 %v1982, %v1982
      %v2111 = vpack.c.b16 %v1983, %v1983
      %v2112 = vpack.c.b16 %v1984, %v1984
      %v2113 = vpack.c.b16 %v1985, %v1985
      %v2114 = vpack.c.b16 %v1986, %v1986
      %v2115 = vpack.c.b16 %v1987, %v1987
      %v2116 = vpack.c.b16 %v1988, %v1988
      %v2117 = vpack.c.b16 %v1989, %v1989
      %v2118 = vpack.c.b16 %v1990, %v1990
      %v2119 = vpack.c.b16 %v1991, %v1991
      %v2120 = vpack.c.b16 %v1992, %v1992
      %v2121 = vpack.c.b16 %v1993, %v1993
      %v2122 = vpack.c.b16 %v1994, %v1994
      %v2123 = vpack.c.b16 %v1995, %v1995
      %v2124 = vpack.c.b16 %v1996, %v1996
      %v2125 = vpack.c.b16 %v1997, %v1997
      %v2126 = vpack.c.b16 %v1998, %v1998
      %v2127 = vpack.c.b16 %v1999, %v1999
      %v2128 = vpack.c.b16 %v2000, %v2000
      %v2129 = vpack.c.b16 %v2001, %v2001
      %v2130 = vpack.c.b16 %v2002, %v2002
      %v2131 = vpack.c.b16 %v2003, %v2003
      %v2132 = vpack.c.b16 %v2004, %v2004
      %v2133 = vpack.c.b16 %v2005, %v2005
      %v2134 = vpack.c.b16 %v2006, %v2006
      %v2135 = vpack.c.b16 %v2007, %v2007
      %v2136 = vpack.c.b16 %v2008, %v2008
      %v2137 = vpack.c.b16 %v2009, %v2009
      %v2138 = vpack.c.b16 %v2010, %v2010
      %v2139 = vpack.c.b16 %v2011, %v2011
      %v2140 = vpack.c.b16 %v2012, %v2012
      %v2141 = vpack.c.b16 %v2013, %v2013
      %v2142 = vpack.c.b16 %v2014, %v2014
      %v2143 = vpack.c.b16 %v2015, %v2015
      %v2144 = vpack.c.b16 %v2016, %v2016
      %v2145 = vpack.c.b16 %v2017, %v2017
      %v2146 = vpack.c.b16 %v2018, %v2018
      %v2147 = vpack.c.b16 %v2019, %v2019
      %v2148 = vpack.c.b16 %v2020, %v2020
      %v2149 = vpack.c.b16 %v2021, %v2021
      %v2150 = vpack.c.b16 %v2022, %v2022
      %v2151 = vpack.c.b16 %v2023, %v2023
      %v2152 = vpack.c.b16 %v2024, %v2024
      %v2153 = vpack.c.b16 %v2025, %v2025
      %v2154 = vpack.c.b16 %v2026, %v2026
      %v2155 = vpack.c.b16 %v2027, %v2027
      %v2156 = vpack.c.b16 %v2028, %v2028
      %v2157 = vpack.c.b16 %v2029, %v2029
      %v2158 = vpack.c.b16 %v2030, %v2030
      %v2159 = vpack.c.b16 %v2031, %v2031
      %v2160 = vpack.c.b16 %v2032, %v2032
      %v2161 = vpack.c.b16 %v2033, %v2033
      %v2162 = vpack.c.b16 %v2034, %v2034
      %v2163 = vpack.c.b16 %v2035, %v2035
      %v2164 = vpack.c.b16 %v2036, %v2036
      %v2165 = vpack.c.b16 %v2037, %v2037
      %v2166 = vpack.c.b16 %v2038, %v2038
      %v2167 = vpack.c.b16 %v2039, %v2039
      %v2168 = vpack.c.b16 %v2040, %v2040
      %v2169 = vpack.c.b16 %v2041, %v2041
      %v2170 = vpack.c.b16 %v2042, %v2042
      %v2171 = vpack.c.b16 %v2043, %v2043
      %v2172 = vpack.c.b16 %v2044, %v2044
      %v2173 = vpack.c.b16 %v2045, %v2045
      %v2174 = vpack.c.b16 %v2046, %v2046
      %v2175 = vpack.c.b16 %v2047, %v2047
      %v2176 = vpack.c.b16 %v2048, %v2048
      %v2177 = vpack.c.b16 %v2049, %v2049
      %v2178 = vpack.c.b16 %v2050, %v2050
      %v2179 = vpack.c.b16 %v2051, %v2051
      %v2180 = vpack.c.b16 %v2052, %v2052
      %v2181 = vpack.c.b16 %v2053, %v2053
      %v2182 = vpack.c.b16 %v2054, %v2054
      %v2183 = vpack.c.b16 %v2055, %v2055
      %v2184 = vpack.c.b16 %v2056, %v2056
      %v2185 = vpack.c.b16 %v2057, %v2057
      %v2186 = vpack.c.b16 %v2058, %v2058
      %v2187 = vpack.c.b16 %v2059, %v2059
      %v2188 = vpack.c.b16 %v2060, %v2060
      %v2189 = vpack.c.b16 %v2061, %v2061
      %v2190 = vpack.c.b16 %v2062, %v2062
      %v2191 = vpack.c.b16 %v2063, %v2063
      %v2192 = vpack.c.b16 %v2064, %v2064
      %v2193 = vpack.c.b16 %v2065, %v2065
      %v2194 = vpack.c.b16 %v2066, %v2066
      %v2195 = vpack.c.b16 %v2067, %v2067
      %v2196 = vpack.c.b16 %v2068, %v2068
      %v2197 = vpack.c.b16 %v2069, %v2069
      %v2198 = vpack.c.b16 %v2070, %v2070
      %v2199 = vpack.c.b16 %v2071, %v2071
      %v2200 = vpack.c.b16 %v2072, %v2072
      %v2201 = vpack.c.b16 %v2073, %v2073
      %v2202 = vpack.c.b16 %v2074, %v2074
      %v2203 = vpack.c.b16 %v2075, %v2075
      %v2204 = vpack.c.b16 %v2076, %v2076
      %v2205 = vpack.c.b16 %v2077, %v2077
      %v2206 = vpack.c.b16 %v2078, %v2078
      %v2207 = vpack.c.b16 %v2079, %v2079
      %v2208 = vpack.c.b16 %v2080, %v2080
      %v2209 = vpack.c.b16 %v2081, %v2081
      %v2210 = vpack.c.b16 %v2082, %v2082
      %2339 = vst [vmem:[%s175] sm:$0xf] %v2083
      %2340 = vst [vmem:[%s175 + $0x4] sm:$0xf] %v2084
      %2341 = vst [vmem:[%s175 + $0x8] sm:$0xf] %v2085
      %2342 = vst [vmem:[%s175 + $0xc] sm:$0xf] %v2086
      %2343 = vst [vmem:[%s175 + $0x10] sm:$0xf] %v2087
      %2344 = vst [vmem:[%s175 + $0x14] sm:$0xf] %v2088
      %2345 = vst [vmem:[%s175 + $0x18] sm:$0xf] %v2089
      %2346 = vst [vmem:[%s175 + $0x1c] sm:$0xf] %v2090
      %2347 = vst [vmem:[%s175 + $0x20] sm:$0xf] %v2091
      %2348 = vst [vmem:[%s175 + $0x24] sm:$0xf] %v2092
      %2349 = vst [vmem:[%s175 + $0x28] sm:$0xf] %v2093
      %2350 = vst [vmem:[%s175 + $0x2c] sm:$0xf] %v2094
      %2351 = vst [vmem:[%s175 + $0x30] sm:$0xf] %v2095
      %2352 = vst [vmem:[%s175 + $0x34] sm:$0xf] %v2096
      %2353 = vst [vmem:[%s175 + $0x38] sm:$0xf] %v2097
      %2354 = vst [vmem:[%s175 + $0x3c] sm:$0xf] %v2098
      %2355 = vst [vmem:[%s175 + $0x40] sm:$0xf] %v2099
      %2356 = vst [vmem:[%s175 + $0x44] sm:$0xf] %v2100
      %2357 = vst [vmem:[%s175 + $0x48] sm:$0xf] %v2101
      %2358 = vst [vmem:[%s175 + $0x4c] sm:$0xf] %v2102
      %2359 = vst [vmem:[%s175 + $0x50] sm:$0xf] %v2103
      %2360 = vst [vmem:[%s175 + $0x54] sm:$0xf] %v2104
      %2361 = vst [vmem:[%s175 + $0x58] sm:$0xf] %v2105
      %2362 = vst [vmem:[%s175 + $0x5c] sm:$0xf] %v2106
      %2363 = vst [vmem:[%s175 + $0x60] sm:$0xf] %v2107
      %2364 = vst [vmem:[%s175 + $0x64] sm:$0xf] %v2108
      %2365 = vst [vmem:[%s175 + $0x68] sm:$0xf] %v2109
      %2366 = vst [vmem:[%s175 + $0x6c] sm:$0xf] %v2110
      %2367 = vst [vmem:[%s175 + $0x70] sm:$0xf] %v2111
      %2368 = vst [vmem:[%s175 + $0x74] sm:$0xf] %v2112
      %2369 = vst [vmem:[%s175 + $0x78] sm:$0xf] %v2113
      %2370 = vst [vmem:[%s175 + $0x7c] sm:$0xf] %v2114
      %2371 = vst [vmem:[%s175 + $0x80] sm:$0xf] %v2115
      %2372 = vst [vmem:[%s175 + $0x84] sm:$0xf] %v2116
      %2373 = vst [vmem:[%s175 + $0x88] sm:$0xf] %v2117
      %2374 = vst [vmem:[%s175 + $0x8c] sm:$0xf] %v2118
      %2375 = vst [vmem:[%s175 + $0x90] sm:$0xf] %v2119
      %2376 = vst [vmem:[%s175 + $0x94] sm:$0xf] %v2120
      %2377 = vst [vmem:[%s175 + $0x98] sm:$0xf] %v2121
      %2378 = vst [vmem:[%s175 + $0x9c] sm:$0xf] %v2122
      %2379 = vst [vmem:[%s175 + $0xa0] sm:$0xf] %v2123
      %2380 = vst [vmem:[%s175 + $0xa4] sm:$0xf] %v2124
      %2381 = vst [vmem:[%s175 + $0xa8] sm:$0xf] %v2125
      %2382 = vst [vmem:[%s175 + $0xac] sm:$0xf] %v2126
      %2383 = vst [vmem:[%s175 + $0xb0] sm:$0xf] %v2127
      %2384 = vst [vmem:[%s175 + $0xb4] sm:$0xf] %v2128
      %2385 = vst [vmem:[%s175 + $0xb8] sm:$0xf] %v2129
      %2386 = vst [vmem:[%s175 + $0xbc] sm:$0xf] %v2130
      %2387 = vst [vmem:[%s175 + $0xc0] sm:$0xf] %v2131
      %2388 = vst [vmem:[%s175 + $0xc4] sm:$0xf] %v2132
      %2389 = vst [vmem:[%s175 + $0xc8] sm:$0xf] %v2133
      %2390 = vst [vmem:[%s175 + $0xcc] sm:$0xf] %v2134
      %2391 = vst [vmem:[%s175 + $0xd0] sm:$0xf] %v2135
      %2392 = vst [vmem:[%s175 + $0xd4] sm:$0xf] %v2136
      %2393 = vst [vmem:[%s175 + $0xd8] sm:$0xf] %v2137
      %2394 = vst [vmem:[%s175 + $0xdc] sm:$0xf] %v2138
      %2395 = vst [vmem:[%s175 + $0xe0] sm:$0xf] %v2139
      %2396 = vst [vmem:[%s175 + $0xe4] sm:$0xf] %v2140
      %2397 = vst [vmem:[%s175 + $0xe8] sm:$0xf] %v2141
      %2398 = vst [vmem:[%s175 + $0xec] sm:$0xf] %v2142
      %2399 = vst [vmem:[%s175 + $0xf0] sm:$0xf] %v2143
      %2400 = vst [vmem:[%s175 + $0xf4] sm:$0xf] %v2144
      %2401 = vst [vmem:[%s175 + $0xf8] sm:$0xf] %v2145
      %2402 = vst [vmem:[%s175 + $0xfc] sm:$0xf] %v2146
      %2403 = vst [vmem:[%s175 + $0x100] sm:$0xf] %v2147
      %2404 = vst [vmem:[%s175 + $0x104] sm:$0xf] %v2148
      %2405 = vst [vmem:[%s175 + $0x108] sm:$0xf] %v2149
      %2406 = vst [vmem:[%s175 + $0x10c] sm:$0xf] %v2150
      %2407 = vst [vmem:[%s175 + $0x110] sm:$0xf] %v2151
      %2408 = vst [vmem:[%s175 + $0x114] sm:$0xf] %v2152
      %2409 = vst [vmem:[%s175 + $0x118] sm:$0xf] %v2153
      %2410 = vst [vmem:[%s175 + $0x11c] sm:$0xf] %v2154
      %2411 = vst [vmem:[%s175 + $0x120] sm:$0xf] %v2155
      %2412 = vst [vmem:[%s175 + $0x124] sm:$0xf] %v2156
      %2413 = vst [vmem:[%s175 + $0x128] sm:$0xf] %v2157
      %2414 = vst [vmem:[%s175 + $0x12c] sm:$0xf] %v2158
      %2415 = vst [vmem:[%s175 + $0x130] sm:$0xf] %v2159
      %2416 = vst [vmem:[%s175 + $0x134] sm:$0xf] %v2160
      %2417 = vst [vmem:[%s175 + $0x138] sm:$0xf] %v2161
      %2418 = vst [vmem:[%s175 + $0x13c] sm:$0xf] %v2162
      %2419 = vst [vmem:[%s175 + $0x140] sm:$0xf] %v2163
      %2420 = vst [vmem:[%s175 + $0x144] sm:$0xf] %v2164
      %2421 = vst [vmem:[%s175 + $0x148] sm:$0xf] %v2165
      %2422 = vst [vmem:[%s175 + $0x14c] sm:$0xf] %v2166
      %2423 = vst [vmem:[%s175 + $0x150] sm:$0xf] %v2167
      %2424 = vst [vmem:[%s175 + $0x154] sm:$0xf] %v2168
      %2425 = vst [vmem:[%s175 + $0x158] sm:$0xf] %v2169
      %2426 = vst [vmem:[%s175 + $0x15c] sm:$0xf] %v2170
      %2427 = vst [vmem:[%s175 + $0x160] sm:$0xf] %v2171
      %2428 = vst [vmem:[%s175 + $0x164] sm:$0xf] %v2172
      %2429 = vst [vmem:[%s175 + $0x168] sm:$0xf] %v2173
      %2430 = vst [vmem:[%s175 + $0x16c] sm:$0xf] %v2174
      %2431 = vst [vmem:[%s175 + $0x170] sm:$0xf] %v2175
      %2432 = vst [vmem:[%s175 + $0x174] sm:$0xf] %v2176
      %2433 = vst [vmem:[%s175 + $0x178] sm:$0xf] %v2177
      %2434 = vst [vmem:[%s175 + $0x17c] sm:$0xf] %v2178
      %2435 = vst [vmem:[%s175 + $0x180] sm:$0xf] %v2179
      %2436 = vst [vmem:[%s175 + $0x184] sm:$0xf] %v2180
      %2437 = vst [vmem:[%s175 + $0x188] sm:$0xf] %v2181
      %2438 = vst [vmem:[%s175 + $0x18c] sm:$0xf] %v2182
      %2439 = vst [vmem:[%s175 + $0x190] sm:$0xf] %v2183
      %2440 = vst [vmem:[%s175 + $0x194] sm:$0xf] %v2184
      %2441 = vst [vmem:[%s175 + $0x198] sm:$0xf] %v2185
      %2442 = vst [vmem:[%s175 + $0x19c] sm:$0xf] %v2186
      %2443 = vst [vmem:[%s175 + $0x1a0] sm:$0xf] %v2187
      %2444 = vst [vmem:[%s175 + $0x1a4] sm:$0xf] %v2188
      %2445 = vst [vmem:[%s175 + $0x1a8] sm:$0xf] %v2189
      %2446 = vst [vmem:[%s175 + $0x1ac] sm:$0xf] %v2190
      %2447 = vst [vmem:[%s175 + $0x1b0] sm:$0xf] %v2191
      %2448 = vst [vmem:[%s175 + $0x1b4] sm:$0xf] %v2192
      %2449 = vst [vmem:[%s175 + $0x1b8] sm:$0xf] %v2193
      %2450 = vst [vmem:[%s175 + $0x1bc] sm:$0xf] %v2194
      %2451 = vst [vmem:[%s175 + $0x1c0] sm:$0xf] %v2195
      %2452 = vst [vmem:[%s175 + $0x1c4] sm:$0xf] %v2196
      %2453 = vst [vmem:[%s175 + $0x1c8] sm:$0xf] %v2197
      %2454 = vst [vmem:[%s175 + $0x1cc] sm:$0xf] %v2198
      %2455 = vst [vmem:[%s175 + $0x1d0] sm:$0xf] %v2199
      %2456 = vst [vmem:[%s175 + $0x1d4] sm:$0xf] %v2200
      %2457 = vst [vmem:[%s175 + $0x1d8] sm:$0xf] %v2201
      %2458 = vst [vmem:[%s175 + $0x1dc] sm:$0xf] %v2202
      %2459 = vst [vmem:[%s175 + $0x1e0] sm:$0xf] %v2203
      %2460 = vst [vmem:[%s175 + $0x1e4] sm:$0xf] %v2204
      %2461 = vst [vmem:[%s175 + $0x1e8] sm:$0xf] %v2205
      %2462 = vst [vmem:[%s175 + $0x1ec] sm:$0xf] %v2206
      %2463 = vst [vmem:[%s175 + $0x1f0] sm:$0xf] %v2207
      %2464 = vst [vmem:[%s175 + $0x1f4] sm:$0xf] %v2208
      %2465 = vst [vmem:[%s175 + $0x1f8] sm:$0xf] %v2209
      %2466 = vst [vmem:[%s175 + $0x1fc] sm:$0xf] %v2210
      %s2467 = smul.u32 128, %s14
      %p2468 = scmp.lt.s32.totalorder %s2467, 255
      %s2469 = scalar_select %p2468, %s2467, 255
      %s2470 = smul.addr %s2469, 4
      %s2471 = scalar_lea.vmem %s3, %s2470
      // Predicated region
      $region33: #{generator_forward.17} parent=31 // pred_check
        %p2472 = pneg %p100
      $region34: #{generator_forward.17} parent=31 // pred_check_branch
        %2474 = sbr.rel (%p2472) target = $region36
      $region35: #{generator_forward.17} parent=31 // pred_region
        %s2475 = smul.u32 128, %s14
      $region36: #{generator_forward.17} parent=31 // pred_fallthru
        _
    $region32: #{generator_forward.17} parent=5 // pred_fallthru
      _
    %p2476 = scmp.le.s32.totalorder 2, %s9
    // Predicated region
    $region37: #{generator_forward.17} parent=5 // pred_check
      %p2477 = pneg %p2476
    $region38: #{generator_forward.17} parent=5 // pred_check_branch
      %2479 = sbr.rel (%p2477) target = $region40
    $region39: #{generator_forward.17} parent=5 // pred_region
      %s2480 = ssub.s32 %s9, 2
      // Predicated region
      $region41: #{generator_forward.17} parent=39 // pred_check
        %p2481 = pneg %p106
      $region42: #{generator_forward.17} parent=39 // pred_check_branch
        %2483 = sbr.rel (%p2481) target = $region44
      $region43: #{generator_forward.17} parent=39 // pred_region
        %s2484 = smul.u32 128, %s15
        %p2485 = scmp.lt.s32.totalorder %s2484, 255
        %s2486 = scalar_select %p2485, %s2484, 255
        %s2487 = smul.addr %s2486, 4
        %s2488 = scalar_lea.vmem %s3, %s2487
      $region44: #{generator_forward.17} parent=39 // pred_fallthru
        _
    $region40: #{generator_forward.17} parent=5 // pred_fallthru
      _
  $region6: #{generator_forward.17} parent=0 // loop_footer
    %s13 = sadd.s32 1, %s9
  $region7: #{generator_forward.17} parent=0 // loop_footer_branch
    %8 = sbr.rel target = $region3
  $region8: #{generator_forward.17} parent=0 // loop_exit
    _

</llo_original>
